<compile_context>
chip_gen: v6e
topology: v6e:2x2x1
jax: 0.10.0
libtpu: 0.0.40
codegen_flags: <defaults>
</compile_context>

<pallas_src>
import functools

import jax
import jax.numpy as jnp
from jax.experimental import pallas as pl
from jax.experimental.pallas import tpu as pltpu


def _vmem_capacity_bytes():
    try:
        info = pltpu.get_tpu_info()
        cap = getattr(info, "vmem_capacity_bytes", None)
        if cap:
            return int(cap)
    except Exception:
        pass
    return 64 << 20  # conservative default (v7x per-TensorCore VMEM)


# ----------------------------------------------------------------------------
# Pallas kernel: PointSIFT cube_select (8-octant nearest neighbour).
# Grid is (B, N/tq); the neighbour scan is an in-kernel fori_loop whose carries
# are 8 lane-dense packed (dist, idx) keys (one XLU min per octant per chunk).
# ----------------------------------------------------------------------------
def _select_cube_kernel(radius_sq, n_valid, q_ref, k_ref, o_ref):
    # q_ref: (1, tq, 3) f32        query tile
    # k_ref: (1, n_chunks, 3, tn)  all (padded) neighbour points, chunk-major
    # o_ref: (1, 8, tq) int32      per-octant nearest-neighbour index
    i = pl.program_id(1)
    tq = q_ref.shape[1]
    n_chunks = k_ref.shape[1]
    tn = k_ref.shape[3]
    n_pad = n_chunks * tn

    q = q_ref[0]                                   # (tq, 3)
    qx, qy, qz = q[:, 0:1], q[:, 1:2], q[:, 2:3]   # (tq, 1)
    row = jax.lax.broadcasted_iota(jnp.int32, (tq, 1), 0) + i * tq

    col_bits = max(int(n_pad - 1).bit_length(), 1)
    dist_bits = 30 - col_bits
    qmax = float((1 << dist_bits) - 1)
    scale = qmax / max(float(radius_sq), 1e-30)
    BIG = jnp.int32(1 << 30)                       # > any valid packed key

    def chunk_body(c, best):
        kc = k_ref[0, c]                           # (3, tn), dynamic major-dim index
        dx = kc[0:1, :] - qx                       # (tq, tn)
        dy = kc[1:2, :] - qy
        dz = kc[2:3, :] - qz
        dist = dx * dx + dy * dy + dz * dz
        octant = ((dx > 0.0).astype(jnp.int32) * 4
                  + (dy > 0.0).astype(jnp.int32) * 2
                  + (dz > 0.0).astype(jnp.int32))
        col = jax.lax.broadcasted_iota(jnp.int32, (tq, tn), 1) + c * tn
        valid = (dist <= radius_sq) & (col != row) & (col < n_valid)
        # Lexicographic (quantized dist, col) key -> single min per octant.
        qd = jnp.minimum(dist * scale, qmax).astype(jnp.int32)
        key = qd * (1 << col_bits) + col
        out = []
        for o in range(8):                         # unrolled
            ko = jnp.where(valid & (octant == o), key, BIG)
            out.append(jnp.minimum(best[o], jnp.min(ko, axis=1)))
        return tuple(out)

    init = tuple(jnp.full((tq,), BIG, dtype=jnp.int32) for _ in range(8))
    best = jax.lax.fori_loop(0, n_chunks, chunk_body, init)

    self_idx = row[:, 0]                           # (tq,) fallback = own index
    col_mask = jnp.int32((1 << col_bits) - 1)
    rows = [jnp.where(best[o] < BIG, jnp.bitwise_and(best[o], col_mask), self_idx)
            for o in range(8)]
    o_ref[0] = jnp.stack(rows, axis=0)             # (8, tq) lane-dense store


def select_cube(xyz, radius):
    """PointSIFT cube_select.  `radius` is a squared-distance threshold (CUDA
    convention); self is excluded; empty octants fall back to the own index.
    Returns (B, N, 8) int32."""
    B, N, _ = xyz.shape
    xyz = xyz.astype(jnp.float32)
    n_pad = ((N + 127) // 128) * 128
    tq = 128
    tn = 256 if n_pad % 256 == 0 else 128
    n_chunks = n_pad // tn

    xyz_q = jnp.pad(xyz, ((0, 0), (0, n_pad - N), (0, 0))) if n_pad != N else xyz
    # (B, n_chunks, 3, tn): lane-dense neighbours, chunk index on a major dim.
    xyz_k = jnp.transpose(
        jnp.transpose(xyz_q, (0, 2, 1)).reshape(B, 3, n_chunks, tn), (0, 2, 1, 3))

    kernel = functools.partial(_select_cube_kernel, float(radius), N)
    idx = pl.pallas_call(
        kernel,
        out_shape=jax.ShapeDtypeStruct((B, 8, n_pad), jnp.int32),
        grid=(B, n_pad // tq),
        in_specs=[pl.BlockSpec((1, tq, 3), lambda b, i: (b, i, 0)),
                  pl.BlockSpec((1, n_chunks, 3, tn), lambda b, i: (b, 0, 0, 0))],
        out_specs=pl.BlockSpec((1, 8, tq), lambda b, i: (b, 0, i)),
        compiler_params=pltpu.CompilerParams(
            dimension_semantics=("parallel", "parallel")),
        cost_estimate=pl.CostEstimate(
            flops=int(B) * int(n_pad) * int(n_pad) * 40,
            transcendentals=0,
            bytes_accessed=int(B * n_pad * (3 * 4 * 2 + 8 * 4))),
    )(xyz_q, xyz_k)
    return jnp.transpose(idx, (0, 2, 1))[:, :N, :]


# ----------------------------------------------------------------------------
# Pallas kernel: one conv_bn x3 stack (8 -> 4 -> 2 -> 1 neighbours).
# Layer 1 is a single (4*tm)-row bf16 matmul (+ a small K=6 xyz matmul);
# layers 2/3 use K-merged (2*Cp, Cp) weights; residual add + final ReLU fused.
# ----------------------------------------------------------------------------
def _make_conv_stack_kernel(has_residual):
    def kernel(*refs):
        if has_residual:
            (gx_ref, gf_ref, w1x_ref, w1f_ref, b1_ref,
             w2_ref, b2_ref, w3_ref, b3_ref, res_ref, o_ref) = refs
        else:
            (gx_ref, gf_ref, w1x_ref, w1f_ref, b1_ref,
             w2_ref, b2_ref, w3_ref, b3_ref, o_ref) = refs
        tm = gx_ref.shape[0]
        c2 = gf_ref.shape[1] // 4                  # 2*Cf: pair-merged feature K

        gx = gx_ref[...]                           # (tm, 24)   bf16, neighbour-major xyz
        gf = gf_ref[...]                           # (tm, 8*Cf) bf16, neighbour-major feats

        # Layer 1: merge the 4 conv windows into one (4*tm)-row MXU stream.
        x_xyz = jnp.concatenate([gx[:, 6 * p:6 * (p + 1)] for p in range(4)], axis=0)
        x_ft = jnp.concatenate([gf[:, c2 * p:c2 * (p + 1)] for p in range(4)], axis=0)
        y1 = (jnp.dot(x_ft, w1f_ref[...], preferred_element_type=jnp.float32)
              + jnp.dot(x_xyz, w1x_ref[...], preferred_element_type=jnp.float32)
              + b1_ref[...])
        y1 = jnp.maximum(y1, 0.0).astype(jnp.bfloat16)        # (4*tm, Cp)

        def pair(x0, x1, w_ref, b_ref):
            # K-merged [1,2] conv window: one K = 2*Cp dot.
            x = jnp.concatenate([x0, x1], axis=1)              # (tm, 2*Cp), 128-aligned
            return jnp.dot(x, w_ref[...], preferred_element_type=jnp.float32) + b_ref[...]

        z0 = jnp.maximum(pair(y1[0:tm], y1[tm:2 * tm], w2_ref, b2_ref),
                         0.0).astype(jnp.bfloat16)             # 4 -> 2
        z1 = jnp.maximum(pair(y1[2 * tm:3 * tm], y1[3 * tm:4 * tm], w2_ref, b2_ref),
                         0.0).astype(jnp.bfloat16)
        y = pair(z0, z1, w3_ref, b3_ref)                       # 2 -> 1 (linear)
        if has_residual:
            y = y + res_ref[...].astype(jnp.float32)           # merge='add'
        # conv1's last layer ends in ReLU; the residual stack ends in the
        # module-level F.relu after the add -- both stacks end with a ReLU.
        y = jnp.maximum(y, 0.0)
        o_ref[...] = y.astype(o_ref.dtype)
    return kernel


def _choose_point_tile(M, Cf, Cp, out_bytes, has_res, vmem_cap):
    """Largest point tile whose double-buffered I/O + intermediates + weights
    fit a device-aware VMEM budget (v7x: 64 MiB/TC, v5e/v6e: 128 MiB)."""
    budget = min(int(vmem_cap * 0.45), 48 << 20)
    io_pp = 2 * (48 + 16 * Cf + (2 * Cp if has_res else 0) + out_bytes * Cp)
    scratch_pp = (48 + 16 * Cf) + 60 * Cp
    weight_bytes = (6 + 2 * Cf) * Cp * 2 + 2 * (2 * Cp * Cp * 2) + 3 * Cp * 4
    avail = max(budget - 2 * weight_bytes, 1 << 20)
    tm = avail // (io_pp + scratch_pp)
    tm = int(min(tm, 1024, max(16, ((M + 15) // 16) * 16)))
    tm = max(16, (tm // 16) * 16)                  # bf16 sublane tiling: mult of 16
    m_pad = ((M + tm - 1) // tm) * tm
    return tm, m_pad, weight_bytes


def conv_stack(gx, gf, layer_params, residual=None, out_dtype=jnp.float32):
    """One conv_bn x3 stack over grouped neighbours, ending in ReLU; if
    `residual` is given it is added before the final ReLU (merge='add').
    gx: (M, 24) bf16 relative xyz, gf: (M, 8*Cf) bf16 features (neighbour-major)."""
    M, gxw = gx.shape
    assert gxw == 24
    Cf = gf.shape[1] // 8
    (w1, b1), (w2, b2), (w3, b3) = layer_params
    Cout = w1.shape[-1]
    assert w1.shape == (2, 3 + Cf, Cout)
    Cp = ((Cout + 127) // 128) * 128               # lane-dense output channels
    has_res = residual is not None

    # Host-side weight prep: pair-merged K, Cout zero-padded to Cp.
    def padc(a):
        return jnp.pad(a, ((0, 0), (0, Cp - Cout)))

    w1x = padc(jnp.concatenate([w1[0, :3], w1[1, :3]], axis=0)).astype(jnp.bfloat16)
    w1f = padc(jnp.concatenate([w1[0, 3:], w1[1, 3:]], axis=0)).astype(jnp.bfloat16)

    def merge2(w):
        wp = jnp.pad(w, ((0, 0), (0, Cp - Cout), (0, Cp - Cout)))
        return jnp.concatenate([wp[0], wp[1]], axis=0).astype(jnp.bfloat16)

    w2m, w3m = merge2(w2), merge2(w3)
    b1p, b2p, b3p = (padc(b.reshape(1, Cout)).astype(jnp.float32) for b in (b1, b2, b3))

    out_bytes = jnp.dtype(out_dtype).itemsize
    vmem_cap = _vmem_capacity_bytes()
    tm, m_pad, weight_bytes = _choose_point_tile(M, Cf, Cp, out_bytes, has_res, vmem_cap)

    if m_pad != M:
        gx = jnp.pad(gx, ((0, m_pad - M), (0, 0)))
        gf = jnp.pad(gf, ((0, m_pad - M), (0, 0)))

    args = [gx, gf, w1x, w1f, b1p, w2m, b2p, w3m, b3p]
    in_specs = [
        pl.BlockSpec((tm, 24), lambda i: (i, 0)),
        pl.BlockSpec((tm, 8 * Cf), lambda i: (i, 0)),
        # Constant-index weight/bias blocks are fetched once and kept resident.
        # (pl.Buffered(1) left out for portability.)
        pl.BlockSpec((6, Cp), lambda i: (0, 0)),
        pl.BlockSpec((2 * Cf, Cp), lambda i: (0, 0)),
        pl.BlockSpec((1, Cp), lambda i: (0, 0)),
        pl.BlockSpec((2 * Cp, Cp), lambda i: (0, 0, )[:2]),
        pl.BlockSpec((1, Cp), lambda i: (0, 0)),
        pl.BlockSpec((2 * Cp, Cp), lambda i: (0, 0)),
        pl.BlockSpec((1, Cp), lambda i: (0, 0)),
    ]
    if has_res:
        res = jnp.pad(residual.astype(jnp.bfloat16),
                      ((0, m_pad - M), (0, Cp - Cout)))
        args.append(res)
        in_specs.append(pl.BlockSpec((tm, Cp), lambda i: (i, 0)))

    tile_bytes = tm * (48 + 16 * Cf + (2 * Cp if has_res else 0) + out_bytes * Cp)
    scratch_bytes = tm * ((48 + 16 * Cf) + 60 * Cp)
    vmem_limit = int(min(int(vmem_cap * 0.85),
                         max(2 * tile_bytes + scratch_bytes + 2 * weight_bytes + (8 << 20),
                             32 << 20)))

    flops = 8 * m_pad * (6 + 2 * Cf) * Cp + 12 * m_pad * Cp * Cp
    bytes_accessed = (gx.size * 2 + gf.size * 2 + m_pad * Cp * out_bytes
                      + (m_pad * Cp * 2 if has_res else 0) + weight_bytes)

    out = pl.pallas_call(
        _make_conv_stack_kernel(has_res),
        out_shape=jax.ShapeDtypeStruct((m_pad, Cp), out_dtype),
        grid=(m_pad // tm,),
        in_specs=in_specs,
        out_specs=pl.BlockSpec((tm, Cp), lambda i: (i, 0)),
        compiler_params=pltpu.CompilerParams(
            dimension_semantics=("parallel",),
            vmem_limit_bytes=vmem_limit),
        cost_estimate=pl.CostEstimate(flops=int(flops), transcendentals=0,
                                      bytes_accessed=int(bytes_accessed)),
    )(*args)
    return out[:M, :Cout]


# ----------------------------------------------------------------------------
# Plain-JAX glue: the neighbour gather.
# ----------------------------------------------------------------------------
def group_points(arr, idx):
    """arr: (B, N, C), idx: (B, N, 8) -> (B, N, 8, C)."""
    # TODO(synk): fuse this gather into the conv-stack kernel (scalar-prefetched
    # idx + manual DMA / in-VMEM gather) so the (B, N, 8, C) tensor never
    # round-trips HBM; it is the dominant remaining HBM cost (esp. on v5e).
    return jax.vmap(lambda a, i: jnp.take(a, i, axis=0))(arr, idx)


# ----------------------------------------------------------------------------
# Full forward of PointSIFT_res_module (merge='add', same_dim=False).
# ----------------------------------------------------------------------------
def pointsift_res_forward(xyz, points, conv1_params, conv2_params, radius):
    B, N, _ = xyz.shape
    Cf = points.shape[-1]
    Cout = conv1_params[0][0].shape[-1]
    assert Cf == Cout, ("merge='add' with same_dim=False requires "
                        "extra_input_channel == output_channel")
    M = B * N

    # pointsift_group(radius, xyz, points, use_xyz=True)
    idx = select_cube(xyz, radius)                                    # (B, N, 8) int32
    gxyz = group_points(xyz, idx) - xyz[:, :, None, :]                # (B, N, 8, 3) f32
    gx = gxyz.astype(jnp.bfloat16).reshape(M, 24)                     # reused by both stacks
    points_bf = points.astype(jnp.bfloat16)
    gf1 = group_points(points_bf, idx).reshape(M, 8 * Cf)

    # conv1 stack (all three conv_bn layers end in ReLU) -> bf16 features.
    new_points = conv_stack(gx, gf1, conv1_params, out_dtype=jnp.bfloat16)   # (M, Cout)

    # pointsift_group_with_idx(idx, xyz, new_points, use_xyz=True)
    gf2 = group_points(new_points.reshape(B, N, Cout), idx).reshape(M, 8 * Cout)

    # conv2 stack (last layer linear) + residual add + final ReLU, fused in-kernel.
    out = conv_stack(gx, gf2, conv2_params,
                     residual=points_bf.reshape(M, Cf), out_dtype=jnp.float32)
    return xyz, out.reshape(B, N, Cout)


# ----------------------------------------------------------------------------
# Deterministic parameter init (Conv2d[1,2] + BatchNorm folded to affine).
# TODO(synk): BatchNorm is folded with running statistics (inference mode); the
# PyTorch module in train() mode would use per-batch statistics instead.
# ----------------------------------------------------------------------------
def _conv_bn_params(key, cin, cout, eps=1e-5):
    k = jax.random.split(key, 6)
    W = jax.random.normal(k[0], (2, cin, cout), jnp.float32) / jnp.sqrt(2.0 * cin)
    b = 0.05 * jax.random.normal(k[1], (cout,), jnp.float32)
    gamma = 1.0 + 0.1 * jax.random.normal(k[2], (cout,), jnp.float32)
    beta = 0.1 * jax.random.normal(k[3], (cout,), jnp.float32)
    mean = 0.1 * jax.random.normal(k[4], (cout,), jnp.float32)
    var = 0.9 + 0.1 * jnp.abs(jax.random.normal(k[5], (cout,), jnp.float32))
    scale = gamma / jnp.sqrt(var + eps)
    W_f = W * scale[None, None, :]
    b_f = (b - mean) * scale + beta
    return W_f, b_f.reshape(1, cout)


def init_params(key, extra_input_channel, output_channel):
    keys = jax.random.split(key, 6)
    conv1 = [
        _conv_bn_params(keys[0], 3 + extra_input_channel, output_channel),
        _conv_bn_params(keys[1], output_channel, output_channel),
        _conv_bn_params(keys[2], output_channel, output_channel),
    ]
    conv2 = [
        _conv_bn_params(keys[3], 3 + output_channel, output_channel),
        _conv_bn_params(keys[4], output_channel, output_channel),
        _conv_bn_params(keys[5], output_channel, output_channel),
    ]
    return conv1, conv2


if __name__ == "__main__":
    B, N = 2, 16
    extra_input_channel = 32   # == output_channel so merge='add' is valid (same_dim=False)
    output_channel = 32
    radius = 0.3               # squared-distance threshold (CUDA cube_select convention)

    key = jax.random.PRNGKey(0)
    kx, kp, kw = jax.random.split(key, 3)
    xyz = jax.random.uniform(kx, (B, N, 3), dtype=jnp.float32)
    points = jax.random.normal(kp, (B, N, extra_input_channel), dtype=jnp.float32)

    conv1_params, conv2_params = init_params(kw, extra_input_channel, output_channel)

    fwd = jax.jit(functools.partial(pointsift_res_forward, radius=radius))
    xyz_out, new_points = fwd(xyz, points, conv1_params, conv2_params)
    jax.block_until_ready(new_points)
    assert xyz_out.shape == (B, N, 3)
    assert new_points.shape == (B, N, output_channel)
    assert bool(jnp.all(jnp.isfinite(new_points)))
    print("KERNEL_OK")
</pallas_src>

<mosaic_0001>
module attributes {stable_mosaic.version = 11 : i64} {
  func.func @_select_cube_kernel(%arg0: i32, %arg1: i32, %arg2: memref<1x128x3xf32, #tpu.memory_space<vmem>>, %arg3: memref<1x1x3x128xf32, #tpu.memory_space<vmem>>, %arg4: memref<1x8x128xi32, #tpu.memory_space<vmem>>) attributes {dimension_semantics = [#tpu.dimension_semantics<parallel>, #tpu.dimension_semantics<parallel>], iteration_bounds = array<i64: 2, 1>, scalar_prefetch = 0 : i64, scratch_operands = 0 : i64, tpu.core_type = #tpu.core_type<tc>, window_params = [{transform_indices = @transform_0, window_bounds = array<i64: 1, 128, 3>}, {transform_indices = @transform_1, window_bounds = array<i64: 1, 1, 3, 128>}, {transform_indices = @transform_2, window_bounds = array<i64: 1, 8, 128>}]} {
    %c0 = arith.constant 0 : index
    %c0_0 = arith.constant 0 : index
    %c0_1 = arith.constant 0 : index
    %0 = vector.load %arg2[%c0, %c0_0, %c0_1] : memref<1x128x3xf32, #tpu.memory_space<vmem>>, vector<1x128x3xf32>
    %1 = vector.shape_cast %0 : vector<1x128x3xf32> to vector<128x3xf32>
    %2 = vector.extract_strided_slice %1 {offsets = [0, 0], sizes = [128, 1], strides = [1, 1]} : vector<128x3xf32> to vector<128x1xf32>
    %3 = vector.extract_strided_slice %1 {offsets = [0, 1], sizes = [128, 1], strides = [1, 1]} : vector<128x3xf32> to vector<128x1xf32>
    %4 = vector.extract_strided_slice %1 {offsets = [0, 2], sizes = [128, 1], strides = [1, 1]} : vector<128x3xf32> to vector<128x1xf32>
    %5 = tpu.iota {dimensions = array<i32: 0>} : vector<128x1xi32>
    %c128_i32 = arith.constant 128 : i32
    %6 = arith.muli %arg1, %c128_i32 : i32
    %7 = vector.broadcast %6 : i32 to vector<128x1xi32>
    %8 = arith.addi %5, %7 : vector<128x1xi32>
    %c1073741824_i32 = arith.constant 1073741824 : i32
    %9 = vector.broadcast %c1073741824_i32 : i32 to vector<128xi32>
    %c1073741824_i32_2 = arith.constant 1073741824 : i32
    %10 = vector.broadcast %c1073741824_i32_2 : i32 to vector<128xi32>
    %c1073741824_i32_3 = arith.constant 1073741824 : i32
    %11 = vector.broadcast %c1073741824_i32_3 : i32 to vector<128xi32>
    %c1073741824_i32_4 = arith.constant 1073741824 : i32
    %12 = vector.broadcast %c1073741824_i32_4 : i32 to vector<128xi32>
    %c1073741824_i32_5 = arith.constant 1073741824 : i32
    %13 = vector.broadcast %c1073741824_i32_5 : i32 to vector<128xi32>
    %c1073741824_i32_6 = arith.constant 1073741824 : i32
    %14 = vector.broadcast %c1073741824_i32_6 : i32 to vector<128xi32>
    %c1073741824_i32_7 = arith.constant 1073741824 : i32
    %15 = vector.broadcast %c1073741824_i32_7 : i32 to vector<128xi32>
    %c1073741824_i32_8 = arith.constant 1073741824 : i32
    %16 = vector.broadcast %c1073741824_i32_8 : i32 to vector<128xi32>
    %c1073741824_i32_9 = arith.constant 1073741824 : i32
    %c0_i32 = arith.constant 0 : i32
    %c0_10 = arith.constant 0 : index
    %17 = arith.index_cast %c0_i32 : i32 to index
    %c0_11 = arith.constant 0 : index
    %c0_12 = arith.constant 0 : index
    %18 = vector.load %arg3[%c0_10, %17, %c0_11, %c0_12] : memref<1x1x3x128xf32, #tpu.memory_space<vmem>>, vector<1x1x3x128xf32>
    %19 = vector.shape_cast %18 : vector<1x1x3x128xf32> to vector<3x128xf32>
    %20 = vector.extract_strided_slice %19 {offsets = [0, 0], sizes = [1, 128], strides = [1, 1]} : vector<3x128xf32> to vector<1x128xf32>
    %21 = vector.broadcast %20 : vector<1x128xf32> to vector<128x128xf32>
    %22 = vector.broadcast %2 : vector<128x1xf32> to vector<128x128xf32>
    %23 = arith.subf %21, %22 : vector<128x128xf32>
    %24 = vector.extract_strided_slice %19 {offsets = [1, 0], sizes = [1, 128], strides = [1, 1]} : vector<3x128xf32> to vector<1x128xf32>
    %25 = vector.broadcast %24 : vector<1x128xf32> to vector<128x128xf32>
    %26 = vector.broadcast %3 : vector<128x1xf32> to vector<128x128xf32>
    %27 = arith.subf %25, %26 : vector<128x128xf32>
    %28 = vector.extract_strided_slice %19 {offsets = [2, 0], sizes = [1, 128], strides = [1, 1]} : vector<3x128xf32> to vector<1x128xf32>
    %29 = vector.broadcast %28 : vector<1x128xf32> to vector<128x128xf32>
    %30 = vector.broadcast %4 : vector<128x1xf32> to vector<128x128xf32>
    %31 = arith.subf %29, %30 : vector<128x128xf32>
    %32 = arith.mulf %23, %23 : vector<128x128xf32>
    %33 = arith.mulf %27, %27 : vector<128x128xf32>
    %34 = arith.addf %32, %33 : vector<128x128xf32>
    %35 = arith.mulf %31, %31 : vector<128x128xf32>
    %36 = arith.addf %34, %35 : vector<128x128xf32>
    %cst = arith.constant 0.000000e+00 : f32
    %37 = vector.broadcast %cst : f32 to vector<128x128xf32>
    %38 = arith.cmpf ogt, %23, %37 : vector<128x128xf32>
    %39 = arith.extui %38 : vector<128x128xi1> to vector<128x128xi32>
    %c4_i32 = arith.constant 4 : i32
    %40 = vector.broadcast %c4_i32 : i32 to vector<128x128xi32>
    %41 = arith.muli %39, %40 : vector<128x128xi32>
    %cst_13 = arith.constant 0.000000e+00 : f32
    %42 = vector.broadcast %cst_13 : f32 to vector<128x128xf32>
    %43 = arith.cmpf ogt, %27, %42 : vector<128x128xf32>
    %44 = arith.extui %43 : vector<128x128xi1> to vector<128x128xi32>
    %c2_i32 = arith.constant 2 : i32
    %45 = vector.broadcast %c2_i32 : i32 to vector<128x128xi32>
    %46 = arith.muli %44, %45 : vector<128x128xi32>
    %47 = arith.addi %41, %46 : vector<128x128xi32>
    %cst_14 = arith.constant 0.000000e+00 : f32
    %48 = vector.broadcast %cst_14 : f32 to vector<128x128xf32>
    %49 = arith.cmpf ogt, %31, %48 : vector<128x128xf32>
    %50 = arith.extui %49 : vector<128x128xi1> to vector<128x128xi32>
    %51 = arith.addi %47, %50 : vector<128x128xi32>
    %52 = tpu.iota {dimensions = array<i32: 1>} : vector<128x128xi32>
    %c128_i32_15 = arith.constant 128 : i32
    %53 = arith.muli %c0_i32, %c128_i32_15 : i32
    %54 = vector.broadcast %53 : i32 to vector<128x128xi32>
    %55 = arith.addi %52, %54 : vector<128x128xi32>
    %cst_16 = arith.constant 3.000000e-01 : f32
    %56 = vector.broadcast %cst_16 : f32 to vector<128x128xf32>
    %57 = arith.cmpf ole, %36, %56 : vector<128x128xf32>
    %58 = vector.broadcast %8 : vector<128x1xi32> to vector<128x128xi32>
    %59 = arith.cmpi ne, %55, %58 : vector<128x128xi32>
    %60 = arith.andi %57, %59 : vector<128x128xi1>
    %c16_i32 = arith.constant 16 : i32
    %61 = vector.broadcast %c16_i32 : i32 to vector<128x128xi32>
    %62 = arith.cmpi slt, %55, %61 : vector<128x128xi32>
    %63 = arith.andi %60, %62 : vector<128x128xi1>
    %cst_17 = arith.constant 0x4BD55554 : f32
    %64 = vector.broadcast %cst_17 : f32 to vector<128x128xf32>
    %65 = arith.mulf %36, %64 : vector<128x128xf32>
    %cst_18 = arith.constant 0x4AFFFFFE : f32
    %66 = vector.broadcast %cst_18 : f32 to vector<128x128xf32>
    %67 = arith.minimumf %65, %66 : vector<128x128xf32>
    %68 = arith.fptosi %67 : vector<128x128xf32> to vector<128x128xi32>
    %c128_i32_19 = arith.constant 128 : i32
    %69 = vector.broadcast %c128_i32_19 : i32 to vector<128x128xi32>
    %70 = arith.muli %68, %69 : vector<128x128xi32>
    %71 = arith.addi %70, %55 : vector<128x128xi32>
    %c0_i32_20 = arith.constant 0 : i32
    %72 = vector.broadcast %c0_i32_20 : i32 to vector<128x128xi32>
    %73 = arith.cmpi eq, %51, %72 : vector<128x128xi32>
    %74 = arith.andi %63, %73 : vector<128x128xi1>
    %75 = vector.broadcast %c1073741824_i32_9 : i32 to vector<128x128xi32>
    %76 = arith.select %74, %71, %75 : vector<128x128xi1>, vector<128x128xi32>
    %cst_21 = arith.constant dense<2147483647> : vector<128xi32>
    %77 = vector.multi_reduction <minsi>, %76, %cst_21 [1] : vector<128x128xi32> to vector<128xi32>
    %78 = arith.minsi %9, %77 : vector<128xi32>
    %c1_i32 = arith.constant 1 : i32
    %79 = vector.broadcast %c1_i32 : i32 to vector<128x128xi32>
    %80 = arith.cmpi eq, %51, %79 : vector<128x128xi32>
    %81 = arith.andi %63, %80 : vector<128x128xi1>
    %82 = vector.broadcast %c1073741824_i32_9 : i32 to vector<128x128xi32>
    %83 = arith.select %81, %71, %82 : vector<128x128xi1>, vector<128x128xi32>
    %cst_22 = arith.constant dense<2147483647> : vector<128xi32>
    %84 = vector.multi_reduction <minsi>, %83, %cst_22 [1] : vector<128x128xi32> to vector<128xi32>
    %85 = arith.minsi %10, %84 : vector<128xi32>
    %c2_i32_23 = arith.constant 2 : i32
    %86 = vector.broadcast %c2_i32_23 : i32 to vector<128x128xi32>
    %87 = arith.cmpi eq, %51, %86 : vector<128x128xi32>
    %88 = arith.andi %63, %87 : vector<128x128xi1>
    %89 = vector.broadcast %c1073741824_i32_9 : i32 to vector<128x128xi32>
    %90 = arith.select %88, %71, %89 : vector<128x128xi1>, vector<128x128xi32>
    %cst_24 = arith.constant dense<2147483647> : vector<128xi32>
    %91 = vector.multi_reduction <minsi>, %90, %cst_24 [1] : vector<128x128xi32> to vector<128xi32>
    %92 = arith.minsi %11, %91 : vector<128xi32>
    %c3_i32 = arith.constant 3 : i32
    %93 = vector.broadcast %c3_i32 : i32 to vector<128x128xi32>
    %94 = arith.cmpi eq, %51, %93 : vector<128x128xi32>
    %95 = arith.andi %63, %94 : vector<128x128xi1>
    %96 = vector.broadcast %c1073741824_i32_9 : i32 to vector<128x128xi32>
    %97 = arith.select %95, %71, %96 : vector<128x128xi1>, vector<128x128xi32>
    %cst_25 = arith.constant dense<2147483647> : vector<128xi32>
    %98 = vector.multi_reduction <minsi>, %97, %cst_25 [1] : vector<128x128xi32> to vector<128xi32>
    %99 = arith.minsi %12, %98 : vector<128xi32>
    %c4_i32_26 = arith.constant 4 : i32
    %100 = vector.broadcast %c4_i32_26 : i32 to vector<128x128xi32>
    %101 = arith.cmpi eq, %51, %100 : vector<128x128xi32>
    %102 = arith.andi %63, %101 : vector<128x128xi1>
    %103 = vector.broadcast %c1073741824_i32_9 : i32 to vector<128x128xi32>
    %104 = arith.select %102, %71, %103 : vector<128x128xi1>, vector<128x128xi32>
    %cst_27 = arith.constant dense<2147483647> : vector<128xi32>
    %105 = vector.multi_reduction <minsi>, %104, %cst_27 [1] : vector<128x128xi32> to vector<128xi32>
    %106 = arith.minsi %13, %105 : vector<128xi32>
    %c5_i32 = arith.constant 5 : i32
    %107 = vector.broadcast %c5_i32 : i32 to vector<128x128xi32>
    %108 = arith.cmpi eq, %51, %107 : vector<128x128xi32>
    %109 = arith.andi %63, %108 : vector<128x128xi1>
    %110 = vector.broadcast %c1073741824_i32_9 : i32 to vector<128x128xi32>
    %111 = arith.select %109, %71, %110 : vector<128x128xi1>, vector<128x128xi32>
    %cst_28 = arith.constant dense<2147483647> : vector<128xi32>
    %112 = vector.multi_reduction <minsi>, %111, %cst_28 [1] : vector<128x128xi32> to vector<128xi32>
    %113 = arith.minsi %14, %112 : vector<128xi32>
    %c6_i32 = arith.constant 6 : i32
    %114 = vector.broadcast %c6_i32 : i32 to vector<128x128xi32>
    %115 = arith.cmpi eq, %51, %114 : vector<128x128xi32>
    %116 = arith.andi %63, %115 : vector<128x128xi1>
    %117 = vector.broadcast %c1073741824_i32_9 : i32 to vector<128x128xi32>
    %118 = arith.select %116, %71, %117 : vector<128x128xi1>, vector<128x128xi32>
    %cst_29 = arith.constant dense<2147483647> : vector<128xi32>
    %119 = vector.multi_reduction <minsi>, %118, %cst_29 [1] : vector<128x128xi32> to vector<128xi32>
    %120 = arith.minsi %15, %119 : vector<128xi32>
    %c7_i32 = arith.constant 7 : i32
    %121 = vector.broadcast %c7_i32 : i32 to vector<128x128xi32>
    %122 = arith.cmpi eq, %51, %121 : vector<128x128xi32>
    %123 = arith.andi %63, %122 : vector<128x128xi1>
    %124 = vector.broadcast %c1073741824_i32_9 : i32 to vector<128x128xi32>
    %125 = arith.select %123, %71, %124 : vector<128x128xi1>, vector<128x128xi32>
    %cst_30 = arith.constant dense<2147483647> : vector<128xi32>
    %126 = vector.multi_reduction <minsi>, %125, %cst_30 [1] : vector<128x128xi32> to vector<128xi32>
    %127 = arith.minsi %16, %126 : vector<128xi32>
    %c1_i32_31 = arith.constant 1 : i32
    %128 = vector.shape_cast %8 : vector<128x1xi32> to vector<128xi32>
    %c1073741824_i32_32 = arith.constant 1073741824 : i32
    %129 = vector.broadcast %c1073741824_i32_32 : i32 to vector<128xi32>
    %130 = arith.cmpi slt, %78, %129 : vector<128xi32>
    %c127_i32 = arith.constant 127 : i32
    %131 = vector.broadcast %c127_i32 : i32 to vector<128xi32>
    %132 = arith.andi %78, %131 : vector<128xi32>
    %133 = arith.select %130, %132, %128 : vector<128xi1>, vector<128xi32>
    %c1073741824_i32_33 = arith.constant 1073741824 : i32
    %134 = vector.broadcast %c1073741824_i32_33 : i32 to vector<128xi32>
    %135 = arith.cmpi slt, %85, %134 : vector<128xi32>
    %c127_i32_34 = arith.constant 127 : i32
    %136 = vector.broadcast %c127_i32_34 : i32 to vector<128xi32>
    %137 = arith.andi %85, %136 : vector<128xi32>
    %138 = arith.select %135, %137, %128 : vector<128xi1>, vector<128xi32>
    %c1073741824_i32_35 = arith.constant 1073741824 : i32
    %139 = vector.broadcast %c1073741824_i32_35 : i32 to vector<128xi32>
    %140 = arith.cmpi slt, %92, %139 : vector<128xi32>
    %c127_i32_36 = arith.constant 127 : i32
    %141 = vector.broadcast %c127_i32_36 : i32 to vector<128xi32>
    %142 = arith.andi %92, %141 : vector<128xi32>
    %143 = arith.select %140, %142, %128 : vector<128xi1>, vector<128xi32>
    %c1073741824_i32_37 = arith.constant 1073741824 : i32
    %144 = vector.broadcast %c1073741824_i32_37 : i32 to vector<128xi32>
    %145 = arith.cmpi slt, %99, %144 : vector<128xi32>
    %c127_i32_38 = arith.constant 127 : i32
    %146 = vector.broadcast %c127_i32_38 : i32 to vector<128xi32>
    %147 = arith.andi %99, %146 : vector<128xi32>
    %148 = arith.select %145, %147, %128 : vector<128xi1>, vector<128xi32>
    %c1073741824_i32_39 = arith.constant 1073741824 : i32
    %149 = vector.broadcast %c1073741824_i32_39 : i32 to vector<128xi32>
    %150 = arith.cmpi slt, %106, %149 : vector<128xi32>
    %c127_i32_40 = arith.constant 127 : i32
    %151 = vector.broadcast %c127_i32_40 : i32 to vector<128xi32>
    %152 = arith.andi %106, %151 : vector<128xi32>
    %153 = arith.select %150, %152, %128 : vector<128xi1>, vector<128xi32>
    %c1073741824_i32_41 = arith.constant 1073741824 : i32
    %154 = vector.broadcast %c1073741824_i32_41 : i32 to vector<128xi32>
    %155 = arith.cmpi slt, %113, %154 : vector<128xi32>
    %c127_i32_42 = arith.constant 127 : i32
    %156 = vector.broadcast %c127_i32_42 : i32 to vector<128xi32>
    %157 = arith.andi %113, %156 : vector<128xi32>
    %158 = arith.select %155, %157, %128 : vector<128xi1>, vector<128xi32>
    %c1073741824_i32_43 = arith.constant 1073741824 : i32
    %159 = vector.broadcast %c1073741824_i32_43 : i32 to vector<128xi32>
    %160 = arith.cmpi slt, %120, %159 : vector<128xi32>
    %c127_i32_44 = arith.constant 127 : i32
    %161 = vector.broadcast %c127_i32_44 : i32 to vector<128xi32>
    %162 = arith.andi %120, %161 : vector<128xi32>
    %163 = arith.select %160, %162, %128 : vector<128xi1>, vector<128xi32>
    %c1073741824_i32_45 = arith.constant 1073741824 : i32
    %164 = vector.broadcast %c1073741824_i32_45 : i32 to vector<128xi32>
    %165 = arith.cmpi slt, %127, %164 : vector<128xi32>
    %c127_i32_46 = arith.constant 127 : i32
    %166 = vector.broadcast %c127_i32_46 : i32 to vector<128xi32>
    %167 = arith.andi %127, %166 : vector<128xi32>
    %168 = arith.select %165, %167, %128 : vector<128xi1>, vector<128xi32>
    %169 = vector.shape_cast %133 : vector<128xi32> to vector<1x128xi32>
    %170 = vector.shape_cast %138 : vector<128xi32> to vector<1x128xi32>
    %171 = vector.shape_cast %143 : vector<128xi32> to vector<1x128xi32>
    %172 = vector.shape_cast %148 : vector<128xi32> to vector<1x128xi32>
    %173 = vector.shape_cast %153 : vector<128xi32> to vector<1x128xi32>
    %174 = vector.shape_cast %158 : vector<128xi32> to vector<1x128xi32>
    %175 = vector.shape_cast %163 : vector<128xi32> to vector<1x128xi32>
    %176 = vector.shape_cast %168 : vector<128xi32> to vector<1x128xi32>
    %177 = tpu.concatenate %169, %170, %171, %172, %173, %174, %175, %176 in 0 : vector<1x128xi32>, vector<1x128xi32>, vector<1x128xi32>, vector<1x128xi32>, vector<1x128xi32>, vector<1x128xi32>, vector<1x128xi32>, vector<1x128xi32> -> vector<8x128xi32>
    %c0_47 = arith.constant 0 : index
    %c0_48 = arith.constant 0 : index
    %c0_49 = arith.constant 0 : index
    %178 = vector.load %arg4[%c0_47, %c0_48, %c0_49] : memref<1x8x128xi32, #tpu.memory_space<vmem>>, vector<1x8x128xi32>
    %179 = vector.shape_cast %178 : vector<1x8x128xi32> to vector<8x128xi32>
    %180 = vector.shape_cast %177 : vector<8x128xi32> to vector<1x8x128xi32>
    tpu.vector_store %arg4[%c0_47, %c0_48, %c0_49], %180 {strides = array<i32>} : memref<1x8x128xi32, #tpu.memory_space<vmem>>, vector<1x8x128xi32>,
    return
  }
  func.func @transform_0(%arg0: i32, %arg1: i32) -> (i32, i32, i32) {
    %c0_i32 = arith.constant 0 : i32
    %c0_i32_0 = arith.constant 0 : i32
    return %arg0, %arg1, %c0_i32 : i32, i32, i32
  }
  func.func @transform_1(%arg0: i32, %arg1: i32) -> (i32, i32, i32, i32) {
    %c0_i32 = arith.constant 0 : i32
    %c0_i32_0 = arith.constant 0 : i32
    %c0_i32_1 = arith.constant 0 : i32
    %c0_i32_2 = arith.constant 0 : i32
    return %arg0, %c0_i32, %c0_i32_0, %c0_i32_1 : i32, i32, i32, i32
  }
  func.func @transform_2(%arg0: i32, %arg1: i32) -> (i32, i32, i32) {
    %c0_i32 = arith.constant 0 : i32
    %c0_i32_0 = arith.constant 0 : i32
    return %arg0, %c0_i32, %arg1 : i32, i32, i32
  }
}

module attributes {stable_mosaic.version = 11 : i64} {
  func.func @kernel(%arg0: i32, %arg1: memref<32x24xbf16, #tpu.memory_space<vmem>>, %arg2: memref<32x256xbf16, #tpu.memory_space<vmem>>, %arg3: memref<6x128xbf16, #tpu.memory_space<vmem>>, %arg4: memref<64x128xbf16, #tpu.memory_space<vmem>>, %arg5: memref<1x128xf32, #tpu.memory_space<vmem>>, %arg6: memref<256x128xbf16, #tpu.memory_space<vmem>>, %arg7: memref<1x128xf32, #tpu.memory_space<vmem>>, %arg8: memref<256x128xbf16, #tpu.memory_space<vmem>>, %arg9: memref<1x128xf32, #tpu.memory_space<vmem>>, %arg10: memref<32x128xbf16, #tpu.memory_space<vmem>>) attributes {dimension_semantics = [#tpu.dimension_semantics<parallel>], iteration_bounds = array<i64: 1>, scalar_prefetch = 0 : i64, scratch_operands = 0 : i64, tpu.core_type = #tpu.core_type<tc>, window_params = [{transform_indices = @transform_0, window_bounds = array<i64: 32, 24>}, {transform_indices = @transform_1, window_bounds = array<i64: 32, 256>}, {pipeline_mode = #tpu.pipeline_mode<synchronous>, transform_indices = @transform_2, window_bounds = array<i64: 6, 128>}, {pipeline_mode = #tpu.pipeline_mode<synchronous>, transform_indices = @transform_3, window_bounds = array<i64: 64, 128>}, {pipeline_mode = #tpu.pipeline_mode<synchronous>, transform_indices = @transform_4, window_bounds = array<i64: 1, 128>}, {pipeline_mode = #tpu.pipeline_mode<synchronous>, transform_indices = @transform_5, window_bounds = array<i64: 256, 128>}, {pipeline_mode = #tpu.pipeline_mode<synchronous>, transform_indices = @transform_6, window_bounds = array<i64: 1, 128>}, {pipeline_mode = #tpu.pipeline_mode<synchronous>, transform_indices = @transform_7, window_bounds = array<i64: 256, 128>}, {pipeline_mode = #tpu.pipeline_mode<synchronous>, transform_indices = @transform_8, window_bounds = array<i64: 1, 128>}, {transform_indices = @transform_9, window_bounds = array<i64: 32, 128>}]} {
    %c0 = arith.constant 0 : index
    %c0_0 = arith.constant 0 : index
    %0 = vector.load %arg1[%c0, %c0_0] : memref<32x24xbf16, #tpu.memory_space<vmem>>, vector<32x24xbf16>
    %c0_1 = arith.constant 0 : index
    %c0_2 = arith.constant 0 : index
    %1 = vector.load %arg2[%c0_1, %c0_2] : memref<32x256xbf16, #tpu.memory_space<vmem>>, vector<32x256xbf16>
    %2 = vector.extract_strided_slice %0 {offsets = [0, 0], sizes = [32, 6], strides = [1, 1]} : vector<32x24xbf16> to vector<32x6xbf16>
    %3 = vector.extract_strided_slice %0 {offsets = [0, 6], sizes = [32, 6], strides = [1, 1]} : vector<32x24xbf16> to vector<32x6xbf16>
    %4 = vector.extract_strided_slice %0 {offsets = [0, 12], sizes = [32, 6], strides = [1, 1]} : vector<32x24xbf16> to vector<32x6xbf16>
    %5 = vector.extract_strided_slice %0 {offsets = [0, 18], sizes = [32, 6], strides = [1, 1]} : vector<32x24xbf16> to vector<32x6xbf16>
    %6 = tpu.concatenate %2, %3, %4, %5 in 0 : vector<32x6xbf16>, vector<32x6xbf16>, vector<32x6xbf16>, vector<32x6xbf16> -> vector<128x6xbf16>
    %7 = vector.extract_strided_slice %1 {offsets = [0, 0], sizes = [32, 64], strides = [1, 1]} : vector<32x256xbf16> to vector<32x64xbf16>
    %8 = vector.extract_strided_slice %1 {offsets = [0, 64], sizes = [32, 64], strides = [1, 1]} : vector<32x256xbf16> to vector<32x64xbf16>
    %9 = vector.extract_strided_slice %1 {offsets = [0, 128], sizes = [32, 64], strides = [1, 1]} : vector<32x256xbf16> to vector<32x64xbf16>
    %10 = vector.extract_strided_slice %1 {offsets = [0, 192], sizes = [32, 64], strides = [1, 1]} : vector<32x256xbf16> to vector<32x64xbf16>
    %11 = tpu.concatenate %7, %8, %9, %10 in 0 : vector<32x64xbf16>, vector<32x64xbf16>, vector<32x64xbf16>, vector<32x64xbf16> -> vector<128x64xbf16>
    %c0_3 = arith.constant 0 : index
    %c0_4 = arith.constant 0 : index
    %12 = vector.load %arg4[%c0_3, %c0_4] : memref<64x128xbf16, #tpu.memory_space<vmem>>, vector<64x128xbf16>
    %cst = arith.constant dense<0.000000e+00> : vector<128x128xf32>
    %13 = tpu.matmul %11, %12, %cst {dimension_numbers = #tpu.dot_dimension_numbers<[1], [0], [0], [1], [0, 0, 1, 1], [], []>} : vector<128x64xbf16>, vector<64x128xbf16>, vector<128x128xf32> -> vector<128x128xf32>
    %c0_5 = arith.constant 0 : index
    %c0_6 = arith.constant 0 : index
    %14 = vector.load %arg3[%c0_5, %c0_6] : memref<6x128xbf16, #tpu.memory_space<vmem>>, vector<6x128xbf16>
    %cst_7 = arith.constant dense<0.000000e+00> : vector<128x128xf32>
    %15 = tpu.matmul %6, %14, %cst_7 {dimension_numbers = #tpu.dot_dimension_numbers<[1], [0], [0], [1], [0, 0, 1, 1], [], []>} : vector<128x6xbf16>, vector<6x128xbf16>, vector<128x128xf32> -> vector<128x128xf32>
    %16 = arith.addf %13, %15 : vector<128x128xf32>
    %c0_8 = arith.constant 0 : index
    %c0_9 = arith.constant 0 : index
    %17 = vector.load %arg5[%c0_8, %c0_9] : memref<1x128xf32, #tpu.memory_space<vmem>>, vector<1x128xf32>
    %18 = vector.broadcast %17 : vector<1x128xf32> to vector<128x128xf32>
    %19 = arith.addf %16, %18 : vector<128x128xf32>
    %cst_10 = arith.constant 0.000000e+00 : f32
    %20 = vector.broadcast %cst_10 : f32 to vector<128x128xf32>
    %21 = arith.maximumf %19, %20 : vector<128x128xf32>
    %22 = arith.truncf %21 : vector<128x128xf32> to vector<128x128xbf16>
    %23 = vector.extract_strided_slice %22 {offsets = [0, 0], sizes = [32, 128], strides = [1, 1]} : vector<128x128xbf16> to vector<32x128xbf16>
    %24 = vector.extract_strided_slice %22 {offsets = [32, 0], sizes = [32, 128], strides = [1, 1]} : vector<128x128xbf16> to vector<32x128xbf16>
    %25 = tpu.concatenate %23, %24 in 1 : vector<32x128xbf16>, vector<32x128xbf16> -> vector<32x256xbf16>
    %c0_11 = arith.constant 0 : index
    %c0_12 = arith.constant 0 : index
    %26 = vector.load %arg6[%c0_11, %c0_12] : memref<256x128xbf16, #tpu.memory_space<vmem>>, vector<256x128xbf16>
    %cst_13 = arith.constant dense<0.000000e+00> : vector<32x128xf32>
    %27 = tpu.matmul %25, %26, %cst_13 {dimension_numbers = #tpu.dot_dimension_numbers<[1], [0], [0], [1], [0, 0, 1, 1], [], []>} : vector<32x256xbf16>, vector<256x128xbf16>, vector<32x128xf32> -> vector<32x128xf32>
    %c0_14 = arith.constant 0 : index
    %c0_15 = arith.constant 0 : index
    %28 = vector.load %arg7[%c0_14, %c0_15] : memref<1x128xf32, #tpu.memory_space<vmem>>, vector<1x128xf32>
    %29 = vector.broadcast %28 : vector<1x128xf32> to vector<32x128xf32>
    %30 = arith.addf %27, %29 : vector<32x128xf32>
    %cst_16 = arith.constant 0.000000e+00 : f32
    %31 = vector.broadcast %cst_16 : f32 to vector<32x128xf32>
    %32 = arith.maximumf %30, %31 : vector<32x128xf32>
    %33 = arith.truncf %32 : vector<32x128xf32> to vector<32x128xbf16>
    %34 = vector.extract_strided_slice %22 {offsets = [64, 0], sizes = [32, 128], strides = [1, 1]} : vector<128x128xbf16> to vector<32x128xbf16>
    %35 = vector.extract_strided_slice %22 {offsets = [96, 0], sizes = [32, 128], strides = [1, 1]} : vector<128x128xbf16> to vector<32x128xbf16>
    %36 = tpu.concatenate %34, %35 in 1 : vector<32x128xbf16>, vector<32x128xbf16> -> vector<32x256xbf16>
    %c0_17 = arith.constant 0 : index
    %c0_18 = arith.constant 0 : index
    %37 = vector.load %arg6[%c0_17, %c0_18] : memref<256x128xbf16, #tpu.memory_space<vmem>>, vector<256x128xbf16>
    %cst_19 = arith.constant dense<0.000000e+00> : vector<32x128xf32>
    %38 = tpu.matmul %36, %37, %cst_19 {dimension_numbers = #tpu.dot_dimension_numbers<[1], [0], [0], [1], [0, 0, 1, 1], [], []>} : vector<32x256xbf16>, vector<256x128xbf16>, vector<32x128xf32> -> vector<32x128xf32>
    %c0_20 = arith.constant 0 : index
    %c0_21 = arith.constant 0 : index
    %39 = vector.load %arg7[%c0_20, %c0_21] : memref<1x128xf32, #tpu.memory_space<vmem>>, vector<1x128xf32>
    %40 = vector.broadcast %39 : vector<1x128xf32> to vector<32x128xf32>
    %41 = arith.addf %38, %40 : vector<32x128xf32>
    %cst_22 = arith.constant 0.000000e+00 : f32
    %42 = vector.broadcast %cst_22 : f32 to vector<32x128xf32>
    %43 = arith.maximumf %41, %42 : vector<32x128xf32>
    %44 = arith.truncf %43 : vector<32x128xf32> to vector<32x128xbf16>
    %45 = tpu.concatenate %33, %44 in 1 : vector<32x128xbf16>, vector<32x128xbf16> -> vector<32x256xbf16>
    %c0_23 = arith.constant 0 : index
    %c0_24 = arith.constant 0 : index
    %46 = vector.load %arg8[%c0_23, %c0_24] : memref<256x128xbf16, #tpu.memory_space<vmem>>, vector<256x128xbf16>
    %cst_25 = arith.constant dense<0.000000e+00> : vector<32x128xf32>
    %47 = tpu.matmul %45, %46, %cst_25 {dimension_numbers = #tpu.dot_dimension_numbers<[1], [0], [0], [1], [0, 0, 1, 1], [], []>} : vector<32x256xbf16>, vector<256x128xbf16>, vector<32x128xf32> -> vector<32x128xf32>
    %c0_26 = arith.constant 0 : index
    %c0_27 = arith.constant 0 : index
    %48 = vector.load %arg9[%c0_26, %c0_27] : memref<1x128xf32, #tpu.memory_space<vmem>>, vector<1x128xf32>
    %49 = vector.broadcast %48 : vector<1x128xf32> to vector<32x128xf32>
    %50 = arith.addf %47, %49 : vector<32x128xf32>
    %cst_28 = arith.constant 0.000000e+00 : f32
    %51 = vector.broadcast %cst_28 : f32 to vector<32x128xf32>
    %52 = arith.maximumf %50, %51 : vector<32x128xf32>
    %53 = arith.truncf %52 : vector<32x128xf32> to vector<32x128xbf16>
    %c0_29 = arith.constant 0 : index
    %c0_30 = arith.constant 0 : index
    %54 = vector.load %arg10[%c0_29, %c0_30] : memref<32x128xbf16, #tpu.memory_space<vmem>>, vector<32x128xbf16>
    tpu.vector_store %arg10[%c0_29, %c0_30], %53 {strides = array<i32>} : memref<32x128xbf16, #tpu.memory_space<vmem>>, vector<32x128xbf16>,
    return
  }
  func.func @transform_0(%arg0: i32) -> (i32, i32) {
    %c0_i32 = arith.constant 0 : i32
    %c0_i32_0 = arith.constant 0 : i32
    return %arg0, %c0_i32 : i32, i32
  }
  func.func @transform_1(%arg0: i32) -> (i32, i32) {
    %c0_i32 = arith.constant 0 : i32
    %c0_i32_0 = arith.constant 0 : i32
    return %arg0, %c0_i32 : i32, i32
  }
  func.func @transform_2(%arg0: i32) -> (i32, i32) {
    %c0_i32 = arith.constant 0 : i32
    %c0_i32_0 = arith.constant 0 : i32
    %c0_i32_1 = arith.constant 0 : i32
    return %c0_i32, %c0_i32_0 : i32, i32
  }
  func.func @transform_3(%arg0: i32) -> (i32, i32) {
    %c0_i32 = arith.constant 0 : i32
    %c0_i32_0 = arith.constant 0 : i32
    %c0_i32_1 = arith.constant 0 : i32
    return %c0_i32, %c0_i32_0 : i32, i32
  }
  func.func @transform_4(%arg0: i32) -> (i32, i32) {
    %c0_i32 = arith.constant 0 : i32
    %c0_i32_0 = arith.constant 0 : i32
    %c0_i32_1 = arith.constant 0 : i32
    return %c0_i32, %c0_i32_0 : i32, i32
  }
  func.func @transform_5(%arg0: i32) -> (i32, i32) {
    %c0_i32 = arith.constant 0 : i32
    %c0_i32_0 = arith.constant 0 : i32
    %c0_i32_1 = arith.constant 0 : i32
    return %c0_i32, %c0_i32_0 : i32, i32
  }
  func.func @transform_6(%arg0: i32) -> (i32, i32) {
    %c0_i32 = arith.constant 0 : i32
    %c0_i32_0 = arith.constant 0 : i32
    %c0_i32_1 = arith.constant 0 : i32
    return %c0_i32, %c0_i32_0 : i32, i32
  }
  func.func @transform_7(%arg0: i32) -> (i32, i32) {
    %c0_i32 = arith.constant 0 : i32
    %c0_i32_0 = arith.constant 0 : i32
    %c0_i32_1 = arith.constant 0 : i32
    return %c0_i32, %c0_i32_0 : i32, i32
  }
  func.func @transform_8(%arg0: i32) -> (i32, i32) {
    %c0_i32 = arith.constant 0 : i32
    %c0_i32_0 = arith.constant 0 : i32
    %c0_i32_1 = arith.constant 0 : i32
    return %c0_i32, %c0_i32_0 : i32, i32
  }
  func.func @transform_9(%arg0: i32) -> (i32, i32) {
    %c0_i32 = arith.constant 0 : i32
    %c0_i32_0 = arith.constant 0 : i32
    return %arg0, %c0_i32 : i32, i32
  }
}

module attributes {stable_mosaic.version = 11 : i64} {
  func.func @kernel(%arg0: i32, %arg1: memref<32x24xbf16, #tpu.memory_space<vmem>>, %arg2: memref<32x256xbf16, #tpu.memory_space<vmem>>, %arg3: memref<6x128xbf16, #tpu.memory_space<vmem>>, %arg4: memref<64x128xbf16, #tpu.memory_space<vmem>>, %arg5: memref<1x128xf32, #tpu.memory_space<vmem>>, %arg6: memref<256x128xbf16, #tpu.memory_space<vmem>>, %arg7: memref<1x128xf32, #tpu.memory_space<vmem>>, %arg8: memref<256x128xbf16, #tpu.memory_space<vmem>>, %arg9: memref<1x128xf32, #tpu.memory_space<vmem>>, %arg10: memref<32x128xbf16, #tpu.memory_space<vmem>>, %arg11: memref<32x128xf32, #tpu.memory_space<vmem>>) attributes {dimension_semantics = [#tpu.dimension_semantics<parallel>], iteration_bounds = array<i64: 1>, scalar_prefetch = 0 : i64, scratch_operands = 0 : i64, tpu.core_type = #tpu.core_type<tc>, window_params = [{transform_indices = @transform_0, window_bounds = array<i64: 32, 24>}, {transform_indices = @transform_1, window_bounds = array<i64: 32, 256>}, {pipeline_mode = #tpu.pipeline_mode<synchronous>, transform_indices = @transform_2, window_bounds = array<i64: 6, 128>}, {pipeline_mode = #tpu.pipeline_mode<synchronous>, transform_indices = @transform_3, window_bounds = array<i64: 64, 128>}, {pipeline_mode = #tpu.pipeline_mode<synchronous>, transform_indices = @transform_4, window_bounds = array<i64: 1, 128>}, {pipeline_mode = #tpu.pipeline_mode<synchronous>, transform_indices = @transform_5, window_bounds = array<i64: 256, 128>}, {pipeline_mode = #tpu.pipeline_mode<synchronous>, transform_indices = @transform_6, window_bounds = array<i64: 1, 128>}, {pipeline_mode = #tpu.pipeline_mode<synchronous>, transform_indices = @transform_7, window_bounds = array<i64: 256, 128>}, {pipeline_mode = #tpu.pipeline_mode<synchronous>, transform_indices = @transform_8, window_bounds = array<i64: 1, 128>}, {transform_indices = @transform_9, window_bounds = array<i64: 32, 128>}, {transform_indices = @transform_10, window_bounds = array<i64: 32, 128>}]} {
    %c0 = arith.constant 0 : index
    %c0_0 = arith.constant 0 : index
    %0 = vector.load %arg1[%c0, %c0_0] : memref<32x24xbf16, #tpu.memory_space<vmem>>, vector<32x24xbf16>
    %c0_1 = arith.constant 0 : index
    %c0_2 = arith.constant 0 : index
    %1 = vector.load %arg2[%c0_1, %c0_2] : memref<32x256xbf16, #tpu.memory_space<vmem>>, vector<32x256xbf16>
    %2 = vector.extract_strided_slice %0 {offsets = [0, 0], sizes = [32, 6], strides = [1, 1]} : vector<32x24xbf16> to vector<32x6xbf16>
    %3 = vector.extract_strided_slice %0 {offsets = [0, 6], sizes = [32, 6], strides = [1, 1]} : vector<32x24xbf16> to vector<32x6xbf16>
    %4 = vector.extract_strided_slice %0 {offsets = [0, 12], sizes = [32, 6], strides = [1, 1]} : vector<32x24xbf16> to vector<32x6xbf16>
    %5 = vector.extract_strided_slice %0 {offsets = [0, 18], sizes = [32, 6], strides = [1, 1]} : vector<32x24xbf16> to vector<32x6xbf16>
    %6 = tpu.concatenate %2, %3, %4, %5 in 0 : vector<32x6xbf16>, vector<32x6xbf16>, vector<32x6xbf16>, vector<32x6xbf16> -> vector<128x6xbf16>
    %7 = vector.extract_strided_slice %1 {offsets = [0, 0], sizes = [32, 64], strides = [1, 1]} : vector<32x256xbf16> to vector<32x64xbf16>
    %8 = vector.extract_strided_slice %1 {offsets = [0, 64], sizes = [32, 64], strides = [1, 1]} : vector<32x256xbf16> to vector<32x64xbf16>
    %9 = vector.extract_strided_slice %1 {offsets = [0, 128], sizes = [32, 64], strides = [1, 1]} : vector<32x256xbf16> to vector<32x64xbf16>
    %10 = vector.extract_strided_slice %1 {offsets = [0, 192], sizes = [32, 64], strides = [1, 1]} : vector<32x256xbf16> to vector<32x64xbf16>
    %11 = tpu.concatenate %7, %8, %9, %10 in 0 : vector<32x64xbf16>, vector<32x64xbf16>, vector<32x64xbf16>, vector<32x64xbf16> -> vector<128x64xbf16>
    %c0_3 = arith.constant 0 : index
    %c0_4 = arith.constant 0 : index
    %12 = vector.load %arg4[%c0_3, %c0_4] : memref<64x128xbf16, #tpu.memory_space<vmem>>, vector<64x128xbf16>
    %cst = arith.constant dense<0.000000e+00> : vector<128x128xf32>
    %13 = tpu.matmul %11, %12, %cst {dimension_numbers = #tpu.dot_dimension_numbers<[1], [0], [0], [1], [0, 0, 1, 1], [], []>} : vector<128x64xbf16>, vector<64x128xbf16>, vector<128x128xf32> -> vector<128x128xf32>
    %c0_5 = arith.constant 0 : index
    %c0_6 = arith.constant 0 : index
    %14 = vector.load %arg3[%c0_5, %c0_6] : memref<6x128xbf16, #tpu.memory_space<vmem>>, vector<6x128xbf16>
    %cst_7 = arith.constant dense<0.000000e+00> : vector<128x128xf32>
    %15 = tpu.matmul %6, %14, %cst_7 {dimension_numbers = #tpu.dot_dimension_numbers<[1], [0], [0], [1], [0, 0, 1, 1], [], []>} : vector<128x6xbf16>, vector<6x128xbf16>, vector<128x128xf32> -> vector<128x128xf32>
    %16 = arith.addf %13, %15 : vector<128x128xf32>
    %c0_8 = arith.constant 0 : index
    %c0_9 = arith.constant 0 : index
    %17 = vector.load %arg5[%c0_8, %c0_9] : memref<1x128xf32, #tpu.memory_space<vmem>>, vector<1x128xf32>
    %18 = vector.broadcast %17 : vector<1x128xf32> to vector<128x128xf32>
    %19 = arith.addf %16, %18 : vector<128x128xf32>
    %cst_10 = arith.constant 0.000000e+00 : f32
    %20 = vector.broadcast %cst_10 : f32 to vector<128x128xf32>
    %21 = arith.maximumf %19, %20 : vector<128x128xf32>
    %22 = arith.truncf %21 : vector<128x128xf32> to vector<128x128xbf16>
    %23 = vector.extract_strided_slice %22 {offsets = [0, 0], sizes = [32, 128], strides = [1, 1]} : vector<128x128xbf16> to vector<32x128xbf16>
    %24 = vector.extract_strided_slice %22 {offsets = [32, 0], sizes = [32, 128], strides = [1, 1]} : vector<128x128xbf16> to vector<32x128xbf16>
    %25 = tpu.concatenate %23, %24 in 1 : vector<32x128xbf16>, vector<32x128xbf16> -> vector<32x256xbf16>
    %c0_11 = arith.constant 0 : index
    %c0_12 = arith.constant 0 : index
    %26 = vector.load %arg6[%c0_11, %c0_12] : memref<256x128xbf16, #tpu.memory_space<vmem>>, vector<256x128xbf16>
    %cst_13 = arith.constant dense<0.000000e+00> : vector<32x128xf32>
    %27 = tpu.matmul %25, %26, %cst_13 {dimension_numbers = #tpu.dot_dimension_numbers<[1], [0], [0], [1], [0, 0, 1, 1], [], []>} : vector<32x256xbf16>, vector<256x128xbf16>, vector<32x128xf32> -> vector<32x128xf32>
    %c0_14 = arith.constant 0 : index
    %c0_15 = arith.constant 0 : index
    %28 = vector.load %arg7[%c0_14, %c0_15] : memref<1x128xf32, #tpu.memory_space<vmem>>, vector<1x128xf32>
    %29 = vector.broadcast %28 : vector<1x128xf32> to vector<32x128xf32>
    %30 = arith.addf %27, %29 : vector<32x128xf32>
    %cst_16 = arith.constant 0.000000e+00 : f32
    %31 = vector.broadcast %cst_16 : f32 to vector<32x128xf32>
    %32 = arith.maximumf %30, %31 : vector<32x128xf32>
    %33 = arith.truncf %32 : vector<32x128xf32> to vector<32x128xbf16>
    %34 = vector.extract_strided_slice %22 {offsets = [64, 0], sizes = [32, 128], strides = [1, 1]} : vector<128x128xbf16> to vector<32x128xbf16>
    %35 = vector.extract_strided_slice %22 {offsets = [96, 0], sizes = [32, 128], strides = [1, 1]} : vector<128x128xbf16> to vector<32x128xbf16>
    %36 = tpu.concatenate %34, %35 in 1 : vector<32x128xbf16>, vector<32x128xbf16> -> vector<32x256xbf16>
    %c0_17 = arith.constant 0 : index
    %c0_18 = arith.constant 0 : index
    %37 = vector.load %arg6[%c0_17, %c0_18] : memref<256x128xbf16, #tpu.memory_space<vmem>>, vector<256x128xbf16>
    %cst_19 = arith.constant dense<0.000000e+00> : vector<32x128xf32>
    %38 = tpu.matmul %36, %37, %cst_19 {dimension_numbers = #tpu.dot_dimension_numbers<[1], [0], [0], [1], [0, 0, 1, 1], [], []>} : vector<32x256xbf16>, vector<256x128xbf16>, vector<32x128xf32> -> vector<32x128xf32>
    %c0_20 = arith.constant 0 : index
    %c0_21 = arith.constant 0 : index
    %39 = vector.load %arg7[%c0_20, %c0_21] : memref<1x128xf32, #tpu.memory_space<vmem>>, vector<1x128xf32>
    %40 = vector.broadcast %39 : vector<1x128xf32> to vector<32x128xf32>
    %41 = arith.addf %38, %40 : vector<32x128xf32>
    %cst_22 = arith.constant 0.000000e+00 : f32
    %42 = vector.broadcast %cst_22 : f32 to vector<32x128xf32>
    %43 = arith.maximumf %41, %42 : vector<32x128xf32>
    %44 = arith.truncf %43 : vector<32x128xf32> to vector<32x128xbf16>
    %45 = tpu.concatenate %33, %44 in 1 : vector<32x128xbf16>, vector<32x128xbf16> -> vector<32x256xbf16>
    %c0_23 = arith.constant 0 : index
    %c0_24 = arith.constant 0 : index
    %46 = vector.load %arg8[%c0_23, %c0_24] : memref<256x128xbf16, #tpu.memory_space<vmem>>, vector<256x128xbf16>
    %cst_25 = arith.constant dense<0.000000e+00> : vector<32x128xf32>
    %47 = tpu.matmul %45, %46, %cst_25 {dimension_numbers = #tpu.dot_dimension_numbers<[1], [0], [0], [1], [0, 0, 1, 1], [], []>} : vector<32x256xbf16>, vector<256x128xbf16>, vector<32x128xf32> -> vector<32x128xf32>
    %c0_26 = arith.constant 0 : index
    %c0_27 = arith.constant 0 : index
    %48 = vector.load %arg9[%c0_26, %c0_27] : memref<1x128xf32, #tpu.memory_space<vmem>>, vector<1x128xf32>
    %49 = vector.broadcast %48 : vector<1x128xf32> to vector<32x128xf32>
    %50 = arith.addf %47, %49 : vector<32x128xf32>
    %c0_28 = arith.constant 0 : index
    %c0_29 = arith.constant 0 : index
    %51 = vector.load %arg10[%c0_28, %c0_29] : memref<32x128xbf16, #tpu.memory_space<vmem>>, vector<32x128xbf16>
    %52 = arith.extf %51 : vector<32x128xbf16> to vector<32x128xf32>
    %53 = arith.addf %50, %52 : vector<32x128xf32>
    %cst_30 = arith.constant 0.000000e+00 : f32
    %54 = vector.broadcast %cst_30 : f32 to vector<32x128xf32>
    %55 = arith.maximumf %53, %54 : vector<32x128xf32>
    %c0_31 = arith.constant 0 : index
    %c0_32 = arith.constant 0 : index
    %56 = vector.load %arg11[%c0_31, %c0_32] : memref<32x128xf32, #tpu.memory_space<vmem>>, vector<32x128xf32>
    tpu.vector_store %arg11[%c0_31, %c0_32], %55 {strides = array<i32>} : memref<32x128xf32, #tpu.memory_space<vmem>>, vector<32x128xf32>,
    return
  }
  func.func @transform_0(%arg0: i32) -> (i32, i32) {
    %c0_i32 = arith.constant 0 : i32
    %c0_i32_0 = arith.constant 0 : i32
    return %arg0, %c0_i32 : i32, i32
  }
  func.func @transform_1(%arg0: i32) -> (i32, i32) {
    %c0_i32 = arith.constant 0 : i32
    %c0_i32_0 = arith.constant 0 : i32
    return %arg0, %c0_i32 : i32, i32
  }
  func.func @transform_2(%arg0: i32) -> (i32, i32) {
    %c0_i32 = arith.constant 0 : i32
    %c0_i32_0 = arith.constant 0 : i32
    %c0_i32_1 = arith.constant 0 : i32
    return %c0_i32, %c0_i32_0 : i32, i32
  }
  func.func @transform_3(%arg0: i32) -> (i32, i32) {
    %c0_i32 = arith.constant 0 : i32
    %c0_i32_0 = arith.constant 0 : i32
    %c0_i32_1 = arith.constant 0 : i32
    return %c0_i32, %c0_i32_0 : i32, i32
  }
  func.func @transform_4(%arg0: i32) -> (i32, i32) {
    %c0_i32 = arith.constant 0 : i32
    %c0_i32_0 = arith.constant 0 : i32
    %c0_i32_1 = arith.constant 0 : i32
    return %c0_i32, %c0_i32_0 : i32, i32
  }
  func.func @transform_5(%arg0: i32) -> (i32, i32) {
    %c0_i32 = arith.constant 0 : i32
    %c0_i32_0 = arith.constant 0 : i32
    %c0_i32_1 = arith.constant 0 : i32
    return %c0_i32, %c0_i32_0 : i32, i32
  }
  func.func @transform_6(%arg0: i32) -> (i32, i32) {
    %c0_i32 = arith.constant 0 : i32
    %c0_i32_0 = arith.constant 0 : i32
    %c0_i32_1 = arith.constant 0 : i32
    return %c0_i32, %c0_i32_0 : i32, i32
  }
  func.func @transform_7(%arg0: i32) -> (i32, i32) {
    %c0_i32 = arith.constant 0 : i32
    %c0_i32_0 = arith.constant 0 : i32
    %c0_i32_1 = arith.constant 0 : i32
    return %c0_i32, %c0_i32_0 : i32, i32
  }
  func.func @transform_8(%arg0: i32) -> (i32, i32) {
    %c0_i32 = arith.constant 0 : i32
    %c0_i32_0 = arith.constant 0 : i32
    %c0_i32_1 = arith.constant 0 : i32
    return %c0_i32, %c0_i32_0 : i32, i32
  }
  func.func @transform_9(%arg0: i32) -> (i32, i32) {
    %c0_i32 = arith.constant 0 : i32
    %c0_i32_0 = arith.constant 0 : i32
    return %arg0, %c0_i32 : i32, i32
  }
  func.func @transform_10(%arg0: i32) -> (i32, i32) {
    %c0_i32 = arith.constant 0 : i32
    %c0_i32_0 = arith.constant 0 : i32
    return %arg0, %c0_i32 : i32, i32
  }
}

</mosaic_0001>

<llo_original>
// kernel: pointsift_res_forward.3
$region0: #{pointsift_res_forward.3}
  #allocation0 [shape = 'u32[]', space=smem, size = 0x4, offset = 0x4, fixed_abs, tag = 'smem constant byte address 0x4 - core index']
  #allocation1 [shape = 'u32[144,128]{1,0:T(1,128)}', space=vmem, size = 0x12000, scoped, tag = 'internal scratch']
  %s0 = inlined_call_operand.vmem [shape: f32[2,128,3], index: 0, kind: input, shape index: {}]
  %s1 = inlined_call_operand.vmem [shape: f32[2,1,3,128], index: 1, kind: input, shape index: {}]
  %s2 = inlined_call_operand.vmem [shape: s32[2,8,128], index: 2, kind: output, shape index: {}]
  %s3 = sld [smem:[#allocation0]]
  $region41: #{pointsift_res_forward.3} parent=0
    _
  %s5 = ssub.s32 1, %s3
  %s6 = scalar_select 0, %s5, %s3
  loop: start=0, step=1, limit=4
  $region2: #{pointsift_res_forward.3} parent=0 // loop_pre_header
    _
  $region3: #{pointsift_res_forward.3} parent=0 // loop_header
    %s8 = sphi 0, %s12
    %p9 = scmp.ge.s32.totalorder %s8, 4
    %s15 = sphi 0, %s27
    %s16 = sphi 0, %s23
    %s17 = sphi 0, %s15
    %s18 = sphi 0, %s16
    %s19 = sphi 0, %s17
    %s20 = sphi 0, %s18
    %s32 = sphi 0, %s34
    %s35 = sphi 0, %s32
    %s36 = sphi 0, %s35
    %s52 = sphi 0, %s36
    %s58 = sphi 0, %s60
    %s61 = sphi 0, %s58
    %s62 = sphi 0, %s61
    %s78 = sphi 0, %s62
    %s86 = sphi 0, %s88
    %s89 = sphi 0, %s86
    %s90 = sphi 0, %s89
    %s106 = sphi 0, %s90
  $region4: #{pointsift_res_forward.3} parent=0 // loop_header_branch
    %11 = sbr.rel (%p9) target = $region8
  $region5: #{pointsift_res_forward.3} parent=0 // loop_body
    %s13 = ssub.s32 %s8, 1
    %s14 = ssub.s32 %s8, 2
    %s21 = sadd.s32 1, %s16
    %p22 = scmp.ge.s32.totalorder %s21, 1
    %s23 = scalar_select %p22, 0, %s21
    %s24 = sadd.s32 1, %s15
    %s25 = scalar_select %p22, %s24, %s15
    %p26 = scmp.ge.s32.totalorder %s25, 2
    %s27 = scalar_select %p26, 0, %s25
    %s28 = ssub.s32 %s15, %s27
    %s29 = ssub.s32 %s16, %s23
    %s30 = sor.u32 %s28, %s29
    %p31 = scmp.eq.s32.totalorder %s30, 0
    %s33 = sadd.s32 %s32, 1
    %s34 = scalar_select %p31, %s32, %s33
    %p37 = pneg %p31
    %p38 = scmp.eq.s32.totalorder %s8, 1
    %p39 = por %p37, %p38
    %p40 = scmp.ne.s32.totalorder %s32, %s35
    %p41 = scmp.eq.s32.totalorder %s8, 0
    %p42 = por %p40, %p41
    %p43 = scmp.ne.s32.totalorder %s32, %s35
    %p44 = scmp.eq.s32.totalorder %s13, 1
    %p45 = por %p43, %p44
    %p46 = scmp.ne.s32.totalorder %s35, %s36
    %p47 = scmp.eq.s32.totalorder %s13, 0
    %p48 = por %p46, %p47
    %p49 = scmp.ne.s32.totalorder %s35, %s36
    %p50 = scmp.eq.s32.totalorder %s14, 1
    %p51 = por %p49, %p50
    %p53 = scmp.ne.s32.totalorder %s36, %s52
    %p54 = scmp.eq.s32.totalorder %s14, 0
    %p55 = por %p53, %p54
    %s56 = ssub.s32 %s15, %s27
    %p57 = scmp.eq.s32.totalorder %s56, 0
    %s59 = sadd.s32 %s58, 1
    %s60 = scalar_select %p57, %s58, %s59
    %p63 = pneg %p57
    %p64 = scmp.eq.s32.totalorder %s8, 1
    %p65 = por %p63, %p64
    %p66 = scmp.ne.s32.totalorder %s58, %s61
    %p67 = scmp.eq.s32.totalorder %s8, 0
    %p68 = por %p66, %p67
    %p69 = scmp.ne.s32.totalorder %s58, %s61
    %p70 = scmp.eq.s32.totalorder %s13, 1
    %p71 = por %p69, %p70
    %p72 = scmp.ne.s32.totalorder %s61, %s62
    %p73 = scmp.eq.s32.totalorder %s13, 0
    %p74 = por %p72, %p73
    %p75 = scmp.ne.s32.totalorder %s61, %s62
    %p76 = scmp.eq.s32.totalorder %s14, 1
    %p77 = por %p75, %p76
    %p79 = scmp.ne.s32.totalorder %s62, %s78
    %p80 = scmp.eq.s32.totalorder %s14, 0
    %p81 = por %p79, %p80
    %s82 = ssub.s32 %s15, %s27
    %s83 = ssub.s32 %s16, %s23
    %s84 = sor.u32 %s82, %s83
    %p85 = scmp.eq.s32.totalorder %s84, 0
    %s87 = sadd.s32 %s86, 1
    %s88 = scalar_select %p85, %s86, %s87
    %p91 = pneg %p85
    %p92 = scmp.eq.s32.totalorder %s8, 1
    %p93 = por %p91, %p92
    %p94 = scmp.ne.s32.totalorder %s86, %s89
    %p95 = scmp.eq.s32.totalorder %s8, 0
    %p96 = por %p94, %p95
    %p97 = scmp.ne.s32.totalorder %s86, %s89
    %p98 = scmp.eq.s32.totalorder %s13, 1
    %p99 = por %p97, %p98
    %p100 = scmp.ne.s32.totalorder %s89, %s90
    %p101 = scmp.eq.s32.totalorder %s13, 0
    %p102 = por %p100, %p101
    %p103 = scmp.ne.s32.totalorder %s89, %s90
    %p104 = scmp.eq.s32.totalorder %s14, 1
    %p105 = por %p103, %p104
    %p107 = scmp.ne.s32.totalorder %s90, %s106
    %p108 = scmp.eq.s32.totalorder %s14, 0
    %p109 = por %p107, %p108
    %p110 = scmp.le.s32.totalorder 1, %s8
    %p111 = scmp.lt.s32.totalorder %s8, 3
    %p112 = pnand %p110, %p111
    %p113 = pneg %p112
    // Predicated region
    $region9: #{pointsift_res_forward.3} parent=5 // pred_check
      _
    $region10: #{pointsift_res_forward.3} parent=5 // pred_check_branch
      %115 = sbr.rel (%p112) target = $region12
    $region11: #{pointsift_res_forward.3} parent=5 // pred_region
      %s116 = ssub.s32 %s8, 1
    $region12: #{pointsift_res_forward.3} parent=5 // pred_fallthru
      _
    %p117 = scmp.lt.s32.totalorder %s8, 2
    // Predicated region
    $region13: #{pointsift_res_forward.3} parent=5 // pred_check
      %p118 = pneg %p117
    $region14: #{pointsift_res_forward.3} parent=5 // pred_check_branch
      %120 = sbr.rel (%p118) target = $region16
    $region15: #{pointsift_res_forward.3} parent=5 // pred_region
      // Predicated region
      $region17: #{pointsift_res_forward.3} parent=15 // pred_check
        %p121 = pneg %p42
      $region18: #{pointsift_res_forward.3} parent=15 // pred_check_branch
        %123 = sbr.rel (%p121) target = $region20
      $region19: #{pointsift_res_forward.3} parent=15 // pred_region
        %s124 = smul.u32 16, %s16
        %p125 = scmp.lt.s32.totalorder %s15, 1
        %s126 = scalar_select %p125, %s15, 1
        %p127 = scmp.lt.s32.totalorder %s124, 15
        %s128 = scalar_select %p127, %s124, 15
        %s129 = smul.addr %s126, 16
        %s130 = sadd.s32 %s128, %s129
        %s131 = smul.addr %s130, 8
        %s132 = scalar_lea.vmem %s0, %s131
        %s133 = smul.u32 16, %s16
      $region20: #{pointsift_res_forward.3} parent=15 // pred_fallthru
        _
      // Predicated region
      $region21: #{pointsift_res_forward.3} parent=15 // pred_check
        %p134 = pneg %p68
      $region22: #{pointsift_res_forward.3} parent=15 // pred_check_branch
        %136 = sbr.rel (%p134) target = $region24
      $region23: #{pointsift_res_forward.3} parent=15 // pred_region
        %p137 = scmp.lt.s32.totalorder %s15, 1
        %s138 = scalar_select %p137, %s15, 1
        %s139 = smul.addr %s138, 4
        %s140 = scalar_lea.vmem %s1, %s139
      $region24: #{pointsift_res_forward.3} parent=15 // pred_fallthru
        _
    $region16: #{pointsift_res_forward.3} parent=5 // pred_fallthru
      _
    %p141 = scmp.le.s32.totalorder 1, %s8
    %p142 = scmp.lt.s32.totalorder %s8, 3
    %p143 = pnand %p141, %p142
    %p144 = pneg %p143
    // Predicated region
    $region25: #{pointsift_res_forward.3} parent=5 // pred_check
      _
    $region26: #{pointsift_res_forward.3} parent=5 // pred_check_branch
      %146 = sbr.rel (%p143) target = $region28
    $region27: #{pointsift_res_forward.3} parent=5 // pred_region
      %s147 = ssub.s32 %s8, 1
      %s148 = smul.u32 16, %s18
      %p149 = scmp.lt.s32.totalorder %s17, 1
      %s150 = scalar_select %p149, %s17, 1
      %p151 = scmp.lt.s32.totalorder %s148, 15
      %s152 = scalar_select %p151, %s148, 15
      %s153 = smul.addr %s150, 16
      %s154 = sadd.s32 %s152, %s153
      %s155 = smul.addr %s154, 8
      %s156 = scalar_lea.vmem %s0, %s155
      %p157 = pneg %p48
      %p158 = pneg %p45
      %p159 = scmp.lt.s32.totalorder %s17, 1
      %s160 = scalar_select %p159, %s17, 1
      %s161 = smul.addr %s160, 4
      %s162 = scalar_lea.vmem %s1, %s161
      %p163 = pneg %p74
      %p164 = pneg %p71
      %p165 = pneg %p102
      %p166 = pneg %p99
      %p167 = scmp.lt.s32.totalorder %s17, 1
      %s168 = scalar_select %p167, %s17, 1
      %p169 = scmp.lt.s32.totalorder %s18, 0
      %s170 = scalar_select %p169, %s18, 0
      %s171 = sadd.s32 %s170, %s168
      %s172 = smul.addr %s171, 8
      %s173 = scalar_lea.vmem %s2, %s172
      %s174 = smul.u32 16, %s18
      %p175 = scmp.lt.s32.totalorder %s17, 1
      %s176 = scalar_select %p175, %s17, 1
      %p177 = scmp.lt.s32.totalorder %s174, 15
      %s178 = scalar_select %p177, %s174, 15
      %s179 = smul.addr %s176, 16
      %s180 = sadd.s32 %s178, %s179
      %s181 = smul.addr %s180, 8
      %s182 = scalar_lea.vmem %s0, %s181
      %s183 = smul.u32 16, %s18
      %p184 = scmp.lt.s32.totalorder %s17, 1
      %s185 = scalar_select %p184, %s17, 1
      %s186 = smul.addr %s185, 4
      %s187 = scalar_lea.vmem %s1, %s186
      %p188 = scmp.lt.s32.totalorder %s17, 1
      %s189 = scalar_select %p188, %s17, 1
      %p190 = scmp.lt.s32.totalorder %s18, 0
      %s191 = scalar_select %p190, %s18, 0
      %s192 = sadd.s32 %s191, %s189
      %s193 = smul.addr %s192, 8
      %s194 = scalar_lea.vmem %s2, %s193
      %v195 = vld [vmem:[%s182] sm:$0xff]
      %v196 = vld [vmem:[%s182 + $0x8] sm:$0xff]
      %v197 = vld [vmem:[%s182 + $0x10] sm:$0xff]
      %v198 = vld [vmem:[%s182 + $0x18] sm:$0xff]
      %v199 = vld [vmem:[%s182 + $0x20] sm:$0xff]
      %v200 = vld [vmem:[%s182 + $0x28] sm:$0xff]
      %v201 = vld [vmem:[%s182 + $0x30] sm:$0xff]
      %v202 = vld [vmem:[%s182 + $0x38] sm:$0xff]
      %v203 = vld [vmem:[%s182 + $0x40] sm:$0xff]
      %v204 = vld [vmem:[%s182 + $0x48] sm:$0xff]
      %v205 = vld [vmem:[%s182 + $0x50] sm:$0xff]
      %v206 = vld [vmem:[%s182 + $0x58] sm:$0xff]
      %v207 = vld [vmem:[%s182 + $0x60] sm:$0xff]
      %v208 = vld [vmem:[%s182 + $0x68] sm:$0xff]
      %v209 = vld [vmem:[%s182 + $0x70] sm:$0xff]
      %v210 = vld [vmem:[%s182 + $0x78] sm:$0xff]
      %v211 = vlaneseq
      %v212 = vshrl.u32 %v211, 7
      %v213 = vadd.s32 %v212, 8
      %v214 = vadd.s32 %v212, 16
      %v215 = vadd.s32 %v212, 24
      %v216 = vadd.s32 %v212, 32
      %v217 = vadd.s32 %v212, 40
      %v218 = vadd.s32 %v212, 48
      %v219 = vadd.s32 %v212, 56
      %v220 = vadd.s32 %v212, 64
      %v221 = vadd.s32 %v212, 72
      %v222 = vadd.s32 %v212, 80
      %v223 = vadd.s32 %v212, 88
      %v224 = vadd.s32 %v212, 96
      %v225 = vadd.s32 %v212, 104
      %v226 = vadd.s32 %v212, 112
      %v227 = vadd.s32 %v212, 120
      %s228 = smul.u32 %s18, 128
      %v229 = vstv %s228
      %v230 = vadd.s32 %v212, %v229
      %v231 = vadd.s32 %v213, %v229
      %v232 = vadd.s32 %v214, %v229
      %v233 = vadd.s32 %v215, %v229
      %v234 = vadd.s32 %v216, %v229
      %v235 = vadd.s32 %v217, %v229
      %v236 = vadd.s32 %v218, %v229
      %v237 = vadd.s32 %v219, %v229
      %v238 = vadd.s32 %v220, %v229
      %v239 = vadd.s32 %v221, %v229
      %v240 = vadd.s32 %v222, %v229
      %v241 = vadd.s32 %v223, %v229
      %v242 = vadd.s32 %v224, %v229
      %v243 = vadd.s32 %v225, %v229
      %v244 = vadd.s32 %v226, %v229
      %v245 = vadd.s32 %v227, %v229
      %v246 = vld [vmem:[%s187] sm:$0x7]
      %v247 = vlaneseq
      %v248 = vshrl.u32 %v247, 7
      %v249 = vsub.s32 0, %v248
      %v250 = vrot.slane %v246, %v249
      %252 = vset.pattern.permute.xlu0 0
      %253 = vperm.xlu0 %252, %v195
      %v254 = vpop.permute.xlu0 %253
      %257 = vset.pattern.permute.xlu0 0
      %258 = vperm.xlu0 %257, %v196
      %v259 = vpop.permute.xlu0 %258
      %262 = vset.pattern.permute.xlu0 0
      %263 = vperm.xlu0 %262, %v197
      %v264 = vpop.permute.xlu0 %263
      %267 = vset.pattern.permute.xlu0 0
      %268 = vperm.xlu0 %267, %v198
      %v269 = vpop.permute.xlu0 %268
      %272 = vset.pattern.permute.xlu0 0
      %273 = vperm.xlu0 %272, %v199
      %v274 = vpop.permute.xlu0 %273
      %277 = vset.pattern.permute.xlu0 0
      %278 = vperm.xlu0 %277, %v200
      %v279 = vpop.permute.xlu0 %278
      %282 = vset.pattern.permute.xlu0 0
      %283 = vperm.xlu0 %282, %v201
      %v284 = vpop.permute.xlu0 %283
      %287 = vset.pattern.permute.xlu0 0
      %288 = vperm.xlu0 %287, %v202
      %v289 = vpop.permute.xlu0 %288
      %292 = vset.pattern.permute.xlu0 0
      %293 = vperm.xlu0 %292, %v203
      %v294 = vpop.permute.xlu0 %293
      %297 = vset.pattern.permute.xlu0 0
      %298 = vperm.xlu0 %297, %v204
      %v299 = vpop.permute.xlu0 %298
      %302 = vset.pattern.permute.xlu0 0
      %303 = vperm.xlu0 %302, %v205
      %v304 = vpop.permute.xlu0 %303
      %307 = vset.pattern.permute.xlu0 0
      %308 = vperm.xlu0 %307, %v206
      %v309 = vpop.permute.xlu0 %308
      %312 = vset.pattern.permute.xlu0 0
      %313 = vperm.xlu0 %312, %v207
      %v314 = vpop.permute.xlu0 %313
      %317 = vset.pattern.permute.xlu0 0
      %318 = vperm.xlu0 %317, %v208
      %v319 = vpop.permute.xlu0 %318
      %322 = vset.pattern.permute.xlu0 0
      %323 = vperm.xlu0 %322, %v209
      %v324 = vpop.permute.xlu0 %323
      %327 = vset.pattern.permute.xlu0 0
      %328 = vperm.xlu0 %327, %v210
      %v329 = vpop.permute.xlu0 %328
      %v331 = vsub.f32 %v250, %v254
      %v332 = vsub.f32 %v250, %v259
      %v333 = vsub.f32 %v250, %v264
      %v334 = vsub.f32 %v250, %v269
      %v335 = vsub.f32 %v250, %v274
      %v336 = vsub.f32 %v250, %v279
      %v337 = vsub.f32 %v250, %v284
      %v338 = vsub.f32 %v250, %v289
      %v339 = vsub.f32 %v250, %v294
      %v340 = vsub.f32 %v250, %v299
      %v341 = vsub.f32 %v250, %v304
      %v342 = vsub.f32 %v250, %v309
      %v343 = vsub.f32 %v250, %v314
      %v344 = vsub.f32 %v250, %v319
      %v345 = vsub.f32 %v250, %v324
      %v346 = vsub.f32 %v250, %v329
      %v347 = vlaneseq
      %v348 = vshrl.u32 %v347, 7
      %v349 = vsub.s32 1, %v348
      %v350 = vrot.slane %v246, %v349
      %351 = vset.pattern.permute.xlu0 1
      %352 = vperm.xlu0 %351, %v195
      %v353 = vpop.permute.xlu0 %352
      %355 = vset.pattern.permute.xlu0 1
      %356 = vperm.xlu0 %355, %v196
      %v357 = vpop.permute.xlu0 %356
      %359 = vset.pattern.permute.xlu0 1
      %360 = vperm.xlu0 %359, %v197
      %v361 = vpop.permute.xlu0 %360
      %363 = vset.pattern.permute.xlu0 1
      %364 = vperm.xlu0 %363, %v198
      %v365 = vpop.permute.xlu0 %364
      %367 = vset.pattern.permute.xlu0 1
      %368 = vperm.xlu0 %367, %v199
      %v369 = vpop.permute.xlu0 %368
      %371 = vset.pattern.permute.xlu0 1
      %372 = vperm.xlu0 %371, %v200
      %v373 = vpop.permute.xlu0 %372
      %375 = vset.pattern.permute.xlu0 1
      %376 = vperm.xlu0 %375, %v201
      %v377 = vpop.permute.xlu0 %376
      %379 = vset.pattern.permute.xlu0 1
      %380 = vperm.xlu0 %379, %v202
      %v381 = vpop.permute.xlu0 %380
      %383 = vset.pattern.permute.xlu0 1
      %384 = vperm.xlu0 %383, %v203
      %v385 = vpop.permute.xlu0 %384
      %387 = vset.pattern.permute.xlu0 1
      %388 = vperm.xlu0 %387, %v204
      %v389 = vpop.permute.xlu0 %388
      %391 = vset.pattern.permute.xlu0 1
      %392 = vperm.xlu0 %391, %v205
      %v393 = vpop.permute.xlu0 %392
      %395 = vset.pattern.permute.xlu0 1
      %396 = vperm.xlu0 %395, %v206
      %v397 = vpop.permute.xlu0 %396
      %399 = vset.pattern.permute.xlu0 1
      %400 = vperm.xlu0 %399, %v207
      %v401 = vpop.permute.xlu0 %400
      %403 = vset.pattern.permute.xlu0 1
      %404 = vperm.xlu0 %403, %v208
      %v405 = vpop.permute.xlu0 %404
      %407 = vset.pattern.permute.xlu0 1
      %408 = vperm.xlu0 %407, %v209
      %v409 = vpop.permute.xlu0 %408
      %411 = vset.pattern.permute.xlu0 1
      %412 = vperm.xlu0 %411, %v210
      %v413 = vpop.permute.xlu0 %412
      %v415 = vsub.f32 %v350, %v353
      %v416 = vsub.f32 %v350, %v357
      %v417 = vsub.f32 %v350, %v361
      %v418 = vsub.f32 %v350, %v365
      %v419 = vsub.f32 %v350, %v369
      %v420 = vsub.f32 %v350, %v373
      %v421 = vsub.f32 %v350, %v377
      %v422 = vsub.f32 %v350, %v381
      %v423 = vsub.f32 %v350, %v385
      %v424 = vsub.f32 %v350, %v389
      %v425 = vsub.f32 %v350, %v393
      %v426 = vsub.f32 %v350, %v397
      %v427 = vsub.f32 %v350, %v401
      %v428 = vsub.f32 %v350, %v405
      %v429 = vsub.f32 %v350, %v409
      %v430 = vsub.f32 %v350, %v413
      %v431 = vlaneseq
      %v432 = vshrl.u32 %v431, 7
      %v433 = vsub.s32 2, %v432
      %v434 = vrot.slane %v246, %v433
      %435 = vset.pattern.permute.xlu0 2
      %436 = vperm.xlu0 %435, %v195
      %v437 = vpop.permute.xlu0 %436
      %439 = vset.pattern.permute.xlu0 2
      %440 = vperm.xlu0 %439, %v196
      %v441 = vpop.permute.xlu0 %440
      %443 = vset.pattern.permute.xlu0 2
      %444 = vperm.xlu0 %443, %v197
      %v445 = vpop.permute.xlu0 %444
      %447 = vset.pattern.permute.xlu0 2
      %448 = vperm.xlu0 %447, %v198
      %v449 = vpop.permute.xlu0 %448
      %451 = vset.pattern.permute.xlu0 2
      %452 = vperm.xlu0 %451, %v199
      %v453 = vpop.permute.xlu0 %452
      %455 = vset.pattern.permute.xlu0 2
      %456 = vperm.xlu0 %455, %v200
      %v457 = vpop.permute.xlu0 %456
      %459 = vset.pattern.permute.xlu0 2
      %460 = vperm.xlu0 %459, %v201
      %v461 = vpop.permute.xlu0 %460
      %463 = vset.pattern.permute.xlu0 2
      %464 = vperm.xlu0 %463, %v202
      %v465 = vpop.permute.xlu0 %464
      %467 = vset.pattern.permute.xlu0 2
      %468 = vperm.xlu0 %467, %v203
      %v469 = vpop.permute.xlu0 %468
      %471 = vset.pattern.permute.xlu0 2
      %472 = vperm.xlu0 %471, %v204
      %v473 = vpop.permute.xlu0 %472
      %475 = vset.pattern.permute.xlu0 2
      %476 = vperm.xlu0 %475, %v205
      %v477 = vpop.permute.xlu0 %476
      %479 = vset.pattern.permute.xlu0 2
      %480 = vperm.xlu0 %479, %v206
      %v481 = vpop.permute.xlu0 %480
      %483 = vset.pattern.permute.xlu0 2
      %484 = vperm.xlu0 %483, %v207
      %v485 = vpop.permute.xlu0 %484
      %487 = vset.pattern.permute.xlu0 2
      %488 = vperm.xlu0 %487, %v208
      %v489 = vpop.permute.xlu0 %488
      %491 = vset.pattern.permute.xlu0 2
      %492 = vperm.xlu0 %491, %v209
      %v493 = vpop.permute.xlu0 %492
      %495 = vset.pattern.permute.xlu0 2
      %496 = vperm.xlu0 %495, %v210
      %v497 = vpop.permute.xlu0 %496
      %v499 = vsub.f32 %v434, %v437
      %v500 = vsub.f32 %v434, %v441
      %v501 = vsub.f32 %v434, %v445
      %v502 = vsub.f32 %v434, %v449
      %v503 = vsub.f32 %v434, %v453
      %v504 = vsub.f32 %v434, %v457
      %v505 = vsub.f32 %v434, %v461
      %v506 = vsub.f32 %v434, %v465
      %v507 = vsub.f32 %v434, %v469
      %v508 = vsub.f32 %v434, %v473
      %v509 = vsub.f32 %v434, %v477
      %v510 = vsub.f32 %v434, %v481
      %v511 = vsub.f32 %v434, %v485
      %v512 = vsub.f32 %v434, %v489
      %v513 = vsub.f32 %v434, %v493
      %v514 = vsub.f32 %v434, %v497
      %v515 = vmul.f32 %v331, %v331
      %v516 = vmul.f32 %v332, %v332
      %v517 = vmul.f32 %v333, %v333
      %v518 = vmul.f32 %v334, %v334
      %v519 = vmul.f32 %v335, %v335
      %v520 = vmul.f32 %v336, %v336
      %v521 = vmul.f32 %v337, %v337
      %v522 = vmul.f32 %v338, %v338
      %v523 = vmul.f32 %v339, %v339
      %v524 = vmul.f32 %v340, %v340
      %v525 = vmul.f32 %v341, %v341
      %v526 = vmul.f32 %v342, %v342
      %v527 = vmul.f32 %v343, %v343
      %v528 = vmul.f32 %v344, %v344
      %v529 = vmul.f32 %v345, %v345
      %v530 = vmul.f32 %v346, %v346
      %v531 = vmul.f32 %v415, %v415
      %v532 = vmul.f32 %v416, %v416
      %v533 = vmul.f32 %v417, %v417
      %v534 = vmul.f32 %v418, %v418
      %v535 = vmul.f32 %v419, %v419
      %v536 = vmul.f32 %v420, %v420
      %v537 = vmul.f32 %v421, %v421
      %v538 = vmul.f32 %v422, %v422
      %v539 = vmul.f32 %v423, %v423
      %v540 = vmul.f32 %v424, %v424
      %v541 = vmul.f32 %v425, %v425
      %v542 = vmul.f32 %v426, %v426
      %v543 = vmul.f32 %v427, %v427
      %v544 = vmul.f32 %v428, %v428
      %v545 = vmul.f32 %v429, %v429
      %v546 = vmul.f32 %v430, %v430
      %v547 = vadd.f32 %v515, %v531
      %v548 = vadd.f32 %v516, %v532
      %v549 = vadd.f32 %v517, %v533
      %v550 = vadd.f32 %v518, %v534
      %v551 = vadd.f32 %v519, %v535
      %v552 = vadd.f32 %v520, %v536
      %v553 = vadd.f32 %v521, %v537
      %v554 = vadd.f32 %v522, %v538
      %v555 = vadd.f32 %v523, %v539
      %v556 = vadd.f32 %v524, %v540
      %v557 = vadd.f32 %v525, %v541
      %v558 = vadd.f32 %v526, %v542
      %v559 = vadd.f32 %v527, %v543
      %v560 = vadd.f32 %v528, %v544
      %v561 = vadd.f32 %v529, %v545
      %v562 = vadd.f32 %v530, %v546
      %v563 = vmul.f32 %v499, %v499
      %v564 = vmul.f32 %v500, %v500
      %v565 = vmul.f32 %v501, %v501
      %v566 = vmul.f32 %v502, %v502
      %v567 = vmul.f32 %v503, %v503
      %v568 = vmul.f32 %v504, %v504
      %v569 = vmul.f32 %v505, %v505
      %v570 = vmul.f32 %v506, %v506
      %v571 = vmul.f32 %v507, %v507
      %v572 = vmul.f32 %v508, %v508
      %v573 = vmul.f32 %v509, %v509
      %v574 = vmul.f32 %v510, %v510
      %v575 = vmul.f32 %v511, %v511
      %v576 = vmul.f32 %v512, %v512
      %v577 = vmul.f32 %v513, %v513
      %v578 = vmul.f32 %v514, %v514
      %v579 = vadd.f32 %v547, %v563
      %v580 = vadd.f32 %v548, %v564
      %v581 = vadd.f32 %v549, %v565
      %v582 = vadd.f32 %v550, %v566
      %v583 = vadd.f32 %v551, %v567
      %v584 = vadd.f32 %v552, %v568
      %v585 = vadd.f32 %v553, %v569
      %v586 = vadd.f32 %v554, %v570
      %v587 = vadd.f32 %v555, %v571
      %v588 = vadd.f32 %v556, %v572
      %v589 = vadd.f32 %v557, %v573
      %v590 = vadd.f32 %v558, %v574
      %v591 = vadd.f32 %v559, %v575
      %v592 = vadd.f32 %v560, %v576
      %v593 = vadd.f32 %v561, %v577
      %v594 = vadd.f32 %v562, %v578
      %vm595 = vcmp.gt.f32.partialorder %v331, 0.0
      %vm596 = vcmp.gt.f32.partialorder %v332, 0.0
      %vm597 = vcmp.gt.f32.partialorder %v333, 0.0
      %vm598 = vcmp.gt.f32.partialorder %v334, 0.0
      %vm599 = vcmp.gt.f32.partialorder %v335, 0.0
      %vm600 = vcmp.gt.f32.partialorder %v336, 0.0
      %vm601 = vcmp.gt.f32.partialorder %v337, 0.0
      %vm602 = vcmp.gt.f32.partialorder %v338, 0.0
      %vm603 = vcmp.gt.f32.partialorder %v339, 0.0
      %vm604 = vcmp.gt.f32.partialorder %v340, 0.0
      %vm605 = vcmp.gt.f32.partialorder %v341, 0.0
      %vm606 = vcmp.gt.f32.partialorder %v342, 0.0
      %vm607 = vcmp.gt.f32.partialorder %v343, 0.0
      %vm608 = vcmp.gt.f32.partialorder %v344, 0.0
      %vm609 = vcmp.gt.f32.partialorder %v345, 0.0
      %vm610 = vcmp.gt.f32.partialorder %v346, 0.0
      %v611 = vsel %vm595, 1, 0
      %v612 = vsel %vm596, 1, 0
      %v613 = vsel %vm597, 1, 0
      %v614 = vsel %vm598, 1, 0
      %v615 = vsel %vm599, 1, 0
      %v616 = vsel %vm600, 1, 0
      %v617 = vsel %vm601, 1, 0
      %v618 = vsel %vm602, 1, 0
      %v619 = vsel %vm603, 1, 0
      %v620 = vsel %vm604, 1, 0
      %v621 = vsel %vm605, 1, 0
      %v622 = vsel %vm606, 1, 0
      %v623 = vsel %vm607, 1, 0
      %v624 = vsel %vm608, 1, 0
      %v625 = vsel %vm609, 1, 0
      %v626 = vsel %vm610, 1, 0
      %v627 = vmul.u32 %v611, 4
      %v628 = vmul.u32 %v612, 4
      %v629 = vmul.u32 %v613, 4
      %v630 = vmul.u32 %v614, 4
      %v631 = vmul.u32 %v615, 4
      %v632 = vmul.u32 %v616, 4
      %v633 = vmul.u32 %v617, 4
      %v634 = vmul.u32 %v618, 4
      %v635 = vmul.u32 %v619, 4
      %v636 = vmul.u32 %v620, 4
      %v637 = vmul.u32 %v621, 4
      %v638 = vmul.u32 %v622, 4
      %v639 = vmul.u32 %v623, 4
      %v640 = vmul.u32 %v624, 4
      %v641 = vmul.u32 %v625, 4
      %v642 = vmul.u32 %v626, 4
      %vm643 = vcmp.gt.f32.partialorder %v415, 0.0
      %vm644 = vcmp.gt.f32.partialorder %v416, 0.0
      %vm645 = vcmp.gt.f32.partialorder %v417, 0.0
      %vm646 = vcmp.gt.f32.partialorder %v418, 0.0
      %vm647 = vcmp.gt.f32.partialorder %v419, 0.0
      %vm648 = vcmp.gt.f32.partialorder %v420, 0.0
      %vm649 = vcmp.gt.f32.partialorder %v421, 0.0
      %vm650 = vcmp.gt.f32.partialorder %v422, 0.0
      %vm651 = vcmp.gt.f32.partialorder %v423, 0.0
      %vm652 = vcmp.gt.f32.partialorder %v424, 0.0
      %vm653 = vcmp.gt.f32.partialorder %v425, 0.0
      %vm654 = vcmp.gt.f32.partialorder %v426, 0.0
      %vm655 = vcmp.gt.f32.partialorder %v427, 0.0
      %vm656 = vcmp.gt.f32.partialorder %v428, 0.0
      %vm657 = vcmp.gt.f32.partialorder %v429, 0.0
      %vm658 = vcmp.gt.f32.partialorder %v430, 0.0
      %v659 = vsel %vm643, 1, 0
      %v660 = vsel %vm644, 1, 0
      %v661 = vsel %vm645, 1, 0
      %v662 = vsel %vm646, 1, 0
      %v663 = vsel %vm647, 1, 0
      %v664 = vsel %vm648, 1, 0
      %v665 = vsel %vm649, 1, 0
      %v666 = vsel %vm650, 1, 0
      %v667 = vsel %vm651, 1, 0
      %v668 = vsel %vm652, 1, 0
      %v669 = vsel %vm653, 1, 0
      %v670 = vsel %vm654, 1, 0
      %v671 = vsel %vm655, 1, 0
      %v672 = vsel %vm656, 1, 0
      %v673 = vsel %vm657, 1, 0
      %v674 = vsel %vm658, 1, 0
      %v675 = vmul.u32 %v659, 2
      %v676 = vmul.u32 %v660, 2
      %v677 = vmul.u32 %v661, 2
      %v678 = vmul.u32 %v662, 2
      %v679 = vmul.u32 %v663, 2
      %v680 = vmul.u32 %v664, 2
      %v681 = vmul.u32 %v665, 2
      %v682 = vmul.u32 %v666, 2
      %v683 = vmul.u32 %v667, 2
      %v684 = vmul.u32 %v668, 2
      %v685 = vmul.u32 %v669, 2
      %v686 = vmul.u32 %v670, 2
      %v687 = vmul.u32 %v671, 2
      %v688 = vmul.u32 %v672, 2
      %v689 = vmul.u32 %v673, 2
      %v690 = vmul.u32 %v674, 2
      %v691 = vadd.s32 %v627, %v675
      %v692 = vadd.s32 %v628, %v676
      %v693 = vadd.s32 %v629, %v677
      %v694 = vadd.s32 %v630, %v678
      %v695 = vadd.s32 %v631, %v679
      %v696 = vadd.s32 %v632, %v680
      %v697 = vadd.s32 %v633, %v681
      %v698 = vadd.s32 %v634, %v682
      %v699 = vadd.s32 %v635, %v683
      %v700 = vadd.s32 %v636, %v684
      %v701 = vadd.s32 %v637, %v685
      %v702 = vadd.s32 %v638, %v686
      %v703 = vadd.s32 %v639, %v687
      %v704 = vadd.s32 %v640, %v688
      %v705 = vadd.s32 %v641, %v689
      %v706 = vadd.s32 %v642, %v690
      %vm707 = vcmp.gt.f32.partialorder %v499, 0.0
      %vm708 = vcmp.gt.f32.partialorder %v500, 0.0
      %vm709 = vcmp.gt.f32.partialorder %v501, 0.0
      %vm710 = vcmp.gt.f32.partialorder %v502, 0.0
      %vm711 = vcmp.gt.f32.partialorder %v503, 0.0
      %vm712 = vcmp.gt.f32.partialorder %v504, 0.0
      %vm713 = vcmp.gt.f32.partialorder %v505, 0.0
      %vm714 = vcmp.gt.f32.partialorder %v506, 0.0
      %vm715 = vcmp.gt.f32.partialorder %v507, 0.0
      %vm716 = vcmp.gt.f32.partialorder %v508, 0.0
      %vm717 = vcmp.gt.f32.partialorder %v509, 0.0
      %vm718 = vcmp.gt.f32.partialorder %v510, 0.0
      %vm719 = vcmp.gt.f32.partialorder %v511, 0.0
      %vm720 = vcmp.gt.f32.partialorder %v512, 0.0
      %vm721 = vcmp.gt.f32.partialorder %v513, 0.0
      %vm722 = vcmp.gt.f32.partialorder %v514, 0.0
      %v723 = vsel %vm707, 1, 0
      %v724 = vsel %vm708, 1, 0
      %v725 = vsel %vm709, 1, 0
      %v726 = vsel %vm710, 1, 0
      %v727 = vsel %vm711, 1, 0
      %v728 = vsel %vm712, 1, 0
      %v729 = vsel %vm713, 1, 0
      %v730 = vsel %vm714, 1, 0
      %v731 = vsel %vm715, 1, 0
      %v732 = vsel %vm716, 1, 0
      %v733 = vsel %vm717, 1, 0
      %v734 = vsel %vm718, 1, 0
      %v735 = vsel %vm719, 1, 0
      %v736 = vsel %vm720, 1, 0
      %v737 = vsel %vm721, 1, 0
      %v738 = vsel %vm722, 1, 0
      %v739 = vadd.s32 %v691, %v723
      %v740 = vadd.s32 %v692, %v724
      %v741 = vadd.s32 %v693, %v725
      %v742 = vadd.s32 %v694, %v726
      %v743 = vadd.s32 %v695, %v727
      %v744 = vadd.s32 %v696, %v728
      %v745 = vadd.s32 %v697, %v729
      %v746 = vadd.s32 %v698, %v730
      %v747 = vadd.s32 %v699, %v731
      %v748 = vadd.s32 %v700, %v732
      %v749 = vadd.s32 %v701, %v733
      %v750 = vadd.s32 %v702, %v734
      %v751 = vadd.s32 %v703, %v735
      %v752 = vadd.s32 %v704, %v736
      %v753 = vadd.s32 %v705, %v737
      %v754 = vadd.s32 %v706, %v738
      %v755 = vlaneseq
      %v756 = vand.u32 %v755, 127
      %vm757 = vcmp.le.f32.partialorder %v579, 0.3
      %vm758 = vcmp.le.f32.partialorder %v580, 0.3
      %vm759 = vcmp.le.f32.partialorder %v581, 0.3
      %vm760 = vcmp.le.f32.partialorder %v582, 0.3
      %vm761 = vcmp.le.f32.partialorder %v583, 0.3
      %vm762 = vcmp.le.f32.partialorder %v584, 0.3
      %vm763 = vcmp.le.f32.partialorder %v585, 0.3
      %vm764 = vcmp.le.f32.partialorder %v586, 0.3
      %vm765 = vcmp.le.f32.partialorder %v587, 0.3
      %vm766 = vcmp.le.f32.partialorder %v588, 0.3
      %vm767 = vcmp.le.f32.partialorder %v589, 0.3
      %vm768 = vcmp.le.f32.partialorder %v590, 0.3
      %vm769 = vcmp.le.f32.partialorder %v591, 0.3
      %vm770 = vcmp.le.f32.partialorder %v592, 0.3
      %vm771 = vcmp.le.f32.partialorder %v593, 0.3
      %vm772 = vcmp.le.f32.partialorder %v594, 0.3
      %vm773 = vcmp.ne.s32.totalorder %v756, %v230
      %vm774 = vcmp.ne.s32.totalorder %v756, %v231
      %vm775 = vcmp.ne.s32.totalorder %v756, %v232
      %vm776 = vcmp.ne.s32.totalorder %v756, %v233
      %vm777 = vcmp.ne.s32.totalorder %v756, %v234
      %vm778 = vcmp.ne.s32.totalorder %v756, %v235
      %vm779 = vcmp.ne.s32.totalorder %v756, %v236
      %vm780 = vcmp.ne.s32.totalorder %v756, %v237
      %vm781 = vcmp.ne.s32.totalorder %v756, %v238
      %vm782 = vcmp.ne.s32.totalorder %v756, %v239
      %vm783 = vcmp.ne.s32.totalorder %v756, %v240
      %vm784 = vcmp.ne.s32.totalorder %v756, %v241
      %vm785 = vcmp.ne.s32.totalorder %v756, %v242
      %vm786 = vcmp.ne.s32.totalorder %v756, %v243
      %vm787 = vcmp.ne.s32.totalorder %v756, %v244
      %vm788 = vcmp.ne.s32.totalorder %v756, %v245
      %vm789 = vmand %vm757, %vm773
      %vm790 = vmand %vm758, %vm774
      %vm791 = vmand %vm759, %vm775
      %vm792 = vmand %vm760, %vm776
      %vm793 = vmand %vm761, %vm777
      %vm794 = vmand %vm762, %vm778
      %vm795 = vmand %vm763, %vm779
      %vm796 = vmand %vm764, %vm780
      %vm797 = vmand %vm765, %vm781
      %vm798 = vmand %vm766, %vm782
      %vm799 = vmand %vm767, %vm783
      %vm800 = vmand %vm768, %vm784
      %vm801 = vmand %vm769, %vm785
      %vm802 = vmand %vm770, %vm786
      %vm803 = vmand %vm771, %vm787
      %vm804 = vmand %vm772, %vm788
      %vm805 = vcmp.lt.s32.totalorder %v756, 16
      %vm806 = vmand %vm789, %vm805
      %vm807 = vmand %vm790, %vm805
      %vm808 = vmand %vm791, %vm805
      %vm809 = vmand %vm792, %vm805
      %vm810 = vmand %vm793, %vm805
      %vm811 = vmand %vm794, %vm805
      %vm812 = vmand %vm795, %vm805
      %vm813 = vmand %vm796, %vm805
      %vm814 = vmand %vm797, %vm805
      %vm815 = vmand %vm798, %vm805
      %vm816 = vmand %vm799, %vm805
      %vm817 = vmand %vm800, %vm805
      %vm818 = vmand %vm801, %vm805
      %vm819 = vmand %vm802, %vm805
      %vm820 = vmand %vm803, %vm805
      %vm821 = vmand %vm804, %vm805
      %v822 = vmul.f32 %v579, 27962024.0
      %v823 = vmul.f32 %v580, 27962024.0
      %v824 = vmul.f32 %v581, 27962024.0
      %v825 = vmul.f32 %v582, 27962024.0
      %v826 = vmul.f32 %v583, 27962024.0
      %v827 = vmul.f32 %v584, 27962024.0
      %v828 = vmul.f32 %v585, 27962024.0
      %v829 = vmul.f32 %v586, 27962024.0
      %v830 = vmul.f32 %v587, 27962024.0
      %v831 = vmul.f32 %v588, 27962024.0
      %v832 = vmul.f32 %v589, 27962024.0
      %v833 = vmul.f32 %v590, 27962024.0
      %v834 = vmul.f32 %v591, 27962024.0
      %v835 = vmul.f32 %v592, 27962024.0
      %v836 = vmul.f32 %v593, 27962024.0
      %v837 = vmul.f32 %v594, 27962024.0
      %v838 = vmin.f32 %v822, 8388607.0
      %v839 = vmin.f32 %v823, 8388607.0
      %v840 = vmin.f32 %v824, 8388607.0
      %v841 = vmin.f32 %v825, 8388607.0
      %v842 = vmin.f32 %v826, 8388607.0
      %v843 = vmin.f32 %v827, 8388607.0
      %v844 = vmin.f32 %v828, 8388607.0
      %v845 = vmin.f32 %v829, 8388607.0
      %v846 = vmin.f32 %v830, 8388607.0
      %v847 = vmin.f32 %v831, 8388607.0
      %v848 = vmin.f32 %v832, 8388607.0
      %v849 = vmin.f32 %v833, 8388607.0
      %v850 = vmin.f32 %v834, 8388607.0
      %v851 = vmin.f32 %v835, 8388607.0
      %v852 = vmin.f32 %v836, 8388607.0
      %v853 = vmin.f32 %v837, 8388607.0
      %v854 = vcvt.f32.s32.to.zero.pseudo %v838
      %v855 = vcvt.f32.s32.to.zero.pseudo %v839
      %v856 = vcvt.f32.s32.to.zero.pseudo %v840
      %v857 = vcvt.f32.s32.to.zero.pseudo %v841
      %v858 = vcvt.f32.s32.to.zero.pseudo %v842
      %v859 = vcvt.f32.s32.to.zero.pseudo %v843
      %v860 = vcvt.f32.s32.to.zero.pseudo %v844
      %v861 = vcvt.f32.s32.to.zero.pseudo %v845
      %v862 = vcvt.f32.s32.to.zero.pseudo %v846
      %v863 = vcvt.f32.s32.to.zero.pseudo %v847
      %v864 = vcvt.f32.s32.to.zero.pseudo %v848
      %v865 = vcvt.f32.s32.to.zero.pseudo %v849
      %v866 = vcvt.f32.s32.to.zero.pseudo %v850
      %v867 = vcvt.f32.s32.to.zero.pseudo %v851
      %v868 = vcvt.f32.s32.to.zero.pseudo %v852
      %v869 = vcvt.f32.s32.to.zero.pseudo %v853
      %v870 = vmul.u32 %v854, 128
      %v871 = vmul.u32 %v855, 128
      %v872 = vmul.u32 %v856, 128
      %v873 = vmul.u32 %v857, 128
      %v874 = vmul.u32 %v858, 128
      %v875 = vmul.u32 %v859, 128
      %v876 = vmul.u32 %v860, 128
      %v877 = vmul.u32 %v861, 128
      %v878 = vmul.u32 %v862, 128
      %v879 = vmul.u32 %v863, 128
      %v880 = vmul.u32 %v864, 128
      %v881 = vmul.u32 %v865, 128
      %v882 = vmul.u32 %v866, 128
      %v883 = vmul.u32 %v867, 128
      %v884 = vmul.u32 %v868, 128
      %v885 = vmul.u32 %v869, 128
      %v886 = vadd.s32 %v870, %v756
      %v887 = vadd.s32 %v871, %v756
      %v888 = vadd.s32 %v872, %v756
      %v889 = vadd.s32 %v873, %v756
      %v890 = vadd.s32 %v874, %v756
      %v891 = vadd.s32 %v875, %v756
      %v892 = vadd.s32 %v876, %v756
      %v893 = vadd.s32 %v877, %v756
      %v894 = vadd.s32 %v878, %v756
      %v895 = vadd.s32 %v879, %v756
      %v896 = vadd.s32 %v880, %v756
      %v897 = vadd.s32 %v881, %v756
      %v898 = vadd.s32 %v882, %v756
      %v899 = vadd.s32 %v883, %v756
      %v900 = vadd.s32 %v884, %v756
      %v901 = vadd.s32 %v885, %v756
      %vm902 = vcmp.eq.s32.totalorder %v739, 0
      %vm903 = vcmp.eq.s32.totalorder %v740, 0
      %vm904 = vcmp.eq.s32.totalorder %v741, 0
      %vm905 = vcmp.eq.s32.totalorder %v742, 0
      %vm906 = vcmp.eq.s32.totalorder %v743, 0
      %vm907 = vcmp.eq.s32.totalorder %v744, 0
      %vm908 = vcmp.eq.s32.totalorder %v745, 0
      %vm909 = vcmp.eq.s32.totalorder %v746, 0
      %vm910 = vcmp.eq.s32.totalorder %v747, 0
      %vm911 = vcmp.eq.s32.totalorder %v748, 0
      %vm912 = vcmp.eq.s32.totalorder %v749, 0
      %vm913 = vcmp.eq.s32.totalorder %v750, 0
      %vm914 = vcmp.eq.s32.totalorder %v751, 0
      %vm915 = vcmp.eq.s32.totalorder %v752, 0
      %vm916 = vcmp.eq.s32.totalorder %v753, 0
      %vm917 = vcmp.eq.s32.totalorder %v754, 0
      %vm918 = vmand %vm806, %vm902
      %vm919 = vmand %vm807, %vm903
      %vm920 = vmand %vm808, %vm904
      %vm921 = vmand %vm809, %vm905
      %vm922 = vmand %vm810, %vm906
      %vm923 = vmand %vm811, %vm907
      %vm924 = vmand %vm812, %vm908
      %vm925 = vmand %vm813, %vm909
      %vm926 = vmand %vm814, %vm910
      %vm927 = vmand %vm815, %vm911
      %vm928 = vmand %vm816, %vm912
      %vm929 = vmand %vm817, %vm913
      %vm930 = vmand %vm818, %vm914
      %vm931 = vmand %vm819, %vm915
      %vm932 = vmand %vm820, %vm916
      %vm933 = vmand %vm821, %vm917
      %v934 = vsel %vm918, %v886, 1073741824
      %v935 = vsel %vm919, %v887, 1073741824
      %v936 = vsel %vm920, %v888, 1073741824
      %v937 = vsel %vm921, %v889, 1073741824
      %v938 = vsel %vm922, %v890, 1073741824
      %v939 = vsel %vm923, %v891, 1073741824
      %v940 = vsel %vm924, %v892, 1073741824
      %v941 = vsel %vm925, %v893, 1073741824
      %v942 = vsel %vm926, %v894, 1073741824
      %v943 = vsel %vm927, %v895, 1073741824
      %v944 = vsel %vm928, %v896, 1073741824
      %v945 = vsel %vm929, %v897, 1073741824
      %v946 = vsel %vm930, %v898, 1073741824
      %v947 = vsel %vm931, %v899, 1073741824
      %v948 = vsel %vm932, %v900, 1073741824
      %v949 = vsel %vm933, %v901, 1073741824
      %v950 = vand.u32 %v934, 65535
      %v951 = vshra.s32 %v934, 16
      %v952 = vcvt.s32.f32 %v950
      %v953 = vcvt.s32.f32 %v951
      %954 = vmin.xlane.f32.xlu0 %v953
      %v955 = vpop.xlane.xlu0 %954
      %vm956 = vcmp.eq.f32.partialorder %v953, %v955
      %v957 = vsel %vm956, %v952, inf
      %958 = vmin.xlane.f32.xlu0 %v957
      %v959 = vpop.xlane.xlu0 %958
      %v960 = vcvt.f32.s32 %v959
      %v961 = vcvt.f32.s32 %v955
      %v962 = vshll.u32 %v961, 16
      %v963 = vadd.s32 %v962, %v960
      %v964 = vand.u32 %v935, 65535
      %v965 = vshra.s32 %v935, 16
      %v966 = vcvt.s32.f32 %v964
      %v967 = vcvt.s32.f32 %v965
      %968 = vmin.xlane.f32.xlu0 %v967
      %v969 = vpop.xlane.xlu0 %968
      %vm970 = vcmp.eq.f32.partialorder %v967, %v969
      %v971 = vsel %vm970, %v966, inf
      %972 = vmin.xlane.f32.xlu0 %v971
      %v973 = vpop.xlane.xlu0 %972
      %v974 = vcvt.f32.s32 %v973
      %v975 = vcvt.f32.s32 %v969
      %v976 = vshll.u32 %v975, 16
      %v977 = vadd.s32 %v976, %v974
      %v978 = vand.u32 %v936, 65535
      %v979 = vshra.s32 %v936, 16
      %v980 = vcvt.s32.f32 %v978
      %v981 = vcvt.s32.f32 %v979
      %982 = vmin.xlane.f32.xlu0 %v981
      %v983 = vpop.xlane.xlu0 %982
      %vm984 = vcmp.eq.f32.partialorder %v981, %v983
      %v985 = vsel %vm984, %v980, inf
      %986 = vmin.xlane.f32.xlu0 %v985
      %v987 = vpop.xlane.xlu0 %986
      %v988 = vcvt.f32.s32 %v987
      %v989 = vcvt.f32.s32 %v983
      %v990 = vshll.u32 %v989, 16
      %v991 = vadd.s32 %v990, %v988
      %v992 = vand.u32 %v937, 65535
      %v993 = vshra.s32 %v937, 16
      %v994 = vcvt.s32.f32 %v992
      %v995 = vcvt.s32.f32 %v993
      %996 = vmin.xlane.f32.xlu0 %v995
      %v997 = vpop.xlane.xlu0 %996
      %vm998 = vcmp.eq.f32.partialorder %v995, %v997
      %v999 = vsel %vm998, %v994, inf
      %1000 = vmin.xlane.f32.xlu0 %v999
      %v1001 = vpop.xlane.xlu0 %1000
      %v1002 = vcvt.f32.s32 %v1001
      %v1003 = vcvt.f32.s32 %v997
      %v1004 = vshll.u32 %v1003, 16
      %v1005 = vadd.s32 %v1004, %v1002
      %v1006 = vand.u32 %v938, 65535
      %v1007 = vshra.s32 %v938, 16
      %v1008 = vcvt.s32.f32 %v1006
      %v1009 = vcvt.s32.f32 %v1007
      %1010 = vmin.xlane.f32.xlu0 %v1009
      %v1011 = vpop.xlane.xlu0 %1010
      %vm1012 = vcmp.eq.f32.partialorder %v1009, %v1011
      %v1013 = vsel %vm1012, %v1008, inf
      %1014 = vmin.xlane.f32.xlu0 %v1013
      %v1015 = vpop.xlane.xlu0 %1014
      %v1016 = vcvt.f32.s32 %v1015
      %v1017 = vcvt.f32.s32 %v1011
      %v1018 = vshll.u32 %v1017, 16
      %v1019 = vadd.s32 %v1018, %v1016
      %v1020 = vand.u32 %v939, 65535
      %v1021 = vshra.s32 %v939, 16
      %v1022 = vcvt.s32.f32 %v1020
      %v1023 = vcvt.s32.f32 %v1021
      %1024 = vmin.xlane.f32.xlu0 %v1023
      %v1025 = vpop.xlane.xlu0 %1024
      %vm1026 = vcmp.eq.f32.partialorder %v1023, %v1025
      %v1027 = vsel %vm1026, %v1022, inf
      %1028 = vmin.xlane.f32.xlu0 %v1027
      %v1029 = vpop.xlane.xlu0 %1028
      %v1030 = vcvt.f32.s32 %v1029
      %v1031 = vcvt.f32.s32 %v1025
      %v1032 = vshll.u32 %v1031, 16
      %v1033 = vadd.s32 %v1032, %v1030
      %v1034 = vand.u32 %v940, 65535
      %v1035 = vshra.s32 %v940, 16
      %v1036 = vcvt.s32.f32 %v1034
      %v1037 = vcvt.s32.f32 %v1035
      %1038 = vmin.xlane.f32.xlu0 %v1037
      %v1039 = vpop.xlane.xlu0 %1038
      %vm1040 = vcmp.eq.f32.partialorder %v1037, %v1039
      %v1041 = vsel %vm1040, %v1036, inf
      %1042 = vmin.xlane.f32.xlu0 %v1041
      %v1043 = vpop.xlane.xlu0 %1042
      %v1044 = vcvt.f32.s32 %v1043
      %v1045 = vcvt.f32.s32 %v1039
      %v1046 = vshll.u32 %v1045, 16
      %v1047 = vadd.s32 %v1046, %v1044
      %v1048 = vand.u32 %v941, 65535
      %v1049 = vshra.s32 %v941, 16
      %v1050 = vcvt.s32.f32 %v1048
      %v1051 = vcvt.s32.f32 %v1049
      %1052 = vmin.xlane.f32.xlu0 %v1051
      %v1053 = vpop.xlane.xlu0 %1052
      %vm1054 = vcmp.eq.f32.partialorder %v1051, %v1053
      %v1055 = vsel %vm1054, %v1050, inf
      %1056 = vmin.xlane.f32.xlu0 %v1055
      %v1057 = vpop.xlane.xlu0 %1056
      %v1058 = vcvt.f32.s32 %v1057
      %v1059 = vcvt.f32.s32 %v1053
      %v1060 = vshll.u32 %v1059, 16
      %v1061 = vadd.s32 %v1060, %v1058
      %v1062 = vand.u32 %v942, 65535
      %v1063 = vshra.s32 %v942, 16
      %v1064 = vcvt.s32.f32 %v1062
      %v1065 = vcvt.s32.f32 %v1063
      %1066 = vmin.xlane.f32.xlu0 %v1065
      %v1067 = vpop.xlane.xlu0 %1066
      %vm1068 = vcmp.eq.f32.partialorder %v1065, %v1067
      %v1069 = vsel %vm1068, %v1064, inf
      %1070 = vmin.xlane.f32.xlu0 %v1069
      %v1071 = vpop.xlane.xlu0 %1070
      %v1072 = vcvt.f32.s32 %v1071
      %v1073 = vcvt.f32.s32 %v1067
      %v1074 = vshll.u32 %v1073, 16
      %v1075 = vadd.s32 %v1074, %v1072
      %v1076 = vand.u32 %v943, 65535
      %v1077 = vshra.s32 %v943, 16
      %v1078 = vcvt.s32.f32 %v1076
      %v1079 = vcvt.s32.f32 %v1077
      %1080 = vmin.xlane.f32.xlu0 %v1079
      %v1081 = vpop.xlane.xlu0 %1080
      %vm1082 = vcmp.eq.f32.partialorder %v1079, %v1081
      %v1083 = vsel %vm1082, %v1078, inf
      %1084 = vmin.xlane.f32.xlu0 %v1083
      %v1085 = vpop.xlane.xlu0 %1084
      %v1086 = vcvt.f32.s32 %v1085
      %v1087 = vcvt.f32.s32 %v1081
      %v1088 = vshll.u32 %v1087, 16
      %v1089 = vadd.s32 %v1088, %v1086
      %v1090 = vand.u32 %v944, 65535
      %v1091 = vshra.s32 %v944, 16
      %v1092 = vcvt.s32.f32 %v1090
      %v1093 = vcvt.s32.f32 %v1091
      %1094 = vmin.xlane.f32.xlu0 %v1093
      %v1095 = vpop.xlane.xlu0 %1094
      %vm1096 = vcmp.eq.f32.partialorder %v1093, %v1095
      %v1097 = vsel %vm1096, %v1092, inf
      %1098 = vmin.xlane.f32.xlu0 %v1097
      %v1099 = vpop.xlane.xlu0 %1098
      %v1100 = vcvt.f32.s32 %v1099
      %v1101 = vcvt.f32.s32 %v1095
      %v1102 = vshll.u32 %v1101, 16
      %v1103 = vadd.s32 %v1102, %v1100
      %v1104 = vand.u32 %v945, 65535
      %v1105 = vshra.s32 %v945, 16
      %v1106 = vcvt.s32.f32 %v1104
      %v1107 = vcvt.s32.f32 %v1105
      %1108 = vmin.xlane.f32.xlu0 %v1107
      %v1109 = vpop.xlane.xlu0 %1108
      %vm1110 = vcmp.eq.f32.partialorder %v1107, %v1109
      %v1111 = vsel %vm1110, %v1106, inf
      %1112 = vmin.xlane.f32.xlu0 %v1111
      %v1113 = vpop.xlane.xlu0 %1112
      %v1114 = vcvt.f32.s32 %v1113
      %v1115 = vcvt.f32.s32 %v1109
      %v1116 = vshll.u32 %v1115, 16
      %v1117 = vadd.s32 %v1116, %v1114
      %v1118 = vand.u32 %v946, 65535
      %v1119 = vshra.s32 %v946, 16
      %v1120 = vcvt.s32.f32 %v1118
      %v1121 = vcvt.s32.f32 %v1119
      %1122 = vmin.xlane.f32.xlu0 %v1121
      %v1123 = vpop.xlane.xlu0 %1122
      %vm1124 = vcmp.eq.f32.partialorder %v1121, %v1123
      %v1125 = vsel %vm1124, %v1120, inf
      %1126 = vmin.xlane.f32.xlu0 %v1125
      %v1127 = vpop.xlane.xlu0 %1126
      %v1128 = vcvt.f32.s32 %v1127
      %v1129 = vcvt.f32.s32 %v1123
      %v1130 = vshll.u32 %v1129, 16
      %v1131 = vadd.s32 %v1130, %v1128
      %v1132 = vand.u32 %v947, 65535
      %v1133 = vshra.s32 %v947, 16
      %v1134 = vcvt.s32.f32 %v1132
      %v1135 = vcvt.s32.f32 %v1133
      %1136 = vmin.xlane.f32.xlu0 %v1135
      %v1137 = vpop.xlane.xlu0 %1136
      %vm1138 = vcmp.eq.f32.partialorder %v1135, %v1137
      %v1139 = vsel %vm1138, %v1134, inf
      %1140 = vmin.xlane.f32.xlu0 %v1139
      %v1141 = vpop.xlane.xlu0 %1140
      %v1142 = vcvt.f32.s32 %v1141
      %v1143 = vcvt.f32.s32 %v1137
      %v1144 = vshll.u32 %v1143, 16
      %v1145 = vadd.s32 %v1144, %v1142
      %v1146 = vand.u32 %v948, 65535
      %v1147 = vshra.s32 %v948, 16
      %v1148 = vcvt.s32.f32 %v1146
      %v1149 = vcvt.s32.f32 %v1147
      %1150 = vmin.xlane.f32.xlu0 %v1149
      %v1151 = vpop.xlane.xlu0 %1150
      %vm1152 = vcmp.eq.f32.partialorder %v1149, %v1151
      %v1153 = vsel %vm1152, %v1148, inf
      %1154 = vmin.xlane.f32.xlu0 %v1153
      %v1155 = vpop.xlane.xlu0 %1154
      %v1156 = vcvt.f32.s32 %v1155
      %v1157 = vcvt.f32.s32 %v1151
      %v1158 = vshll.u32 %v1157, 16
      %v1159 = vadd.s32 %v1158, %v1156
      %v1160 = vand.u32 %v949, 65535
      %v1161 = vshra.s32 %v949, 16
      %v1162 = vcvt.s32.f32 %v1160
      %v1163 = vcvt.s32.f32 %v1161
      %1164 = vmin.xlane.f32.xlu0 %v1163
      %v1165 = vpop.xlane.xlu0 %1164
      %vm1166 = vcmp.eq.f32.partialorder %v1163, %v1165
      %v1167 = vsel %vm1166, %v1162, inf
      %1168 = vmin.xlane.f32.xlu0 %v1167
      %v1169 = vpop.xlane.xlu0 %1168
      %v1170 = vcvt.f32.s32 %v1169
      %v1171 = vcvt.f32.s32 %v1165
      %v1172 = vshll.u32 %v1171, 16
      %v1173 = vadd.s32 %v1172, %v1170
      %vm1174 = vcmp.lt.s32.totalorder %v963, 1073741824
      %v1175 = vsel %vm1174, %v963, 1073741824
      %vm1176 = vcmp.lt.s32.totalorder %v977, 1073741824
      %v1177 = vsel %vm1176, %v977, 1073741824
      %vm1178 = vcmp.lt.s32.totalorder %v991, 1073741824
      %v1179 = vsel %vm1178, %v991, 1073741824
      %vm1180 = vcmp.lt.s32.totalorder %v1005, 1073741824
      %v1181 = vsel %vm1180, %v1005, 1073741824
      %vm1182 = vcmp.lt.s32.totalorder %v1019, 1073741824
      %v1183 = vsel %vm1182, %v1019, 1073741824
      %vm1184 = vcmp.lt.s32.totalorder %v1033, 1073741824
      %v1185 = vsel %vm1184, %v1033, 1073741824
      %vm1186 = vcmp.lt.s32.totalorder %v1047, 1073741824
      %v1187 = vsel %vm1186, %v1047, 1073741824
      %vm1188 = vcmp.lt.s32.totalorder %v1061, 1073741824
      %v1189 = vsel %vm1188, %v1061, 1073741824
      %vm1190 = vcmp.lt.s32.totalorder %v1075, 1073741824
      %v1191 = vsel %vm1190, %v1075, 1073741824
      %vm1192 = vcmp.lt.s32.totalorder %v1089, 1073741824
      %v1193 = vsel %vm1192, %v1089, 1073741824
      %vm1194 = vcmp.lt.s32.totalorder %v1103, 1073741824
      %v1195 = vsel %vm1194, %v1103, 1073741824
      %vm1196 = vcmp.lt.s32.totalorder %v1117, 1073741824
      %v1197 = vsel %vm1196, %v1117, 1073741824
      %vm1198 = vcmp.lt.s32.totalorder %v1131, 1073741824
      %v1199 = vsel %vm1198, %v1131, 1073741824
      %vm1200 = vcmp.lt.s32.totalorder %v1145, 1073741824
      %v1201 = vsel %vm1200, %v1145, 1073741824
      %vm1202 = vcmp.lt.s32.totalorder %v1159, 1073741824
      %v1203 = vsel %vm1202, %v1159, 1073741824
      %vm1204 = vcmp.lt.s32.totalorder %v1173, 1073741824
      %v1205 = vsel %vm1204, %v1173, 1073741824
      %vm1206 = vcmp.eq.s32.totalorder %v739, 1
      %vm1207 = vcmp.eq.s32.totalorder %v740, 1
      %vm1208 = vcmp.eq.s32.totalorder %v741, 1
      %vm1209 = vcmp.eq.s32.totalorder %v742, 1
      %vm1210 = vcmp.eq.s32.totalorder %v743, 1
      %vm1211 = vcmp.eq.s32.totalorder %v744, 1
      %vm1212 = vcmp.eq.s32.totalorder %v745, 1
      %vm1213 = vcmp.eq.s32.totalorder %v746, 1
      %vm1214 = vcmp.eq.s32.totalorder %v747, 1
      %vm1215 = vcmp.eq.s32.totalorder %v748, 1
      %vm1216 = vcmp.eq.s32.totalorder %v749, 1
      %vm1217 = vcmp.eq.s32.totalorder %v750, 1
      %vm1218 = vcmp.eq.s32.totalorder %v751, 1
      %vm1219 = vcmp.eq.s32.totalorder %v752, 1
      %vm1220 = vcmp.eq.s32.totalorder %v753, 1
      %vm1221 = vcmp.eq.s32.totalorder %v754, 1
      %vm1222 = vmand %vm806, %vm1206
      %vm1223 = vmand %vm807, %vm1207
      %vm1224 = vmand %vm808, %vm1208
      %vm1225 = vmand %vm809, %vm1209
      %vm1226 = vmand %vm810, %vm1210
      %vm1227 = vmand %vm811, %vm1211
      %vm1228 = vmand %vm812, %vm1212
      %vm1229 = vmand %vm813, %vm1213
      %vm1230 = vmand %vm814, %vm1214
      %vm1231 = vmand %vm815, %vm1215
      %vm1232 = vmand %vm816, %vm1216
      %vm1233 = vmand %vm817, %vm1217
      %vm1234 = vmand %vm818, %vm1218
      %vm1235 = vmand %vm819, %vm1219
      %vm1236 = vmand %vm820, %vm1220
      %vm1237 = vmand %vm821, %vm1221
      %v1238 = vsel %vm1222, %v886, 1073741824
      %v1239 = vsel %vm1223, %v887, 1073741824
      %v1240 = vsel %vm1224, %v888, 1073741824
      %v1241 = vsel %vm1225, %v889, 1073741824
      %v1242 = vsel %vm1226, %v890, 1073741824
      %v1243 = vsel %vm1227, %v891, 1073741824
      %v1244 = vsel %vm1228, %v892, 1073741824
      %v1245 = vsel %vm1229, %v893, 1073741824
      %v1246 = vsel %vm1230, %v894, 1073741824
      %v1247 = vsel %vm1231, %v895, 1073741824
      %v1248 = vsel %vm1232, %v896, 1073741824
      %v1249 = vsel %vm1233, %v897, 1073741824
      %v1250 = vsel %vm1234, %v898, 1073741824
      %v1251 = vsel %vm1235, %v899, 1073741824
      %v1252 = vsel %vm1236, %v900, 1073741824
      %v1253 = vsel %vm1237, %v901, 1073741824
      %v1254 = vand.u32 %v1238, 65535
      %v1255 = vshra.s32 %v1238, 16
      %v1256 = vcvt.s32.f32 %v1254
      %v1257 = vcvt.s32.f32 %v1255
      %1258 = vmin.xlane.f32.xlu0 %v1257
      %v1259 = vpop.xlane.xlu0 %1258
      %vm1260 = vcmp.eq.f32.partialorder %v1257, %v1259
      %v1261 = vsel %vm1260, %v1256, inf
      %1262 = vmin.xlane.f32.xlu0 %v1261
      %v1263 = vpop.xlane.xlu0 %1262
      %v1264 = vcvt.f32.s32 %v1263
      %v1265 = vcvt.f32.s32 %v1259
      %v1266 = vshll.u32 %v1265, 16
      %v1267 = vadd.s32 %v1266, %v1264
      %v1268 = vand.u32 %v1239, 65535
      %v1269 = vshra.s32 %v1239, 16
      %v1270 = vcvt.s32.f32 %v1268
      %v1271 = vcvt.s32.f32 %v1269
      %1272 = vmin.xlane.f32.xlu0 %v1271
      %v1273 = vpop.xlane.xlu0 %1272
      %vm1274 = vcmp.eq.f32.partialorder %v1271, %v1273
      %v1275 = vsel %vm1274, %v1270, inf
      %1276 = vmin.xlane.f32.xlu0 %v1275
      %v1277 = vpop.xlane.xlu0 %1276
      %v1278 = vcvt.f32.s32 %v1277
      %v1279 = vcvt.f32.s32 %v1273
      %v1280 = vshll.u32 %v1279, 16
      %v1281 = vadd.s32 %v1280, %v1278
      %v1282 = vand.u32 %v1240, 65535
      %v1283 = vshra.s32 %v1240, 16
      %v1284 = vcvt.s32.f32 %v1282
      %v1285 = vcvt.s32.f32 %v1283
      %1286 = vmin.xlane.f32.xlu0 %v1285
      %v1287 = vpop.xlane.xlu0 %1286
      %vm1288 = vcmp.eq.f32.partialorder %v1285, %v1287
      %v1289 = vsel %vm1288, %v1284, inf
      %1290 = vmin.xlane.f32.xlu0 %v1289
      %v1291 = vpop.xlane.xlu0 %1290
      %v1292 = vcvt.f32.s32 %v1291
      %v1293 = vcvt.f32.s32 %v1287
      %v1294 = vshll.u32 %v1293, 16
      %v1295 = vadd.s32 %v1294, %v1292
      %v1296 = vand.u32 %v1241, 65535
      %v1297 = vshra.s32 %v1241, 16
      %v1298 = vcvt.s32.f32 %v1296
      %v1299 = vcvt.s32.f32 %v1297
      %1300 = vmin.xlane.f32.xlu0 %v1299
      %v1301 = vpop.xlane.xlu0 %1300
      %vm1302 = vcmp.eq.f32.partialorder %v1299, %v1301
      %v1303 = vsel %vm1302, %v1298, inf
      %1304 = vmin.xlane.f32.xlu0 %v1303
      %v1305 = vpop.xlane.xlu0 %1304
      %v1306 = vcvt.f32.s32 %v1305
      %v1307 = vcvt.f32.s32 %v1301
      %v1308 = vshll.u32 %v1307, 16
      %v1309 = vadd.s32 %v1308, %v1306
      %v1310 = vand.u32 %v1242, 65535
      %v1311 = vshra.s32 %v1242, 16
      %v1312 = vcvt.s32.f32 %v1310
      %v1313 = vcvt.s32.f32 %v1311
      %1314 = vmin.xlane.f32.xlu0 %v1313
      %v1315 = vpop.xlane.xlu0 %1314
      %vm1316 = vcmp.eq.f32.partialorder %v1313, %v1315
      %v1317 = vsel %vm1316, %v1312, inf
      %1318 = vmin.xlane.f32.xlu0 %v1317
      %v1319 = vpop.xlane.xlu0 %1318
      %v1320 = vcvt.f32.s32 %v1319
      %v1321 = vcvt.f32.s32 %v1315
      %v1322 = vshll.u32 %v1321, 16
      %v1323 = vadd.s32 %v1322, %v1320
      %v1324 = vand.u32 %v1243, 65535
      %v1325 = vshra.s32 %v1243, 16
      %v1326 = vcvt.s32.f32 %v1324
      %v1327 = vcvt.s32.f32 %v1325
      %1328 = vmin.xlane.f32.xlu0 %v1327
      %v1329 = vpop.xlane.xlu0 %1328
      %vm1330 = vcmp.eq.f32.partialorder %v1327, %v1329
      %v1331 = vsel %vm1330, %v1326, inf
      %1332 = vmin.xlane.f32.xlu0 %v1331
      %v1333 = vpop.xlane.xlu0 %1332
      %v1334 = vcvt.f32.s32 %v1333
      %v1335 = vcvt.f32.s32 %v1329
      %v1336 = vshll.u32 %v1335, 16
      %v1337 = vadd.s32 %v1336, %v1334
      %v1338 = vand.u32 %v1244, 65535
      %v1339 = vshra.s32 %v1244, 16
      %v1340 = vcvt.s32.f32 %v1338
      %v1341 = vcvt.s32.f32 %v1339
      %1342 = vmin.xlane.f32.xlu0 %v1341
      %v1343 = vpop.xlane.xlu0 %1342
      %vm1344 = vcmp.eq.f32.partialorder %v1341, %v1343
      %v1345 = vsel %vm1344, %v1340, inf
      %1346 = vmin.xlane.f32.xlu0 %v1345
      %v1347 = vpop.xlane.xlu0 %1346
      %v1348 = vcvt.f32.s32 %v1347
      %v1349 = vcvt.f32.s32 %v1343
      %v1350 = vshll.u32 %v1349, 16
      %v1351 = vadd.s32 %v1350, %v1348
      %v1352 = vand.u32 %v1245, 65535
      %v1353 = vshra.s32 %v1245, 16
      %v1354 = vcvt.s32.f32 %v1352
      %v1355 = vcvt.s32.f32 %v1353
      %1356 = vmin.xlane.f32.xlu0 %v1355
      %v1357 = vpop.xlane.xlu0 %1356
      %vm1358 = vcmp.eq.f32.partialorder %v1355, %v1357
      %v1359 = vsel %vm1358, %v1354, inf
      %1360 = vmin.xlane.f32.xlu0 %v1359
      %v1361 = vpop.xlane.xlu0 %1360
      %v1362 = vcvt.f32.s32 %v1361
      %v1363 = vcvt.f32.s32 %v1357
      %v1364 = vshll.u32 %v1363, 16
      %v1365 = vadd.s32 %v1364, %v1362
      %v1366 = vand.u32 %v1246, 65535
      %v1367 = vshra.s32 %v1246, 16
      %v1368 = vcvt.s32.f32 %v1366
      %v1369 = vcvt.s32.f32 %v1367
      %1370 = vmin.xlane.f32.xlu0 %v1369
      %v1371 = vpop.xlane.xlu0 %1370
      %vm1372 = vcmp.eq.f32.partialorder %v1369, %v1371
      %v1373 = vsel %vm1372, %v1368, inf
      %1374 = vmin.xlane.f32.xlu0 %v1373
      %v1375 = vpop.xlane.xlu0 %1374
      %v1376 = vcvt.f32.s32 %v1375
      %v1377 = vcvt.f32.s32 %v1371
      %v1378 = vshll.u32 %v1377, 16
      %v1379 = vadd.s32 %v1378, %v1376
      %v1380 = vand.u32 %v1247, 65535
      %v1381 = vshra.s32 %v1247, 16
      %v1382 = vcvt.s32.f32 %v1380
      %v1383 = vcvt.s32.f32 %v1381
      %1384 = vmin.xlane.f32.xlu0 %v1383
      %v1385 = vpop.xlane.xlu0 %1384
      %vm1386 = vcmp.eq.f32.partialorder %v1383, %v1385
      %v1387 = vsel %vm1386, %v1382, inf
      %1388 = vmin.xlane.f32.xlu0 %v1387
      %v1389 = vpop.xlane.xlu0 %1388
      %v1390 = vcvt.f32.s32 %v1389
      %v1391 = vcvt.f32.s32 %v1385
      %v1392 = vshll.u32 %v1391, 16
      %v1393 = vadd.s32 %v1392, %v1390
      %v1394 = vand.u32 %v1248, 65535
      %v1395 = vshra.s32 %v1248, 16
      %v1396 = vcvt.s32.f32 %v1394
      %v1397 = vcvt.s32.f32 %v1395
      %1398 = vmin.xlane.f32.xlu0 %v1397
      %v1399 = vpop.xlane.xlu0 %1398
      %vm1400 = vcmp.eq.f32.partialorder %v1397, %v1399
      %v1401 = vsel %vm1400, %v1396, inf
      %1402 = vmin.xlane.f32.xlu0 %v1401
      %v1403 = vpop.xlane.xlu0 %1402
      %v1404 = vcvt.f32.s32 %v1403
      %v1405 = vcvt.f32.s32 %v1399
      %v1406 = vshll.u32 %v1405, 16
      %v1407 = vadd.s32 %v1406, %v1404
      %v1408 = vand.u32 %v1249, 65535
      %v1409 = vshra.s32 %v1249, 16
      %v1410 = vcvt.s32.f32 %v1408
      %v1411 = vcvt.s32.f32 %v1409
      %1412 = vmin.xlane.f32.xlu0 %v1411
      %v1413 = vpop.xlane.xlu0 %1412
      %vm1414 = vcmp.eq.f32.partialorder %v1411, %v1413
      %v1415 = vsel %vm1414, %v1410, inf
      %1416 = vmin.xlane.f32.xlu0 %v1415
      %v1417 = vpop.xlane.xlu0 %1416
      %v1418 = vcvt.f32.s32 %v1417
      %v1419 = vcvt.f32.s32 %v1413
      %v1420 = vshll.u32 %v1419, 16
      %v1421 = vadd.s32 %v1420, %v1418
      %v1422 = vand.u32 %v1250, 65535
      %v1423 = vshra.s32 %v1250, 16
      %v1424 = vcvt.s32.f32 %v1422
      %v1425 = vcvt.s32.f32 %v1423
      %1426 = vmin.xlane.f32.xlu0 %v1425
      %v1427 = vpop.xlane.xlu0 %1426
      %vm1428 = vcmp.eq.f32.partialorder %v1425, %v1427
      %v1429 = vsel %vm1428, %v1424, inf
      %1430 = vmin.xlane.f32.xlu0 %v1429
      %v1431 = vpop.xlane.xlu0 %1430
      %v1432 = vcvt.f32.s32 %v1431
      %v1433 = vcvt.f32.s32 %v1427
      %v1434 = vshll.u32 %v1433, 16
      %v1435 = vadd.s32 %v1434, %v1432
      %v1436 = vand.u32 %v1251, 65535
      %v1437 = vshra.s32 %v1251, 16
      %v1438 = vcvt.s32.f32 %v1436
      %v1439 = vcvt.s32.f32 %v1437
      %1440 = vmin.xlane.f32.xlu0 %v1439
      %v1441 = vpop.xlane.xlu0 %1440
      %vm1442 = vcmp.eq.f32.partialorder %v1439, %v1441
      %v1443 = vsel %vm1442, %v1438, inf
      %1444 = vmin.xlane.f32.xlu0 %v1443
      %v1445 = vpop.xlane.xlu0 %1444
      %v1446 = vcvt.f32.s32 %v1445
      %v1447 = vcvt.f32.s32 %v1441
      %v1448 = vshll.u32 %v1447, 16
      %v1449 = vadd.s32 %v1448, %v1446
      %v1450 = vand.u32 %v1252, 65535
      %v1451 = vshra.s32 %v1252, 16
      %v1452 = vcvt.s32.f32 %v1450
      %v1453 = vcvt.s32.f32 %v1451
      %1454 = vmin.xlane.f32.xlu0 %v1453
      %v1455 = vpop.xlane.xlu0 %1454
      %vm1456 = vcmp.eq.f32.partialorder %v1453, %v1455
      %v1457 = vsel %vm1456, %v1452, inf
      %1458 = vmin.xlane.f32.xlu0 %v1457
      %v1459 = vpop.xlane.xlu0 %1458
      %v1460 = vcvt.f32.s32 %v1459
      %v1461 = vcvt.f32.s32 %v1455
      %v1462 = vshll.u32 %v1461, 16
      %v1463 = vadd.s32 %v1462, %v1460
      %v1464 = vand.u32 %v1253, 65535
      %v1465 = vshra.s32 %v1253, 16
      %v1466 = vcvt.s32.f32 %v1464
      %v1467 = vcvt.s32.f32 %v1465
      %1468 = vmin.xlane.f32.xlu0 %v1467
      %v1469 = vpop.xlane.xlu0 %1468
      %vm1470 = vcmp.eq.f32.partialorder %v1467, %v1469
      %v1471 = vsel %vm1470, %v1466, inf
      %1472 = vmin.xlane.f32.xlu0 %v1471
      %v1473 = vpop.xlane.xlu0 %1472
      %v1474 = vcvt.f32.s32 %v1473
      %v1475 = vcvt.f32.s32 %v1469
      %v1476 = vshll.u32 %v1475, 16
      %v1477 = vadd.s32 %v1476, %v1474
      %vm1478 = vcmp.lt.s32.totalorder %v1267, 1073741824
      %v1479 = vsel %vm1478, %v1267, 1073741824
      %vm1480 = vcmp.lt.s32.totalorder %v1281, 1073741824
      %v1481 = vsel %vm1480, %v1281, 1073741824
      %vm1482 = vcmp.lt.s32.totalorder %v1295, 1073741824
      %v1483 = vsel %vm1482, %v1295, 1073741824
      %vm1484 = vcmp.lt.s32.totalorder %v1309, 1073741824
      %v1485 = vsel %vm1484, %v1309, 1073741824
      %vm1486 = vcmp.lt.s32.totalorder %v1323, 1073741824
      %v1487 = vsel %vm1486, %v1323, 1073741824
      %vm1488 = vcmp.lt.s32.totalorder %v1337, 1073741824
      %v1489 = vsel %vm1488, %v1337, 1073741824
      %vm1490 = vcmp.lt.s32.totalorder %v1351, 1073741824
      %v1491 = vsel %vm1490, %v1351, 1073741824
      %vm1492 = vcmp.lt.s32.totalorder %v1365, 1073741824
      %v1493 = vsel %vm1492, %v1365, 1073741824
      %vm1494 = vcmp.lt.s32.totalorder %v1379, 1073741824
      %v1495 = vsel %vm1494, %v1379, 1073741824
      %vm1496 = vcmp.lt.s32.totalorder %v1393, 1073741824
      %v1497 = vsel %vm1496, %v1393, 1073741824
      %vm1498 = vcmp.lt.s32.totalorder %v1407, 1073741824
      %v1499 = vsel %vm1498, %v1407, 1073741824
      %vm1500 = vcmp.lt.s32.totalorder %v1421, 1073741824
      %v1501 = vsel %vm1500, %v1421, 1073741824
      %vm1502 = vcmp.lt.s32.totalorder %v1435, 1073741824
      %v1503 = vsel %vm1502, %v1435, 1073741824
      %vm1504 = vcmp.lt.s32.totalorder %v1449, 1073741824
      %v1505 = vsel %vm1504, %v1449, 1073741824
      %vm1506 = vcmp.lt.s32.totalorder %v1463, 1073741824
      %v1507 = vsel %vm1506, %v1463, 1073741824
      %vm1508 = vcmp.lt.s32.totalorder %v1477, 1073741824
      %v1509 = vsel %vm1508, %v1477, 1073741824
      %vm1510 = vcmp.eq.s32.totalorder %v739, 2
      %vm1511 = vcmp.eq.s32.totalorder %v740, 2
      %vm1512 = vcmp.eq.s32.totalorder %v741, 2
      %vm1513 = vcmp.eq.s32.totalorder %v742, 2
      %vm1514 = vcmp.eq.s32.totalorder %v743, 2
      %vm1515 = vcmp.eq.s32.totalorder %v744, 2
      %vm1516 = vcmp.eq.s32.totalorder %v745, 2
      %vm1517 = vcmp.eq.s32.totalorder %v746, 2
      %vm1518 = vcmp.eq.s32.totalorder %v747, 2
      %vm1519 = vcmp.eq.s32.totalorder %v748, 2
      %vm1520 = vcmp.eq.s32.totalorder %v749, 2
      %vm1521 = vcmp.eq.s32.totalorder %v750, 2
      %vm1522 = vcmp.eq.s32.totalorder %v751, 2
      %vm1523 = vcmp.eq.s32.totalorder %v752, 2
      %vm1524 = vcmp.eq.s32.totalorder %v753, 2
      %vm1525 = vcmp.eq.s32.totalorder %v754, 2
      %vm1526 = vmand %vm806, %vm1510
      %vm1527 = vmand %vm807, %vm1511
      %vm1528 = vmand %vm808, %vm1512
      %vm1529 = vmand %vm809, %vm1513
      %vm1530 = vmand %vm810, %vm1514
      %vm1531 = vmand %vm811, %vm1515
      %vm1532 = vmand %vm812, %vm1516
      %vm1533 = vmand %vm813, %vm1517
      %vm1534 = vmand %vm814, %vm1518
      %vm1535 = vmand %vm815, %vm1519
      %vm1536 = vmand %vm816, %vm1520
      %vm1537 = vmand %vm817, %vm1521
      %vm1538 = vmand %vm818, %vm1522
      %vm1539 = vmand %vm819, %vm1523
      %vm1540 = vmand %vm820, %vm1524
      %vm1541 = vmand %vm821, %vm1525
      %v1542 = vsel %vm1526, %v886, 1073741824
      %v1543 = vsel %vm1527, %v887, 1073741824
      %v1544 = vsel %vm1528, %v888, 1073741824
      %v1545 = vsel %vm1529, %v889, 1073741824
      %v1546 = vsel %vm1530, %v890, 1073741824
      %v1547 = vsel %vm1531, %v891, 1073741824
      %v1548 = vsel %vm1532, %v892, 1073741824
      %v1549 = vsel %vm1533, %v893, 1073741824
      %v1550 = vsel %vm1534, %v894, 1073741824
      %v1551 = vsel %vm1535, %v895, 1073741824
      %v1552 = vsel %vm1536, %v896, 1073741824
      %v1553 = vsel %vm1537, %v897, 1073741824
      %v1554 = vsel %vm1538, %v898, 1073741824
      %v1555 = vsel %vm1539, %v899, 1073741824
      %v1556 = vsel %vm1540, %v900, 1073741824
      %v1557 = vsel %vm1541, %v901, 1073741824
      %v1558 = vand.u32 %v1542, 65535
      %v1559 = vshra.s32 %v1542, 16
      %v1560 = vcvt.s32.f32 %v1558
      %v1561 = vcvt.s32.f32 %v1559
      %1562 = vmin.xlane.f32.xlu0 %v1561
      %v1563 = vpop.xlane.xlu0 %1562
      %vm1564 = vcmp.eq.f32.partialorder %v1561, %v1563
      %v1565 = vsel %vm1564, %v1560, inf
      %1566 = vmin.xlane.f32.xlu0 %v1565
      %v1567 = vpop.xlane.xlu0 %1566
      %v1568 = vcvt.f32.s32 %v1567
      %v1569 = vcvt.f32.s32 %v1563
      %v1570 = vshll.u32 %v1569, 16
      %v1571 = vadd.s32 %v1570, %v1568
      %v1572 = vand.u32 %v1543, 65535
      %v1573 = vshra.s32 %v1543, 16
      %v1574 = vcvt.s32.f32 %v1572
      %v1575 = vcvt.s32.f32 %v1573
      %1576 = vmin.xlane.f32.xlu0 %v1575
      %v1577 = vpop.xlane.xlu0 %1576
      %vm1578 = vcmp.eq.f32.partialorder %v1575, %v1577
      %v1579 = vsel %vm1578, %v1574, inf
      %1580 = vmin.xlane.f32.xlu0 %v1579
      %v1581 = vpop.xlane.xlu0 %1580
      %v1582 = vcvt.f32.s32 %v1581
      %v1583 = vcvt.f32.s32 %v1577
      %v1584 = vshll.u32 %v1583, 16
      %v1585 = vadd.s32 %v1584, %v1582
      %v1586 = vand.u32 %v1544, 65535
      %v1587 = vshra.s32 %v1544, 16
      %v1588 = vcvt.s32.f32 %v1586
      %v1589 = vcvt.s32.f32 %v1587
      %1590 = vmin.xlane.f32.xlu0 %v1589
      %v1591 = vpop.xlane.xlu0 %1590
      %vm1592 = vcmp.eq.f32.partialorder %v1589, %v1591
      %v1593 = vsel %vm1592, %v1588, inf
      %1594 = vmin.xlane.f32.xlu0 %v1593
      %v1595 = vpop.xlane.xlu0 %1594
      %v1596 = vcvt.f32.s32 %v1595
      %v1597 = vcvt.f32.s32 %v1591
      %v1598 = vshll.u32 %v1597, 16
      %v1599 = vadd.s32 %v1598, %v1596
      %v1600 = vand.u32 %v1545, 65535
      %v1601 = vshra.s32 %v1545, 16
      %v1602 = vcvt.s32.f32 %v1600
      %v1603 = vcvt.s32.f32 %v1601
      %1604 = vmin.xlane.f32.xlu0 %v1603
      %v1605 = vpop.xlane.xlu0 %1604
      %vm1606 = vcmp.eq.f32.partialorder %v1603, %v1605
      %v1607 = vsel %vm1606, %v1602, inf
      %1608 = vmin.xlane.f32.xlu0 %v1607
      %v1609 = vpop.xlane.xlu0 %1608
      %v1610 = vcvt.f32.s32 %v1609
      %v1611 = vcvt.f32.s32 %v1605
      %v1612 = vshll.u32 %v1611, 16
      %v1613 = vadd.s32 %v1612, %v1610
      %v1614 = vand.u32 %v1546, 65535
      %v1615 = vshra.s32 %v1546, 16
      %v1616 = vcvt.s32.f32 %v1614
      %v1617 = vcvt.s32.f32 %v1615
      %1618 = vmin.xlane.f32.xlu0 %v1617
      %v1619 = vpop.xlane.xlu0 %1618
      %vm1620 = vcmp.eq.f32.partialorder %v1617, %v1619
      %v1621 = vsel %vm1620, %v1616, inf
      %1622 = vmin.xlane.f32.xlu0 %v1621
      %v1623 = vpop.xlane.xlu0 %1622
      %v1624 = vcvt.f32.s32 %v1623
      %v1625 = vcvt.f32.s32 %v1619
      %v1626 = vshll.u32 %v1625, 16
      %v1627 = vadd.s32 %v1626, %v1624
      %v1628 = vand.u32 %v1547, 65535
      %v1629 = vshra.s32 %v1547, 16
      %v1630 = vcvt.s32.f32 %v1628
      %v1631 = vcvt.s32.f32 %v1629
      %1632 = vmin.xlane.f32.xlu0 %v1631
      %v1633 = vpop.xlane.xlu0 %1632
      %vm1634 = vcmp.eq.f32.partialorder %v1631, %v1633
      %v1635 = vsel %vm1634, %v1630, inf
      %1636 = vmin.xlane.f32.xlu0 %v1635
      %v1637 = vpop.xlane.xlu0 %1636
      %v1638 = vcvt.f32.s32 %v1637
      %v1639 = vcvt.f32.s32 %v1633
      %v1640 = vshll.u32 %v1639, 16
      %v1641 = vadd.s32 %v1640, %v1638
      %v1642 = vand.u32 %v1548, 65535
      %v1643 = vshra.s32 %v1548, 16
      %v1644 = vcvt.s32.f32 %v1642
      %v1645 = vcvt.s32.f32 %v1643
      %1646 = vmin.xlane.f32.xlu0 %v1645
      %v1647 = vpop.xlane.xlu0 %1646
      %vm1648 = vcmp.eq.f32.partialorder %v1645, %v1647
      %v1649 = vsel %vm1648, %v1644, inf
      %1650 = vmin.xlane.f32.xlu0 %v1649
      %v1651 = vpop.xlane.xlu0 %1650
      %v1652 = vcvt.f32.s32 %v1651
      %v1653 = vcvt.f32.s32 %v1647
      %v1654 = vshll.u32 %v1653, 16
      %v1655 = vadd.s32 %v1654, %v1652
      %v1656 = vand.u32 %v1549, 65535
      %v1657 = vshra.s32 %v1549, 16
      %v1658 = vcvt.s32.f32 %v1656
      %v1659 = vcvt.s32.f32 %v1657
      %1660 = vmin.xlane.f32.xlu0 %v1659
      %v1661 = vpop.xlane.xlu0 %1660
      %vm1662 = vcmp.eq.f32.partialorder %v1659, %v1661
      %v1663 = vsel %vm1662, %v1658, inf
      %1664 = vmin.xlane.f32.xlu0 %v1663
      %v1665 = vpop.xlane.xlu0 %1664
      %v1666 = vcvt.f32.s32 %v1665
      %v1667 = vcvt.f32.s32 %v1661
      %v1668 = vshll.u32 %v1667, 16
      %v1669 = vadd.s32 %v1668, %v1666
      %v1670 = vand.u32 %v1550, 65535
      %v1671 = vshra.s32 %v1550, 16
      %v1672 = vcvt.s32.f32 %v1670
      %v1673 = vcvt.s32.f32 %v1671
      %1674 = vmin.xlane.f32.xlu0 %v1673
      %v1675 = vpop.xlane.xlu0 %1674
      %vm1676 = vcmp.eq.f32.partialorder %v1673, %v1675
      %v1677 = vsel %vm1676, %v1672, inf
      %1678 = vmin.xlane.f32.xlu0 %v1677
      %v1679 = vpop.xlane.xlu0 %1678
      %v1680 = vcvt.f32.s32 %v1679
      %v1681 = vcvt.f32.s32 %v1675
      %v1682 = vshll.u32 %v1681, 16
      %v1683 = vadd.s32 %v1682, %v1680
      %v1684 = vand.u32 %v1551, 65535
      %v1685 = vshra.s32 %v1551, 16
      %v1686 = vcvt.s32.f32 %v1684
      %v1687 = vcvt.s32.f32 %v1685
      %1688 = vmin.xlane.f32.xlu0 %v1687
      %v1689 = vpop.xlane.xlu0 %1688
      %vm1690 = vcmp.eq.f32.partialorder %v1687, %v1689
      %v1691 = vsel %vm1690, %v1686, inf
      %1692 = vmin.xlane.f32.xlu0 %v1691
      %v1693 = vpop.xlane.xlu0 %1692
      %v1694 = vcvt.f32.s32 %v1693
      %v1695 = vcvt.f32.s32 %v1689
      %v1696 = vshll.u32 %v1695, 16
      %v1697 = vadd.s32 %v1696, %v1694
      %v1698 = vand.u32 %v1552, 65535
      %v1699 = vshra.s32 %v1552, 16
      %v1700 = vcvt.s32.f32 %v1698
      %v1701 = vcvt.s32.f32 %v1699
      %1702 = vmin.xlane.f32.xlu0 %v1701
      %v1703 = vpop.xlane.xlu0 %1702
      %vm1704 = vcmp.eq.f32.partialorder %v1701, %v1703
      %v1705 = vsel %vm1704, %v1700, inf
      %1706 = vmin.xlane.f32.xlu0 %v1705
      %v1707 = vpop.xlane.xlu0 %1706
      %v1708 = vcvt.f32.s32 %v1707
      %v1709 = vcvt.f32.s32 %v1703
      %v1710 = vshll.u32 %v1709, 16
      %v1711 = vadd.s32 %v1710, %v1708
      %v1712 = vand.u32 %v1553, 65535
      %v1713 = vshra.s32 %v1553, 16
      %v1714 = vcvt.s32.f32 %v1712
      %v1715 = vcvt.s32.f32 %v1713
      %1716 = vmin.xlane.f32.xlu0 %v1715
      %v1717 = vpop.xlane.xlu0 %1716
      %vm1718 = vcmp.eq.f32.partialorder %v1715, %v1717
      %v1719 = vsel %vm1718, %v1714, inf
      %1720 = vmin.xlane.f32.xlu0 %v1719
      %v1721 = vpop.xlane.xlu0 %1720
      %v1722 = vcvt.f32.s32 %v1721
      %v1723 = vcvt.f32.s32 %v1717
      %v1724 = vshll.u32 %v1723, 16
      %v1725 = vadd.s32 %v1724, %v1722
      %v1726 = vand.u32 %v1554, 65535
      %v1727 = vshra.s32 %v1554, 16
      %v1728 = vcvt.s32.f32 %v1726
      %v1729 = vcvt.s32.f32 %v1727
      %1730 = vmin.xlane.f32.xlu0 %v1729
      %v1731 = vpop.xlane.xlu0 %1730
      %vm1732 = vcmp.eq.f32.partialorder %v1729, %v1731
      %v1733 = vsel %vm1732, %v1728, inf
      %1734 = vmin.xlane.f32.xlu0 %v1733
      %v1735 = vpop.xlane.xlu0 %1734
      %v1736 = vcvt.f32.s32 %v1735
      %v1737 = vcvt.f32.s32 %v1731
      %v1738 = vshll.u32 %v1737, 16
      %v1739 = vadd.s32 %v1738, %v1736
      %v1740 = vand.u32 %v1555, 65535
      %v1741 = vshra.s32 %v1555, 16
      %v1742 = vcvt.s32.f32 %v1740
      %v1743 = vcvt.s32.f32 %v1741
      %1744 = vmin.xlane.f32.xlu0 %v1743
      %v1745 = vpop.xlane.xlu0 %1744
      %vm1746 = vcmp.eq.f32.partialorder %v1743, %v1745
      %v1747 = vsel %vm1746, %v1742, inf
      %1748 = vmin.xlane.f32.xlu0 %v1747
      %v1749 = vpop.xlane.xlu0 %1748
      %v1750 = vcvt.f32.s32 %v1749
      %v1751 = vcvt.f32.s32 %v1745
      %v1752 = vshll.u32 %v1751, 16
      %v1753 = vadd.s32 %v1752, %v1750
      %v1754 = vand.u32 %v1556, 65535
      %v1755 = vshra.s32 %v1556, 16
      %v1756 = vcvt.s32.f32 %v1754
      %v1757 = vcvt.s32.f32 %v1755
      %1758 = vmin.xlane.f32.xlu0 %v1757
      %v1759 = vpop.xlane.xlu0 %1758
      %vm1760 = vcmp.eq.f32.partialorder %v1757, %v1759
      %v1761 = vsel %vm1760, %v1756, inf
      %1762 = vmin.xlane.f32.xlu0 %v1761
      %v1763 = vpop.xlane.xlu0 %1762
      %v1764 = vcvt.f32.s32 %v1763
      %v1765 = vcvt.f32.s32 %v1759
      %v1766 = vshll.u32 %v1765, 16
      %v1767 = vadd.s32 %v1766, %v1764
      %v1768 = vand.u32 %v1557, 65535
      %v1769 = vshra.s32 %v1557, 16
      %v1770 = vcvt.s32.f32 %v1768
      %v1771 = vcvt.s32.f32 %v1769
      %1772 = vmin.xlane.f32.xlu0 %v1771
      %v1773 = vpop.xlane.xlu0 %1772
      %vm1774 = vcmp.eq.f32.partialorder %v1771, %v1773
      %v1775 = vsel %vm1774, %v1770, inf
      %1776 = vmin.xlane.f32.xlu0 %v1775
      %v1777 = vpop.xlane.xlu0 %1776
      %v1778 = vcvt.f32.s32 %v1777
      %v1779 = vcvt.f32.s32 %v1773
      %v1780 = vshll.u32 %v1779, 16
      %v1781 = vadd.s32 %v1780, %v1778
      %vm1782 = vcmp.lt.s32.totalorder %v1571, 1073741824
      %v1783 = vsel %vm1782, %v1571, 1073741824
      %vm1784 = vcmp.lt.s32.totalorder %v1585, 1073741824
      %v1785 = vsel %vm1784, %v1585, 1073741824
      %vm1786 = vcmp.lt.s32.totalorder %v1599, 1073741824
      %v1787 = vsel %vm1786, %v1599, 1073741824
      %vm1788 = vcmp.lt.s32.totalorder %v1613, 1073741824
      %v1789 = vsel %vm1788, %v1613, 1073741824
      %vm1790 = vcmp.lt.s32.totalorder %v1627, 1073741824
      %v1791 = vsel %vm1790, %v1627, 1073741824
      %vm1792 = vcmp.lt.s32.totalorder %v1641, 1073741824
      %v1793 = vsel %vm1792, %v1641, 1073741824
      %vm1794 = vcmp.lt.s32.totalorder %v1655, 1073741824
      %v1795 = vsel %vm1794, %v1655, 1073741824
      %vm1796 = vcmp.lt.s32.totalorder %v1669, 1073741824
      %v1797 = vsel %vm1796, %v1669, 1073741824
      %vm1798 = vcmp.lt.s32.totalorder %v1683, 1073741824
      %v1799 = vsel %vm1798, %v1683, 1073741824
      %vm1800 = vcmp.lt.s32.totalorder %v1697, 1073741824
      %v1801 = vsel %vm1800, %v1697, 1073741824
      %vm1802 = vcmp.lt.s32.totalorder %v1711, 1073741824
      %v1803 = vsel %vm1802, %v1711, 1073741824
      %vm1804 = vcmp.lt.s32.totalorder %v1725, 1073741824
      %v1805 = vsel %vm1804, %v1725, 1073741824
      %vm1806 = vcmp.lt.s32.totalorder %v1739, 1073741824
      %v1807 = vsel %vm1806, %v1739, 1073741824
      %vm1808 = vcmp.lt.s32.totalorder %v1753, 1073741824
      %v1809 = vsel %vm1808, %v1753, 1073741824
      %vm1810 = vcmp.lt.s32.totalorder %v1767, 1073741824
      %v1811 = vsel %vm1810, %v1767, 1073741824
      %vm1812 = vcmp.lt.s32.totalorder %v1781, 1073741824
      %v1813 = vsel %vm1812, %v1781, 1073741824
      %vm1814 = vcmp.eq.s32.totalorder %v739, 3
      %vm1815 = vcmp.eq.s32.totalorder %v740, 3
      %vm1816 = vcmp.eq.s32.totalorder %v741, 3
      %vm1817 = vcmp.eq.s32.totalorder %v742, 3
      %vm1818 = vcmp.eq.s32.totalorder %v743, 3
      %vm1819 = vcmp.eq.s32.totalorder %v744, 3
      %vm1820 = vcmp.eq.s32.totalorder %v745, 3
      %vm1821 = vcmp.eq.s32.totalorder %v746, 3
      %vm1822 = vcmp.eq.s32.totalorder %v747, 3
      %vm1823 = vcmp.eq.s32.totalorder %v748, 3
      %vm1824 = vcmp.eq.s32.totalorder %v749, 3
      %vm1825 = vcmp.eq.s32.totalorder %v750, 3
      %vm1826 = vcmp.eq.s32.totalorder %v751, 3
      %vm1827 = vcmp.eq.s32.totalorder %v752, 3
      %vm1828 = vcmp.eq.s32.totalorder %v753, 3
      %vm1829 = vcmp.eq.s32.totalorder %v754, 3
      %vm1830 = vmand %vm806, %vm1814
      %vm1831 = vmand %vm807, %vm1815
      %vm1832 = vmand %vm808, %vm1816
      %vm1833 = vmand %vm809, %vm1817
      %vm1834 = vmand %vm810, %vm1818
      %vm1835 = vmand %vm811, %vm1819
      %vm1836 = vmand %vm812, %vm1820
      %vm1837 = vmand %vm813, %vm1821
      %vm1838 = vmand %vm814, %vm1822
      %vm1839 = vmand %vm815, %vm1823
      %vm1840 = vmand %vm816, %vm1824
      %vm1841 = vmand %vm817, %vm1825
      %vm1842 = vmand %vm818, %vm1826
      %vm1843 = vmand %vm819, %vm1827
      %vm1844 = vmand %vm820, %vm1828
      %vm1845 = vmand %vm821, %vm1829
      %v1846 = vsel %vm1830, %v886, 1073741824
      %v1847 = vsel %vm1831, %v887, 1073741824
      %v1848 = vsel %vm1832, %v888, 1073741824
      %v1849 = vsel %vm1833, %v889, 1073741824
      %v1850 = vsel %vm1834, %v890, 1073741824
      %v1851 = vsel %vm1835, %v891, 1073741824
      %v1852 = vsel %vm1836, %v892, 1073741824
      %v1853 = vsel %vm1837, %v893, 1073741824
      %v1854 = vsel %vm1838, %v894, 1073741824
      %v1855 = vsel %vm1839, %v895, 1073741824
      %v1856 = vsel %vm1840, %v896, 1073741824
      %v1857 = vsel %vm1841, %v897, 1073741824
      %v1858 = vsel %vm1842, %v898, 1073741824
      %v1859 = vsel %vm1843, %v899, 1073741824
      %v1860 = vsel %vm1844, %v900, 1073741824
      %v1861 = vsel %vm1845, %v901, 1073741824
      %v1862 = vand.u32 %v1846, 65535
      %v1863 = vshra.s32 %v1846, 16
      %v1864 = vcvt.s32.f32 %v1862
      %v1865 = vcvt.s32.f32 %v1863
      %1866 = vmin.xlane.f32.xlu0 %v1865
      %v1867 = vpop.xlane.xlu0 %1866
      %vm1868 = vcmp.eq.f32.partialorder %v1865, %v1867
      %v1869 = vsel %vm1868, %v1864, inf
      %1870 = vmin.xlane.f32.xlu0 %v1869
      %v1871 = vpop.xlane.xlu0 %1870
      %v1872 = vcvt.f32.s32 %v1871
      %v1873 = vcvt.f32.s32 %v1867
      %v1874 = vshll.u32 %v1873, 16
      %v1875 = vadd.s32 %v1874, %v1872
      %v1876 = vand.u32 %v1847, 65535
      %v1877 = vshra.s32 %v1847, 16
      %v1878 = vcvt.s32.f32 %v1876
      %v1879 = vcvt.s32.f32 %v1877
      %1880 = vmin.xlane.f32.xlu0 %v1879
      %v1881 = vpop.xlane.xlu0 %1880
      %vm1882 = vcmp.eq.f32.partialorder %v1879, %v1881
      %v1883 = vsel %vm1882, %v1878, inf
      %1884 = vmin.xlane.f32.xlu0 %v1883
      %v1885 = vpop.xlane.xlu0 %1884
      %v1886 = vcvt.f32.s32 %v1885
      %v1887 = vcvt.f32.s32 %v1881
      %v1888 = vshll.u32 %v1887, 16
      %v1889 = vadd.s32 %v1888, %v1886
      %v1890 = vand.u32 %v1848, 65535
      %v1891 = vshra.s32 %v1848, 16
      %v1892 = vcvt.s32.f32 %v1890
      %v1893 = vcvt.s32.f32 %v1891
      %1894 = vmin.xlane.f32.xlu0 %v1893
      %v1895 = vpop.xlane.xlu0 %1894
      %vm1896 = vcmp.eq.f32.partialorder %v1893, %v1895
      %v1897 = vsel %vm1896, %v1892, inf
      %1898 = vmin.xlane.f32.xlu0 %v1897
      %v1899 = vpop.xlane.xlu0 %1898
      %v1900 = vcvt.f32.s32 %v1899
      %v1901 = vcvt.f32.s32 %v1895
      %v1902 = vshll.u32 %v1901, 16
      %v1903 = vadd.s32 %v1902, %v1900
      %v1904 = vand.u32 %v1849, 65535
      %v1905 = vshra.s32 %v1849, 16
      %v1906 = vcvt.s32.f32 %v1904
      %v1907 = vcvt.s32.f32 %v1905
      %1908 = vmin.xlane.f32.xlu0 %v1907
      %v1909 = vpop.xlane.xlu0 %1908
      %vm1910 = vcmp.eq.f32.partialorder %v1907, %v1909
      %v1911 = vsel %vm1910, %v1906, inf
      %1912 = vmin.xlane.f32.xlu0 %v1911
      %v1913 = vpop.xlane.xlu0 %1912
      %v1914 = vcvt.f32.s32 %v1913
      %v1915 = vcvt.f32.s32 %v1909
      %v1916 = vshll.u32 %v1915, 16
      %v1917 = vadd.s32 %v1916, %v1914
      %v1918 = vand.u32 %v1850, 65535
      %v1919 = vshra.s32 %v1850, 16
      %v1920 = vcvt.s32.f32 %v1918
      %v1921 = vcvt.s32.f32 %v1919
      %1922 = vmin.xlane.f32.xlu0 %v1921
      %v1923 = vpop.xlane.xlu0 %1922
      %vm1924 = vcmp.eq.f32.partialorder %v1921, %v1923
      %v1925 = vsel %vm1924, %v1920, inf
      %1926 = vmin.xlane.f32.xlu0 %v1925
      %v1927 = vpop.xlane.xlu0 %1926
      %v1928 = vcvt.f32.s32 %v1927
      %v1929 = vcvt.f32.s32 %v1923
      %v1930 = vshll.u32 %v1929, 16
      %v1931 = vadd.s32 %v1930, %v1928
      %v1932 = vand.u32 %v1851, 65535
      %v1933 = vshra.s32 %v1851, 16
      %v1934 = vcvt.s32.f32 %v1932
      %v1935 = vcvt.s32.f32 %v1933
      %1936 = vmin.xlane.f32.xlu0 %v1935
      %v1937 = vpop.xlane.xlu0 %1936
      %vm1938 = vcmp.eq.f32.partialorder %v1935, %v1937
      %v1939 = vsel %vm1938, %v1934, inf
      %1940 = vmin.xlane.f32.xlu0 %v1939
      %v1941 = vpop.xlane.xlu0 %1940
      %v1942 = vcvt.f32.s32 %v1941
      %v1943 = vcvt.f32.s32 %v1937
      %v1944 = vshll.u32 %v1943, 16
      %v1945 = vadd.s32 %v1944, %v1942
      %v1946 = vand.u32 %v1852, 65535
      %v1947 = vshra.s32 %v1852, 16
      %v1948 = vcvt.s32.f32 %v1946
      %v1949 = vcvt.s32.f32 %v1947
      %1950 = vmin.xlane.f32.xlu0 %v1949
      %v1951 = vpop.xlane.xlu0 %1950
      %vm1952 = vcmp.eq.f32.partialorder %v1949, %v1951
      %v1953 = vsel %vm1952, %v1948, inf
      %1954 = vmin.xlane.f32.xlu0 %v1953
      %v1955 = vpop.xlane.xlu0 %1954
      %v1956 = vcvt.f32.s32 %v1955
      %v1957 = vcvt.f32.s32 %v1951
      %v1958 = vshll.u32 %v1957, 16
      %v1959 = vadd.s32 %v1958, %v1956
      %v1960 = vand.u32 %v1853, 65535
      %v1961 = vshra.s32 %v1853, 16
      %v1962 = vcvt.s32.f32 %v1960
      %v1963 = vcvt.s32.f32 %v1961
      %1964 = vmin.xlane.f32.xlu0 %v1963
      %v1965 = vpop.xlane.xlu0 %1964
      %vm1966 = vcmp.eq.f32.partialorder %v1963, %v1965
      %v1967 = vsel %vm1966, %v1962, inf
      %1968 = vmin.xlane.f32.xlu0 %v1967
      %v1969 = vpop.xlane.xlu0 %1968
      %v1970 = vcvt.f32.s32 %v1969
      %v1971 = vcvt.f32.s32 %v1965
      %v1972 = vshll.u32 %v1971, 16
      %v1973 = vadd.s32 %v1972, %v1970
      %v1974 = vand.u32 %v1854, 65535
      %v1975 = vshra.s32 %v1854, 16
      %v1976 = vcvt.s32.f32 %v1974
      %v1977 = vcvt.s32.f32 %v1975
      %1978 = vmin.xlane.f32.xlu0 %v1977
      %v1979 = vpop.xlane.xlu0 %1978
      %vm1980 = vcmp.eq.f32.partialorder %v1977, %v1979
      %v1981 = vsel %vm1980, %v1976, inf
      %1982 = vmin.xlane.f32.xlu0 %v1981
      %v1983 = vpop.xlane.xlu0 %1982
      %v1984 = vcvt.f32.s32 %v1983
      %v1985 = vcvt.f32.s32 %v1979
      %v1986 = vshll.u32 %v1985, 16
      %v1987 = vadd.s32 %v1986, %v1984
      %v1988 = vand.u32 %v1855, 65535
      %v1989 = vshra.s32 %v1855, 16
      %v1990 = vcvt.s32.f32 %v1988
      %v1991 = vcvt.s32.f32 %v1989
      %1992 = vmin.xlane.f32.xlu0 %v1991
      %v1993 = vpop.xlane.xlu0 %1992
      %vm1994 = vcmp.eq.f32.partialorder %v1991, %v1993
      %v1995 = vsel %vm1994, %v1990, inf
      %1996 = vmin.xlane.f32.xlu0 %v1995
      %v1997 = vpop.xlane.xlu0 %1996
      %v1998 = vcvt.f32.s32 %v1997
      %v1999 = vcvt.f32.s32 %v1993
      %v2000 = vshll.u32 %v1999, 16
      %v2001 = vadd.s32 %v2000, %v1998
      %v2002 = vand.u32 %v1856, 65535
      %v2003 = vshra.s32 %v1856, 16
      %v2004 = vcvt.s32.f32 %v2002
      %v2005 = vcvt.s32.f32 %v2003
      %2006 = vmin.xlane.f32.xlu0 %v2005
      %v2007 = vpop.xlane.xlu0 %2006
      %vm2008 = vcmp.eq.f32.partialorder %v2005, %v2007
      %v2009 = vsel %vm2008, %v2004, inf
      %2010 = vmin.xlane.f32.xlu0 %v2009
      %v2011 = vpop.xlane.xlu0 %2010
      %v2012 = vcvt.f32.s32 %v2011
      %v2013 = vcvt.f32.s32 %v2007
      %v2014 = vshll.u32 %v2013, 16
      %v2015 = vadd.s32 %v2014, %v2012
      %v2016 = vand.u32 %v1857, 65535
      %v2017 = vshra.s32 %v1857, 16
      %v2018 = vcvt.s32.f32 %v2016
      %v2019 = vcvt.s32.f32 %v2017
      %2020 = vmin.xlane.f32.xlu0 %v2019
      %v2021 = vpop.xlane.xlu0 %2020
      %vm2022 = vcmp.eq.f32.partialorder %v2019, %v2021
      %v2023 = vsel %vm2022, %v2018, inf
      %2024 = vmin.xlane.f32.xlu0 %v2023
      %v2025 = vpop.xlane.xlu0 %2024
      %v2026 = vcvt.f32.s32 %v2025
      %v2027 = vcvt.f32.s32 %v2021
      %v2028 = vshll.u32 %v2027, 16
      %v2029 = vadd.s32 %v2028, %v2026
      %v2030 = vand.u32 %v1858, 65535
      %v2031 = vshra.s32 %v1858, 16
      %v2032 = vcvt.s32.f32 %v2030
      %v2033 = vcvt.s32.f32 %v2031
      %2034 = vmin.xlane.f32.xlu0 %v2033
      %v2035 = vpop.xlane.xlu0 %2034
      %vm2036 = vcmp.eq.f32.partialorder %v2033, %v2035
      %v2037 = vsel %vm2036, %v2032, inf
      %2038 = vmin.xlane.f32.xlu0 %v2037
      %v2039 = vpop.xlane.xlu0 %2038
      %v2040 = vcvt.f32.s32 %v2039
      %v2041 = vcvt.f32.s32 %v2035
      %v2042 = vshll.u32 %v2041, 16
      %v2043 = vadd.s32 %v2042, %v2040
      %v2044 = vand.u32 %v1859, 65535
      %v2045 = vshra.s32 %v1859, 16
      %v2046 = vcvt.s32.f32 %v2044
      %v2047 = vcvt.s32.f32 %v2045
      %2048 = vmin.xlane.f32.xlu0 %v2047
      %v2049 = vpop.xlane.xlu0 %2048
      %vm2050 = vcmp.eq.f32.partialorder %v2047, %v2049
      %v2051 = vsel %vm2050, %v2046, inf
      %2052 = vmin.xlane.f32.xlu0 %v2051
      %v2053 = vpop.xlane.xlu0 %2052
      %v2054 = vcvt.f32.s32 %v2053
      %v2055 = vcvt.f32.s32 %v2049
      %v2056 = vshll.u32 %v2055, 16
      %v2057 = vadd.s32 %v2056, %v2054
      %v2058 = vand.u32 %v1860, 65535
      %v2059 = vshra.s32 %v1860, 16
      %v2060 = vcvt.s32.f32 %v2058
      %v2061 = vcvt.s32.f32 %v2059
      %2062 = vmin.xlane.f32.xlu0 %v2061
      %v2063 = vpop.xlane.xlu0 %2062
      %vm2064 = vcmp.eq.f32.partialorder %v2061, %v2063
      %v2065 = vsel %vm2064, %v2060, inf
      %2066 = vmin.xlane.f32.xlu0 %v2065
      %v2067 = vpop.xlane.xlu0 %2066
      %v2068 = vcvt.f32.s32 %v2067
      %v2069 = vcvt.f32.s32 %v2063
      %v2070 = vshll.u32 %v2069, 16
      %v2071 = vadd.s32 %v2070, %v2068
      %v2072 = vand.u32 %v1861, 65535
      %v2073 = vshra.s32 %v1861, 16
      %v2074 = vcvt.s32.f32 %v2072
      %v2075 = vcvt.s32.f32 %v2073
      %2076 = vmin.xlane.f32.xlu0 %v2075
      %v2077 = vpop.xlane.xlu0 %2076
      %vm2078 = vcmp.eq.f32.partialorder %v2075, %v2077
      %v2079 = vsel %vm2078, %v2074, inf
      %2080 = vmin.xlane.f32.xlu0 %v2079
      %v2081 = vpop.xlane.xlu0 %2080
      %v2082 = vcvt.f32.s32 %v2081
      %v2083 = vcvt.f32.s32 %v2077
      %v2084 = vshll.u32 %v2083, 16
      %v2085 = vadd.s32 %v2084, %v2082
      %vm2086 = vcmp.lt.s32.totalorder %v1875, 1073741824
      %v2087 = vsel %vm2086, %v1875, 1073741824
      %vm2088 = vcmp.lt.s32.totalorder %v1889, 1073741824
      %v2089 = vsel %vm2088, %v1889, 1073741824
      %vm2090 = vcmp.lt.s32.totalorder %v1903, 1073741824
      %v2091 = vsel %vm2090, %v1903, 1073741824
      %vm2092 = vcmp.lt.s32.totalorder %v1917, 1073741824
      %v2093 = vsel %vm2092, %v1917, 1073741824
      %vm2094 = vcmp.lt.s32.totalorder %v1931, 1073741824
      %v2095 = vsel %vm2094, %v1931, 1073741824
      %vm2096 = vcmp.lt.s32.totalorder %v1945, 1073741824
      %v2097 = vsel %vm2096, %v1945, 1073741824
      %vm2098 = vcmp.lt.s32.totalorder %v1959, 1073741824
      %v2099 = vsel %vm2098, %v1959, 1073741824
      %vm2100 = vcmp.lt.s32.totalorder %v1973, 1073741824
      %v2101 = vsel %vm2100, %v1973, 1073741824
      %vm2102 = vcmp.lt.s32.totalorder %v1987, 1073741824
      %v2103 = vsel %vm2102, %v1987, 1073741824
      %vm2104 = vcmp.lt.s32.totalorder %v2001, 1073741824
      %v2105 = vsel %vm2104, %v2001, 1073741824
      %vm2106 = vcmp.lt.s32.totalorder %v2015, 1073741824
      %v2107 = vsel %vm2106, %v2015, 1073741824
      %vm2108 = vcmp.lt.s32.totalorder %v2029, 1073741824
      %v2109 = vsel %vm2108, %v2029, 1073741824
      %vm2110 = vcmp.lt.s32.totalorder %v2043, 1073741824
      %v2111 = vsel %vm2110, %v2043, 1073741824
      %vm2112 = vcmp.lt.s32.totalorder %v2057, 1073741824
      %v2113 = vsel %vm2112, %v2057, 1073741824
      %vm2114 = vcmp.lt.s32.totalorder %v2071, 1073741824
      %v2115 = vsel %vm2114, %v2071, 1073741824
      %vm2116 = vcmp.lt.s32.totalorder %v2085, 1073741824
      %v2117 = vsel %vm2116, %v2085, 1073741824
      %vm2118 = vcmp.eq.s32.totalorder %v739, 4
      %vm2119 = vcmp.eq.s32.totalorder %v740, 4
      %vm2120 = vcmp.eq.s32.totalorder %v741, 4
      %vm2121 = vcmp.eq.s32.totalorder %v742, 4
      %vm2122 = vcmp.eq.s32.totalorder %v743, 4
      %vm2123 = vcmp.eq.s32.totalorder %v744, 4
      %vm2124 = vcmp.eq.s32.totalorder %v745, 4
      %vm2125 = vcmp.eq.s32.totalorder %v746, 4
      %vm2126 = vcmp.eq.s32.totalorder %v747, 4
      %vm2127 = vcmp.eq.s32.totalorder %v748, 4
      %vm2128 = vcmp.eq.s32.totalorder %v749, 4
      %vm2129 = vcmp.eq.s32.totalorder %v750, 4
      %vm2130 = vcmp.eq.s32.totalorder %v751, 4
      %vm2131 = vcmp.eq.s32.totalorder %v752, 4
      %vm2132 = vcmp.eq.s32.totalorder %v753, 4
      %vm2133 = vcmp.eq.s32.totalorder %v754, 4
      %vm2134 = vmand %vm806, %vm2118
      %vm2135 = vmand %vm807, %vm2119
      %vm2136 = vmand %vm808, %vm2120
      %vm2137 = vmand %vm809, %vm2121
      %vm2138 = vmand %vm810, %vm2122
      %vm2139 = vmand %vm811, %vm2123
      %vm2140 = vmand %vm812, %vm2124
      %vm2141 = vmand %vm813, %vm2125
      %vm2142 = vmand %vm814, %vm2126
      %vm2143 = vmand %vm815, %vm2127
      %vm2144 = vmand %vm816, %vm2128
      %vm2145 = vmand %vm817, %vm2129
      %vm2146 = vmand %vm818, %vm2130
      %vm2147 = vmand %vm819, %vm2131
      %vm2148 = vmand %vm820, %vm2132
      %vm2149 = vmand %vm821, %vm2133
      %v2150 = vsel %vm2134, %v886, 1073741824
      %v2151 = vsel %vm2135, %v887, 1073741824
      %v2152 = vsel %vm2136, %v888, 1073741824
      %v2153 = vsel %vm2137, %v889, 1073741824
      %v2154 = vsel %vm2138, %v890, 1073741824
      %v2155 = vsel %vm2139, %v891, 1073741824
      %v2156 = vsel %vm2140, %v892, 1073741824
      %v2157 = vsel %vm2141, %v893, 1073741824
      %v2158 = vsel %vm2142, %v894, 1073741824
      %v2159 = vsel %vm2143, %v895, 1073741824
      %v2160 = vsel %vm2144, %v896, 1073741824
      %v2161 = vsel %vm2145, %v897, 1073741824
      %v2162 = vsel %vm2146, %v898, 1073741824
      %v2163 = vsel %vm2147, %v899, 1073741824
      %v2164 = vsel %vm2148, %v900, 1073741824
      %v2165 = vsel %vm2149, %v901, 1073741824
      %v2166 = vand.u32 %v2150, 65535
      %v2167 = vshra.s32 %v2150, 16
      %v2168 = vcvt.s32.f32 %v2166
      %v2169 = vcvt.s32.f32 %v2167
      %2170 = vmin.xlane.f32.xlu0 %v2169
      %v2171 = vpop.xlane.xlu0 %2170
      %vm2172 = vcmp.eq.f32.partialorder %v2169, %v2171
      %v2173 = vsel %vm2172, %v2168, inf
      %2174 = vmin.xlane.f32.xlu0 %v2173
      %v2175 = vpop.xlane.xlu0 %2174
      %v2176 = vcvt.f32.s32 %v2175
      %v2177 = vcvt.f32.s32 %v2171
      %v2178 = vshll.u32 %v2177, 16
      %v2179 = vadd.s32 %v2178, %v2176
      %v2180 = vand.u32 %v2151, 65535
      %v2181 = vshra.s32 %v2151, 16
      %v2182 = vcvt.s32.f32 %v2180
      %v2183 = vcvt.s32.f32 %v2181
      %2184 = vmin.xlane.f32.xlu0 %v2183
      %v2185 = vpop.xlane.xlu0 %2184
      %vm2186 = vcmp.eq.f32.partialorder %v2183, %v2185
      %v2187 = vsel %vm2186, %v2182, inf
      %2188 = vmin.xlane.f32.xlu0 %v2187
      %v2189 = vpop.xlane.xlu0 %2188
      %v2190 = vcvt.f32.s32 %v2189
      %v2191 = vcvt.f32.s32 %v2185
      %v2192 = vshll.u32 %v2191, 16
      %v2193 = vadd.s32 %v2192, %v2190
      %v2194 = vand.u32 %v2152, 65535
      %v2195 = vshra.s32 %v2152, 16
      %v2196 = vcvt.s32.f32 %v2194
      %v2197 = vcvt.s32.f32 %v2195
      %2198 = vmin.xlane.f32.xlu0 %v2197
      %v2199 = vpop.xlane.xlu0 %2198
      %vm2200 = vcmp.eq.f32.partialorder %v2197, %v2199
      %v2201 = vsel %vm2200, %v2196, inf
      %2202 = vmin.xlane.f32.xlu0 %v2201
      %v2203 = vpop.xlane.xlu0 %2202
      %v2204 = vcvt.f32.s32 %v2203
      %v2205 = vcvt.f32.s32 %v2199
      %v2206 = vshll.u32 %v2205, 16
      %v2207 = vadd.s32 %v2206, %v2204
      %v2208 = vand.u32 %v2153, 65535
      %v2209 = vshra.s32 %v2153, 16
      %v2210 = vcvt.s32.f32 %v2208
      %v2211 = vcvt.s32.f32 %v2209
      %2212 = vmin.xlane.f32.xlu0 %v2211
      %v2213 = vpop.xlane.xlu0 %2212
      %vm2214 = vcmp.eq.f32.partialorder %v2211, %v2213
      %v2215 = vsel %vm2214, %v2210, inf
      %2216 = vmin.xlane.f32.xlu0 %v2215
      %v2217 = vpop.xlane.xlu0 %2216
      %v2218 = vcvt.f32.s32 %v2217
      %v2219 = vcvt.f32.s32 %v2213
      %v2220 = vshll.u32 %v2219, 16
      %v2221 = vadd.s32 %v2220, %v2218
      %v2222 = vand.u32 %v2154, 65535
      %v2223 = vshra.s32 %v2154, 16
      %v2224 = vcvt.s32.f32 %v2222
      %v2225 = vcvt.s32.f32 %v2223
      %2226 = vmin.xlane.f32.xlu0 %v2225
      %v2227 = vpop.xlane.xlu0 %2226
      %vm2228 = vcmp.eq.f32.partialorder %v2225, %v2227
      %v2229 = vsel %vm2228, %v2224, inf
      %2230 = vmin.xlane.f32.xlu0 %v2229
      %v2231 = vpop.xlane.xlu0 %2230
      %v2232 = vcvt.f32.s32 %v2231
      %v2233 = vcvt.f32.s32 %v2227
      %v2234 = vshll.u32 %v2233, 16
      %v2235 = vadd.s32 %v2234, %v2232
      %v2236 = vand.u32 %v2155, 65535
      %v2237 = vshra.s32 %v2155, 16
      %v2238 = vcvt.s32.f32 %v2236
      %v2239 = vcvt.s32.f32 %v2237
      %2240 = vmin.xlane.f32.xlu0 %v2239
      %v2241 = vpop.xlane.xlu0 %2240
      %vm2242 = vcmp.eq.f32.partialorder %v2239, %v2241
      %v2243 = vsel %vm2242, %v2238, inf
      %2244 = vmin.xlane.f32.xlu0 %v2243
      %v2245 = vpop.xlane.xlu0 %2244
      %v2246 = vcvt.f32.s32 %v2245
      %v2247 = vcvt.f32.s32 %v2241
      %v2248 = vshll.u32 %v2247, 16
      %v2249 = vadd.s32 %v2248, %v2246
      %v2250 = vand.u32 %v2156, 65535
      %v2251 = vshra.s32 %v2156, 16
      %v2252 = vcvt.s32.f32 %v2250
      %v2253 = vcvt.s32.f32 %v2251
      %2254 = vmin.xlane.f32.xlu0 %v2253
      %v2255 = vpop.xlane.xlu0 %2254
      %vm2256 = vcmp.eq.f32.partialorder %v2253, %v2255
      %v2257 = vsel %vm2256, %v2252, inf
      %2258 = vmin.xlane.f32.xlu0 %v2257
      %v2259 = vpop.xlane.xlu0 %2258
      %v2260 = vcvt.f32.s32 %v2259
      %v2261 = vcvt.f32.s32 %v2255
      %v2262 = vshll.u32 %v2261, 16
      %v2263 = vadd.s32 %v2262, %v2260
      %v2264 = vand.u32 %v2157, 65535
      %v2265 = vshra.s32 %v2157, 16
      %v2266 = vcvt.s32.f32 %v2264
      %v2267 = vcvt.s32.f32 %v2265
      %2268 = vmin.xlane.f32.xlu0 %v2267
      %v2269 = vpop.xlane.xlu0 %2268
      %vm2270 = vcmp.eq.f32.partialorder %v2267, %v2269
      %v2271 = vsel %vm2270, %v2266, inf
      %2272 = vmin.xlane.f32.xlu0 %v2271
      %v2273 = vpop.xlane.xlu0 %2272
      %v2274 = vcvt.f32.s32 %v2273
      %v2275 = vcvt.f32.s32 %v2269
      %v2276 = vshll.u32 %v2275, 16
      %v2277 = vadd.s32 %v2276, %v2274
      %v2278 = vand.u32 %v2158, 65535
      %v2279 = vshra.s32 %v2158, 16
      %v2280 = vcvt.s32.f32 %v2278
      %v2281 = vcvt.s32.f32 %v2279
      %2282 = vmin.xlane.f32.xlu0 %v2281
      %v2283 = vpop.xlane.xlu0 %2282
      %vm2284 = vcmp.eq.f32.partialorder %v2281, %v2283
      %v2285 = vsel %vm2284, %v2280, inf
      %2286 = vmin.xlane.f32.xlu0 %v2285
      %v2287 = vpop.xlane.xlu0 %2286
      %v2288 = vcvt.f32.s32 %v2287
      %v2289 = vcvt.f32.s32 %v2283
      %v2290 = vshll.u32 %v2289, 16
      %v2291 = vadd.s32 %v2290, %v2288
      %v2292 = vand.u32 %v2159, 65535
      %v2293 = vshra.s32 %v2159, 16
      %v2294 = vcvt.s32.f32 %v2292
      %v2295 = vcvt.s32.f32 %v2293
      %2296 = vmin.xlane.f32.xlu0 %v2295
      %v2297 = vpop.xlane.xlu0 %2296
      %vm2298 = vcmp.eq.f32.partialorder %v2295, %v2297
      %v2299 = vsel %vm2298, %v2294, inf
      %2300 = vmin.xlane.f32.xlu0 %v2299
      %v2301 = vpop.xlane.xlu0 %2300
      %v2302 = vcvt.f32.s32 %v2301
      %v2303 = vcvt.f32.s32 %v2297
      %v2304 = vshll.u32 %v2303, 16
      %v2305 = vadd.s32 %v2304, %v2302
      %v2306 = vand.u32 %v2160, 65535
      %v2307 = vshra.s32 %v2160, 16
      %v2308 = vcvt.s32.f32 %v2306
      %v2309 = vcvt.s32.f32 %v2307
      %2310 = vmin.xlane.f32.xlu0 %v2309
      %v2311 = vpop.xlane.xlu0 %2310
      %vm2312 = vcmp.eq.f32.partialorder %v2309, %v2311
      %v2313 = vsel %vm2312, %v2308, inf
      %2314 = vmin.xlane.f32.xlu0 %v2313
      %v2315 = vpop.xlane.xlu0 %2314
      %v2316 = vcvt.f32.s32 %v2315
      %v2317 = vcvt.f32.s32 %v2311
      %v2318 = vshll.u32 %v2317, 16
      %v2319 = vadd.s32 %v2318, %v2316
      %v2320 = vand.u32 %v2161, 65535
      %v2321 = vshra.s32 %v2161, 16
      %v2322 = vcvt.s32.f32 %v2320
      %v2323 = vcvt.s32.f32 %v2321
      %2324 = vmin.xlane.f32.xlu0 %v2323
      %v2325 = vpop.xlane.xlu0 %2324
      %vm2326 = vcmp.eq.f32.partialorder %v2323, %v2325
      %v2327 = vsel %vm2326, %v2322, inf
      %2328 = vmin.xlane.f32.xlu0 %v2327
      %v2329 = vpop.xlane.xlu0 %2328
      %v2330 = vcvt.f32.s32 %v2329
      %v2331 = vcvt.f32.s32 %v2325
      %v2332 = vshll.u32 %v2331, 16
      %v2333 = vadd.s32 %v2332, %v2330
      %v2334 = vand.u32 %v2162, 65535
      %v2335 = vshra.s32 %v2162, 16
      %v2336 = vcvt.s32.f32 %v2334
      %v2337 = vcvt.s32.f32 %v2335
      %2338 = vmin.xlane.f32.xlu0 %v2337
      %v2339 = vpop.xlane.xlu0 %2338
      %vm2340 = vcmp.eq.f32.partialorder %v2337, %v2339
      %v2341 = vsel %vm2340, %v2336, inf
      %2342 = vmin.xlane.f32.xlu0 %v2341
      %v2343 = vpop.xlane.xlu0 %2342
      %v2344 = vcvt.f32.s32 %v2343
      %v2345 = vcvt.f32.s32 %v2339
      %v2346 = vshll.u32 %v2345, 16
      %v2347 = vadd.s32 %v2346, %v2344
      %v2348 = vand.u32 %v2163, 65535
      %v2349 = vshra.s32 %v2163, 16
      %v2350 = vcvt.s32.f32 %v2348
      %v2351 = vcvt.s32.f32 %v2349
      %2352 = vmin.xlane.f32.xlu0 %v2351
      %v2353 = vpop.xlane.xlu0 %2352
      %vm2354 = vcmp.eq.f32.partialorder %v2351, %v2353
      %v2355 = vsel %vm2354, %v2350, inf
      %2356 = vmin.xlane.f32.xlu0 %v2355
      %v2357 = vpop.xlane.xlu0 %2356
      %v2358 = vcvt.f32.s32 %v2357
      %v2359 = vcvt.f32.s32 %v2353
      %v2360 = vshll.u32 %v2359, 16
      %v2361 = vadd.s32 %v2360, %v2358
      %v2362 = vand.u32 %v2164, 65535
      %v2363 = vshra.s32 %v2164, 16
      %v2364 = vcvt.s32.f32 %v2362
      %v2365 = vcvt.s32.f32 %v2363
      %2366 = vmin.xlane.f32.xlu0 %v2365
      %v2367 = vpop.xlane.xlu0 %2366
      %vm2368 = vcmp.eq.f32.partialorder %v2365, %v2367
      %v2369 = vsel %vm2368, %v2364, inf
      %2370 = vmin.xlane.f32.xlu0 %v2369
      %v2371 = vpop.xlane.xlu0 %2370
      %v2372 = vcvt.f32.s32 %v2371
      %v2373 = vcvt.f32.s32 %v2367
      %v2374 = vshll.u32 %v2373, 16
      %v2375 = vadd.s32 %v2374, %v2372
      %v2376 = vand.u32 %v2165, 65535
      %v2377 = vshra.s32 %v2165, 16
      %v2378 = vcvt.s32.f32 %v2376
      %v2379 = vcvt.s32.f32 %v2377
      %2380 = vmin.xlane.f32.xlu0 %v2379
      %v2381 = vpop.xlane.xlu0 %2380
      %vm2382 = vcmp.eq.f32.partialorder %v2379, %v2381
      %v2383 = vsel %vm2382, %v2378, inf
      %2384 = vmin.xlane.f32.xlu0 %v2383
      %v2385 = vpop.xlane.xlu0 %2384
      %v2386 = vcvt.f32.s32 %v2385
      %v2387 = vcvt.f32.s32 %v2381
      %v2388 = vshll.u32 %v2387, 16
      %v2389 = vadd.s32 %v2388, %v2386
      %vm2390 = vcmp.lt.s32.totalorder %v2179, 1073741824
      %v2391 = vsel %vm2390, %v2179, 1073741824
      %vm2392 = vcmp.lt.s32.totalorder %v2193, 1073741824
      %v2393 = vsel %vm2392, %v2193, 1073741824
      %vm2394 = vcmp.lt.s32.totalorder %v2207, 1073741824
      %v2395 = vsel %vm2394, %v2207, 1073741824
      %vm2396 = vcmp.lt.s32.totalorder %v2221, 1073741824
      %v2397 = vsel %vm2396, %v2221, 1073741824
      %vm2398 = vcmp.lt.s32.totalorder %v2235, 1073741824
      %v2399 = vsel %vm2398, %v2235, 1073741824
      %vm2400 = vcmp.lt.s32.totalorder %v2249, 1073741824
      %v2401 = vsel %vm2400, %v2249, 1073741824
      %vm2402 = vcmp.lt.s32.totalorder %v2263, 1073741824
      %v2403 = vsel %vm2402, %v2263, 1073741824
      %vm2404 = vcmp.lt.s32.totalorder %v2277, 1073741824
      %v2405 = vsel %vm2404, %v2277, 1073741824
      %vm2406 = vcmp.lt.s32.totalorder %v2291, 1073741824
      %v2407 = vsel %vm2406, %v2291, 1073741824
      %vm2408 = vcmp.lt.s32.totalorder %v2305, 1073741824
      %v2409 = vsel %vm2408, %v2305, 1073741824
      %vm2410 = vcmp.lt.s32.totalorder %v2319, 1073741824
      %v2411 = vsel %vm2410, %v2319, 1073741824
      %vm2412 = vcmp.lt.s32.totalorder %v2333, 1073741824
      %v2413 = vsel %vm2412, %v2333, 1073741824
      %vm2414 = vcmp.lt.s32.totalorder %v2347, 1073741824
      %v2415 = vsel %vm2414, %v2347, 1073741824
      %vm2416 = vcmp.lt.s32.totalorder %v2361, 1073741824
      %v2417 = vsel %vm2416, %v2361, 1073741824
      %vm2418 = vcmp.lt.s32.totalorder %v2375, 1073741824
      %v2419 = vsel %vm2418, %v2375, 1073741824
      %vm2420 = vcmp.lt.s32.totalorder %v2389, 1073741824
      %v2421 = vsel %vm2420, %v2389, 1073741824
      %vm2422 = vcmp.eq.s32.totalorder %v739, 5
      %vm2423 = vcmp.eq.s32.totalorder %v740, 5
      %vm2424 = vcmp.eq.s32.totalorder %v741, 5
      %vm2425 = vcmp.eq.s32.totalorder %v742, 5
      %vm2426 = vcmp.eq.s32.totalorder %v743, 5
      %vm2427 = vcmp.eq.s32.totalorder %v744, 5
      %vm2428 = vcmp.eq.s32.totalorder %v745, 5
      %vm2429 = vcmp.eq.s32.totalorder %v746, 5
      %vm2430 = vcmp.eq.s32.totalorder %v747, 5
      %vm2431 = vcmp.eq.s32.totalorder %v748, 5
      %vm2432 = vcmp.eq.s32.totalorder %v749, 5
      %vm2433 = vcmp.eq.s32.totalorder %v750, 5
      %vm2434 = vcmp.eq.s32.totalorder %v751, 5
      %vm2435 = vcmp.eq.s32.totalorder %v752, 5
      %vm2436 = vcmp.eq.s32.totalorder %v753, 5
      %vm2437 = vcmp.eq.s32.totalorder %v754, 5
      %vm2438 = vmand %vm806, %vm2422
      %vm2439 = vmand %vm807, %vm2423
      %vm2440 = vmand %vm808, %vm2424
      %vm2441 = vmand %vm809, %vm2425
      %vm2442 = vmand %vm810, %vm2426
      %vm2443 = vmand %vm811, %vm2427
      %vm2444 = vmand %vm812, %vm2428
      %vm2445 = vmand %vm813, %vm2429
      %vm2446 = vmand %vm814, %vm2430
      %vm2447 = vmand %vm815, %vm2431
      %vm2448 = vmand %vm816, %vm2432
      %vm2449 = vmand %vm817, %vm2433
      %vm2450 = vmand %vm818, %vm2434
      %vm2451 = vmand %vm819, %vm2435
      %vm2452 = vmand %vm820, %vm2436
      %vm2453 = vmand %vm821, %vm2437
      %v2454 = vsel %vm2438, %v886, 1073741824
      %v2455 = vsel %vm2439, %v887, 1073741824
      %v2456 = vsel %vm2440, %v888, 1073741824
      %v2457 = vsel %vm2441, %v889, 1073741824
      %v2458 = vsel %vm2442, %v890, 1073741824
      %v2459 = vsel %vm2443, %v891, 1073741824
      %v2460 = vsel %vm2444, %v892, 1073741824
      %v2461 = vsel %vm2445, %v893, 1073741824
      %v2462 = vsel %vm2446, %v894, 1073741824
      %v2463 = vsel %vm2447, %v895, 1073741824
      %v2464 = vsel %vm2448, %v896, 1073741824
      %v2465 = vsel %vm2449, %v897, 1073741824
      %v2466 = vsel %vm2450, %v898, 1073741824
      %v2467 = vsel %vm2451, %v899, 1073741824
      %v2468 = vsel %vm2452, %v900, 1073741824
      %v2469 = vsel %vm2453, %v901, 1073741824
      %v2470 = vand.u32 %v2454, 65535
      %v2471 = vshra.s32 %v2454, 16
      %v2472 = vcvt.s32.f32 %v2470
      %v2473 = vcvt.s32.f32 %v2471
      %2474 = vmin.xlane.f32.xlu0 %v2473
      %v2475 = vpop.xlane.xlu0 %2474
      %vm2476 = vcmp.eq.f32.partialorder %v2473, %v2475
      %v2477 = vsel %vm2476, %v2472, inf
      %2478 = vmin.xlane.f32.xlu0 %v2477
      %v2479 = vpop.xlane.xlu0 %2478
      %v2480 = vcvt.f32.s32 %v2479
      %v2481 = vcvt.f32.s32 %v2475
      %v2482 = vshll.u32 %v2481, 16
      %v2483 = vadd.s32 %v2482, %v2480
      %v2484 = vand.u32 %v2455, 65535
      %v2485 = vshra.s32 %v2455, 16
      %v2486 = vcvt.s32.f32 %v2484
      %v2487 = vcvt.s32.f32 %v2485
      %2488 = vmin.xlane.f32.xlu0 %v2487
      %v2489 = vpop.xlane.xlu0 %2488
      %vm2490 = vcmp.eq.f32.partialorder %v2487, %v2489
      %v2491 = vsel %vm2490, %v2486, inf
      %2492 = vmin.xlane.f32.xlu0 %v2491
      %v2493 = vpop.xlane.xlu0 %2492
      %v2494 = vcvt.f32.s32 %v2493
      %v2495 = vcvt.f32.s32 %v2489
      %v2496 = vshll.u32 %v2495, 16
      %v2497 = vadd.s32 %v2496, %v2494
      %v2498 = vand.u32 %v2456, 65535
      %v2499 = vshra.s32 %v2456, 16
      %v2500 = vcvt.s32.f32 %v2498
      %v2501 = vcvt.s32.f32 %v2499
      %2502 = vmin.xlane.f32.xlu0 %v2501
      %v2503 = vpop.xlane.xlu0 %2502
      %vm2504 = vcmp.eq.f32.partialorder %v2501, %v2503
      %v2505 = vsel %vm2504, %v2500, inf
      %2506 = vmin.xlane.f32.xlu0 %v2505
      %v2507 = vpop.xlane.xlu0 %2506
      %v2508 = vcvt.f32.s32 %v2507
      %v2509 = vcvt.f32.s32 %v2503
      %v2510 = vshll.u32 %v2509, 16
      %v2511 = vadd.s32 %v2510, %v2508
      %v2512 = vand.u32 %v2457, 65535
      %v2513 = vshra.s32 %v2457, 16
      %v2514 = vcvt.s32.f32 %v2512
      %v2515 = vcvt.s32.f32 %v2513
      %2516 = vmin.xlane.f32.xlu0 %v2515
      %v2517 = vpop.xlane.xlu0 %2516
      %vm2518 = vcmp.eq.f32.partialorder %v2515, %v2517
      %v2519 = vsel %vm2518, %v2514, inf
      %2520 = vmin.xlane.f32.xlu0 %v2519
      %v2521 = vpop.xlane.xlu0 %2520
      %v2522 = vcvt.f32.s32 %v2521
      %v2523 = vcvt.f32.s32 %v2517
      %v2524 = vshll.u32 %v2523, 16
      %v2525 = vadd.s32 %v2524, %v2522
      %v2526 = vand.u32 %v2458, 65535
      %v2527 = vshra.s32 %v2458, 16
      %v2528 = vcvt.s32.f32 %v2526
      %v2529 = vcvt.s32.f32 %v2527
      %2530 = vmin.xlane.f32.xlu0 %v2529
      %v2531 = vpop.xlane.xlu0 %2530
      %vm2532 = vcmp.eq.f32.partialorder %v2529, %v2531
      %v2533 = vsel %vm2532, %v2528, inf
      %2534 = vmin.xlane.f32.xlu0 %v2533
      %v2535 = vpop.xlane.xlu0 %2534
      %v2536 = vcvt.f32.s32 %v2535
      %v2537 = vcvt.f32.s32 %v2531
      %v2538 = vshll.u32 %v2537, 16
      %v2539 = vadd.s32 %v2538, %v2536
      %v2540 = vand.u32 %v2459, 65535
      %v2541 = vshra.s32 %v2459, 16
      %v2542 = vcvt.s32.f32 %v2540
      %v2543 = vcvt.s32.f32 %v2541
      %2544 = vmin.xlane.f32.xlu0 %v2543
      %v2545 = vpop.xlane.xlu0 %2544
      %vm2546 = vcmp.eq.f32.partialorder %v2543, %v2545
      %v2547 = vsel %vm2546, %v2542, inf
      %2548 = vmin.xlane.f32.xlu0 %v2547
      %v2549 = vpop.xlane.xlu0 %2548
      %v2550 = vcvt.f32.s32 %v2549
      %v2551 = vcvt.f32.s32 %v2545
      %v2552 = vshll.u32 %v2551, 16
      %v2553 = vadd.s32 %v2552, %v2550
      %v2554 = vand.u32 %v2460, 65535
      %v2555 = vshra.s32 %v2460, 16
      %v2556 = vcvt.s32.f32 %v2554
      %v2557 = vcvt.s32.f32 %v2555
      %2558 = vmin.xlane.f32.xlu0 %v2557
      %v2559 = vpop.xlane.xlu0 %2558
      %vm2560 = vcmp.eq.f32.partialorder %v2557, %v2559
      %v2561 = vsel %vm2560, %v2556, inf
      %2562 = vmin.xlane.f32.xlu0 %v2561
      %v2563 = vpop.xlane.xlu0 %2562
      %v2564 = vcvt.f32.s32 %v2563
      %v2565 = vcvt.f32.s32 %v2559
      %v2566 = vshll.u32 %v2565, 16
      %v2567 = vadd.s32 %v2566, %v2564
      %v2568 = vand.u32 %v2461, 65535
      %v2569 = vshra.s32 %v2461, 16
      %v2570 = vcvt.s32.f32 %v2568
      %v2571 = vcvt.s32.f32 %v2569
      %2572 = vmin.xlane.f32.xlu0 %v2571
      %v2573 = vpop.xlane.xlu0 %2572
      %vm2574 = vcmp.eq.f32.partialorder %v2571, %v2573
      %v2575 = vsel %vm2574, %v2570, inf
      %2576 = vmin.xlane.f32.xlu0 %v2575
      %v2577 = vpop.xlane.xlu0 %2576
      %v2578 = vcvt.f32.s32 %v2577
      %v2579 = vcvt.f32.s32 %v2573
      %v2580 = vshll.u32 %v2579, 16
      %v2581 = vadd.s32 %v2580, %v2578
      %v2582 = vand.u32 %v2462, 65535
      %v2583 = vshra.s32 %v2462, 16
      %v2584 = vcvt.s32.f32 %v2582
      %v2585 = vcvt.s32.f32 %v2583
      %2586 = vmin.xlane.f32.xlu0 %v2585
      %v2587 = vpop.xlane.xlu0 %2586
      %vm2588 = vcmp.eq.f32.partialorder %v2585, %v2587
      %v2589 = vsel %vm2588, %v2584, inf
      %2590 = vmin.xlane.f32.xlu0 %v2589
      %v2591 = vpop.xlane.xlu0 %2590
      %v2592 = vcvt.f32.s32 %v2591
      %v2593 = vcvt.f32.s32 %v2587
      %v2594 = vshll.u32 %v2593, 16
      %v2595 = vadd.s32 %v2594, %v2592
      %v2596 = vand.u32 %v2463, 65535
      %v2597 = vshra.s32 %v2463, 16
      %v2598 = vcvt.s32.f32 %v2596
      %v2599 = vcvt.s32.f32 %v2597
      %2600 = vmin.xlane.f32.xlu0 %v2599
      %v2601 = vpop.xlane.xlu0 %2600
      %vm2602 = vcmp.eq.f32.partialorder %v2599, %v2601
      %v2603 = vsel %vm2602, %v2598, inf
      %2604 = vmin.xlane.f32.xlu0 %v2603
      %v2605 = vpop.xlane.xlu0 %2604
      %v2606 = vcvt.f32.s32 %v2605
      %v2607 = vcvt.f32.s32 %v2601
      %v2608 = vshll.u32 %v2607, 16
      %v2609 = vadd.s32 %v2608, %v2606
      %v2610 = vand.u32 %v2464, 65535
      %v2611 = vshra.s32 %v2464, 16
      %v2612 = vcvt.s32.f32 %v2610
      %v2613 = vcvt.s32.f32 %v2611
      %2614 = vmin.xlane.f32.xlu0 %v2613
      %v2615 = vpop.xlane.xlu0 %2614
      %vm2616 = vcmp.eq.f32.partialorder %v2613, %v2615
      %v2617 = vsel %vm2616, %v2612, inf
      %2618 = vmin.xlane.f32.xlu0 %v2617
      %v2619 = vpop.xlane.xlu0 %2618
      %v2620 = vcvt.f32.s32 %v2619
      %v2621 = vcvt.f32.s32 %v2615
      %v2622 = vshll.u32 %v2621, 16
      %v2623 = vadd.s32 %v2622, %v2620
      %v2624 = vand.u32 %v2465, 65535
      %v2625 = vshra.s32 %v2465, 16
      %v2626 = vcvt.s32.f32 %v2624
      %v2627 = vcvt.s32.f32 %v2625
      %2628 = vmin.xlane.f32.xlu0 %v2627
      %v2629 = vpop.xlane.xlu0 %2628
      %vm2630 = vcmp.eq.f32.partialorder %v2627, %v2629
      %v2631 = vsel %vm2630, %v2626, inf
      %2632 = vmin.xlane.f32.xlu0 %v2631
      %v2633 = vpop.xlane.xlu0 %2632
      %v2634 = vcvt.f32.s32 %v2633
      %v2635 = vcvt.f32.s32 %v2629
      %v2636 = vshll.u32 %v2635, 16
      %v2637 = vadd.s32 %v2636, %v2634
      %v2638 = vand.u32 %v2466, 65535
      %v2639 = vshra.s32 %v2466, 16
      %v2640 = vcvt.s32.f32 %v2638
      %v2641 = vcvt.s32.f32 %v2639
      %2642 = vmin.xlane.f32.xlu0 %v2641
      %v2643 = vpop.xlane.xlu0 %2642
      %vm2644 = vcmp.eq.f32.partialorder %v2641, %v2643
      %v2645 = vsel %vm2644, %v2640, inf
      %2646 = vmin.xlane.f32.xlu0 %v2645
      %v2647 = vpop.xlane.xlu0 %2646
      %v2648 = vcvt.f32.s32 %v2647
      %v2649 = vcvt.f32.s32 %v2643
      %v2650 = vshll.u32 %v2649, 16
      %v2651 = vadd.s32 %v2650, %v2648
      %v2652 = vand.u32 %v2467, 65535
      %v2653 = vshra.s32 %v2467, 16
      %v2654 = vcvt.s32.f32 %v2652
      %v2655 = vcvt.s32.f32 %v2653
      %2656 = vmin.xlane.f32.xlu0 %v2655
      %v2657 = vpop.xlane.xlu0 %2656
      %vm2658 = vcmp.eq.f32.partialorder %v2655, %v2657
      %v2659 = vsel %vm2658, %v2654, inf
      %2660 = vmin.xlane.f32.xlu0 %v2659
      %v2661 = vpop.xlane.xlu0 %2660
      %v2662 = vcvt.f32.s32 %v2661
      %v2663 = vcvt.f32.s32 %v2657
      %v2664 = vshll.u32 %v2663, 16
      %v2665 = vadd.s32 %v2664, %v2662
      %v2666 = vand.u32 %v2468, 65535
      %v2667 = vshra.s32 %v2468, 16
      %v2668 = vcvt.s32.f32 %v2666
      %v2669 = vcvt.s32.f32 %v2667
      %2670 = vmin.xlane.f32.xlu0 %v2669
      %v2671 = vpop.xlane.xlu0 %2670
      %vm2672 = vcmp.eq.f32.partialorder %v2669, %v2671
      %v2673 = vsel %vm2672, %v2668, inf
      %2674 = vmin.xlane.f32.xlu0 %v2673
      %v2675 = vpop.xlane.xlu0 %2674
      %v2676 = vcvt.f32.s32 %v2675
      %v2677 = vcvt.f32.s32 %v2671
      %v2678 = vshll.u32 %v2677, 16
      %v2679 = vadd.s32 %v2678, %v2676
      %v2680 = vand.u32 %v2469, 65535
      %v2681 = vshra.s32 %v2469, 16
      %v2682 = vcvt.s32.f32 %v2680
      %v2683 = vcvt.s32.f32 %v2681
      %2684 = vmin.xlane.f32.xlu0 %v2683
      %v2685 = vpop.xlane.xlu0 %2684
      %vm2686 = vcmp.eq.f32.partialorder %v2683, %v2685
      %v2687 = vsel %vm2686, %v2682, inf
      %2688 = vmin.xlane.f32.xlu0 %v2687
      %v2689 = vpop.xlane.xlu0 %2688
      %v2690 = vcvt.f32.s32 %v2689
      %v2691 = vcvt.f32.s32 %v2685
      %v2692 = vshll.u32 %v2691, 16
      %v2693 = vadd.s32 %v2692, %v2690
      %vm2694 = vcmp.lt.s32.totalorder %v2483, 1073741824
      %v2695 = vsel %vm2694, %v2483, 1073741824
      %vm2696 = vcmp.lt.s32.totalorder %v2497, 1073741824
      %v2697 = vsel %vm2696, %v2497, 1073741824
      %vm2698 = vcmp.lt.s32.totalorder %v2511, 1073741824
      %v2699 = vsel %vm2698, %v2511, 1073741824
      %vm2700 = vcmp.lt.s32.totalorder %v2525, 1073741824
      %v2701 = vsel %vm2700, %v2525, 1073741824
      %vm2702 = vcmp.lt.s32.totalorder %v2539, 1073741824
      %v2703 = vsel %vm2702, %v2539, 1073741824
      %vm2704 = vcmp.lt.s32.totalorder %v2553, 1073741824
      %v2705 = vsel %vm2704, %v2553, 1073741824
      %vm2706 = vcmp.lt.s32.totalorder %v2567, 1073741824
      %v2707 = vsel %vm2706, %v2567, 1073741824
      %vm2708 = vcmp.lt.s32.totalorder %v2581, 1073741824
      %v2709 = vsel %vm2708, %v2581, 1073741824
      %vm2710 = vcmp.lt.s32.totalorder %v2595, 1073741824
      %v2711 = vsel %vm2710, %v2595, 1073741824
      %vm2712 = vcmp.lt.s32.totalorder %v2609, 1073741824
      %v2713 = vsel %vm2712, %v2609, 1073741824
      %vm2714 = vcmp.lt.s32.totalorder %v2623, 1073741824
      %v2715 = vsel %vm2714, %v2623, 1073741824
      %vm2716 = vcmp.lt.s32.totalorder %v2637, 1073741824
      %v2717 = vsel %vm2716, %v2637, 1073741824
      %vm2718 = vcmp.lt.s32.totalorder %v2651, 1073741824
      %v2719 = vsel %vm2718, %v2651, 1073741824
      %vm2720 = vcmp.lt.s32.totalorder %v2665, 1073741824
      %v2721 = vsel %vm2720, %v2665, 1073741824
      %vm2722 = vcmp.lt.s32.totalorder %v2679, 1073741824
      %v2723 = vsel %vm2722, %v2679, 1073741824
      %vm2724 = vcmp.lt.s32.totalorder %v2693, 1073741824
      %v2725 = vsel %vm2724, %v2693, 1073741824
      %vm2726 = vcmp.eq.s32.totalorder %v739, 6
      %vm2727 = vcmp.eq.s32.totalorder %v740, 6
      %vm2728 = vcmp.eq.s32.totalorder %v741, 6
      %vm2729 = vcmp.eq.s32.totalorder %v742, 6
      %vm2730 = vcmp.eq.s32.totalorder %v743, 6
      %vm2731 = vcmp.eq.s32.totalorder %v744, 6
      %vm2732 = vcmp.eq.s32.totalorder %v745, 6
      %vm2733 = vcmp.eq.s32.totalorder %v746, 6
      %vm2734 = vcmp.eq.s32.totalorder %v747, 6
      %vm2735 = vcmp.eq.s32.totalorder %v748, 6
      %vm2736 = vcmp.eq.s32.totalorder %v749, 6
      %vm2737 = vcmp.eq.s32.totalorder %v750, 6
      %vm2738 = vcmp.eq.s32.totalorder %v751, 6
      %vm2739 = vcmp.eq.s32.totalorder %v752, 6
      %vm2740 = vcmp.eq.s32.totalorder %v753, 6
      %vm2741 = vcmp.eq.s32.totalorder %v754, 6
      %vm2742 = vmand %vm806, %vm2726
      %vm2743 = vmand %vm807, %vm2727
      %vm2744 = vmand %vm808, %vm2728
      %vm2745 = vmand %vm809, %vm2729
      %vm2746 = vmand %vm810, %vm2730
      %vm2747 = vmand %vm811, %vm2731
      %vm2748 = vmand %vm812, %vm2732
      %vm2749 = vmand %vm813, %vm2733
      %vm2750 = vmand %vm814, %vm2734
      %vm2751 = vmand %vm815, %vm2735
      %vm2752 = vmand %vm816, %vm2736
      %vm2753 = vmand %vm817, %vm2737
      %vm2754 = vmand %vm818, %vm2738
      %vm2755 = vmand %vm819, %vm2739
      %vm2756 = vmand %vm820, %vm2740
      %vm2757 = vmand %vm821, %vm2741
      %v2758 = vsel %vm2742, %v886, 1073741824
      %v2759 = vsel %vm2743, %v887, 1073741824
      %v2760 = vsel %vm2744, %v888, 1073741824
      %v2761 = vsel %vm2745, %v889, 1073741824
      %v2762 = vsel %vm2746, %v890, 1073741824
      %v2763 = vsel %vm2747, %v891, 1073741824
      %v2764 = vsel %vm2748, %v892, 1073741824
      %v2765 = vsel %vm2749, %v893, 1073741824
      %v2766 = vsel %vm2750, %v894, 1073741824
      %v2767 = vsel %vm2751, %v895, 1073741824
      %v2768 = vsel %vm2752, %v896, 1073741824
      %v2769 = vsel %vm2753, %v897, 1073741824
      %v2770 = vsel %vm2754, %v898, 1073741824
      %v2771 = vsel %vm2755, %v899, 1073741824
      %v2772 = vsel %vm2756, %v900, 1073741824
      %v2773 = vsel %vm2757, %v901, 1073741824
      %v2774 = vand.u32 %v2758, 65535
      %v2775 = vshra.s32 %v2758, 16
      %v2776 = vcvt.s32.f32 %v2774
      %v2777 = vcvt.s32.f32 %v2775
      %2778 = vmin.xlane.f32.xlu0 %v2777
      %v2779 = vpop.xlane.xlu0 %2778
      %vm2780 = vcmp.eq.f32.partialorder %v2777, %v2779
      %v2781 = vsel %vm2780, %v2776, inf
      %2782 = vmin.xlane.f32.xlu0 %v2781
      %v2783 = vpop.xlane.xlu0 %2782
      %v2784 = vcvt.f32.s32 %v2783
      %v2785 = vcvt.f32.s32 %v2779
      %v2786 = vshll.u32 %v2785, 16
      %v2787 = vadd.s32 %v2786, %v2784
      %v2788 = vand.u32 %v2759, 65535
      %v2789 = vshra.s32 %v2759, 16
      %v2790 = vcvt.s32.f32 %v2788
      %v2791 = vcvt.s32.f32 %v2789
      %2792 = vmin.xlane.f32.xlu0 %v2791
      %v2793 = vpop.xlane.xlu0 %2792
      %vm2794 = vcmp.eq.f32.partialorder %v2791, %v2793
      %v2795 = vsel %vm2794, %v2790, inf
      %2796 = vmin.xlane.f32.xlu0 %v2795
      %v2797 = vpop.xlane.xlu0 %2796
      %v2798 = vcvt.f32.s32 %v2797
      %v2799 = vcvt.f32.s32 %v2793
      %v2800 = vshll.u32 %v2799, 16
      %v2801 = vadd.s32 %v2800, %v2798
      %v2802 = vand.u32 %v2760, 65535
      %v2803 = vshra.s32 %v2760, 16
      %v2804 = vcvt.s32.f32 %v2802
      %v2805 = vcvt.s32.f32 %v2803
      %2806 = vmin.xlane.f32.xlu0 %v2805
      %v2807 = vpop.xlane.xlu0 %2806
      %vm2808 = vcmp.eq.f32.partialorder %v2805, %v2807
      %v2809 = vsel %vm2808, %v2804, inf
      %2810 = vmin.xlane.f32.xlu0 %v2809
      %v2811 = vpop.xlane.xlu0 %2810
      %v2812 = vcvt.f32.s32 %v2811
      %v2813 = vcvt.f32.s32 %v2807
      %v2814 = vshll.u32 %v2813, 16
      %v2815 = vadd.s32 %v2814, %v2812
      %v2816 = vand.u32 %v2761, 65535
      %v2817 = vshra.s32 %v2761, 16
      %v2818 = vcvt.s32.f32 %v2816
      %v2819 = vcvt.s32.f32 %v2817
      %2820 = vmin.xlane.f32.xlu0 %v2819
      %v2821 = vpop.xlane.xlu0 %2820
      %vm2822 = vcmp.eq.f32.partialorder %v2819, %v2821
      %v2823 = vsel %vm2822, %v2818, inf
      %2824 = vmin.xlane.f32.xlu0 %v2823
      %v2825 = vpop.xlane.xlu0 %2824
      %v2826 = vcvt.f32.s32 %v2825
      %v2827 = vcvt.f32.s32 %v2821
      %v2828 = vshll.u32 %v2827, 16
      %v2829 = vadd.s32 %v2828, %v2826
      %v2830 = vand.u32 %v2762, 65535
      %v2831 = vshra.s32 %v2762, 16
      %v2832 = vcvt.s32.f32 %v2830
      %v2833 = vcvt.s32.f32 %v2831
      %2834 = vmin.xlane.f32.xlu0 %v2833
      %v2835 = vpop.xlane.xlu0 %2834
      %vm2836 = vcmp.eq.f32.partialorder %v2833, %v2835
      %v2837 = vsel %vm2836, %v2832, inf
      %2838 = vmin.xlane.f32.xlu0 %v2837
      %v2839 = vpop.xlane.xlu0 %2838
      %v2840 = vcvt.f32.s32 %v2839
      %v2841 = vcvt.f32.s32 %v2835
      %v2842 = vshll.u32 %v2841, 16
      %v2843 = vadd.s32 %v2842, %v2840
      %v2844 = vand.u32 %v2763, 65535
      %v2845 = vshra.s32 %v2763, 16
      %v2846 = vcvt.s32.f32 %v2844
      %v2847 = vcvt.s32.f32 %v2845
      %2848 = vmin.xlane.f32.xlu0 %v2847
      %v2849 = vpop.xlane.xlu0 %2848
      %vm2850 = vcmp.eq.f32.partialorder %v2847, %v2849
      %v2851 = vsel %vm2850, %v2846, inf
      %2852 = vmin.xlane.f32.xlu0 %v2851
      %v2853 = vpop.xlane.xlu0 %2852
      %v2854 = vcvt.f32.s32 %v2853
      %v2855 = vcvt.f32.s32 %v2849
      %v2856 = vshll.u32 %v2855, 16
      %v2857 = vadd.s32 %v2856, %v2854
      %v2858 = vand.u32 %v2764, 65535
      %v2859 = vshra.s32 %v2764, 16
      %v2860 = vcvt.s32.f32 %v2858
      %v2861 = vcvt.s32.f32 %v2859
      %2862 = vmin.xlane.f32.xlu0 %v2861
      %v2863 = vpop.xlane.xlu0 %2862
      %vm2864 = vcmp.eq.f32.partialorder %v2861, %v2863
      %v2865 = vsel %vm2864, %v2860, inf
      %2866 = vmin.xlane.f32.xlu0 %v2865
      %v2867 = vpop.xlane.xlu0 %2866
      %v2868 = vcvt.f32.s32 %v2867
      %v2869 = vcvt.f32.s32 %v2863
      %v2870 = vshll.u32 %v2869, 16
      %v2871 = vadd.s32 %v2870, %v2868
      %v2872 = vand.u32 %v2765, 65535
      %v2873 = vshra.s32 %v2765, 16
      %v2874 = vcvt.s32.f32 %v2872
      %v2875 = vcvt.s32.f32 %v2873
      %2876 = vmin.xlane.f32.xlu0 %v2875
      %v2877 = vpop.xlane.xlu0 %2876
      %vm2878 = vcmp.eq.f32.partialorder %v2875, %v2877
      %v2879 = vsel %vm2878, %v2874, inf
      %2880 = vmin.xlane.f32.xlu0 %v2879
      %v2881 = vpop.xlane.xlu0 %2880
      %v2882 = vcvt.f32.s32 %v2881
      %v2883 = vcvt.f32.s32 %v2877
      %v2884 = vshll.u32 %v2883, 16
      %v2885 = vadd.s32 %v2884, %v2882
      %v2886 = vand.u32 %v2766, 65535
      %v2887 = vshra.s32 %v2766, 16
      %v2888 = vcvt.s32.f32 %v2886
      %v2889 = vcvt.s32.f32 %v2887
      %2890 = vmin.xlane.f32.xlu0 %v2889
      %v2891 = vpop.xlane.xlu0 %2890
      %vm2892 = vcmp.eq.f32.partialorder %v2889, %v2891
      %v2893 = vsel %vm2892, %v2888, inf
      %2894 = vmin.xlane.f32.xlu0 %v2893
      %v2895 = vpop.xlane.xlu0 %2894
      %v2896 = vcvt.f32.s32 %v2895
      %v2897 = vcvt.f32.s32 %v2891
      %v2898 = vshll.u32 %v2897, 16
      %v2899 = vadd.s32 %v2898, %v2896
      %v2900 = vand.u32 %v2767, 65535
      %v2901 = vshra.s32 %v2767, 16
      %v2902 = vcvt.s32.f32 %v2900
      %v2903 = vcvt.s32.f32 %v2901
      %2904 = vmin.xlane.f32.xlu0 %v2903
      %v2905 = vpop.xlane.xlu0 %2904
      %vm2906 = vcmp.eq.f32.partialorder %v2903, %v2905
      %v2907 = vsel %vm2906, %v2902, inf
      %2908 = vmin.xlane.f32.xlu0 %v2907
      %v2909 = vpop.xlane.xlu0 %2908
      %v2910 = vcvt.f32.s32 %v2909
      %v2911 = vcvt.f32.s32 %v2905
      %v2912 = vshll.u32 %v2911, 16
      %v2913 = vadd.s32 %v2912, %v2910
      %v2914 = vand.u32 %v2768, 65535
      %v2915 = vshra.s32 %v2768, 16
      %v2916 = vcvt.s32.f32 %v2914
      %v2917 = vcvt.s32.f32 %v2915
      %2918 = vmin.xlane.f32.xlu0 %v2917
      %v2919 = vpop.xlane.xlu0 %2918
      %vm2920 = vcmp.eq.f32.partialorder %v2917, %v2919
      %v2921 = vsel %vm2920, %v2916, inf
      %2922 = vmin.xlane.f32.xlu0 %v2921
      %v2923 = vpop.xlane.xlu0 %2922
      %v2924 = vcvt.f32.s32 %v2923
      %v2925 = vcvt.f32.s32 %v2919
      %v2926 = vshll.u32 %v2925, 16
      %v2927 = vadd.s32 %v2926, %v2924
      %v2928 = vand.u32 %v2769, 65535
      %v2929 = vshra.s32 %v2769, 16
      %v2930 = vcvt.s32.f32 %v2928
      %v2931 = vcvt.s32.f32 %v2929
      %2932 = vmin.xlane.f32.xlu0 %v2931
      %v2933 = vpop.xlane.xlu0 %2932
      %vm2934 = vcmp.eq.f32.partialorder %v2931, %v2933
      %v2935 = vsel %vm2934, %v2930, inf
      %2936 = vmin.xlane.f32.xlu0 %v2935
      %v2937 = vpop.xlane.xlu0 %2936
      %v2938 = vcvt.f32.s32 %v2937
      %v2939 = vcvt.f32.s32 %v2933
      %v2940 = vshll.u32 %v2939, 16
      %v2941 = vadd.s32 %v2940, %v2938
      %v2942 = vand.u32 %v2770, 65535
      %v2943 = vshra.s32 %v2770, 16
      %v2944 = vcvt.s32.f32 %v2942
      %v2945 = vcvt.s32.f32 %v2943
      %2946 = vmin.xlane.f32.xlu0 %v2945
      %v2947 = vpop.xlane.xlu0 %2946
      %vm2948 = vcmp.eq.f32.partialorder %v2945, %v2947
      %v2949 = vsel %vm2948, %v2944, inf
      %2950 = vmin.xlane.f32.xlu0 %v2949
      %v2951 = vpop.xlane.xlu0 %2950
      %v2952 = vcvt.f32.s32 %v2951
      %v2953 = vcvt.f32.s32 %v2947
      %v2954 = vshll.u32 %v2953, 16
      %v2955 = vadd.s32 %v2954, %v2952
      %v2956 = vand.u32 %v2771, 65535
      %v2957 = vshra.s32 %v2771, 16
      %v2958 = vcvt.s32.f32 %v2956
      %v2959 = vcvt.s32.f32 %v2957
      %2960 = vmin.xlane.f32.xlu0 %v2959
      %v2961 = vpop.xlane.xlu0 %2960
      %vm2962 = vcmp.eq.f32.partialorder %v2959, %v2961
      %v2963 = vsel %vm2962, %v2958, inf
      %2964 = vmin.xlane.f32.xlu0 %v2963
      %v2965 = vpop.xlane.xlu0 %2964
      %v2966 = vcvt.f32.s32 %v2965
      %v2967 = vcvt.f32.s32 %v2961
      %v2968 = vshll.u32 %v2967, 16
      %v2969 = vadd.s32 %v2968, %v2966
      %v2970 = vand.u32 %v2772, 65535
      %v2971 = vshra.s32 %v2772, 16
      %v2972 = vcvt.s32.f32 %v2970
      %v2973 = vcvt.s32.f32 %v2971
      %2974 = vmin.xlane.f32.xlu0 %v2973
      %v2975 = vpop.xlane.xlu0 %2974
      %vm2976 = vcmp.eq.f32.partialorder %v2973, %v2975
      %v2977 = vsel %vm2976, %v2972, inf
      %2978 = vmin.xlane.f32.xlu0 %v2977
      %v2979 = vpop.xlane.xlu0 %2978
      %v2980 = vcvt.f32.s32 %v2979
      %v2981 = vcvt.f32.s32 %v2975
      %v2982 = vshll.u32 %v2981, 16
      %v2983 = vadd.s32 %v2982, %v2980
      %v2984 = vand.u32 %v2773, 65535
      %v2985 = vshra.s32 %v2773, 16
      %v2986 = vcvt.s32.f32 %v2984
      %v2987 = vcvt.s32.f32 %v2985
      %2988 = vmin.xlane.f32.xlu0 %v2987
      %v2989 = vpop.xlane.xlu0 %2988
      %vm2990 = vcmp.eq.f32.partialorder %v2987, %v2989
      %v2991 = vsel %vm2990, %v2986, inf
      %2992 = vmin.xlane.f32.xlu0 %v2991
      %v2993 = vpop.xlane.xlu0 %2992
      %v2994 = vcvt.f32.s32 %v2993
      %v2995 = vcvt.f32.s32 %v2989
      %v2996 = vshll.u32 %v2995, 16
      %v2997 = vadd.s32 %v2996, %v2994
      %vm2998 = vcmp.lt.s32.totalorder %v2787, 1073741824
      %v2999 = vsel %vm2998, %v2787, 1073741824
      %vm3000 = vcmp.lt.s32.totalorder %v2801, 1073741824
      %v3001 = vsel %vm3000, %v2801, 1073741824
      %vm3002 = vcmp.lt.s32.totalorder %v2815, 1073741824
      %v3003 = vsel %vm3002, %v2815, 1073741824
      %vm3004 = vcmp.lt.s32.totalorder %v2829, 1073741824
      %v3005 = vsel %vm3004, %v2829, 1073741824
      %vm3006 = vcmp.lt.s32.totalorder %v2843, 1073741824
      %v3007 = vsel %vm3006, %v2843, 1073741824
      %vm3008 = vcmp.lt.s32.totalorder %v2857, 1073741824
      %v3009 = vsel %vm3008, %v2857, 1073741824
      %vm3010 = vcmp.lt.s32.totalorder %v2871, 1073741824
      %v3011 = vsel %vm3010, %v2871, 1073741824
      %vm3012 = vcmp.lt.s32.totalorder %v2885, 1073741824
      %v3013 = vsel %vm3012, %v2885, 1073741824
      %vm3014 = vcmp.lt.s32.totalorder %v2899, 1073741824
      %v3015 = vsel %vm3014, %v2899, 1073741824
      %vm3016 = vcmp.lt.s32.totalorder %v2913, 1073741824
      %v3017 = vsel %vm3016, %v2913, 1073741824
      %vm3018 = vcmp.lt.s32.totalorder %v2927, 1073741824
      %v3019 = vsel %vm3018, %v2927, 1073741824
      %vm3020 = vcmp.lt.s32.totalorder %v2941, 1073741824
      %v3021 = vsel %vm3020, %v2941, 1073741824
      %vm3022 = vcmp.lt.s32.totalorder %v2955, 1073741824
      %v3023 = vsel %vm3022, %v2955, 1073741824
      %vm3024 = vcmp.lt.s32.totalorder %v2969, 1073741824
      %v3025 = vsel %vm3024, %v2969, 1073741824
      %vm3026 = vcmp.lt.s32.totalorder %v2983, 1073741824
      %v3027 = vsel %vm3026, %v2983, 1073741824
      %vm3028 = vcmp.lt.s32.totalorder %v2997, 1073741824
      %v3029 = vsel %vm3028, %v2997, 1073741824
      %vm3030 = vcmp.eq.s32.totalorder %v739, 7
      %vm3031 = vcmp.eq.s32.totalorder %v740, 7
      %vm3032 = vcmp.eq.s32.totalorder %v741, 7
      %vm3033 = vcmp.eq.s32.totalorder %v742, 7
      %vm3034 = vcmp.eq.s32.totalorder %v743, 7
      %vm3035 = vcmp.eq.s32.totalorder %v744, 7
      %vm3036 = vcmp.eq.s32.totalorder %v745, 7
      %vm3037 = vcmp.eq.s32.totalorder %v746, 7
      %vm3038 = vcmp.eq.s32.totalorder %v747, 7
      %vm3039 = vcmp.eq.s32.totalorder %v748, 7
      %vm3040 = vcmp.eq.s32.totalorder %v749, 7
      %vm3041 = vcmp.eq.s32.totalorder %v750, 7
      %vm3042 = vcmp.eq.s32.totalorder %v751, 7
      %vm3043 = vcmp.eq.s32.totalorder %v752, 7
      %vm3044 = vcmp.eq.s32.totalorder %v753, 7
      %vm3045 = vcmp.eq.s32.totalorder %v754, 7
      %vm3046 = vmand %vm806, %vm3030
      %vm3047 = vmand %vm807, %vm3031
      %vm3048 = vmand %vm808, %vm3032
      %vm3049 = vmand %vm809, %vm3033
      %vm3050 = vmand %vm810, %vm3034
      %vm3051 = vmand %vm811, %vm3035
      %vm3052 = vmand %vm812, %vm3036
      %vm3053 = vmand %vm813, %vm3037
      %vm3054 = vmand %vm814, %vm3038
      %vm3055 = vmand %vm815, %vm3039
      %vm3056 = vmand %vm816, %vm3040
      %vm3057 = vmand %vm817, %vm3041
      %vm3058 = vmand %vm818, %vm3042
      %vm3059 = vmand %vm819, %vm3043
      %vm3060 = vmand %vm820, %vm3044
      %vm3061 = vmand %vm821, %vm3045
      %v3062 = vsel %vm3046, %v886, 1073741824
      %v3063 = vsel %vm3047, %v887, 1073741824
      %v3064 = vsel %vm3048, %v888, 1073741824
      %v3065 = vsel %vm3049, %v889, 1073741824
      %v3066 = vsel %vm3050, %v890, 1073741824
      %v3067 = vsel %vm3051, %v891, 1073741824
      %v3068 = vsel %vm3052, %v892, 1073741824
      %v3069 = vsel %vm3053, %v893, 1073741824
      %v3070 = vsel %vm3054, %v894, 1073741824
      %v3071 = vsel %vm3055, %v895, 1073741824
      %v3072 = vsel %vm3056, %v896, 1073741824
      %v3073 = vsel %vm3057, %v897, 1073741824
      %v3074 = vsel %vm3058, %v898, 1073741824
      %v3075 = vsel %vm3059, %v899, 1073741824
      %v3076 = vsel %vm3060, %v900, 1073741824
      %v3077 = vsel %vm3061, %v901, 1073741824
      %v3078 = vand.u32 %v3062, 65535
      %v3079 = vshra.s32 %v3062, 16
      %v3080 = vcvt.s32.f32 %v3078
      %v3081 = vcvt.s32.f32 %v3079
      %3082 = vmin.xlane.f32.xlu0 %v3081
      %v3083 = vpop.xlane.xlu0 %3082
      %vm3084 = vcmp.eq.f32.partialorder %v3081, %v3083
      %v3085 = vsel %vm3084, %v3080, inf
      %3086 = vmin.xlane.f32.xlu0 %v3085
      %v3087 = vpop.xlane.xlu0 %3086
      %v3088 = vcvt.f32.s32 %v3087
      %v3089 = vcvt.f32.s32 %v3083
      %v3090 = vshll.u32 %v3089, 16
      %v3091 = vadd.s32 %v3090, %v3088
      %v3092 = vand.u32 %v3063, 65535
      %v3093 = vshra.s32 %v3063, 16
      %v3094 = vcvt.s32.f32 %v3092
      %v3095 = vcvt.s32.f32 %v3093
      %3096 = vmin.xlane.f32.xlu0 %v3095
      %v3097 = vpop.xlane.xlu0 %3096
      %vm3098 = vcmp.eq.f32.partialorder %v3095, %v3097
      %v3099 = vsel %vm3098, %v3094, inf
      %3100 = vmin.xlane.f32.xlu0 %v3099
      %v3101 = vpop.xlane.xlu0 %3100
      %v3102 = vcvt.f32.s32 %v3101
      %v3103 = vcvt.f32.s32 %v3097
      %v3104 = vshll.u32 %v3103, 16
      %v3105 = vadd.s32 %v3104, %v3102
      %v3106 = vand.u32 %v3064, 65535
      %v3107 = vshra.s32 %v3064, 16
      %v3108 = vcvt.s32.f32 %v3106
      %v3109 = vcvt.s32.f32 %v3107
      %3110 = vmin.xlane.f32.xlu0 %v3109
      %v3111 = vpop.xlane.xlu0 %3110
      %vm3112 = vcmp.eq.f32.partialorder %v3109, %v3111
      %v3113 = vsel %vm3112, %v3108, inf
      %3114 = vmin.xlane.f32.xlu0 %v3113
      %v3115 = vpop.xlane.xlu0 %3114
      %v3116 = vcvt.f32.s32 %v3115
      %v3117 = vcvt.f32.s32 %v3111
      %v3118 = vshll.u32 %v3117, 16
      %v3119 = vadd.s32 %v3118, %v3116
      %v3120 = vand.u32 %v3065, 65535
      %v3121 = vshra.s32 %v3065, 16
      %v3122 = vcvt.s32.f32 %v3120
      %v3123 = vcvt.s32.f32 %v3121
      %3124 = vmin.xlane.f32.xlu0 %v3123
      %v3125 = vpop.xlane.xlu0 %3124
      %vm3126 = vcmp.eq.f32.partialorder %v3123, %v3125
      %v3127 = vsel %vm3126, %v3122, inf
      %3128 = vmin.xlane.f32.xlu0 %v3127
      %v3129 = vpop.xlane.xlu0 %3128
      %v3130 = vcvt.f32.s32 %v3129
      %v3131 = vcvt.f32.s32 %v3125
      %v3132 = vshll.u32 %v3131, 16
      %v3133 = vadd.s32 %v3132, %v3130
      %v3134 = vand.u32 %v3066, 65535
      %v3135 = vshra.s32 %v3066, 16
      %v3136 = vcvt.s32.f32 %v3134
      %v3137 = vcvt.s32.f32 %v3135
      %3138 = vmin.xlane.f32.xlu0 %v3137
      %v3139 = vpop.xlane.xlu0 %3138
      %vm3140 = vcmp.eq.f32.partialorder %v3137, %v3139
      %v3141 = vsel %vm3140, %v3136, inf
      %3142 = vmin.xlane.f32.xlu0 %v3141
      %v3143 = vpop.xlane.xlu0 %3142
      %v3144 = vcvt.f32.s32 %v3143
      %v3145 = vcvt.f32.s32 %v3139
      %v3146 = vshll.u32 %v3145, 16
      %v3147 = vadd.s32 %v3146, %v3144
      %v3148 = vand.u32 %v3067, 65535
      %v3149 = vshra.s32 %v3067, 16
      %v3150 = vcvt.s32.f32 %v3148
      %v3151 = vcvt.s32.f32 %v3149
      %3152 = vmin.xlane.f32.xlu0 %v3151
      %v3153 = vpop.xlane.xlu0 %3152
      %vm3154 = vcmp.eq.f32.partialorder %v3151, %v3153
      %v3155 = vsel %vm3154, %v3150, inf
      %3156 = vmin.xlane.f32.xlu0 %v3155
      %v3157 = vpop.xlane.xlu0 %3156
      %v3158 = vcvt.f32.s32 %v3157
      %v3159 = vcvt.f32.s32 %v3153
      %v3160 = vshll.u32 %v3159, 16
      %v3161 = vadd.s32 %v3160, %v3158
      %v3162 = vand.u32 %v3068, 65535
      %v3163 = vshra.s32 %v3068, 16
      %v3164 = vcvt.s32.f32 %v3162
      %v3165 = vcvt.s32.f32 %v3163
      %3166 = vmin.xlane.f32.xlu0 %v3165
      %v3167 = vpop.xlane.xlu0 %3166
      %vm3168 = vcmp.eq.f32.partialorder %v3165, %v3167
      %v3169 = vsel %vm3168, %v3164, inf
      %3170 = vmin.xlane.f32.xlu0 %v3169
      %v3171 = vpop.xlane.xlu0 %3170
      %v3172 = vcvt.f32.s32 %v3171
      %v3173 = vcvt.f32.s32 %v3167
      %v3174 = vshll.u32 %v3173, 16
      %v3175 = vadd.s32 %v3174, %v3172
      %v3176 = vand.u32 %v3069, 65535
      %v3177 = vshra.s32 %v3069, 16
      %v3178 = vcvt.s32.f32 %v3176
      %v3179 = vcvt.s32.f32 %v3177
      %3180 = vmin.xlane.f32.xlu0 %v3179
      %v3181 = vpop.xlane.xlu0 %3180
      %vm3182 = vcmp.eq.f32.partialorder %v3179, %v3181
      %v3183 = vsel %vm3182, %v3178, inf
      %3184 = vmin.xlane.f32.xlu0 %v3183
      %v3185 = vpop.xlane.xlu0 %3184
      %v3186 = vcvt.f32.s32 %v3185
      %v3187 = vcvt.f32.s32 %v3181
      %v3188 = vshll.u32 %v3187, 16
      %v3189 = vadd.s32 %v3188, %v3186
      %v3190 = vand.u32 %v3070, 65535
      %v3191 = vshra.s32 %v3070, 16
      %v3192 = vcvt.s32.f32 %v3190
      %v3193 = vcvt.s32.f32 %v3191
      %3194 = vmin.xlane.f32.xlu0 %v3193
      %v3195 = vpop.xlane.xlu0 %3194
      %vm3196 = vcmp.eq.f32.partialorder %v3193, %v3195
      %v3197 = vsel %vm3196, %v3192, inf
      %3198 = vmin.xlane.f32.xlu0 %v3197
      %v3199 = vpop.xlane.xlu0 %3198
      %v3200 = vcvt.f32.s32 %v3199
      %v3201 = vcvt.f32.s32 %v3195
      %v3202 = vshll.u32 %v3201, 16
      %v3203 = vadd.s32 %v3202, %v3200
      %v3204 = vand.u32 %v3071, 65535
      %v3205 = vshra.s32 %v3071, 16
      %v3206 = vcvt.s32.f32 %v3204
      %v3207 = vcvt.s32.f32 %v3205
      %3208 = vmin.xlane.f32.xlu0 %v3207
      %v3209 = vpop.xlane.xlu0 %3208
      %vm3210 = vcmp.eq.f32.partialorder %v3207, %v3209
      %v3211 = vsel %vm3210, %v3206, inf
      %3212 = vmin.xlane.f32.xlu0 %v3211
      %v3213 = vpop.xlane.xlu0 %3212
      %v3214 = vcvt.f32.s32 %v3213
      %v3215 = vcvt.f32.s32 %v3209
      %v3216 = vshll.u32 %v3215, 16
      %v3217 = vadd.s32 %v3216, %v3214
      %v3218 = vand.u32 %v3072, 65535
      %v3219 = vshra.s32 %v3072, 16
      %v3220 = vcvt.s32.f32 %v3218
      %v3221 = vcvt.s32.f32 %v3219
      %3222 = vmin.xlane.f32.xlu0 %v3221
      %v3223 = vpop.xlane.xlu0 %3222
      %vm3224 = vcmp.eq.f32.partialorder %v3221, %v3223
      %v3225 = vsel %vm3224, %v3220, inf
      %3226 = vmin.xlane.f32.xlu0 %v3225
      %v3227 = vpop.xlane.xlu0 %3226
      %v3228 = vcvt.f32.s32 %v3227
      %v3229 = vcvt.f32.s32 %v3223
      %v3230 = vshll.u32 %v3229, 16
      %v3231 = vadd.s32 %v3230, %v3228
      %v3232 = vand.u32 %v3073, 65535
      %v3233 = vshra.s32 %v3073, 16
      %v3234 = vcvt.s32.f32 %v3232
      %v3235 = vcvt.s32.f32 %v3233
      %3236 = vmin.xlane.f32.xlu0 %v3235
      %v3237 = vpop.xlane.xlu0 %3236
      %vm3238 = vcmp.eq.f32.partialorder %v3235, %v3237
      %v3239 = vsel %vm3238, %v3234, inf
      %3240 = vmin.xlane.f32.xlu0 %v3239
      %v3241 = vpop.xlane.xlu0 %3240
      %v3242 = vcvt.f32.s32 %v3241
      %v3243 = vcvt.f32.s32 %v3237
      %v3244 = vshll.u32 %v3243, 16
      %v3245 = vadd.s32 %v3244, %v3242
      %v3246 = vand.u32 %v3074, 65535
      %v3247 = vshra.s32 %v3074, 16
      %v3248 = vcvt.s32.f32 %v3246
      %v3249 = vcvt.s32.f32 %v3247
      %3250 = vmin.xlane.f32.xlu0 %v3249
      %v3251 = vpop.xlane.xlu0 %3250
      %vm3252 = vcmp.eq.f32.partialorder %v3249, %v3251
      %v3253 = vsel %vm3252, %v3248, inf
      %3254 = vmin.xlane.f32.xlu0 %v3253
      %v3255 = vpop.xlane.xlu0 %3254
      %v3256 = vcvt.f32.s32 %v3255
      %v3257 = vcvt.f32.s32 %v3251
      %v3258 = vshll.u32 %v3257, 16
      %v3259 = vadd.s32 %v3258, %v3256
      %v3260 = vand.u32 %v3075, 65535
      %v3261 = vshra.s32 %v3075, 16
      %v3262 = vcvt.s32.f32 %v3260
      %v3263 = vcvt.s32.f32 %v3261
      %3264 = vmin.xlane.f32.xlu0 %v3263
      %v3265 = vpop.xlane.xlu0 %3264
      %vm3266 = vcmp.eq.f32.partialorder %v3263, %v3265
      %v3267 = vsel %vm3266, %v3262, inf
      %3268 = vmin.xlane.f32.xlu0 %v3267
      %v3269 = vpop.xlane.xlu0 %3268
      %v3270 = vcvt.f32.s32 %v3269
      %v3271 = vcvt.f32.s32 %v3265
      %v3272 = vshll.u32 %v3271, 16
      %v3273 = vadd.s32 %v3272, %v3270
      %v3274 = vand.u32 %v3076, 65535
      %v3275 = vshra.s32 %v3076, 16
      %v3276 = vcvt.s32.f32 %v3274
      %v3277 = vcvt.s32.f32 %v3275
      %3278 = vmin.xlane.f32.xlu0 %v3277
      %v3279 = vpop.xlane.xlu0 %3278
      %vm3280 = vcmp.eq.f32.partialorder %v3277, %v3279
      %v3281 = vsel %vm3280, %v3276, inf
      %3282 = vmin.xlane.f32.xlu0 %v3281
      %v3283 = vpop.xlane.xlu0 %3282
      %v3284 = vcvt.f32.s32 %v3283
      %v3285 = vcvt.f32.s32 %v3279
      %v3286 = vshll.u32 %v3285, 16
      %v3287 = vadd.s32 %v3286, %v3284
      %v3288 = vand.u32 %v3077, 65535
      %v3289 = vshra.s32 %v3077, 16
      %v3290 = vcvt.s32.f32 %v3288
      %v3291 = vcvt.s32.f32 %v3289
      %3292 = vmin.xlane.f32.xlu0 %v3291
      %v3293 = vpop.xlane.xlu0 %3292
      %vm3294 = vcmp.eq.f32.partialorder %v3291, %v3293
      %v3295 = vsel %vm3294, %v3290, inf
      %3296 = vmin.xlane.f32.xlu0 %v3295
      %v3297 = vpop.xlane.xlu0 %3296
      %v3298 = vcvt.f32.s32 %v3297
      %v3299 = vcvt.f32.s32 %v3293
      %v3300 = vshll.u32 %v3299, 16
      %v3301 = vadd.s32 %v3300, %v3298
      %vm3302 = vcmp.lt.s32.totalorder %v3091, 1073741824
      %v3303 = vsel %vm3302, %v3091, 1073741824
      %vm3304 = vcmp.lt.s32.totalorder %v3105, 1073741824
      %v3305 = vsel %vm3304, %v3105, 1073741824
      %vm3306 = vcmp.lt.s32.totalorder %v3119, 1073741824
      %v3307 = vsel %vm3306, %v3119, 1073741824
      %vm3308 = vcmp.lt.s32.totalorder %v3133, 1073741824
      %v3309 = vsel %vm3308, %v3133, 1073741824
      %vm3310 = vcmp.lt.s32.totalorder %v3147, 1073741824
      %v3311 = vsel %vm3310, %v3147, 1073741824
      %vm3312 = vcmp.lt.s32.totalorder %v3161, 1073741824
      %v3313 = vsel %vm3312, %v3161, 1073741824
      %vm3314 = vcmp.lt.s32.totalorder %v3175, 1073741824
      %v3315 = vsel %vm3314, %v3175, 1073741824
      %vm3316 = vcmp.lt.s32.totalorder %v3189, 1073741824
      %v3317 = vsel %vm3316, %v3189, 1073741824
      %vm3318 = vcmp.lt.s32.totalorder %v3203, 1073741824
      %v3319 = vsel %vm3318, %v3203, 1073741824
      %vm3320 = vcmp.lt.s32.totalorder %v3217, 1073741824
      %v3321 = vsel %vm3320, %v3217, 1073741824
      %vm3322 = vcmp.lt.s32.totalorder %v3231, 1073741824
      %v3323 = vsel %vm3322, %v3231, 1073741824
      %vm3324 = vcmp.lt.s32.totalorder %v3245, 1073741824
      %v3325 = vsel %vm3324, %v3245, 1073741824
      %vm3326 = vcmp.lt.s32.totalorder %v3259, 1073741824
      %v3327 = vsel %vm3326, %v3259, 1073741824
      %vm3328 = vcmp.lt.s32.totalorder %v3273, 1073741824
      %v3329 = vsel %vm3328, %v3273, 1073741824
      %vm3330 = vcmp.lt.s32.totalorder %v3287, 1073741824
      %v3331 = vsel %vm3330, %v3287, 1073741824
      %vm3332 = vcmp.lt.s32.totalorder %v3301, 1073741824
      %v3333 = vsel %vm3332, %v3301, 1073741824
      %vm3334 = vcmp.lt.s32.totalorder %v1175, 1073741824
      %vm3335 = vcmp.lt.s32.totalorder %v1177, 1073741824
      %vm3336 = vcmp.lt.s32.totalorder %v1179, 1073741824
      %vm3337 = vcmp.lt.s32.totalorder %v1181, 1073741824
      %vm3338 = vcmp.lt.s32.totalorder %v1183, 1073741824
      %vm3339 = vcmp.lt.s32.totalorder %v1185, 1073741824
      %vm3340 = vcmp.lt.s32.totalorder %v1187, 1073741824
      %vm3341 = vcmp.lt.s32.totalorder %v1189, 1073741824
      %vm3342 = vcmp.lt.s32.totalorder %v1191, 1073741824
      %vm3343 = vcmp.lt.s32.totalorder %v1193, 1073741824
      %vm3344 = vcmp.lt.s32.totalorder %v1195, 1073741824
      %vm3345 = vcmp.lt.s32.totalorder %v1197, 1073741824
      %vm3346 = vcmp.lt.s32.totalorder %v1199, 1073741824
      %vm3347 = vcmp.lt.s32.totalorder %v1201, 1073741824
      %vm3348 = vcmp.lt.s32.totalorder %v1203, 1073741824
      %vm3349 = vcmp.lt.s32.totalorder %v1205, 1073741824
      %v3350 = vand.u32 %v1175, 127
      %v3351 = vand.u32 %v1177, 127
      %v3352 = vand.u32 %v1179, 127
      %v3353 = vand.u32 %v1181, 127
      %v3354 = vand.u32 %v1183, 127
      %v3355 = vand.u32 %v1185, 127
      %v3356 = vand.u32 %v1187, 127
      %v3357 = vand.u32 %v1189, 127
      %v3358 = vand.u32 %v1191, 127
      %v3359 = vand.u32 %v1193, 127
      %v3360 = vand.u32 %v1195, 127
      %v3361 = vand.u32 %v1197, 127
      %v3362 = vand.u32 %v1199, 127
      %v3363 = vand.u32 %v1201, 127
      %v3364 = vand.u32 %v1203, 127
      %v3365 = vand.u32 %v1205, 127
      %v3366 = vsel %vm3334, %v3350, %v230
      %v3367 = vsel %vm3335, %v3351, %v231
      %v3368 = vsel %vm3336, %v3352, %v232
      %v3369 = vsel %vm3337, %v3353, %v233
      %v3370 = vsel %vm3338, %v3354, %v234
      %v3371 = vsel %vm3339, %v3355, %v235
      %v3372 = vsel %vm3340, %v3356, %v236
      %v3373 = vsel %vm3341, %v3357, %v237
      %v3374 = vsel %vm3342, %v3358, %v238
      %v3375 = vsel %vm3343, %v3359, %v239
      %v3376 = vsel %vm3344, %v3360, %v240
      %v3377 = vsel %vm3345, %v3361, %v241
      %v3378 = vsel %vm3346, %v3362, %v242
      %v3379 = vsel %vm3347, %v3363, %v243
      %v3380 = vsel %vm3348, %v3364, %v244
      %v3381 = vsel %vm3349, %v3365, %v245
      %vm3382 = vcmp.lt.s32.totalorder %v1479, 1073741824
      %vm3383 = vcmp.lt.s32.totalorder %v1481, 1073741824
      %vm3384 = vcmp.lt.s32.totalorder %v1483, 1073741824
      %vm3385 = vcmp.lt.s32.totalorder %v1485, 1073741824
      %vm3386 = vcmp.lt.s32.totalorder %v1487, 1073741824
      %vm3387 = vcmp.lt.s32.totalorder %v1489, 1073741824
      %vm3388 = vcmp.lt.s32.totalorder %v1491, 1073741824
      %vm3389 = vcmp.lt.s32.totalorder %v1493, 1073741824
      %vm3390 = vcmp.lt.s32.totalorder %v1495, 1073741824
      %vm3391 = vcmp.lt.s32.totalorder %v1497, 1073741824
      %vm3392 = vcmp.lt.s32.totalorder %v1499, 1073741824
      %vm3393 = vcmp.lt.s32.totalorder %v1501, 1073741824
      %vm3394 = vcmp.lt.s32.totalorder %v1503, 1073741824
      %vm3395 = vcmp.lt.s32.totalorder %v1505, 1073741824
      %vm3396 = vcmp.lt.s32.totalorder %v1507, 1073741824
      %vm3397 = vcmp.lt.s32.totalorder %v1509, 1073741824
      %v3398 = vand.u32 %v1479, 127
      %v3399 = vand.u32 %v1481, 127
      %v3400 = vand.u32 %v1483, 127
      %v3401 = vand.u32 %v1485, 127
      %v3402 = vand.u32 %v1487, 127
      %v3403 = vand.u32 %v1489, 127
      %v3404 = vand.u32 %v1491, 127
      %v3405 = vand.u32 %v1493, 127
      %v3406 = vand.u32 %v1495, 127
      %v3407 = vand.u32 %v1497, 127
      %v3408 = vand.u32 %v1499, 127
      %v3409 = vand.u32 %v1501, 127
      %v3410 = vand.u32 %v1503, 127
      %v3411 = vand.u32 %v1505, 127
      %v3412 = vand.u32 %v1507, 127
      %v3413 = vand.u32 %v1509, 127
      %v3414 = vsel %vm3382, %v3398, %v230
      %v3415 = vsel %vm3383, %v3399, %v231
      %v3416 = vsel %vm3384, %v3400, %v232
      %v3417 = vsel %vm3385, %v3401, %v233
      %v3418 = vsel %vm3386, %v3402, %v234
      %v3419 = vsel %vm3387, %v3403, %v235
      %v3420 = vsel %vm3388, %v3404, %v236
      %v3421 = vsel %vm3389, %v3405, %v237
      %v3422 = vsel %vm3390, %v3406, %v238
      %v3423 = vsel %vm3391, %v3407, %v239
      %v3424 = vsel %vm3392, %v3408, %v240
      %v3425 = vsel %vm3393, %v3409, %v241
      %v3426 = vsel %vm3394, %v3410, %v242
      %v3427 = vsel %vm3395, %v3411, %v243
      %v3428 = vsel %vm3396, %v3412, %v244
      %v3429 = vsel %vm3397, %v3413, %v245
      %vm3430 = vcmp.lt.s32.totalorder %v1783, 1073741824
      %vm3431 = vcmp.lt.s32.totalorder %v1785, 1073741824
      %vm3432 = vcmp.lt.s32.totalorder %v1787, 1073741824
      %vm3433 = vcmp.lt.s32.totalorder %v1789, 1073741824
      %vm3434 = vcmp.lt.s32.totalorder %v1791, 1073741824
      %vm3435 = vcmp.lt.s32.totalorder %v1793, 1073741824
      %vm3436 = vcmp.lt.s32.totalorder %v1795, 1073741824
      %vm3437 = vcmp.lt.s32.totalorder %v1797, 1073741824
      %vm3438 = vcmp.lt.s32.totalorder %v1799, 1073741824
      %vm3439 = vcmp.lt.s32.totalorder %v1801, 1073741824
      %vm3440 = vcmp.lt.s32.totalorder %v1803, 1073741824
      %vm3441 = vcmp.lt.s32.totalorder %v1805, 1073741824
      %vm3442 = vcmp.lt.s32.totalorder %v1807, 1073741824
      %vm3443 = vcmp.lt.s32.totalorder %v1809, 1073741824
      %vm3444 = vcmp.lt.s32.totalorder %v1811, 1073741824
      %vm3445 = vcmp.lt.s32.totalorder %v1813, 1073741824
      %v3446 = vand.u32 %v1783, 127
      %v3447 = vand.u32 %v1785, 127
      %v3448 = vand.u32 %v1787, 127
      %v3449 = vand.u32 %v1789, 127
      %v3450 = vand.u32 %v1791, 127
      %v3451 = vand.u32 %v1793, 127
      %v3452 = vand.u32 %v1795, 127
      %v3453 = vand.u32 %v1797, 127
      %v3454 = vand.u32 %v1799, 127
      %v3455 = vand.u32 %v1801, 127
      %v3456 = vand.u32 %v1803, 127
      %v3457 = vand.u32 %v1805, 127
      %v3458 = vand.u32 %v1807, 127
      %v3459 = vand.u32 %v1809, 127
      %v3460 = vand.u32 %v1811, 127
      %v3461 = vand.u32 %v1813, 127
      %v3462 = vsel %vm3430, %v3446, %v230
      %v3463 = vsel %vm3431, %v3447, %v231
      %v3464 = vsel %vm3432, %v3448, %v232
      %v3465 = vsel %vm3433, %v3449, %v233
      %v3466 = vsel %vm3434, %v3450, %v234
      %v3467 = vsel %vm3435, %v3451, %v235
      %v3468 = vsel %vm3436, %v3452, %v236
      %v3469 = vsel %vm3437, %v3453, %v237
      %v3470 = vsel %vm3438, %v3454, %v238
      %v3471 = vsel %vm3439, %v3455, %v239
      %v3472 = vsel %vm3440, %v3456, %v240
      %v3473 = vsel %vm3441, %v3457, %v241
      %v3474 = vsel %vm3442, %v3458, %v242
      %v3475 = vsel %vm3443, %v3459, %v243
      %v3476 = vsel %vm3444, %v3460, %v244
      %v3477 = vsel %vm3445, %v3461, %v245
      %vm3478 = vcmp.lt.s32.totalorder %v2087, 1073741824
      %vm3479 = vcmp.lt.s32.totalorder %v2089, 1073741824
      %vm3480 = vcmp.lt.s32.totalorder %v2091, 1073741824
      %vm3481 = vcmp.lt.s32.totalorder %v2093, 1073741824
      %vm3482 = vcmp.lt.s32.totalorder %v2095, 1073741824
      %vm3483 = vcmp.lt.s32.totalorder %v2097, 1073741824
      %vm3484 = vcmp.lt.s32.totalorder %v2099, 1073741824
      %vm3485 = vcmp.lt.s32.totalorder %v2101, 1073741824
      %vm3486 = vcmp.lt.s32.totalorder %v2103, 1073741824
      %vm3487 = vcmp.lt.s32.totalorder %v2105, 1073741824
      %vm3488 = vcmp.lt.s32.totalorder %v2107, 1073741824
      %vm3489 = vcmp.lt.s32.totalorder %v2109, 1073741824
      %vm3490 = vcmp.lt.s32.totalorder %v2111, 1073741824
      %vm3491 = vcmp.lt.s32.totalorder %v2113, 1073741824
      %vm3492 = vcmp.lt.s32.totalorder %v2115, 1073741824
      %vm3493 = vcmp.lt.s32.totalorder %v2117, 1073741824
      %v3494 = vand.u32 %v2087, 127
      %v3495 = vand.u32 %v2089, 127
      %v3496 = vand.u32 %v2091, 127
      %v3497 = vand.u32 %v2093, 127
      %v3498 = vand.u32 %v2095, 127
      %v3499 = vand.u32 %v2097, 127
      %v3500 = vand.u32 %v2099, 127
      %v3501 = vand.u32 %v2101, 127
      %v3502 = vand.u32 %v2103, 127
      %v3503 = vand.u32 %v2105, 127
      %v3504 = vand.u32 %v2107, 127
      %v3505 = vand.u32 %v2109, 127
      %v3506 = vand.u32 %v2111, 127
      %v3507 = vand.u32 %v2113, 127
      %v3508 = vand.u32 %v2115, 127
      %v3509 = vand.u32 %v2117, 127
      %v3510 = vsel %vm3478, %v3494, %v230
      %v3511 = vsel %vm3479, %v3495, %v231
      %v3512 = vsel %vm3480, %v3496, %v232
      %v3513 = vsel %vm3481, %v3497, %v233
      %v3514 = vsel %vm3482, %v3498, %v234
      %v3515 = vsel %vm3483, %v3499, %v235
      %v3516 = vsel %vm3484, %v3500, %v236
      %v3517 = vsel %vm3485, %v3501, %v237
      %v3518 = vsel %vm3486, %v3502, %v238
      %v3519 = vsel %vm3487, %v3503, %v239
      %v3520 = vsel %vm3488, %v3504, %v240
      %v3521 = vsel %vm3489, %v3505, %v241
      %v3522 = vsel %vm3490, %v3506, %v242
      %v3523 = vsel %vm3491, %v3507, %v243
      %v3524 = vsel %vm3492, %v3508, %v244
      %v3525 = vsel %vm3493, %v3509, %v245
      %vm3526 = vcmp.lt.s32.totalorder %v2391, 1073741824
      %vm3527 = vcmp.lt.s32.totalorder %v2393, 1073741824
      %vm3528 = vcmp.lt.s32.totalorder %v2395, 1073741824
      %vm3529 = vcmp.lt.s32.totalorder %v2397, 1073741824
      %vm3530 = vcmp.lt.s32.totalorder %v2399, 1073741824
      %vm3531 = vcmp.lt.s32.totalorder %v2401, 1073741824
      %vm3532 = vcmp.lt.s32.totalorder %v2403, 1073741824
      %vm3533 = vcmp.lt.s32.totalorder %v2405, 1073741824
      %vm3534 = vcmp.lt.s32.totalorder %v2407, 1073741824
      %vm3535 = vcmp.lt.s32.totalorder %v2409, 1073741824
      %vm3536 = vcmp.lt.s32.totalorder %v2411, 1073741824
      %vm3537 = vcmp.lt.s32.totalorder %v2413, 1073741824
      %vm3538 = vcmp.lt.s32.totalorder %v2415, 1073741824
      %vm3539 = vcmp.lt.s32.totalorder %v2417, 1073741824
      %vm3540 = vcmp.lt.s32.totalorder %v2419, 1073741824
      %vm3541 = vcmp.lt.s32.totalorder %v2421, 1073741824
      %v3542 = vand.u32 %v2391, 127
      %v3543 = vand.u32 %v2393, 127
      %v3544 = vand.u32 %v2395, 127
      %v3545 = vand.u32 %v2397, 127
      %v3546 = vand.u32 %v2399, 127
      %v3547 = vand.u32 %v2401, 127
      %v3548 = vand.u32 %v2403, 127
      %v3549 = vand.u32 %v2405, 127
      %v3550 = vand.u32 %v2407, 127
      %v3551 = vand.u32 %v2409, 127
      %v3552 = vand.u32 %v2411, 127
      %v3553 = vand.u32 %v2413, 127
      %v3554 = vand.u32 %v2415, 127
      %v3555 = vand.u32 %v2417, 127
      %v3556 = vand.u32 %v2419, 127
      %v3557 = vand.u32 %v2421, 127
      %v3558 = vsel %vm3526, %v3542, %v230
      %v3559 = vsel %vm3527, %v3543, %v231
      %v3560 = vsel %vm3528, %v3544, %v232
      %v3561 = vsel %vm3529, %v3545, %v233
      %v3562 = vsel %vm3530, %v3546, %v234
      %v3563 = vsel %vm3531, %v3547, %v235
      %v3564 = vsel %vm3532, %v3548, %v236
      %v3565 = vsel %vm3533, %v3549, %v237
      %v3566 = vsel %vm3534, %v3550, %v238
      %v3567 = vsel %vm3535, %v3551, %v239
      %v3568 = vsel %vm3536, %v3552, %v240
      %v3569 = vsel %vm3537, %v3553, %v241
      %v3570 = vsel %vm3538, %v3554, %v242
      %v3571 = vsel %vm3539, %v3555, %v243
      %v3572 = vsel %vm3540, %v3556, %v244
      %v3573 = vsel %vm3541, %v3557, %v245
      %vm3574 = vcmp.lt.s32.totalorder %v2695, 1073741824
      %vm3575 = vcmp.lt.s32.totalorder %v2697, 1073741824
      %vm3576 = vcmp.lt.s32.totalorder %v2699, 1073741824
      %vm3577 = vcmp.lt.s32.totalorder %v2701, 1073741824
      %vm3578 = vcmp.lt.s32.totalorder %v2703, 1073741824
      %vm3579 = vcmp.lt.s32.totalorder %v2705, 1073741824
      %vm3580 = vcmp.lt.s32.totalorder %v2707, 1073741824
      %vm3581 = vcmp.lt.s32.totalorder %v2709, 1073741824
      %vm3582 = vcmp.lt.s32.totalorder %v2711, 1073741824
      %vm3583 = vcmp.lt.s32.totalorder %v2713, 1073741824
      %vm3584 = vcmp.lt.s32.totalorder %v2715, 1073741824
      %vm3585 = vcmp.lt.s32.totalorder %v2717, 1073741824
      %vm3586 = vcmp.lt.s32.totalorder %v2719, 1073741824
      %vm3587 = vcmp.lt.s32.totalorder %v2721, 1073741824
      %vm3588 = vcmp.lt.s32.totalorder %v2723, 1073741824
      %vm3589 = vcmp.lt.s32.totalorder %v2725, 1073741824
      %v3590 = vand.u32 %v2695, 127
      %v3591 = vand.u32 %v2697, 127
      %v3592 = vand.u32 %v2699, 127
      %v3593 = vand.u32 %v2701, 127
      %v3594 = vand.u32 %v2703, 127
      %v3595 = vand.u32 %v2705, 127
      %v3596 = vand.u32 %v2707, 127
      %v3597 = vand.u32 %v2709, 127
      %v3598 = vand.u32 %v2711, 127
      %v3599 = vand.u32 %v2713, 127
      %v3600 = vand.u32 %v2715, 127
      %v3601 = vand.u32 %v2717, 127
      %v3602 = vand.u32 %v2719, 127
      %v3603 = vand.u32 %v2721, 127
      %v3604 = vand.u32 %v2723, 127
      %v3605 = vand.u32 %v2725, 127
      %v3606 = vsel %vm3574, %v3590, %v230
      %v3607 = vsel %vm3575, %v3591, %v231
      %v3608 = vsel %vm3576, %v3592, %v232
      %v3609 = vsel %vm3577, %v3593, %v233
      %v3610 = vsel %vm3578, %v3594, %v234
      %v3611 = vsel %vm3579, %v3595, %v235
      %v3612 = vsel %vm3580, %v3596, %v236
      %v3613 = vsel %vm3581, %v3597, %v237
      %v3614 = vsel %vm3582, %v3598, %v238
      %v3615 = vsel %vm3583, %v3599, %v239
      %v3616 = vsel %vm3584, %v3600, %v240
      %v3617 = vsel %vm3585, %v3601, %v241
      %v3618 = vsel %vm3586, %v3602, %v242
      %v3619 = vsel %vm3587, %v3603, %v243
      %v3620 = vsel %vm3588, %v3604, %v244
      %v3621 = vsel %vm3589, %v3605, %v245
      %vm3622 = vcmp.lt.s32.totalorder %v2999, 1073741824
      %vm3623 = vcmp.lt.s32.totalorder %v3001, 1073741824
      %vm3624 = vcmp.lt.s32.totalorder %v3003, 1073741824
      %vm3625 = vcmp.lt.s32.totalorder %v3005, 1073741824
      %vm3626 = vcmp.lt.s32.totalorder %v3007, 1073741824
      %vm3627 = vcmp.lt.s32.totalorder %v3009, 1073741824
      %vm3628 = vcmp.lt.s32.totalorder %v3011, 1073741824
      %vm3629 = vcmp.lt.s32.totalorder %v3013, 1073741824
      %vm3630 = vcmp.lt.s32.totalorder %v3015, 1073741824
      %vm3631 = vcmp.lt.s32.totalorder %v3017, 1073741824
      %vm3632 = vcmp.lt.s32.totalorder %v3019, 1073741824
      %vm3633 = vcmp.lt.s32.totalorder %v3021, 1073741824
      %vm3634 = vcmp.lt.s32.totalorder %v3023, 1073741824
      %vm3635 = vcmp.lt.s32.totalorder %v3025, 1073741824
      %vm3636 = vcmp.lt.s32.totalorder %v3027, 1073741824
      %vm3637 = vcmp.lt.s32.totalorder %v3029, 1073741824
      %v3638 = vand.u32 %v2999, 127
      %v3639 = vand.u32 %v3001, 127
      %v3640 = vand.u32 %v3003, 127
      %v3641 = vand.u32 %v3005, 127
      %v3642 = vand.u32 %v3007, 127
      %v3643 = vand.u32 %v3009, 127
      %v3644 = vand.u32 %v3011, 127
      %v3645 = vand.u32 %v3013, 127
      %v3646 = vand.u32 %v3015, 127
      %v3647 = vand.u32 %v3017, 127
      %v3648 = vand.u32 %v3019, 127
      %v3649 = vand.u32 %v3021, 127
      %v3650 = vand.u32 %v3023, 127
      %v3651 = vand.u32 %v3025, 127
      %v3652 = vand.u32 %v3027, 127
      %v3653 = vand.u32 %v3029, 127
      %v3654 = vsel %vm3622, %v3638, %v230
      %v3655 = vsel %vm3623, %v3639, %v231
      %v3656 = vsel %vm3624, %v3640, %v232
      %v3657 = vsel %vm3625, %v3641, %v233
      %v3658 = vsel %vm3626, %v3642, %v234
      %v3659 = vsel %vm3627, %v3643, %v235
      %v3660 = vsel %vm3628, %v3644, %v236
      %v3661 = vsel %vm3629, %v3645, %v237
      %v3662 = vsel %vm3630, %v3646, %v238
      %v3663 = vsel %vm3631, %v3647, %v239
      %v3664 = vsel %vm3632, %v3648, %v240
      %v3665 = vsel %vm3633, %v3649, %v241
      %v3666 = vsel %vm3634, %v3650, %v242
      %v3667 = vsel %vm3635, %v3651, %v243
      %v3668 = vsel %vm3636, %v3652, %v244
      %v3669 = vsel %vm3637, %v3653, %v245
      %vm3670 = vcmp.lt.s32.totalorder %v3303, 1073741824
      %vm3671 = vcmp.lt.s32.totalorder %v3305, 1073741824
      %vm3672 = vcmp.lt.s32.totalorder %v3307, 1073741824
      %vm3673 = vcmp.lt.s32.totalorder %v3309, 1073741824
      %vm3674 = vcmp.lt.s32.totalorder %v3311, 1073741824
      %vm3675 = vcmp.lt.s32.totalorder %v3313, 1073741824
      %vm3676 = vcmp.lt.s32.totalorder %v3315, 1073741824
      %vm3677 = vcmp.lt.s32.totalorder %v3317, 1073741824
      %vm3678 = vcmp.lt.s32.totalorder %v3319, 1073741824
      %vm3679 = vcmp.lt.s32.totalorder %v3321, 1073741824
      %vm3680 = vcmp.lt.s32.totalorder %v3323, 1073741824
      %vm3681 = vcmp.lt.s32.totalorder %v3325, 1073741824
      %vm3682 = vcmp.lt.s32.totalorder %v3327, 1073741824
      %vm3683 = vcmp.lt.s32.totalorder %v3329, 1073741824
      %vm3684 = vcmp.lt.s32.totalorder %v3331, 1073741824
      %vm3685 = vcmp.lt.s32.totalorder %v3333, 1073741824
      %v3686 = vand.u32 %v3303, 127
      %v3687 = vand.u32 %v3305, 127
      %v3688 = vand.u32 %v3307, 127
      %v3689 = vand.u32 %v3309, 127
      %v3690 = vand.u32 %v3311, 127
      %v3691 = vand.u32 %v3313, 127
      %v3692 = vand.u32 %v3315, 127
      %v3693 = vand.u32 %v3317, 127
      %v3694 = vand.u32 %v3319, 127
      %v3695 = vand.u32 %v3321, 127
      %v3696 = vand.u32 %v3323, 127
      %v3697 = vand.u32 %v3325, 127
      %v3698 = vand.u32 %v3327, 127
      %v3699 = vand.u32 %v3329, 127
      %v3700 = vand.u32 %v3331, 127
      %v3701 = vand.u32 %v3333, 127
      %v3702 = vsel %vm3670, %v3686, %v230
      %v3703 = vsel %vm3671, %v3687, %v231
      %v3704 = vsel %vm3672, %v3688, %v232
      %v3705 = vsel %vm3673, %v3689, %v233
      %v3706 = vsel %vm3674, %v3690, %v234
      %v3707 = vsel %vm3675, %v3691, %v235
      %v3708 = vsel %vm3676, %v3692, %v236
      %v3709 = vsel %vm3677, %v3693, %v237
      %v3710 = vsel %vm3678, %v3694, %v238
      %v3711 = vsel %vm3679, %v3695, %v239
      %v3712 = vsel %vm3680, %v3696, %v240
      %v3713 = vsel %vm3681, %v3697, %v241
      %v3714 = vsel %vm3682, %v3698, %v242
      %v3715 = vsel %vm3683, %v3699, %v243
      %v3716 = vsel %vm3684, %v3700, %v244
      %v3717 = vsel %vm3685, %v3701, %v245
      %v3718 = vlaneseq
      %v3719 = vshrl.u32 %v3718, 7
      %v3720 = vsub.s32 %v756, %v3719
      %v3721 = vrot.slane %v3366, %v3720
      %v3722 = vadd.s32 %v756, 4294967288
      %v3723 = vlaneseq
      %v3724 = vshrl.u32 %v3723, 7
      %v3725 = vsub.s32 %v3722, %v3724
      %v3726 = vrot.slane %v3367, %v3725
      %vm3727 = vcmask 130112
      %v3728 = vsel %vm3727, %v3726, %v3721
      %v3729 = vadd.s32 %v756, 4294967280
      %v3730 = vlaneseq
      %v3731 = vshrl.u32 %v3730, 7
      %v3732 = vsub.s32 %v3729, %v3731
      %v3733 = vrot.slane %v3368, %v3732
      %vm3734 = vcmask 195712
      %v3735 = vsel %vm3734, %v3733, %v3728
      %v3736 = vadd.s32 %v756, 4294967272
      %v3737 = vlaneseq
      %v3738 = vshrl.u32 %v3737, 7
      %v3739 = vsub.s32 %v3736, %v3738
      %v3740 = vrot.slane %v3369, %v3739
      %vm3741 = vcmask 261312
      %v3742 = vsel %vm3741, %v3740, %v3735
      %v3743 = vadd.s32 %v756, 4294967264
      %v3744 = vlaneseq
      %v3745 = vshrl.u32 %v3744, 7
      %v3746 = vsub.s32 %v3743, %v3745
      %v3747 = vrot.slane %v3370, %v3746
      %vm3748 = vcmask 326912
      %v3749 = vsel %vm3748, %v3747, %v3742
      %v3750 = vadd.s32 %v756, 4294967256
      %v3751 = vlaneseq
      %v3752 = vshrl.u32 %v3751, 7
      %v3753 = vsub.s32 %v3750, %v3752
      %v3754 = vrot.slane %v3371, %v3753
      %vm3755 = vcmask 392512
      %v3756 = vsel %vm3755, %v3754, %v3749
      %v3757 = vadd.s32 %v756, 4294967248
      %v3758 = vlaneseq
      %v3759 = vshrl.u32 %v3758, 7
      %v3760 = vsub.s32 %v3757, %v3759
      %v3761 = vrot.slane %v3372, %v3760
      %vm3762 = vcmask 458112
      %v3763 = vsel %vm3762, %v3761, %v3756
      %v3764 = vadd.s32 %v756, 4294967240
      %v3765 = vlaneseq
      %v3766 = vshrl.u32 %v3765, 7
      %v3767 = vsub.s32 %v3764, %v3766
      %v3768 = vrot.slane %v3373, %v3767
      %vm3769 = vcmask 523712
      %v3770 = vsel %vm3769, %v3768, %v3763
      %v3771 = vadd.s32 %v756, 4294967232
      %v3772 = vlaneseq
      %v3773 = vshrl.u32 %v3772, 7
      %v3774 = vsub.s32 %v3771, %v3773
      %v3775 = vrot.slane %v3374, %v3774
      %vm3776 = vcmask 589312
      %v3777 = vsel %vm3776, %v3775, %v3770
      %v3778 = vadd.s32 %v756, 4294967224
      %v3779 = vlaneseq
      %v3780 = vshrl.u32 %v3779, 7
      %v3781 = vsub.s32 %v3778, %v3780
      %v3782 = vrot.slane %v3375, %v3781
      %vm3783 = vcmask 654912
      %v3784 = vsel %vm3783, %v3782, %v3777
      %v3785 = vadd.s32 %v756, 4294967216
      %v3786 = vlaneseq
      %v3787 = vshrl.u32 %v3786, 7
      %v3788 = vsub.s32 %v3785, %v3787
      %v3789 = vrot.slane %v3376, %v3788
      %vm3790 = vcmask 720512
      %v3791 = vsel %vm3790, %v3789, %v3784
      %v3792 = vadd.s32 %v756, 4294967208
      %v3793 = vlaneseq
      %v3794 = vshrl.u32 %v3793, 7
      %v3795 = vsub.s32 %v3792, %v3794
      %v3796 = vrot.slane %v3377, %v3795
      %vm3797 = vcmask 786112
      %v3798 = vsel %vm3797, %v3796, %v3791
      %v3799 = vadd.s32 %v756, 4294967200
      %v3800 = vlaneseq
      %v3801 = vshrl.u32 %v3800, 7
      %v3802 = vsub.s32 %v3799, %v3801
      %v3803 = vrot.slane %v3378, %v3802
      %vm3804 = vcmask 851712
      %v3805 = vsel %vm3804, %v3803, %v3798
      %v3806 = vadd.s32 %v756, 4294967192
      %v3807 = vlaneseq
      %v3808 = vshrl.u32 %v3807, 7
      %v3809 = vsub.s32 %v3806, %v3808
      %v3810 = vrot.slane %v3379, %v3809
      %vm3811 = vcmask 917312
      %v3812 = vsel %vm3811, %v3810, %v3805
      %v3813 = vadd.s32 %v756, 4294967184
      %v3814 = vlaneseq
      %v3815 = vshrl.u32 %v3814, 7
      %v3816 = vsub.s32 %v3813, %v3815
      %v3817 = vrot.slane %v3380, %v3816
      %vm3818 = vcmask 982912
      %v3819 = vsel %vm3818, %v3817, %v3812
      %v3820 = vadd.s32 %v756, 4294967176
      %v3821 = vlaneseq
      %v3822 = vshrl.u32 %v3821, 7
      %v3823 = vsub.s32 %v3820, %v3822
      %v3824 = vrot.slane %v3381, %v3823
      %vm3825 = vcmask 1048512
      %v3826 = vsel %vm3825, %v3824, %v3819
      %v3827 = vlaneseq
      %v3828 = vshrl.u32 %v3827, 7
      %v3829 = vsub.s32 %v756, %v3828
      %v3830 = vrot.slane %v3414, %v3829
      %v3831 = vlaneseq
      %v3832 = vshrl.u32 %v3831, 7
      %v3833 = vsub.s32 %v3722, %v3832
      %v3834 = vrot.slane %v3415, %v3833
      %v3835 = vsel %vm3727, %v3834, %v3830
      %v3836 = vlaneseq
      %v3837 = vshrl.u32 %v3836, 7
      %v3838 = vsub.s32 %v3729, %v3837
      %v3839 = vrot.slane %v3416, %v3838
      %v3840 = vsel %vm3734, %v3839, %v3835
      %v3841 = vlaneseq
      %v3842 = vshrl.u32 %v3841, 7
      %v3843 = vsub.s32 %v3736, %v3842
      %v3844 = vrot.slane %v3417, %v3843
      %v3845 = vsel %vm3741, %v3844, %v3840
      %v3846 = vlaneseq
      %v3847 = vshrl.u32 %v3846, 7
      %v3848 = vsub.s32 %v3743, %v3847
      %v3849 = vrot.slane %v3418, %v3848
      %v3850 = vsel %vm3748, %v3849, %v3845
      %v3851 = vlaneseq
      %v3852 = vshrl.u32 %v3851, 7
      %v3853 = vsub.s32 %v3750, %v3852
      %v3854 = vrot.slane %v3419, %v3853
      %v3855 = vsel %vm3755, %v3854, %v3850
      %v3856 = vlaneseq
      %v3857 = vshrl.u32 %v3856, 7
      %v3858 = vsub.s32 %v3757, %v3857
      %v3859 = vrot.slane %v3420, %v3858
      %v3860 = vsel %vm3762, %v3859, %v3855
      %v3861 = vlaneseq
      %v3862 = vshrl.u32 %v3861, 7
      %v3863 = vsub.s32 %v3764, %v3862
      %v3864 = vrot.slane %v3421, %v3863
      %v3865 = vsel %vm3769, %v3864, %v3860
      %v3866 = vlaneseq
      %v3867 = vshrl.u32 %v3866, 7
      %v3868 = vsub.s32 %v3771, %v3867
      %v3869 = vrot.slane %v3422, %v3868
      %v3870 = vsel %vm3776, %v3869, %v3865
      %v3871 = vlaneseq
      %v3872 = vshrl.u32 %v3871, 7
      %v3873 = vsub.s32 %v3778, %v3872
      %v3874 = vrot.slane %v3423, %v3873
      %v3875 = vsel %vm3783, %v3874, %v3870
      %v3876 = vlaneseq
      %v3877 = vshrl.u32 %v3876, 7
      %v3878 = vsub.s32 %v3785, %v3877
      %v3879 = vrot.slane %v3424, %v3878
      %v3880 = vsel %vm3790, %v3879, %v3875
      %v3881 = vlaneseq
      %v3882 = vshrl.u32 %v3881, 7
      %v3883 = vsub.s32 %v3792, %v3882
      %v3884 = vrot.slane %v3425, %v3883
      %v3885 = vsel %vm3797, %v3884, %v3880
      %v3886 = vlaneseq
      %v3887 = vshrl.u32 %v3886, 7
      %v3888 = vsub.s32 %v3799, %v3887
      %v3889 = vrot.slane %v3426, %v3888
      %v3890 = vsel %vm3804, %v3889, %v3885
      %v3891 = vlaneseq
      %v3892 = vshrl.u32 %v3891, 7
      %v3893 = vsub.s32 %v3806, %v3892
      %v3894 = vrot.slane %v3427, %v3893
      %v3895 = vsel %vm3811, %v3894, %v3890
      %v3896 = vlaneseq
      %v3897 = vshrl.u32 %v3896, 7
      %v3898 = vsub.s32 %v3813, %v3897
      %v3899 = vrot.slane %v3428, %v3898
      %v3900 = vsel %vm3818, %v3899, %v3895
      %v3901 = vlaneseq
      %v3902 = vshrl.u32 %v3901, 7
      %v3903 = vsub.s32 %v3820, %v3902
      %v3904 = vrot.slane %v3429, %v3903
      %v3905 = vsel %vm3825, %v3904, %v3900
      %v3906 = vlaneseq
      %v3907 = vshrl.u32 %v3906, 7
      %v3908 = vsub.s32 %v756, %v3907
      %v3909 = vrot.slane %v3462, %v3908
      %v3910 = vlaneseq
      %v3911 = vshrl.u32 %v3910, 7
      %v3912 = vsub.s32 %v3722, %v3911
      %v3913 = vrot.slane %v3463, %v3912
      %v3914 = vsel %vm3727, %v3913, %v3909
      %v3915 = vlaneseq
      %v3916 = vshrl.u32 %v3915, 7
      %v3917 = vsub.s32 %v3729, %v3916
      %v3918 = vrot.slane %v3464, %v3917
      %v3919 = vsel %vm3734, %v3918, %v3914
      %v3920 = vlaneseq
      %v3921 = vshrl.u32 %v3920, 7
      %v3922 = vsub.s32 %v3736, %v3921
      %v3923 = vrot.slane %v3465, %v3922
      %v3924 = vsel %vm3741, %v3923, %v3919
      %v3925 = vlaneseq
      %v3926 = vshrl.u32 %v3925, 7
      %v3927 = vsub.s32 %v3743, %v3926
      %v3928 = vrot.slane %v3466, %v3927
      %v3929 = vsel %vm3748, %v3928, %v3924
      %v3930 = vlaneseq
      %v3931 = vshrl.u32 %v3930, 7
      %v3932 = vsub.s32 %v3750, %v3931
      %v3933 = vrot.slane %v3467, %v3932
      %v3934 = vsel %vm3755, %v3933, %v3929
      %v3935 = vlaneseq
      %v3936 = vshrl.u32 %v3935, 7
      %v3937 = vsub.s32 %v3757, %v3936
      %v3938 = vrot.slane %v3468, %v3937
      %v3939 = vsel %vm3762, %v3938, %v3934
      %v3940 = vlaneseq
      %v3941 = vshrl.u32 %v3940, 7
      %v3942 = vsub.s32 %v3764, %v3941
      %v3943 = vrot.slane %v3469, %v3942
      %v3944 = vsel %vm3769, %v3943, %v3939
      %v3945 = vlaneseq
      %v3946 = vshrl.u32 %v3945, 7
      %v3947 = vsub.s32 %v3771, %v3946
      %v3948 = vrot.slane %v3470, %v3947
      %v3949 = vsel %vm3776, %v3948, %v3944
      %v3950 = vlaneseq
      %v3951 = vshrl.u32 %v3950, 7
      %v3952 = vsub.s32 %v3778, %v3951
      %v3953 = vrot.slane %v3471, %v3952
      %v3954 = vsel %vm3783, %v3953, %v3949
      %v3955 = vlaneseq
      %v3956 = vshrl.u32 %v3955, 7
      %v3957 = vsub.s32 %v3785, %v3956
      %v3958 = vrot.slane %v3472, %v3957
      %v3959 = vsel %vm3790, %v3958, %v3954
      %v3960 = vlaneseq
      %v3961 = vshrl.u32 %v3960, 7
      %v3962 = vsub.s32 %v3792, %v3961
      %v3963 = vrot.slane %v3473, %v3962
      %v3964 = vsel %vm3797, %v3963, %v3959
      %v3965 = vlaneseq
      %v3966 = vshrl.u32 %v3965, 7
      %v3967 = vsub.s32 %v3799, %v3966
      %v3968 = vrot.slane %v3474, %v3967
      %v3969 = vsel %vm3804, %v3968, %v3964
      %v3970 = vlaneseq
      %v3971 = vshrl.u32 %v3970, 7
      %v3972 = vsub.s32 %v3806, %v3971
      %v3973 = vrot.slane %v3475, %v3972
      %v3974 = vsel %vm3811, %v3973, %v3969
      %v3975 = vlaneseq
      %v3976 = vshrl.u32 %v3975, 7
      %v3977 = vsub.s32 %v3813, %v3976
      %v3978 = vrot.slane %v3476, %v3977
      %v3979 = vsel %vm3818, %v3978, %v3974
      %v3980 = vlaneseq
      %v3981 = vshrl.u32 %v3980, 7
      %v3982 = vsub.s32 %v3820, %v3981
      %v3983 = vrot.slane %v3477, %v3982
      %v3984 = vsel %vm3825, %v3983, %v3979
      %v3985 = vlaneseq
      %v3986 = vshrl.u32 %v3985, 7
      %v3987 = vsub.s32 %v756, %v3986
      %v3988 = vrot.slane %v3510, %v3987
      %v3989 = vlaneseq
      %v3990 = vshrl.u32 %v3989, 7
      %v3991 = vsub.s32 %v3722, %v3990
      %v3992 = vrot.slane %v3511, %v3991
      %v3993 = vsel %vm3727, %v3992, %v3988
      %v3994 = vlaneseq
      %v3995 = vshrl.u32 %v3994, 7
      %v3996 = vsub.s32 %v3729, %v3995
      %v3997 = vrot.slane %v3512, %v3996
      %v3998 = vsel %vm3734, %v3997, %v3993
      %v3999 = vlaneseq
      %v4000 = vshrl.u32 %v3999, 7
      %v4001 = vsub.s32 %v3736, %v4000
      %v4002 = vrot.slane %v3513, %v4001
      %v4003 = vsel %vm3741, %v4002, %v3998
      %v4004 = vlaneseq
      %v4005 = vshrl.u32 %v4004, 7
      %v4006 = vsub.s32 %v3743, %v4005
      %v4007 = vrot.slane %v3514, %v4006
      %v4008 = vsel %vm3748, %v4007, %v4003
      %v4009 = vlaneseq
      %v4010 = vshrl.u32 %v4009, 7
      %v4011 = vsub.s32 %v3750, %v4010
      %v4012 = vrot.slane %v3515, %v4011
      %v4013 = vsel %vm3755, %v4012, %v4008
      %v4014 = vlaneseq
      %v4015 = vshrl.u32 %v4014, 7
      %v4016 = vsub.s32 %v3757, %v4015
      %v4017 = vrot.slane %v3516, %v4016
      %v4018 = vsel %vm3762, %v4017, %v4013
      %v4019 = vlaneseq
      %v4020 = vshrl.u32 %v4019, 7
      %v4021 = vsub.s32 %v3764, %v4020
      %v4022 = vrot.slane %v3517, %v4021
      %v4023 = vsel %vm3769, %v4022, %v4018
      %v4024 = vlaneseq
      %v4025 = vshrl.u32 %v4024, 7
      %v4026 = vsub.s32 %v3771, %v4025
      %v4027 = vrot.slane %v3518, %v4026
      %v4028 = vsel %vm3776, %v4027, %v4023
      %v4029 = vlaneseq
      %v4030 = vshrl.u32 %v4029, 7
      %v4031 = vsub.s32 %v3778, %v4030
      %v4032 = vrot.slane %v3519, %v4031
      %v4033 = vsel %vm3783, %v4032, %v4028
      %v4034 = vlaneseq
      %v4035 = vshrl.u32 %v4034, 7
      %v4036 = vsub.s32 %v3785, %v4035
      %v4037 = vrot.slane %v3520, %v4036
      %v4038 = vsel %vm3790, %v4037, %v4033
      %v4039 = vlaneseq
      %v4040 = vshrl.u32 %v4039, 7
      %v4041 = vsub.s32 %v3792, %v4040
      %v4042 = vrot.slane %v3521, %v4041
      %v4043 = vsel %vm3797, %v4042, %v4038
      %v4044 = vlaneseq
      %v4045 = vshrl.u32 %v4044, 7
      %v4046 = vsub.s32 %v3799, %v4045
      %v4047 = vrot.slane %v3522, %v4046
      %v4048 = vsel %vm3804, %v4047, %v4043
      %v4049 = vlaneseq
      %v4050 = vshrl.u32 %v4049, 7
      %v4051 = vsub.s32 %v3806, %v4050
      %v4052 = vrot.slane %v3523, %v4051
      %v4053 = vsel %vm3811, %v4052, %v4048
      %v4054 = vlaneseq
      %v4055 = vshrl.u32 %v4054, 7
      %v4056 = vsub.s32 %v3813, %v4055
      %v4057 = vrot.slane %v3524, %v4056
      %v4058 = vsel %vm3818, %v4057, %v4053
      %v4059 = vlaneseq
      %v4060 = vshrl.u32 %v4059, 7
      %v4061 = vsub.s32 %v3820, %v4060
      %v4062 = vrot.slane %v3525, %v4061
      %v4063 = vsel %vm3825, %v4062, %v4058
      %v4064 = vlaneseq
      %v4065 = vshrl.u32 %v4064, 7
      %v4066 = vsub.s32 %v756, %v4065
      %v4067 = vrot.slane %v3558, %v4066
      %v4068 = vlaneseq
      %v4069 = vshrl.u32 %v4068, 7
      %v4070 = vsub.s32 %v3722, %v4069
      %v4071 = vrot.slane %v3559, %v4070
      %v4072 = vsel %vm3727, %v4071, %v4067
      %v4073 = vlaneseq
      %v4074 = vshrl.u32 %v4073, 7
      %v4075 = vsub.s32 %v3729, %v4074
      %v4076 = vrot.slane %v3560, %v4075
      %v4077 = vsel %vm3734, %v4076, %v4072
      %v4078 = vlaneseq
      %v4079 = vshrl.u32 %v4078, 7
      %v4080 = vsub.s32 %v3736, %v4079
      %v4081 = vrot.slane %v3561, %v4080
      %v4082 = vsel %vm3741, %v4081, %v4077
      %v4083 = vlaneseq
      %v4084 = vshrl.u32 %v4083, 7
      %v4085 = vsub.s32 %v3743, %v4084
      %v4086 = vrot.slane %v3562, %v4085
      %v4087 = vsel %vm3748, %v4086, %v4082
      %v4088 = vlaneseq
      %v4089 = vshrl.u32 %v4088, 7
      %v4090 = vsub.s32 %v3750, %v4089
      %v4091 = vrot.slane %v3563, %v4090
      %v4092 = vsel %vm3755, %v4091, %v4087
      %v4093 = vlaneseq
      %v4094 = vshrl.u32 %v4093, 7
      %v4095 = vsub.s32 %v3757, %v4094
      %v4096 = vrot.slane %v3564, %v4095
      %v4097 = vsel %vm3762, %v4096, %v4092
      %v4098 = vlaneseq
      %v4099 = vshrl.u32 %v4098, 7
      %v4100 = vsub.s32 %v3764, %v4099
      %v4101 = vrot.slane %v3565, %v4100
      %v4102 = vsel %vm3769, %v4101, %v4097
      %v4103 = vlaneseq
      %v4104 = vshrl.u32 %v4103, 7
      %v4105 = vsub.s32 %v3771, %v4104
      %v4106 = vrot.slane %v3566, %v4105
      %v4107 = vsel %vm3776, %v4106, %v4102
      %v4108 = vlaneseq
      %v4109 = vshrl.u32 %v4108, 7
      %v4110 = vsub.s32 %v3778, %v4109
      %v4111 = vrot.slane %v3567, %v4110
      %v4112 = vsel %vm3783, %v4111, %v4107
      %v4113 = vlaneseq
      %v4114 = vshrl.u32 %v4113, 7
      %v4115 = vsub.s32 %v3785, %v4114
      %v4116 = vrot.slane %v3568, %v4115
      %v4117 = vsel %vm3790, %v4116, %v4112
      %v4118 = vlaneseq
      %v4119 = vshrl.u32 %v4118, 7
      %v4120 = vsub.s32 %v3792, %v4119
      %v4121 = vrot.slane %v3569, %v4120
      %v4122 = vsel %vm3797, %v4121, %v4117
      %v4123 = vlaneseq
      %v4124 = vshrl.u32 %v4123, 7
      %v4125 = vsub.s32 %v3799, %v4124
      %v4126 = vrot.slane %v3570, %v4125
      %v4127 = vsel %vm3804, %v4126, %v4122
      %v4128 = vlaneseq
      %v4129 = vshrl.u32 %v4128, 7
      %v4130 = vsub.s32 %v3806, %v4129
      %v4131 = vrot.slane %v3571, %v4130
      %v4132 = vsel %vm3811, %v4131, %v4127
      %v4133 = vlaneseq
      %v4134 = vshrl.u32 %v4133, 7
      %v4135 = vsub.s32 %v3813, %v4134
      %v4136 = vrot.slane %v3572, %v4135
      %v4137 = vsel %vm3818, %v4136, %v4132
      %v4138 = vlaneseq
      %v4139 = vshrl.u32 %v4138, 7
      %v4140 = vsub.s32 %v3820, %v4139
      %v4141 = vrot.slane %v3573, %v4140
      %v4142 = vsel %vm3825, %v4141, %v4137
      %v4143 = vlaneseq
      %v4144 = vshrl.u32 %v4143, 7
      %v4145 = vsub.s32 %v756, %v4144
      %v4146 = vrot.slane %v3606, %v4145
      %v4147 = vlaneseq
      %v4148 = vshrl.u32 %v4147, 7
      %v4149 = vsub.s32 %v3722, %v4148
      %v4150 = vrot.slane %v3607, %v4149
      %v4151 = vsel %vm3727, %v4150, %v4146
      %v4152 = vlaneseq
      %v4153 = vshrl.u32 %v4152, 7
      %v4154 = vsub.s32 %v3729, %v4153
      %v4155 = vrot.slane %v3608, %v4154
      %v4156 = vsel %vm3734, %v4155, %v4151
      %v4157 = vlaneseq
      %v4158 = vshrl.u32 %v4157, 7
      %v4159 = vsub.s32 %v3736, %v4158
      %v4160 = vrot.slane %v3609, %v4159
      %v4161 = vsel %vm3741, %v4160, %v4156
      %v4162 = vlaneseq
      %v4163 = vshrl.u32 %v4162, 7
      %v4164 = vsub.s32 %v3743, %v4163
      %v4165 = vrot.slane %v3610, %v4164
      %v4166 = vsel %vm3748, %v4165, %v4161
      %v4167 = vlaneseq
      %v4168 = vshrl.u32 %v4167, 7
      %v4169 = vsub.s32 %v3750, %v4168
      %v4170 = vrot.slane %v3611, %v4169
      %v4171 = vsel %vm3755, %v4170, %v4166
      %v4172 = vlaneseq
      %v4173 = vshrl.u32 %v4172, 7
      %v4174 = vsub.s32 %v3757, %v4173
      %v4175 = vrot.slane %v3612, %v4174
      %v4176 = vsel %vm3762, %v4175, %v4171
      %v4177 = vlaneseq
      %v4178 = vshrl.u32 %v4177, 7
      %v4179 = vsub.s32 %v3764, %v4178
      %v4180 = vrot.slane %v3613, %v4179
      %v4181 = vsel %vm3769, %v4180, %v4176
      %v4182 = vlaneseq
      %v4183 = vshrl.u32 %v4182, 7
      %v4184 = vsub.s32 %v3771, %v4183
      %v4185 = vrot.slane %v3614, %v4184
      %v4186 = vsel %vm3776, %v4185, %v4181
      %v4187 = vlaneseq
      %v4188 = vshrl.u32 %v4187, 7
      %v4189 = vsub.s32 %v3778, %v4188
      %v4190 = vrot.slane %v3615, %v4189
      %v4191 = vsel %vm3783, %v4190, %v4186
      %v4192 = vlaneseq
      %v4193 = vshrl.u32 %v4192, 7
      %v4194 = vsub.s32 %v3785, %v4193
      %v4195 = vrot.slane %v3616, %v4194
      %v4196 = vsel %vm3790, %v4195, %v4191
      %v4197 = vlaneseq
      %v4198 = vshrl.u32 %v4197, 7
      %v4199 = vsub.s32 %v3792, %v4198
      %v4200 = vrot.slane %v3617, %v4199
      %v4201 = vsel %vm3797, %v4200, %v4196
      %v4202 = vlaneseq
      %v4203 = vshrl.u32 %v4202, 7
      %v4204 = vsub.s32 %v3799, %v4203
      %v4205 = vrot.slane %v3618, %v4204
      %v4206 = vsel %vm3804, %v4205, %v4201
      %v4207 = vlaneseq
      %v4208 = vshrl.u32 %v4207, 7
      %v4209 = vsub.s32 %v3806, %v4208
      %v4210 = vrot.slane %v3619, %v4209
      %v4211 = vsel %vm3811, %v4210, %v4206
      %v4212 = vlaneseq
      %v4213 = vshrl.u32 %v4212, 7
      %v4214 = vsub.s32 %v3813, %v4213
      %v4215 = vrot.slane %v3620, %v4214
      %v4216 = vsel %vm3818, %v4215, %v4211
      %v4217 = vlaneseq
      %v4218 = vshrl.u32 %v4217, 7
      %v4219 = vsub.s32 %v3820, %v4218
      %v4220 = vrot.slane %v3621, %v4219
      %v4221 = vsel %vm3825, %v4220, %v4216
      %v4222 = vlaneseq
      %v4223 = vshrl.u32 %v4222, 7
      %v4224 = vsub.s32 %v756, %v4223
      %v4225 = vrot.slane %v3654, %v4224
      %v4226 = vlaneseq
      %v4227 = vshrl.u32 %v4226, 7
      %v4228 = vsub.s32 %v3722, %v4227
      %v4229 = vrot.slane %v3655, %v4228
      %v4230 = vsel %vm3727, %v4229, %v4225
      %v4231 = vlaneseq
      %v4232 = vshrl.u32 %v4231, 7
      %v4233 = vsub.s32 %v3729, %v4232
      %v4234 = vrot.slane %v3656, %v4233
      %v4235 = vsel %vm3734, %v4234, %v4230
      %v4236 = vlaneseq
      %v4237 = vshrl.u32 %v4236, 7
      %v4238 = vsub.s32 %v3736, %v4237
      %v4239 = vrot.slane %v3657, %v4238
      %v4240 = vsel %vm3741, %v4239, %v4235
      %v4241 = vlaneseq
      %v4242 = vshrl.u32 %v4241, 7
      %v4243 = vsub.s32 %v3743, %v4242
      %v4244 = vrot.slane %v3658, %v4243
      %v4245 = vsel %vm3748, %v4244, %v4240
      %v4246 = vlaneseq
      %v4247 = vshrl.u32 %v4246, 7
      %v4248 = vsub.s32 %v3750, %v4247
      %v4249 = vrot.slane %v3659, %v4248
      %v4250 = vsel %vm3755, %v4249, %v4245
      %v4251 = vlaneseq
      %v4252 = vshrl.u32 %v4251, 7
      %v4253 = vsub.s32 %v3757, %v4252
      %v4254 = vrot.slane %v3660, %v4253
      %v4255 = vsel %vm3762, %v4254, %v4250
      %v4256 = vlaneseq
      %v4257 = vshrl.u32 %v4256, 7
      %v4258 = vsub.s32 %v3764, %v4257
      %v4259 = vrot.slane %v3661, %v4258
      %v4260 = vsel %vm3769, %v4259, %v4255
      %v4261 = vlaneseq
      %v4262 = vshrl.u32 %v4261, 7
      %v4263 = vsub.s32 %v3771, %v4262
      %v4264 = vrot.slane %v3662, %v4263
      %v4265 = vsel %vm3776, %v4264, %v4260
      %v4266 = vlaneseq
      %v4267 = vshrl.u32 %v4266, 7
      %v4268 = vsub.s32 %v3778, %v4267
      %v4269 = vrot.slane %v3663, %v4268
      %v4270 = vsel %vm3783, %v4269, %v4265
      %v4271 = vlaneseq
      %v4272 = vshrl.u32 %v4271, 7
      %v4273 = vsub.s32 %v3785, %v4272
      %v4274 = vrot.slane %v3664, %v4273
      %v4275 = vsel %vm3790, %v4274, %v4270
      %v4276 = vlaneseq
      %v4277 = vshrl.u32 %v4276, 7
      %v4278 = vsub.s32 %v3792, %v4277
      %v4279 = vrot.slane %v3665, %v4278
      %v4280 = vsel %vm3797, %v4279, %v4275
      %v4281 = vlaneseq
      %v4282 = vshrl.u32 %v4281, 7
      %v4283 = vsub.s32 %v3799, %v4282
      %v4284 = vrot.slane %v3666, %v4283
      %v4285 = vsel %vm3804, %v4284, %v4280
      %v4286 = vlaneseq
      %v4287 = vshrl.u32 %v4286, 7
      %v4288 = vsub.s32 %v3806, %v4287
      %v4289 = vrot.slane %v3667, %v4288
      %v4290 = vsel %vm3811, %v4289, %v4285
      %v4291 = vlaneseq
      %v4292 = vshrl.u32 %v4291, 7
      %v4293 = vsub.s32 %v3813, %v4292
      %v4294 = vrot.slane %v3668, %v4293
      %v4295 = vsel %vm3818, %v4294, %v4290
      %v4296 = vlaneseq
      %v4297 = vshrl.u32 %v4296, 7
      %v4298 = vsub.s32 %v3820, %v4297
      %v4299 = vrot.slane %v3669, %v4298
      %v4300 = vsel %vm3825, %v4299, %v4295
      %v4301 = vlaneseq
      %v4302 = vshrl.u32 %v4301, 7
      %v4303 = vsub.s32 %v756, %v4302
      %v4304 = vrot.slane %v3702, %v4303
      %v4305 = vlaneseq
      %v4306 = vshrl.u32 %v4305, 7
      %v4307 = vsub.s32 %v3722, %v4306
      %v4308 = vrot.slane %v3703, %v4307
      %v4309 = vsel %vm3727, %v4308, %v4304
      %v4310 = vlaneseq
      %v4311 = vshrl.u32 %v4310, 7
      %v4312 = vsub.s32 %v3729, %v4311
      %v4313 = vrot.slane %v3704, %v4312
      %v4314 = vsel %vm3734, %v4313, %v4309
      %v4315 = vlaneseq
      %v4316 = vshrl.u32 %v4315, 7
      %v4317 = vsub.s32 %v3736, %v4316
      %v4318 = vrot.slane %v3705, %v4317
      %v4319 = vsel %vm3741, %v4318, %v4314
      %v4320 = vlaneseq
      %v4321 = vshrl.u32 %v4320, 7
      %v4322 = vsub.s32 %v3743, %v4321
      %v4323 = vrot.slane %v3706, %v4322
      %v4324 = vsel %vm3748, %v4323, %v4319
      %v4325 = vlaneseq
      %v4326 = vshrl.u32 %v4325, 7
      %v4327 = vsub.s32 %v3750, %v4326
      %v4328 = vrot.slane %v3707, %v4327
      %v4329 = vsel %vm3755, %v4328, %v4324
      %v4330 = vlaneseq
      %v4331 = vshrl.u32 %v4330, 7
      %v4332 = vsub.s32 %v3757, %v4331
      %v4333 = vrot.slane %v3708, %v4332
      %v4334 = vsel %vm3762, %v4333, %v4329
      %v4335 = vlaneseq
      %v4336 = vshrl.u32 %v4335, 7
      %v4337 = vsub.s32 %v3764, %v4336
      %v4338 = vrot.slane %v3709, %v4337
      %v4339 = vsel %vm3769, %v4338, %v4334
      %v4340 = vlaneseq
      %v4341 = vshrl.u32 %v4340, 7
      %v4342 = vsub.s32 %v3771, %v4341
      %v4343 = vrot.slane %v3710, %v4342
      %v4344 = vsel %vm3776, %v4343, %v4339
      %v4345 = vlaneseq
      %v4346 = vshrl.u32 %v4345, 7
      %v4347 = vsub.s32 %v3778, %v4346
      %v4348 = vrot.slane %v3711, %v4347
      %v4349 = vsel %vm3783, %v4348, %v4344
      %v4350 = vlaneseq
      %v4351 = vshrl.u32 %v4350, 7
      %v4352 = vsub.s32 %v3785, %v4351
      %v4353 = vrot.slane %v3712, %v4352
      %v4354 = vsel %vm3790, %v4353, %v4349
      %v4355 = vlaneseq
      %v4356 = vshrl.u32 %v4355, 7
      %v4357 = vsub.s32 %v3792, %v4356
      %v4358 = vrot.slane %v3713, %v4357
      %v4359 = vsel %vm3797, %v4358, %v4354
      %v4360 = vlaneseq
      %v4361 = vshrl.u32 %v4360, 7
      %v4362 = vsub.s32 %v3799, %v4361
      %v4363 = vrot.slane %v3714, %v4362
      %v4364 = vsel %vm3804, %v4363, %v4359
      %v4365 = vlaneseq
      %v4366 = vshrl.u32 %v4365, 7
      %v4367 = vsub.s32 %v3806, %v4366
      %v4368 = vrot.slane %v3715, %v4367
      %v4369 = vsel %vm3811, %v4368, %v4364
      %v4370 = vlaneseq
      %v4371 = vshrl.u32 %v4370, 7
      %v4372 = vsub.s32 %v3813, %v4371
      %v4373 = vrot.slane %v3716, %v4372
      %v4374 = vsel %vm3818, %v4373, %v4369
      %v4375 = vlaneseq
      %v4376 = vshrl.u32 %v4375, 7
      %v4377 = vsub.s32 %v3820, %v4376
      %v4378 = vrot.slane %v3717, %v4377
      %v4379 = vsel %vm3825, %v4378, %v4374
      %vm4380 = vcmask 1040384
      %v4381 = vsel %vm4380, %v3826, %v3905
      %vm4382 = vcmask 1041408
      %v4383 = vsel %vm4382, %v4381, %v3984
      %vm4384 = vcmask 1042432
      %v4385 = vsel %vm4384, %v4383, %v4063
      %vm4386 = vcmask 1043456
      %v4387 = vsel %vm4386, %v4385, %v4142
      %vm4388 = vcmask 1044480
      %v4389 = vsel %vm4388, %v4387, %v4221
      %vm4390 = vcmask 1045504
      %v4391 = vsel %vm4390, %v4389, %v4300
      %vm4392 = vcmask 1046528
      %v4393 = vsel %vm4392, %v4391, %v4379
      %4394 = vst [vmem:[%s194] sm:$0xff] %v4393
      %p4395 = scmp.lt.s32.totalorder %s17, 1
      %s4396 = scalar_select %p4395, %s17, 1
      %p4397 = scmp.lt.s32.totalorder %s18, 0
      %s4398 = scalar_select %p4397, %s18, 0
      %s4399 = sadd.s32 %s4398, %s4396
      %s4400 = smul.addr %s4399, 8
      %s4401 = scalar_lea.vmem %s2, %s4400
      // Predicated region
      $region29: #{pointsift_res_forward.3} parent=27 // pred_check
        %p4402 = pneg %p99
      $region30: #{pointsift_res_forward.3} parent=27 // pred_check_branch
        %4404 = sbr.rel (%p4402) target = $region32
      $region31: #{pointsift_res_forward.3} parent=27 // pred_region
        _
      $region32: #{pointsift_res_forward.3} parent=27 // pred_fallthru
        _
    $region28: #{pointsift_res_forward.3} parent=5 // pred_fallthru
      _
    %p4405 = scmp.le.s32.totalorder 2, %s8
    // Predicated region
    $region33: #{pointsift_res_forward.3} parent=5 // pred_check
      %p4406 = pneg %p4405
    $region34: #{pointsift_res_forward.3} parent=5 // pred_check_branch
      %4408 = sbr.rel (%p4406) target = $region36
    $region35: #{pointsift_res_forward.3} parent=5 // pred_region
      %s4409 = ssub.s32 %s8, 2
      // Predicated region
      $region37: #{pointsift_res_forward.3} parent=35 // pred_check
        %p4410 = pneg %p105
      $region38: #{pointsift_res_forward.3} parent=35 // pred_check_branch
        %4412 = sbr.rel (%p4410) target = $region40
      $region39: #{pointsift_res_forward.3} parent=35 // pred_region
        %p4413 = scmp.lt.s32.totalorder %s19, 1
        %s4414 = scalar_select %p4413, %s19, 1
        %p4415 = scmp.lt.s32.totalorder %s20, 0
        %s4416 = scalar_select %p4415, %s20, 0
        %s4417 = sadd.s32 %s4416, %s4414
        %s4418 = smul.addr %s4417, 8
        %s4419 = scalar_lea.vmem %s2, %s4418
      $region40: #{pointsift_res_forward.3} parent=35 // pred_fallthru
        _
    $region36: #{pointsift_res_forward.3} parent=5 // pred_fallthru
      _
  $region6: #{pointsift_res_forward.3} parent=0 // loop_footer
    %s12 = sadd.s32 1, %s8
  $region7: #{pointsift_res_forward.3} parent=0 // loop_footer_branch
    %7 = sbr.rel target = $region3
  $region8: #{pointsift_res_forward.3} parent=0 // loop_exit
    _

// kernel: pointsift_res_forward.4
$region0: #{pointsift_res_forward.4}
  #allocation0 [shape = 'u32[]', space=smem, size = 0x4, offset = 0x4, fixed_abs, tag = 'smem constant byte address 0x4 - core index']
  #allocation1 [shape = 'u32[144,128]{1,0:T(1,128)}', space=vmem, size = 0x12000, scoped, tag = 'internal scratch']
  %s0 = inlined_call_operand.vmem [shape: bf16[32,24], index: 0, kind: input, shape index: {}]
  %s1 = inlined_call_operand.vmem [shape: bf16[32,256], index: 1, kind: input, shape index: {}]
  %s2 = inlined_call_operand.vmem [shape: bf16[6,128], index: 2, kind: input, shape index: {}]
  %s3 = inlined_call_operand.vmem [shape: bf16[64,128], index: 3, kind: input, shape index: {}]
  %s4 = inlined_call_operand.vmem [shape: f32[1,128], index: 4, kind: input, shape index: {}]
  %s5 = inlined_call_operand.vmem [shape: bf16[256,128], index: 5, kind: input, shape index: {}]
  %s6 = inlined_call_operand.vmem [shape: f32[1,128], index: 6, kind: input, shape index: {}]
  %s7 = inlined_call_operand.vmem [shape: bf16[256,128], index: 7, kind: input, shape index: {}]
  %s8 = inlined_call_operand.vmem [shape: f32[1,128], index: 8, kind: input, shape index: {}]
  %s9 = inlined_call_operand.vmem [shape: bf16[32,128], index: 9, kind: output, shape index: {}]
  %s10 = sld [smem:[#allocation0]]
  $region46: #{pointsift_res_forward.4} parent=0
    _
  %s12 = ssub.s32 1, %s10
  %s13 = scalar_select 0, %s12, %s10
  // Predicated region
  $region2: #{pointsift_res_forward.4} parent=0 // pred_check
    _
  $region3: #{pointsift_res_forward.4} parent=0 // pred_check_branch
    %15 = sbr.rel (0) target = $region5
  $region4: #{pointsift_res_forward.4} parent=0 // pred_region
    _
  $region5: #{pointsift_res_forward.4} parent=0 // pred_fallthru
    _
  // Predicated region
  $region6: #{pointsift_res_forward.4} parent=0 // pred_check
    _
  $region7: #{pointsift_res_forward.4} parent=0 // pred_check_branch
    %17 = sbr.rel (0) target = $region9
  $region8: #{pointsift_res_forward.4} parent=0 // pred_region
    _
  $region9: #{pointsift_res_forward.4} parent=0 // pred_fallthru
    _
  // Predicated region
  $region10: #{pointsift_res_forward.4} parent=0 // pred_check
    _
  $region11: #{pointsift_res_forward.4} parent=0 // pred_check_branch
    %19 = sbr.rel (0) target = $region13
  $region12: #{pointsift_res_forward.4} parent=0 // pred_region
    _
  $region13: #{pointsift_res_forward.4} parent=0 // pred_fallthru
    _
  // Predicated region
  $region14: #{pointsift_res_forward.4} parent=0 // pred_check
    _
  $region15: #{pointsift_res_forward.4} parent=0 // pred_check_branch
    %21 = sbr.rel (0) target = $region17
  $region16: #{pointsift_res_forward.4} parent=0 // pred_region
    _
  $region17: #{pointsift_res_forward.4} parent=0 // pred_fallthru
    _
  // Predicated region
  $region18: #{pointsift_res_forward.4} parent=0 // pred_check
    _
  $region19: #{pointsift_res_forward.4} parent=0 // pred_check_branch
    %23 = sbr.rel (0) target = $region21
  $region20: #{pointsift_res_forward.4} parent=0 // pred_region
    _
  $region21: #{pointsift_res_forward.4} parent=0 // pred_fallthru
    _
  // Predicated region
  $region22: #{pointsift_res_forward.4} parent=0 // pred_check
    _
  $region23: #{pointsift_res_forward.4} parent=0 // pred_check_branch
    %25 = sbr.rel (0) target = $region25
  $region24: #{pointsift_res_forward.4} parent=0 // pred_region
    _
  $region25: #{pointsift_res_forward.4} parent=0 // pred_fallthru
    _
  // Predicated region
  $region26: #{pointsift_res_forward.4} parent=0 // pred_check
    _
  $region27: #{pointsift_res_forward.4} parent=0 // pred_check_branch
    %27 = sbr.rel (0) target = $region29
  $region28: #{pointsift_res_forward.4} parent=0 // pred_region
    _
  $region29: #{pointsift_res_forward.4} parent=0 // pred_fallthru
    _
  // Predicated region
  $region30: #{pointsift_res_forward.4} parent=0 // pred_check
    _
  $region31: #{pointsift_res_forward.4} parent=0 // pred_check_branch
    %29 = sbr.rel (0) target = $region33
  $region32: #{pointsift_res_forward.4} parent=0 // pred_region
    _
  $region33: #{pointsift_res_forward.4} parent=0 // pred_fallthru
    _
  // Predicated region
  $region34: #{pointsift_res_forward.4} parent=0 // pred_check
    _
  $region35: #{pointsift_res_forward.4} parent=0 // pred_check_branch
    %31 = sbr.rel (0) target = $region37
  $region36: #{pointsift_res_forward.4} parent=0 // pred_region
    _
  $region37: #{pointsift_res_forward.4} parent=0 // pred_fallthru
    _
  %v33 = vld [vmem:[%s0] sm:$0xf]
  %v34 = vld [vmem:[%s0 + $0x4] sm:$0xf]
  %v35 = vld [vmem:[%s0 + $0x8] sm:$0xf]
  %v36 = vld [vmem:[%s0 + $0xc] sm:$0xf]
  %v37 = vld [vmem:[%s1] sm:$0xff]
  %v38 = vld [vmem:[%s1 + $0x8] sm:$0xff]
  %v39 = vld [vmem:[%s1 + $0x10] sm:$0xff]
  %v40 = vld [vmem:[%s1 + $0x18] sm:$0xff]
  %v45 = vunpack.c.l.b16 %v33
  %v46 = vunpack.c.l.b16 %v34
  %v47 = vunpack.c.l.b16 %v35
  %v48 = vunpack.c.l.b16 %v36
  %v49 = vpack.c.b16 %v46, %v45
  %v50 = vpack.c.b16 %v48, %v47
  %51 = vrot.lane.b32.xlu0 %v49, 122
  %v52 = vpop.permute.xlu0 %51
  %53 = vrot.lane.b32.xlu0 %v50, 122
  %v54 = vpop.permute.xlu0 %53
  %55 = vrot.lane.b32.xlu0 %v49, 116
  %v56 = vpop.permute.xlu0 %55
  %57 = vrot.lane.b32.xlu0 %v50, 116
  %v58 = vpop.permute.xlu0 %57
  %59 = vrot.lane.b32.xlu0 %v49, 110
  %v60 = vpop.permute.xlu0 %59
  %61 = vrot.lane.b32.xlu0 %v50, 110
  %v62 = vpop.permute.xlu0 %61
  %v67 = vunpack.c.l.b16 %v37
  %v68 = vunpack.c.l.b16 %v38
  %v69 = vunpack.c.l.b16 %v39
  %v70 = vunpack.c.l.b16 %v40
  %v71 = vpack.c.b16 %v68, %v67
  %v72 = vpack.c.b16 %v70, %v69
  %73 = vrot.lane.b32.xlu0 %v71, 64
  %v74 = vpop.permute.xlu0 %73
  %75 = vrot.lane.b32.xlu0 %v72, 64
  %v76 = vpop.permute.xlu0 %75
  %v77 = vunpack.c.h.b16 %v37
  %v78 = vunpack.c.h.b16 %v38
  %v79 = vunpack.c.h.b16 %v39
  %v80 = vunpack.c.h.b16 %v40
  %v81 = vpack.c.b16 %v78, %v77
  %v82 = vpack.c.b16 %v80, %v79
  %83 = vrot.lane.b32.xlu0 %v81, 64
  %v84 = vpop.permute.xlu0 %83
  %85 = vrot.lane.b32.xlu0 %v82, 64
  %v86 = vpop.permute.xlu0 %85
  %v87 = vld [vmem:[%s3] sm:$0xf]
  %v88 = vld [vmem:[%s3 + $0x4] sm:$0xf]
  %v89 = vld [vmem:[%s3 + $0x8] sm:$0xf]
  %v90 = vld [vmem:[%s3 + $0xc] sm:$0xf]
  %v91 = vld [vmem:[%s3 + $0x10] sm:$0xf]
  %v92 = vld [vmem:[%s3 + $0x14] sm:$0xf]
  %v93 = vld [vmem:[%s3 + $0x18] sm:$0xf]
  %v94 = vld [vmem:[%s3 + $0x1c] sm:$0xf]
  %v95 = vld [vmem:[%s2] sm:$0x7]
  %vm96 = vcmask 48128
  %v98 = vsel %vm96, %v49, 0
  %v101 = vsel %vm96, %v50, 0
  %v104 = vsel %vm96, %v52, 0
  %v107 = vsel %vm96, %v54, 0
  %v110 = vsel %vm96, %v56, 0
  %v113 = vsel %vm96, %v58, 0
  %v116 = vsel %vm96, %v60, 0
  %v119 = vsel %vm96, %v62, 0
  %vm121 = vcmask 1042432
  %v123 = vsel %vm121, %v95, 0
  %125 = vmatprep.subr.bf16.mxu0 0
  %126 = vmatpush1.bf16.msra.mxu0 0
  %127 = vmatprep.subr.bf16.mxu0 0
  %128 = vmatpush1.bf16.msra.mxu0 0
  %129 = vmatprep.subr.bf16.mxu0 0
  %130 = vmatpush1.bf16.msra.mxu0 0
  %131 = vmatprep.subr.bf16.mxu0 0
  %132 = vmatpush1.bf16.msra.mxu0 0
  %133 = vmatprep.subr.bf16.mxu0 0
  %134 = vmatpush1.bf16.msra.mxu0 0
  %135 = vmatprep.subr.bf16.mxu0 0
  %136 = vmatpush1.bf16.msra.mxu0 0
  %137 = vmatprep.subr.bf16.mxu0 0
  %138 = vmatpush1.bf16.msra.mxu0 0
  %139 = vmatprep.subr.bf16.mxu0 0
  %140 = vmatpush1.bf16.msra.mxu0 %v123
  %141 = vmatprep.subr.bf16.mxu0 0
  %142 = vmatpush2.bf16.msra.mxu0 0
  %143 = vmatprep.subr.bf16.mxu0 0
  %144 = vmatpush2.bf16.msra.mxu0 0
  %145 = vmatprep.subr.bf16.mxu0 0
  %146 = vmatpush2.bf16.msra.mxu0 0
  %147 = vmatprep.subr.bf16.mxu0 0
  %148 = vmatpush2.bf16.msra.mxu0 0
  %149 = vmatprep.subr.bf16.mxu0 0
  %150 = vmatpush2.bf16.msra.mxu0 0
  %151 = vmatprep.subr.bf16.mxu0 0
  %152 = vmatpush2.bf16.msra.mxu0 0
  %153 = vmatprep.subr.bf16.mxu0 0
  %154 = vmatpush2.bf16.msra.mxu0 0
  %155 = vmatprep.subr.bf16.mxu0 0
  %156 = vmatpush2.bf16.msra.mxu0 0
  %157 = vmatprep.mubr.bf16.mxu0 0
  %158 = vmatmul.mubr.bf16.gmra.mxu0 %v98
  %v159 = vpop.f32.mrf.mxu0
  %v160 = vadd.f32 0.0, %v159
  %v161 = vpop.f32.mrf.mxu0
  %v162 = vpop.f32.mrf.mxu0
  %v163 = vadd.f32 0.0, %v162
  %v164 = vpop.f32.mrf.mxu0
  %165 = vmatprep.mubr.bf16.mxu0 0
  %166 = vmatmul.mubr.bf16.gmra.mxu0 %v101
  %v167 = vpop.f32.mrf.mxu0
  %v168 = vadd.f32 0.0, %v167
  %v169 = vpop.f32.mrf.mxu0
  %v170 = vpop.f32.mrf.mxu0
  %v171 = vadd.f32 0.0, %v170
  %v172 = vpop.f32.mrf.mxu0
  %173 = vmatprep.mubr.bf16.mxu0 0
  %174 = vmatmul.mubr.bf16.gmra.mxu0 %v104
  %v175 = vpop.f32.mrf.mxu0
  %v176 = vadd.f32 0.0, %v175
  %v177 = vpop.f32.mrf.mxu0
  %v178 = vpop.f32.mrf.mxu0
  %v179 = vadd.f32 0.0, %v178
  %v180 = vpop.f32.mrf.mxu0
  %181 = vmatprep.mubr.bf16.mxu0 0
  %182 = vmatmul.mubr.bf16.gmra.mxu0 %v107
  %v183 = vpop.f32.mrf.mxu0
  %v184 = vadd.f32 0.0, %v183
  %v185 = vpop.f32.mrf.mxu0
  %v186 = vpop.f32.mrf.mxu0
  %v187 = vadd.f32 0.0, %v186
  %v188 = vpop.f32.mrf.mxu0
  %189 = vmatprep.mubr.bf16.mxu0 0
  %190 = vmatmul.mubr.bf16.gmra.mxu0 %v110
  %v191 = vpop.f32.mrf.mxu0
  %v192 = vadd.f32 0.0, %v191
  %v193 = vpop.f32.mrf.mxu0
  %v194 = vpop.f32.mrf.mxu0
  %v195 = vadd.f32 0.0, %v194
  %v196 = vpop.f32.mrf.mxu0
  %197 = vmatprep.mubr.bf16.mxu0 0
  %198 = vmatmul.mubr.bf16.gmra.mxu0 %v113
  %v199 = vpop.f32.mrf.mxu0
  %v200 = vadd.f32 0.0, %v199
  %v201 = vpop.f32.mrf.mxu0
  %v202 = vpop.f32.mrf.mxu0
  %v203 = vadd.f32 0.0, %v202
  %v204 = vpop.f32.mrf.mxu0
  %205 = vmatprep.mubr.bf16.mxu0 0
  %206 = vmatmul.mubr.bf16.gmra.mxu0 %v116
  %v207 = vpop.f32.mrf.mxu0
  %v208 = vadd.f32 0.0, %v207
  %v209 = vpop.f32.mrf.mxu0
  %v210 = vpop.f32.mrf.mxu0
  %v211 = vadd.f32 0.0, %v210
  %v212 = vpop.f32.mrf.mxu0
  %213 = vmatprep.mubr.bf16.mxu0 0
  %214 = vmatmul.mubr.bf16.gmra.mxu0 %v119
  %v215 = vpop.f32.mrf.mxu0
  %v216 = vadd.f32 0.0, %v215
  %v217 = vpop.f32.mrf.mxu0
  %v218 = vpop.f32.mrf.mxu0
  %v219 = vadd.f32 0.0, %v218
  %v220 = vpop.f32.mrf.mxu0
  %221 = vdwg.mxu0
  %v230 = vunpack.c.l.b16 %v87
  %v231 = vunpack.c.l.b16 %v88
  %v232 = vunpack.c.l.b16 %v89
  %v233 = vunpack.c.l.b16 %v90
  %v234 = vunpack.c.l.b16 %v91
  %v235 = vunpack.c.l.b16 %v92
  %v236 = vunpack.c.l.b16 %v93
  %v237 = vunpack.c.l.b16 %v94
  %v238 = vpack.c.b16 %v231, %v230
  %v239 = vpack.c.b16 %v233, %v232
  %v240 = vpack.c.b16 %v235, %v234
  %v241 = vpack.c.b16 %v237, %v236
  %vm246 = vcmask 523264
  %v248 = vsel %vm246, %v71, 0
  %v251 = vsel %vm246, %v72, 0
  %v254 = vsel %vm246, %v74, 0
  %v257 = vsel %vm246, %v76, 0
  %v260 = vsel %vm246, %v81, 0
  %v263 = vsel %vm246, %v82, 0
  %v266 = vsel %vm246, %v84, 0
  %v269 = vsel %vm246, %v86, 0
  %271 = vmatprep.subr.bf16.mxu0 0
  %272 = vmatpush1.bf16.msra.mxu0 0
  %273 = vmatprep.subr.bf16.mxu0 0
  %274 = vmatpush1.bf16.msra.mxu0 0
  %275 = vmatprep.subr.bf16.mxu0 0
  %276 = vmatpush1.bf16.msra.mxu0 0
  %277 = vmatprep.subr.bf16.mxu0 0
  %278 = vmatpush1.bf16.msra.mxu0 0
  %279 = vmatprep.subr.bf16.mxu0 0
  %280 = vmatpush1.bf16.msra.mxu0 %v241
  %281 = vmatprep.subr.bf16.mxu0 0
  %282 = vmatpush1.bf16.msra.mxu0 %v240
  %283 = vmatprep.subr.bf16.mxu0 0
  %284 = vmatpush1.bf16.msra.mxu0 %v239
  %285 = vmatprep.subr.bf16.mxu0 0
  %286 = vmatpush1.bf16.msra.mxu0 %v238
  %287 = vmatprep.subr.bf16.mxu0 0
  %288 = vmatpush2.bf16.msra.mxu0 0
  %289 = vmatprep.subr.bf16.mxu0 0
  %290 = vmatpush2.bf16.msra.mxu0 0
  %291 = vmatprep.subr.bf16.mxu0 0
  %292 = vmatpush2.bf16.msra.mxu0 0
  %293 = vmatprep.subr.bf16.mxu0 0
  %294 = vmatpush2.bf16.msra.mxu0 0
  %295 = vmatprep.subr.bf16.mxu0 0
  %296 = vmatpush2.bf16.msra.mxu0 0
  %297 = vmatprep.subr.bf16.mxu0 0
  %298 = vmatpush2.bf16.msra.mxu0 0
  %299 = vmatprep.subr.bf16.mxu0 0
  %300 = vmatpush2.bf16.msra.mxu0 0
  %301 = vmatprep.subr.bf16.mxu0 0
  %302 = vmatpush2.bf16.msra.mxu0 0
  %303 = vmatprep.mubr.bf16.mxu0 0
  %304 = vmatmul.mubr.bf16.gmra.mxu0 %v248
  %v305 = vpop.f32.mrf.mxu0
  %v306 = vadd.f32 %v160, %v305
  %v307 = vpop.f32.mrf.mxu0
  %v308 = vpop.f32.mrf.mxu0
  %v309 = vadd.f32 %v163, %v308
  %v310 = vpop.f32.mrf.mxu0
  %311 = vmatprep.mubr.bf16.mxu0 0
  %312 = vmatmul.mubr.bf16.gmra.mxu0 %v251
  %v313 = vpop.f32.mrf.mxu0
  %v314 = vadd.f32 %v168, %v313
  %v315 = vpop.f32.mrf.mxu0
  %v316 = vpop.f32.mrf.mxu0
  %v317 = vadd.f32 %v171, %v316
  %v318 = vpop.f32.mrf.mxu0
  %319 = vmatprep.mubr.bf16.mxu0 0
  %320 = vmatmul.mubr.bf16.gmra.mxu0 %v254
  %v321 = vpop.f32.mrf.mxu0
  %v322 = vadd.f32 %v176, %v321
  %v323 = vpop.f32.mrf.mxu0
  %v324 = vpop.f32.mrf.mxu0
  %v325 = vadd.f32 %v179, %v324
  %v326 = vpop.f32.mrf.mxu0
  %327 = vmatprep.mubr.bf16.mxu0 0
  %328 = vmatmul.mubr.bf16.gmra.mxu0 %v257
  %v329 = vpop.f32.mrf.mxu0
  %v330 = vadd.f32 %v184, %v329
  %v331 = vpop.f32.mrf.mxu0
  %v332 = vpop.f32.mrf.mxu0
  %v333 = vadd.f32 %v187, %v332
  %v334 = vpop.f32.mrf.mxu0
  %335 = vmatprep.mubr.bf16.mxu0 0
  %336 = vmatmul.mubr.bf16.gmra.mxu0 %v260
  %v337 = vpop.f32.mrf.mxu0
  %v338 = vadd.f32 %v192, %v337
  %v339 = vpop.f32.mrf.mxu0
  %v340 = vpop.f32.mrf.mxu0
  %v341 = vadd.f32 %v195, %v340
  %v342 = vpop.f32.mrf.mxu0
  %343 = vmatprep.mubr.bf16.mxu0 0
  %344 = vmatmul.mubr.bf16.gmra.mxu0 %v263
  %v345 = vpop.f32.mrf.mxu0
  %v346 = vadd.f32 %v200, %v345
  %v347 = vpop.f32.mrf.mxu0
  %v348 = vpop.f32.mrf.mxu0
  %v349 = vadd.f32 %v203, %v348
  %v350 = vpop.f32.mrf.mxu0
  %351 = vmatprep.mubr.bf16.mxu0 0
  %352 = vmatmul.mubr.bf16.gmra.mxu0 %v266
  %v353 = vpop.f32.mrf.mxu0
  %v354 = vadd.f32 %v208, %v353
  %v355 = vpop.f32.mrf.mxu0
  %v356 = vpop.f32.mrf.mxu0
  %v357 = vadd.f32 %v211, %v356
  %v358 = vpop.f32.mrf.mxu0
  %359 = vmatprep.mubr.bf16.mxu0 0
  %360 = vmatmul.mubr.bf16.gmra.mxu0 %v269
  %v361 = vpop.f32.mrf.mxu0
  %v362 = vadd.f32 %v216, %v361
  %v363 = vpop.f32.mrf.mxu0
  %v364 = vpop.f32.mrf.mxu0
  %v365 = vadd.f32 %v219, %v364
  %v366 = vpop.f32.mrf.mxu0
  %367 = vdwg.mxu0
  %v368 = vld [vmem:[%s4] sm:$0x1]
  %v370 = vlaneseq
  %v371 = vshrl.u32 %v370, 7
  %v372 = vsub.s32 0, %v371
  %v373 = vrot.slane %v368, %v372
  %v375 = vadd.f32 %v306, %v373
  %v376 = vadd.f32 %v309, %v373
  %v377 = vadd.f32 %v314, %v373
  %v378 = vadd.f32 %v317, %v373
  %v379 = vadd.f32 %v322, %v373
  %v380 = vadd.f32 %v325, %v373
  %v381 = vadd.f32 %v330, %v373
  %v382 = vadd.f32 %v333, %v373
  %v383 = vadd.f32 %v338, %v373
  %v384 = vadd.f32 %v341, %v373
  %v385 = vadd.f32 %v346, %v373
  %v386 = vadd.f32 %v349, %v373
  %v387 = vadd.f32 %v354, %v373
  %v388 = vadd.f32 %v357, %v373
  %v389 = vadd.f32 %v362, %v373
  %v390 = vadd.f32 %v365, %v373
  %v391 = vmax.f32 %v375, 0.0
  %v392 = vmax.f32 %v376, 0.0
  %v393 = vmax.f32 %v377, 0.0
  %v394 = vmax.f32 %v378, 0.0
  %v395 = vmax.f32 %v379, 0.0
  %v396 = vmax.f32 %v380, 0.0
  %v397 = vmax.f32 %v381, 0.0
  %v398 = vmax.f32 %v382, 0.0
  %v399 = vmax.f32 %v383, 0.0
  %v400 = vmax.f32 %v384, 0.0
  %v401 = vmax.f32 %v385, 0.0
  %v402 = vmax.f32 %v386, 0.0
  %v403 = vmax.f32 %v387, 0.0
  %v404 = vmax.f32 %v388, 0.0
  %v405 = vmax.f32 %v389, 0.0
  %v406 = vmax.f32 %v390, 0.0
  %v407 = vpack.c.bf16 %v392, %v391
  %v408 = vpack.c.bf16 %v394, %v393
  %v409 = vpack.c.bf16 %v396, %v395
  %v410 = vpack.c.bf16 %v398, %v397
  %v411 = vpack.c.bf16 %v400, %v399
  %v412 = vpack.c.bf16 %v402, %v401
  %v413 = vpack.c.bf16 %v404, %v403
  %v414 = vpack.c.bf16 %v406, %v405
  %v415 = vld [vmem:[%s5] sm:$0xf]
  %v416 = vld [vmem:[%s5 + $0x4] sm:$0xf]
  %v417 = vld [vmem:[%s5 + $0x8] sm:$0xf]
  %v418 = vld [vmem:[%s5 + $0xc] sm:$0xf]
  %v419 = vld [vmem:[%s5 + $0x10] sm:$0xf]
  %v420 = vld [vmem:[%s5 + $0x14] sm:$0xf]
  %v421 = vld [vmem:[%s5 + $0x18] sm:$0xf]
  %v422 = vld [vmem:[%s5 + $0x1c] sm:$0xf]
  %v423 = vld [vmem:[%s5 + $0x20] sm:$0xf]
  %v424 = vld [vmem:[%s5 + $0x24] sm:$0xf]
  %v425 = vld [vmem:[%s5 + $0x28] sm:$0xf]
  %v426 = vld [vmem:[%s5 + $0x2c] sm:$0xf]
  %v427 = vld [vmem:[%s5 + $0x30] sm:$0xf]
  %v428 = vld [vmem:[%s5 + $0x34] sm:$0xf]
  %v429 = vld [vmem:[%s5 + $0x38] sm:$0xf]
  %v430 = vld [vmem:[%s5 + $0x3c] sm:$0xf]
  %v431 = vld [vmem:[%s5 + $0x40] sm:$0xf]
  %v432 = vld [vmem:[%s5 + $0x44] sm:$0xf]
  %v433 = vld [vmem:[%s5 + $0x48] sm:$0xf]
  %v434 = vld [vmem:[%s5 + $0x4c] sm:$0xf]
  %v435 = vld [vmem:[%s5 + $0x50] sm:$0xf]
  %v436 = vld [vmem:[%s5 + $0x54] sm:$0xf]
  %v437 = vld [vmem:[%s5 + $0x58] sm:$0xf]
  %v438 = vld [vmem:[%s5 + $0x5c] sm:$0xf]
  %v439 = vld [vmem:[%s5 + $0x60] sm:$0xf]
  %v440 = vld [vmem:[%s5 + $0x64] sm:$0xf]
  %v441 = vld [vmem:[%s5 + $0x68] sm:$0xf]
  %v442 = vld [vmem:[%s5 + $0x6c] sm:$0xf]
  %v443 = vld [vmem:[%s5 + $0x70] sm:$0xf]
  %v444 = vld [vmem:[%s5 + $0x74] sm:$0xf]
  %v445 = vld [vmem:[%s5 + $0x78] sm:$0xf]
  %v446 = vld [vmem:[%s5 + $0x7c] sm:$0xf]
  %v447 = vld [vmem:[%s6] sm:$0x1]
  %v449 = vlaneseq
  %v450 = vshrl.u32 %v449, 7
  %v451 = vsub.s32 0, %v450
  %v452 = vrot.slane %v447, %v451
  %v486 = vunpack.c.l.b16 %v415
  %v487 = vunpack.c.l.b16 %v416
  %v488 = vunpack.c.l.b16 %v417
  %v489 = vunpack.c.l.b16 %v418
  %v490 = vunpack.c.l.b16 %v419
  %v491 = vunpack.c.l.b16 %v420
  %v492 = vunpack.c.l.b16 %v421
  %v493 = vunpack.c.l.b16 %v422
  %v494 = vunpack.c.l.b16 %v423
  %v495 = vunpack.c.l.b16 %v424
  %v496 = vunpack.c.l.b16 %v425
  %v497 = vunpack.c.l.b16 %v426
  %v498 = vunpack.c.l.b16 %v427
  %v499 = vunpack.c.l.b16 %v428
  %v500 = vunpack.c.l.b16 %v429
  %v501 = vunpack.c.l.b16 %v430
  %v502 = vunpack.c.l.b16 %v431
  %v503 = vunpack.c.l.b16 %v432
  %v504 = vunpack.c.l.b16 %v433
  %v505 = vunpack.c.l.b16 %v434
  %v506 = vunpack.c.l.b16 %v435
  %v507 = vunpack.c.l.b16 %v436
  %v508 = vunpack.c.l.b16 %v437
  %v509 = vunpack.c.l.b16 %v438
  %v510 = vunpack.c.l.b16 %v439
  %v511 = vunpack.c.l.b16 %v440
  %v512 = vunpack.c.l.b16 %v441
  %v513 = vunpack.c.l.b16 %v442
  %v514 = vunpack.c.l.b16 %v443
  %v515 = vunpack.c.l.b16 %v444
  %v516 = vunpack.c.l.b16 %v445
  %v517 = vunpack.c.l.b16 %v446
  %v518 = vpack.c.b16 %v487, %v486
  %v519 = vpack.c.b16 %v489, %v488
  %v520 = vpack.c.b16 %v491, %v490
  %v521 = vpack.c.b16 %v493, %v492
  %v522 = vpack.c.b16 %v495, %v494
  %v523 = vpack.c.b16 %v497, %v496
  %v524 = vpack.c.b16 %v499, %v498
  %v525 = vpack.c.b16 %v501, %v500
  %v526 = vpack.c.b16 %v503, %v502
  %v527 = vpack.c.b16 %v505, %v504
  %v528 = vpack.c.b16 %v507, %v506
  %v529 = vpack.c.b16 %v509, %v508
  %v530 = vpack.c.b16 %v511, %v510
  %v531 = vpack.c.b16 %v513, %v512
  %v532 = vpack.c.b16 %v515, %v514
  %v533 = vpack.c.b16 %v517, %v516
  %550 = vmatprep.subr.bf16.mxu0 0
  %551 = vmatpush1.bf16.msra.mxu0 %v525
  %552 = vmatprep.subr.bf16.mxu0 0
  %553 = vmatpush1.bf16.msra.mxu0 %v524
  %554 = vmatprep.subr.bf16.mxu0 0
  %555 = vmatpush1.bf16.msra.mxu0 %v523
  %556 = vmatprep.subr.bf16.mxu0 0
  %557 = vmatpush1.bf16.msra.mxu0 %v522
  %558 = vmatprep.subr.bf16.mxu0 0
  %559 = vmatpush1.bf16.msra.mxu0 %v521
  %560 = vmatprep.subr.bf16.mxu0 0
  %561 = vmatpush1.bf16.msra.mxu0 %v520
  %562 = vmatprep.subr.bf16.mxu0 0
  %563 = vmatpush1.bf16.msra.mxu0 %v519
  %564 = vmatprep.subr.bf16.mxu0 0
  %565 = vmatpush1.bf16.msra.mxu0 %v518
  %566 = vmatprep.subr.bf16.mxu0 0
  %567 = vmatpush2.bf16.msra.mxu0 %v533
  %568 = vmatprep.subr.bf16.mxu0 0
  %569 = vmatpush2.bf16.msra.mxu0 %v532
  %570 = vmatprep.subr.bf16.mxu0 0
  %571 = vmatpush2.bf16.msra.mxu0 %v531
  %572 = vmatprep.subr.bf16.mxu0 0
  %573 = vmatpush2.bf16.msra.mxu0 %v530
  %574 = vmatprep.subr.bf16.mxu0 0
  %575 = vmatpush2.bf16.msra.mxu0 %v529
  %576 = vmatprep.subr.bf16.mxu0 0
  %577 = vmatpush2.bf16.msra.mxu0 %v528
  %578 = vmatprep.subr.bf16.mxu0 0
  %579 = vmatpush2.bf16.msra.mxu0 %v527
  %580 = vmatprep.subr.bf16.mxu0 0
  %581 = vmatpush2.bf16.msra.mxu0 %v526
  %582 = vmatprep.mubr.bf16.mxu0 %v409
  %583 = vmatmul.mubr.bf16.gmra.mxu0 %v407
  %v584 = vpop.f32.mrf.mxu0
  %v585 = vadd.f32 %v452, %v584
  %v586 = vpop.f32.mrf.mxu0
  %v587 = vpop.f32.mrf.mxu0
  %v588 = vadd.f32 %v452, %v587
  %v589 = vpop.f32.mrf.mxu0
  %590 = vmatprep.mubr.bf16.mxu0 %v410
  %591 = vmatmul.mubr.bf16.gmra.mxu0 %v408
  %v592 = vpop.f32.mrf.mxu0
  %v593 = vadd.f32 %v452, %v592
  %v594 = vpop.f32.mrf.mxu0
  %v595 = vpop.f32.mrf.mxu0
  %v596 = vadd.f32 %v452, %v595
  %v597 = vpop.f32.mrf.mxu0
  %598 = vdwg.mxu0
  %v599 = vmax.f32 %v585, 0.0
  %v600 = vmax.f32 %v588, 0.0
  %v601 = vmax.f32 %v593, 0.0
  %v602 = vmax.f32 %v596, 0.0
  %v603 = vpack.c.bf16 %v600, %v599
  %v604 = vpack.c.bf16 %v602, %v601
  %605 = vmatprep.subr.bf16.mxu0 0
  %606 = vmatpush1.bf16.msra.mxu0 %v525
  %607 = vmatprep.subr.bf16.mxu0 0
  %608 = vmatpush1.bf16.msra.mxu0 %v524
  %609 = vmatprep.subr.bf16.mxu0 0
  %610 = vmatpush1.bf16.msra.mxu0 %v523
  %611 = vmatprep.subr.bf16.mxu0 0
  %612 = vmatpush1.bf16.msra.mxu0 %v522
  %613 = vmatprep.subr.bf16.mxu0 0
  %614 = vmatpush1.bf16.msra.mxu0 %v521
  %615 = vmatprep.subr.bf16.mxu0 0
  %616 = vmatpush1.bf16.msra.mxu0 %v520
  %617 = vmatprep.subr.bf16.mxu0 0
  %618 = vmatpush1.bf16.msra.mxu0 %v519
  %619 = vmatprep.subr.bf16.mxu0 0
  %620 = vmatpush1.bf16.msra.mxu0 %v518
  %621 = vmatprep.subr.bf16.mxu0 0
  %622 = vmatpush2.bf16.msra.mxu0 %v533
  %623 = vmatprep.subr.bf16.mxu0 0
  %624 = vmatpush2.bf16.msra.mxu0 %v532
  %625 = vmatprep.subr.bf16.mxu0 0
  %626 = vmatpush2.bf16.msra.mxu0 %v531
  %627 = vmatprep.subr.bf16.mxu0 0
  %628 = vmatpush2.bf16.msra.mxu0 %v530
  %629 = vmatprep.subr.bf16.mxu0 0
  %630 = vmatpush2.bf16.msra.mxu0 %v529
  %631 = vmatprep.subr.bf16.mxu0 0
  %632 = vmatpush2.bf16.msra.mxu0 %v528
  %633 = vmatprep.subr.bf16.mxu0 0
  %634 = vmatpush2.bf16.msra.mxu0 %v527
  %635 = vmatprep.subr.bf16.mxu0 0
  %636 = vmatpush2.bf16.msra.mxu0 %v526
  %637 = vmatprep.mubr.bf16.mxu0 %v413
  %638 = vmatmul.mubr.bf16.gmra.mxu0 %v411
  %v639 = vpop.f32.mrf.mxu0
  %v640 = vadd.f32 %v452, %v639
  %v641 = vpop.f32.mrf.mxu0
  %v642 = vpop.f32.mrf.mxu0
  %v643 = vadd.f32 %v452, %v642
  %v644 = vpop.f32.mrf.mxu0
  %645 = vmatprep.mubr.bf16.mxu0 %v414
  %646 = vmatmul.mubr.bf16.gmra.mxu0 %v412
  %v647 = vpop.f32.mrf.mxu0
  %v648 = vadd.f32 %v452, %v647
  %v649 = vpop.f32.mrf.mxu0
  %v650 = vpop.f32.mrf.mxu0
  %v651 = vadd.f32 %v452, %v650
  %v652 = vpop.f32.mrf.mxu0
  %653 = vdwg.mxu0
  %v654 = vmax.f32 %v640, 0.0
  %v655 = vmax.f32 %v643, 0.0
  %v656 = vmax.f32 %v648, 0.0
  %v657 = vmax.f32 %v651, 0.0
  %v658 = vpack.c.bf16 %v655, %v654
  %v659 = vpack.c.bf16 %v657, %v656
  %v660 = vld [vmem:[%s7] sm:$0xf]
  %v661 = vld [vmem:[%s7 + $0x4] sm:$0xf]
  %v662 = vld [vmem:[%s7 + $0x8] sm:$0xf]
  %v663 = vld [vmem:[%s7 + $0xc] sm:$0xf]
  %v664 = vld [vmem:[%s7 + $0x10] sm:$0xf]
  %v665 = vld [vmem:[%s7 + $0x14] sm:$0xf]
  %v666 = vld [vmem:[%s7 + $0x18] sm:$0xf]
  %v667 = vld [vmem:[%s7 + $0x1c] sm:$0xf]
  %v668 = vld [vmem:[%s7 + $0x20] sm:$0xf]
  %v669 = vld [vmem:[%s7 + $0x24] sm:$0xf]
  %v670 = vld [vmem:[%s7 + $0x28] sm:$0xf]
  %v671 = vld [vmem:[%s7 + $0x2c] sm:$0xf]
  %v672 = vld [vmem:[%s7 + $0x30] sm:$0xf]
  %v673 = vld [vmem:[%s7 + $0x34] sm:$0xf]
  %v674 = vld [vmem:[%s7 + $0x38] sm:$0xf]
  %v675 = vld [vmem:[%s7 + $0x3c] sm:$0xf]
  %v676 = vld [vmem:[%s7 + $0x40] sm:$0xf]
  %v677 = vld [vmem:[%s7 + $0x44] sm:$0xf]
  %v678 = vld [vmem:[%s7 + $0x48] sm:$0xf]
  %v679 = vld [vmem:[%s7 + $0x4c] sm:$0xf]
  %v680 = vld [vmem:[%s7 + $0x50] sm:$0xf]
  %v681 = vld [vmem:[%s7 + $0x54] sm:$0xf]
  %v682 = vld [vmem:[%s7 + $0x58] sm:$0xf]
  %v683 = vld [vmem:[%s7 + $0x5c] sm:$0xf]
  %v684 = vld [vmem:[%s7 + $0x60] sm:$0xf]
  %v685 = vld [vmem:[%s7 + $0x64] sm:$0xf]
  %v686 = vld [vmem:[%s7 + $0x68] sm:$0xf]
  %v687 = vld [vmem:[%s7 + $0x6c] sm:$0xf]
  %v688 = vld [vmem:[%s7 + $0x70] sm:$0xf]
  %v689 = vld [vmem:[%s7 + $0x74] sm:$0xf]
  %v690 = vld [vmem:[%s7 + $0x78] sm:$0xf]
  %v691 = vld [vmem:[%s7 + $0x7c] sm:$0xf]
  %v692 = vld [vmem:[%s8] sm:$0x1]
  %v694 = vlaneseq
  %v695 = vshrl.u32 %v694, 7
  %v696 = vsub.s32 0, %v695
  %v697 = vrot.slane %v692, %v696
  %v731 = vunpack.c.l.b16 %v660
  %v732 = vunpack.c.l.b16 %v661
  %v733 = vunpack.c.l.b16 %v662
  %v734 = vunpack.c.l.b16 %v663
  %v735 = vunpack.c.l.b16 %v664
  %v736 = vunpack.c.l.b16 %v665
  %v737 = vunpack.c.l.b16 %v666
  %v738 = vunpack.c.l.b16 %v667
  %v739 = vunpack.c.l.b16 %v668
  %v740 = vunpack.c.l.b16 %v669
  %v741 = vunpack.c.l.b16 %v670
  %v742 = vunpack.c.l.b16 %v671
  %v743 = vunpack.c.l.b16 %v672
  %v744 = vunpack.c.l.b16 %v673
  %v745 = vunpack.c.l.b16 %v674
  %v746 = vunpack.c.l.b16 %v675
  %v747 = vunpack.c.l.b16 %v676
  %v748 = vunpack.c.l.b16 %v677
  %v749 = vunpack.c.l.b16 %v678
  %v750 = vunpack.c.l.b16 %v679
  %v751 = vunpack.c.l.b16 %v680
  %v752 = vunpack.c.l.b16 %v681
  %v753 = vunpack.c.l.b16 %v682
  %v754 = vunpack.c.l.b16 %v683
  %v755 = vunpack.c.l.b16 %v684
  %v756 = vunpack.c.l.b16 %v685
  %v757 = vunpack.c.l.b16 %v686
  %v758 = vunpack.c.l.b16 %v687
  %v759 = vunpack.c.l.b16 %v688
  %v760 = vunpack.c.l.b16 %v689
  %v761 = vunpack.c.l.b16 %v690
  %v762 = vunpack.c.l.b16 %v691
  %v763 = vpack.c.b16 %v732, %v731
  %v764 = vpack.c.b16 %v734, %v733
  %v765 = vpack.c.b16 %v736, %v735
  %v766 = vpack.c.b16 %v738, %v737
  %v767 = vpack.c.b16 %v740, %v739
  %v768 = vpack.c.b16 %v742, %v741
  %v769 = vpack.c.b16 %v744, %v743
  %v770 = vpack.c.b16 %v746, %v745
  %v771 = vpack.c.b16 %v748, %v747
  %v772 = vpack.c.b16 %v750, %v749
  %v773 = vpack.c.b16 %v752, %v751
  %v774 = vpack.c.b16 %v754, %v753
  %v775 = vpack.c.b16 %v756, %v755
  %v776 = vpack.c.b16 %v758, %v757
  %v777 = vpack.c.b16 %v760, %v759
  %v778 = vpack.c.b16 %v762, %v761
  %795 = vmatprep.subr.bf16.mxu0 0
  %796 = vmatpush1.bf16.msra.mxu0 %v770
  %797 = vmatprep.subr.bf16.mxu0 0
  %798 = vmatpush1.bf16.msra.mxu0 %v769
  %799 = vmatprep.subr.bf16.mxu0 0
  %800 = vmatpush1.bf16.msra.mxu0 %v768
  %801 = vmatprep.subr.bf16.mxu0 0
  %802 = vmatpush1.bf16.msra.mxu0 %v767
  %803 = vmatprep.subr.bf16.mxu0 0
  %804 = vmatpush1.bf16.msra.mxu0 %v766
  %805 = vmatprep.subr.bf16.mxu0 0
  %806 = vmatpush1.bf16.msra.mxu0 %v765
  %807 = vmatprep.subr.bf16.mxu0 0
  %808 = vmatpush1.bf16.msra.mxu0 %v764
  %809 = vmatprep.subr.bf16.mxu0 0
  %810 = vmatpush1.bf16.msra.mxu0 %v763
  %811 = vmatprep.subr.bf16.mxu0 0
  %812 = vmatpush2.bf16.msra.mxu0 %v778
  %813 = vmatprep.subr.bf16.mxu0 0
  %814 = vmatpush2.bf16.msra.mxu0 %v777
  %815 = vmatprep.subr.bf16.mxu0 0
  %816 = vmatpush2.bf16.msra.mxu0 %v776
  %817 = vmatprep.subr.bf16.mxu0 0
  %818 = vmatpush2.bf16.msra.mxu0 %v775
  %819 = vmatprep.subr.bf16.mxu0 0
  %820 = vmatpush2.bf16.msra.mxu0 %v774
  %821 = vmatprep.subr.bf16.mxu0 0
  %822 = vmatpush2.bf16.msra.mxu0 %v773
  %823 = vmatprep.subr.bf16.mxu0 0
  %824 = vmatpush2.bf16.msra.mxu0 %v772
  %825 = vmatprep.subr.bf16.mxu0 0
  %826 = vmatpush2.bf16.msra.mxu0 %v771
  %827 = vmatprep.mubr.bf16.mxu0 %v658
  %828 = vmatmul.mubr.bf16.gmra.mxu0 %v603
  %v829 = vpop.f32.mrf.mxu0
  %v830 = vadd.f32 %v697, %v829
  %v831 = vpop.f32.mrf.mxu0
  %v832 = vpop.f32.mrf.mxu0
  %v833 = vadd.f32 %v697, %v832
  %v834 = vpop.f32.mrf.mxu0
  %835 = vmatprep.mubr.bf16.mxu0 %v659
  %836 = vmatmul.mubr.bf16.gmra.mxu0 %v604
  %v837 = vpop.f32.mrf.mxu0
  %v838 = vadd.f32 %v697, %v837
  %v839 = vpop.f32.mrf.mxu0
  %v840 = vpop.f32.mrf.mxu0
  %v841 = vadd.f32 %v697, %v840
  %v842 = vpop.f32.mrf.mxu0
  %843 = vdwg.mxu0
  %v844 = vmax.f32 %v830, 0.0
  %v845 = vmax.f32 %v833, 0.0
  %v846 = vmax.f32 %v838, 0.0
  %v847 = vmax.f32 %v841, 0.0
  %v848 = vpack.c.bf16 %v845, %v844
  %v849 = vpack.c.bf16 %v847, %v846
  %v852 = vunpack.c.l.b16 %v848
  %v853 = vunpack.c.h.b16 %v848
  %v854 = vunpack.c.l.b16 %v849
  %v855 = vunpack.c.h.b16 %v849
  %v856 = vpack.c.b16 %v852, %v852
  %v857 = vpack.c.b16 %v853, %v853
  %v858 = vpack.c.b16 %v854, %v854
  %v859 = vpack.c.b16 %v855, %v855
  %864 = vst [vmem:[%s9] sm:$0xf] %v856
  %865 = vst [vmem:[%s9 + $0x4] sm:$0xf] %v857
  %866 = vst [vmem:[%s9 + $0x8] sm:$0xf] %v858
  %867 = vst [vmem:[%s9 + $0xc] sm:$0xf] %v859
  // Predicated region
  $region38: #{pointsift_res_forward.4} parent=0 // pred_check
    _
  $region39: #{pointsift_res_forward.4} parent=0 // pred_check_branch
    %869 = sbr.rel (0) target = $region41
  $region40: #{pointsift_res_forward.4} parent=0 // pred_region
    _
  $region41: #{pointsift_res_forward.4} parent=0 // pred_fallthru
    _
  // Predicated region
  $region42: #{pointsift_res_forward.4} parent=0 // pred_check
    _
  $region43: #{pointsift_res_forward.4} parent=0 // pred_check_branch
    %871 = sbr.rel (0) target = $region45
  $region44: #{pointsift_res_forward.4} parent=0 // pred_region
    _
  $region45: #{pointsift_res_forward.4} parent=0 // pred_fallthru
    _

// kernel: pointsift_res_forward.5
$region0: #{pointsift_res_forward.5}
  #allocation0 [shape = 'u32[]', space=smem, size = 0x4, offset = 0x4, fixed_abs, tag = 'smem constant byte address 0x4 - core index']
  #allocation1 [shape = 'u32[144,128]{1,0:T(1,128)}', space=vmem, size = 0x12000, scoped, tag = 'internal scratch']
  %s0 = inlined_call_operand.vmem [shape: bf16[32,24], index: 0, kind: input, shape index: {}]
  %s1 = inlined_call_operand.vmem [shape: bf16[32,256], index: 1, kind: input, shape index: {}]
  %s2 = inlined_call_operand.vmem [shape: bf16[6,128], index: 2, kind: input, shape index: {}]
  %s3 = inlined_call_operand.vmem [shape: bf16[64,128], index: 3, kind: input, shape index: {}]
  %s4 = inlined_call_operand.vmem [shape: f32[1,128], index: 4, kind: input, shape index: {}]
  %s5 = inlined_call_operand.vmem [shape: bf16[256,128], index: 5, kind: input, shape index: {}]
  %s6 = inlined_call_operand.vmem [shape: f32[1,128], index: 6, kind: input, shape index: {}]
  %s7 = inlined_call_operand.vmem [shape: bf16[256,128], index: 7, kind: input, shape index: {}]
  %s8 = inlined_call_operand.vmem [shape: f32[1,128], index: 8, kind: input, shape index: {}]
  %s9 = inlined_call_operand.vmem [shape: bf16[32,128], index: 9, kind: input, shape index: {}]
  %s10 = inlined_call_operand.hbm [shape: f32[32,128], index: 10, kind: output, shape index: {}]
  %s11 = sld [smem:[#allocation0]]
  $region50: #{pointsift_res_forward.5} parent=0
    _
  %s13 = ssub.s32 1, %s11
  %s14 = scalar_select 0, %s13, %s11
  $region1: #{pointsift_res_forward.5} parent=0
    #allocation2 [shape = 'u8[16384]{0}', space=vmem, size = 0x4000, scoped, tag = 'output window, operand 0, single buffered']
    #allocation3 [shape = 's32[1]{0}', space=sflag, size = 0x4, scoped, tag = 'scoped memory for pointsift_res_forward.5']
    %15 = vsyncpa [#allocation3], 0
    // Predicated region
    $region2: #{pointsift_res_forward.5} parent=1 // pred_check
      _
    $region3: #{pointsift_res_forward.5} parent=1 // pred_check_branch
      %17 = sbr.rel (0) target = $region5
    $region4: #{pointsift_res_forward.5} parent=1 // pred_region
      _
    $region5: #{pointsift_res_forward.5} parent=1 // pred_fallthru
      _
    // Predicated region
    $region6: #{pointsift_res_forward.5} parent=1 // pred_check
      _
    $region7: #{pointsift_res_forward.5} parent=1 // pred_check_branch
      %19 = sbr.rel (0) target = $region9
    $region8: #{pointsift_res_forward.5} parent=1 // pred_region
      _
    $region9: #{pointsift_res_forward.5} parent=1 // pred_fallthru
      _
    // Predicated region
    $region10: #{pointsift_res_forward.5} parent=1 // pred_check
      _
    $region11: #{pointsift_res_forward.5} parent=1 // pred_check_branch
      %21 = sbr.rel (0) target = $region13
    $region12: #{pointsift_res_forward.5} parent=1 // pred_region
      _
    $region13: #{pointsift_res_forward.5} parent=1 // pred_fallthru
      _
    // Predicated region
    $region14: #{pointsift_res_forward.5} parent=1 // pred_check
      _
    $region15: #{pointsift_res_forward.5} parent=1 // pred_check_branch
      %23 = sbr.rel (0) target = $region17
    $region16: #{pointsift_res_forward.5} parent=1 // pred_region
      _
    $region17: #{pointsift_res_forward.5} parent=1 // pred_fallthru
      _
    // Predicated region
    $region18: #{pointsift_res_forward.5} parent=1 // pred_check
      _
    $region19: #{pointsift_res_forward.5} parent=1 // pred_check_branch
      %25 = sbr.rel (0) target = $region21
    $region20: #{pointsift_res_forward.5} parent=1 // pred_region
      _
    $region21: #{pointsift_res_forward.5} parent=1 // pred_fallthru
      _
    // Predicated region
    $region22: #{pointsift_res_forward.5} parent=1 // pred_check
      _
    $region23: #{pointsift_res_forward.5} parent=1 // pred_check_branch
      %27 = sbr.rel (0) target = $region25
    $region24: #{pointsift_res_forward.5} parent=1 // pred_region
      _
    $region25: #{pointsift_res_forward.5} parent=1 // pred_fallthru
      _
    // Predicated region
    $region26: #{pointsift_res_forward.5} parent=1 // pred_check
      _
    $region27: #{pointsift_res_forward.5} parent=1 // pred_check_branch
      %29 = sbr.rel (0) target = $region29
    $region28: #{pointsift_res_forward.5} parent=1 // pred_region
      _
    $region29: #{pointsift_res_forward.5} parent=1 // pred_fallthru
      _
    // Predicated region
    $region30: #{pointsift_res_forward.5} parent=1 // pred_check
      _
    $region31: #{pointsift_res_forward.5} parent=1 // pred_check_branch
      %31 = sbr.rel (0) target = $region33
    $region32: #{pointsift_res_forward.5} parent=1 // pred_region
      _
    $region33: #{pointsift_res_forward.5} parent=1 // pred_fallthru
      _
    // Predicated region
    $region34: #{pointsift_res_forward.5} parent=1 // pred_check
      _
    $region35: #{pointsift_res_forward.5} parent=1 // pred_check_branch
      %33 = sbr.rel (0) target = $region37
    $region36: #{pointsift_res_forward.5} parent=1 // pred_region
      _
    $region37: #{pointsift_res_forward.5} parent=1 // pred_fallthru
      _
    // Predicated region
    $region38: #{pointsift_res_forward.5} parent=1 // pred_check
      _
    $region39: #{pointsift_res_forward.5} parent=1 // pred_check_branch
      %35 = sbr.rel (0) target = $region41
    $region40: #{pointsift_res_forward.5} parent=1 // pred_region
      _
    $region41: #{pointsift_res_forward.5} parent=1 // pred_fallthru
      _
    %v37 = vld [vmem:[%s0] sm:$0xf]
    %v38 = vld [vmem:[%s0 + $0x4] sm:$0xf]
    %v39 = vld [vmem:[%s0 + $0x8] sm:$0xf]
    %v40 = vld [vmem:[%s0 + $0xc] sm:$0xf]
    %v41 = vld [vmem:[%s1] sm:$0xff]
    %v42 = vld [vmem:[%s1 + $0x8] sm:$0xff]
    %v43 = vld [vmem:[%s1 + $0x10] sm:$0xff]
    %v44 = vld [vmem:[%s1 + $0x18] sm:$0xff]
    %v49 = vunpack.c.l.b16 %v37
    %v50 = vunpack.c.l.b16 %v38
    %v51 = vunpack.c.l.b16 %v39
    %v52 = vunpack.c.l.b16 %v40
    %v53 = vpack.c.b16 %v50, %v49
    %v54 = vpack.c.b16 %v52, %v51
    %55 = vrot.lane.b32.xlu0 %v53, 122
    %v56 = vpop.permute.xlu0 %55
    %57 = vrot.lane.b32.xlu0 %v54, 122
    %v58 = vpop.permute.xlu0 %57
    %59 = vrot.lane.b32.xlu0 %v53, 116
    %v60 = vpop.permute.xlu0 %59
    %61 = vrot.lane.b32.xlu0 %v54, 116
    %v62 = vpop.permute.xlu0 %61
    %63 = vrot.lane.b32.xlu0 %v53, 110
    %v64 = vpop.permute.xlu0 %63
    %65 = vrot.lane.b32.xlu0 %v54, 110
    %v66 = vpop.permute.xlu0 %65
    %v71 = vunpack.c.l.b16 %v41
    %v72 = vunpack.c.l.b16 %v42
    %v73 = vunpack.c.l.b16 %v43
    %v74 = vunpack.c.l.b16 %v44
    %v75 = vpack.c.b16 %v72, %v71
    %v76 = vpack.c.b16 %v74, %v73
    %77 = vrot.lane.b32.xlu0 %v75, 64
    %v78 = vpop.permute.xlu0 %77
    %79 = vrot.lane.b32.xlu0 %v76, 64
    %v80 = vpop.permute.xlu0 %79
    %v81 = vunpack.c.h.b16 %v41
    %v82 = vunpack.c.h.b16 %v42
    %v83 = vunpack.c.h.b16 %v43
    %v84 = vunpack.c.h.b16 %v44
    %v85 = vpack.c.b16 %v82, %v81
    %v86 = vpack.c.b16 %v84, %v83
    %87 = vrot.lane.b32.xlu0 %v85, 64
    %v88 = vpop.permute.xlu0 %87
    %89 = vrot.lane.b32.xlu0 %v86, 64
    %v90 = vpop.permute.xlu0 %89
    %v91 = vld [vmem:[%s3] sm:$0xf]
    %v92 = vld [vmem:[%s3 + $0x4] sm:$0xf]
    %v93 = vld [vmem:[%s3 + $0x8] sm:$0xf]
    %v94 = vld [vmem:[%s3 + $0xc] sm:$0xf]
    %v95 = vld [vmem:[%s3 + $0x10] sm:$0xf]
    %v96 = vld [vmem:[%s3 + $0x14] sm:$0xf]
    %v97 = vld [vmem:[%s3 + $0x18] sm:$0xf]
    %v98 = vld [vmem:[%s3 + $0x1c] sm:$0xf]
    %v99 = vld [vmem:[%s2] sm:$0x7]
    %vm100 = vcmask 48128
    %v102 = vsel %vm100, %v53, 0
    %v105 = vsel %vm100, %v54, 0
    %v108 = vsel %vm100, %v56, 0
    %v111 = vsel %vm100, %v58, 0
    %v114 = vsel %vm100, %v60, 0
    %v117 = vsel %vm100, %v62, 0
    %v120 = vsel %vm100, %v64, 0
    %v123 = vsel %vm100, %v66, 0
    %vm125 = vcmask 1042432
    %v127 = vsel %vm125, %v99, 0
    %129 = vmatprep.subr.bf16.mxu0 0
    %130 = vmatpush1.bf16.msra.mxu0 0
    %131 = vmatprep.subr.bf16.mxu0 0
    %132 = vmatpush1.bf16.msra.mxu0 0
    %133 = vmatprep.subr.bf16.mxu0 0
    %134 = vmatpush1.bf16.msra.mxu0 0
    %135 = vmatprep.subr.bf16.mxu0 0
    %136 = vmatpush1.bf16.msra.mxu0 0
    %137 = vmatprep.subr.bf16.mxu0 0
    %138 = vmatpush1.bf16.msra.mxu0 0
    %139 = vmatprep.subr.bf16.mxu0 0
    %140 = vmatpush1.bf16.msra.mxu0 0
    %141 = vmatprep.subr.bf16.mxu0 0
    %142 = vmatpush1.bf16.msra.mxu0 0
    %143 = vmatprep.subr.bf16.mxu0 0
    %144 = vmatpush1.bf16.msra.mxu0 %v127
    %145 = vmatprep.subr.bf16.mxu0 0
    %146 = vmatpush2.bf16.msra.mxu0 0
    %147 = vmatprep.subr.bf16.mxu0 0
    %148 = vmatpush2.bf16.msra.mxu0 0
    %149 = vmatprep.subr.bf16.mxu0 0
    %150 = vmatpush2.bf16.msra.mxu0 0
    %151 = vmatprep.subr.bf16.mxu0 0
    %152 = vmatpush2.bf16.msra.mxu0 0
    %153 = vmatprep.subr.bf16.mxu0 0
    %154 = vmatpush2.bf16.msra.mxu0 0
    %155 = vmatprep.subr.bf16.mxu0 0
    %156 = vmatpush2.bf16.msra.mxu0 0
    %157 = vmatprep.subr.bf16.mxu0 0
    %158 = vmatpush2.bf16.msra.mxu0 0
    %159 = vmatprep.subr.bf16.mxu0 0
    %160 = vmatpush2.bf16.msra.mxu0 0
    %161 = vmatprep.mubr.bf16.mxu0 0
    %162 = vmatmul.mubr.bf16.gmra.mxu0 %v102
    %v163 = vpop.f32.mrf.mxu0
    %v164 = vadd.f32 0.0, %v163
    %v165 = vpop.f32.mrf.mxu0
    %v166 = vpop.f32.mrf.mxu0
    %v167 = vadd.f32 0.0, %v166
    %v168 = vpop.f32.mrf.mxu0
    %169 = vmatprep.mubr.bf16.mxu0 0
    %170 = vmatmul.mubr.bf16.gmra.mxu0 %v105
    %v171 = vpop.f32.mrf.mxu0
    %v172 = vadd.f32 0.0, %v171
    %v173 = vpop.f32.mrf.mxu0
    %v174 = vpop.f32.mrf.mxu0
    %v175 = vadd.f32 0.0, %v174
    %v176 = vpop.f32.mrf.mxu0
    %177 = vmatprep.mubr.bf16.mxu0 0
    %178 = vmatmul.mubr.bf16.gmra.mxu0 %v108
    %v179 = vpop.f32.mrf.mxu0
    %v180 = vadd.f32 0.0, %v179
    %v181 = vpop.f32.mrf.mxu0
    %v182 = vpop.f32.mrf.mxu0
    %v183 = vadd.f32 0.0, %v182
    %v184 = vpop.f32.mrf.mxu0
    %185 = vmatprep.mubr.bf16.mxu0 0
    %186 = vmatmul.mubr.bf16.gmra.mxu0 %v111
    %v187 = vpop.f32.mrf.mxu0
    %v188 = vadd.f32 0.0, %v187
    %v189 = vpop.f32.mrf.mxu0
    %v190 = vpop.f32.mrf.mxu0
    %v191 = vadd.f32 0.0, %v190
    %v192 = vpop.f32.mrf.mxu0
    %193 = vmatprep.mubr.bf16.mxu0 0
    %194 = vmatmul.mubr.bf16.gmra.mxu0 %v114
    %v195 = vpop.f32.mrf.mxu0
    %v196 = vadd.f32 0.0, %v195
    %v197 = vpop.f32.mrf.mxu0
    %v198 = vpop.f32.mrf.mxu0
    %v199 = vadd.f32 0.0, %v198
    %v200 = vpop.f32.mrf.mxu0
    %201 = vmatprep.mubr.bf16.mxu0 0
    %202 = vmatmul.mubr.bf16.gmra.mxu0 %v117
    %v203 = vpop.f32.mrf.mxu0
    %v204 = vadd.f32 0.0, %v203
    %v205 = vpop.f32.mrf.mxu0
    %v206 = vpop.f32.mrf.mxu0
    %v207 = vadd.f32 0.0, %v206
    %v208 = vpop.f32.mrf.mxu0
    %209 = vmatprep.mubr.bf16.mxu0 0
    %210 = vmatmul.mubr.bf16.gmra.mxu0 %v120
    %v211 = vpop.f32.mrf.mxu0
    %v212 = vadd.f32 0.0, %v211
    %v213 = vpop.f32.mrf.mxu0
    %v214 = vpop.f32.mrf.mxu0
    %v215 = vadd.f32 0.0, %v214
    %v216 = vpop.f32.mrf.mxu0
    %217 = vmatprep.mubr.bf16.mxu0 0
    %218 = vmatmul.mubr.bf16.gmra.mxu0 %v123
    %v219 = vpop.f32.mrf.mxu0
    %v220 = vadd.f32 0.0, %v219
    %v221 = vpop.f32.mrf.mxu0
    %v222 = vpop.f32.mrf.mxu0
    %v223 = vadd.f32 0.0, %v222
    %v224 = vpop.f32.mrf.mxu0
    %225 = vdwg.mxu0
    %v234 = vunpack.c.l.b16 %v91
    %v235 = vunpack.c.l.b16 %v92
    %v236 = vunpack.c.l.b16 %v93
    %v237 = vunpack.c.l.b16 %v94
    %v238 = vunpack.c.l.b16 %v95
    %v239 = vunpack.c.l.b16 %v96
    %v240 = vunpack.c.l.b16 %v97
    %v241 = vunpack.c.l.b16 %v98
    %v242 = vpack.c.b16 %v235, %v234
    %v243 = vpack.c.b16 %v237, %v236
    %v244 = vpack.c.b16 %v239, %v238
    %v245 = vpack.c.b16 %v241, %v240
    %vm250 = vcmask 523264
    %v252 = vsel %vm250, %v75, 0
    %v255 = vsel %vm250, %v76, 0
    %v258 = vsel %vm250, %v78, 0
    %v261 = vsel %vm250, %v80, 0
    %v264 = vsel %vm250, %v85, 0
    %v267 = vsel %vm250, %v86, 0
    %v270 = vsel %vm250, %v88, 0
    %v273 = vsel %vm250, %v90, 0
    %275 = vmatprep.subr.bf16.mxu0 0
    %276 = vmatpush1.bf16.msra.mxu0 0
    %277 = vmatprep.subr.bf16.mxu0 0
    %278 = vmatpush1.bf16.msra.mxu0 0
    %279 = vmatprep.subr.bf16.mxu0 0
    %280 = vmatpush1.bf16.msra.mxu0 0
    %281 = vmatprep.subr.bf16.mxu0 0
    %282 = vmatpush1.bf16.msra.mxu0 0
    %283 = vmatprep.subr.bf16.mxu0 0
    %284 = vmatpush1.bf16.msra.mxu0 %v245
    %285 = vmatprep.subr.bf16.mxu0 0
    %286 = vmatpush1.bf16.msra.mxu0 %v244
    %287 = vmatprep.subr.bf16.mxu0 0
    %288 = vmatpush1.bf16.msra.mxu0 %v243
    %289 = vmatprep.subr.bf16.mxu0 0
    %290 = vmatpush1.bf16.msra.mxu0 %v242
    %291 = vmatprep.subr.bf16.mxu0 0
    %292 = vmatpush2.bf16.msra.mxu0 0
    %293 = vmatprep.subr.bf16.mxu0 0
    %294 = vmatpush2.bf16.msra.mxu0 0
    %295 = vmatprep.subr.bf16.mxu0 0
    %296 = vmatpush2.bf16.msra.mxu0 0
    %297 = vmatprep.subr.bf16.mxu0 0
    %298 = vmatpush2.bf16.msra.mxu0 0
    %299 = vmatprep.subr.bf16.mxu0 0
    %300 = vmatpush2.bf16.msra.mxu0 0
    %301 = vmatprep.subr.bf16.mxu0 0
    %302 = vmatpush2.bf16.msra.mxu0 0
    %303 = vmatprep.subr.bf16.mxu0 0
    %304 = vmatpush2.bf16.msra.mxu0 0
    %305 = vmatprep.subr.bf16.mxu0 0
    %306 = vmatpush2.bf16.msra.mxu0 0
    %307 = vmatprep.mubr.bf16.mxu0 0
    %308 = vmatmul.mubr.bf16.gmra.mxu0 %v252
    %v309 = vpop.f32.mrf.mxu0
    %v310 = vadd.f32 %v164, %v309
    %v311 = vpop.f32.mrf.mxu0
    %v312 = vpop.f32.mrf.mxu0
    %v313 = vadd.f32 %v167, %v312
    %v314 = vpop.f32.mrf.mxu0
    %315 = vmatprep.mubr.bf16.mxu0 0
    %316 = vmatmul.mubr.bf16.gmra.mxu0 %v255
    %v317 = vpop.f32.mrf.mxu0
    %v318 = vadd.f32 %v172, %v317
    %v319 = vpop.f32.mrf.mxu0
    %v320 = vpop.f32.mrf.mxu0
    %v321 = vadd.f32 %v175, %v320
    %v322 = vpop.f32.mrf.mxu0
    %323 = vmatprep.mubr.bf16.mxu0 0
    %324 = vmatmul.mubr.bf16.gmra.mxu0 %v258
    %v325 = vpop.f32.mrf.mxu0
    %v326 = vadd.f32 %v180, %v325
    %v327 = vpop.f32.mrf.mxu0
    %v328 = vpop.f32.mrf.mxu0
    %v329 = vadd.f32 %v183, %v328
    %v330 = vpop.f32.mrf.mxu0
    %331 = vmatprep.mubr.bf16.mxu0 0
    %332 = vmatmul.mubr.bf16.gmra.mxu0 %v261
    %v333 = vpop.f32.mrf.mxu0
    %v334 = vadd.f32 %v188, %v333
    %v335 = vpop.f32.mrf.mxu0
    %v336 = vpop.f32.mrf.mxu0
    %v337 = vadd.f32 %v191, %v336
    %v338 = vpop.f32.mrf.mxu0
    %339 = vmatprep.mubr.bf16.mxu0 0
    %340 = vmatmul.mubr.bf16.gmra.mxu0 %v264
    %v341 = vpop.f32.mrf.mxu0
    %v342 = vadd.f32 %v196, %v341
    %v343 = vpop.f32.mrf.mxu0
    %v344 = vpop.f32.mrf.mxu0
    %v345 = vadd.f32 %v199, %v344
    %v346 = vpop.f32.mrf.mxu0
    %347 = vmatprep.mubr.bf16.mxu0 0
    %348 = vmatmul.mubr.bf16.gmra.mxu0 %v267
    %v349 = vpop.f32.mrf.mxu0
    %v350 = vadd.f32 %v204, %v349
    %v351 = vpop.f32.mrf.mxu0
    %v352 = vpop.f32.mrf.mxu0
    %v353 = vadd.f32 %v207, %v352
    %v354 = vpop.f32.mrf.mxu0
    %355 = vmatprep.mubr.bf16.mxu0 0
    %356 = vmatmul.mubr.bf16.gmra.mxu0 %v270
    %v357 = vpop.f32.mrf.mxu0
    %v358 = vadd.f32 %v212, %v357
    %v359 = vpop.f32.mrf.mxu0
    %v360 = vpop.f32.mrf.mxu0
    %v361 = vadd.f32 %v215, %v360
    %v362 = vpop.f32.mrf.mxu0
    %363 = vmatprep.mubr.bf16.mxu0 0
    %364 = vmatmul.mubr.bf16.gmra.mxu0 %v273
    %v365 = vpop.f32.mrf.mxu0
    %v366 = vadd.f32 %v220, %v365
    %v367 = vpop.f32.mrf.mxu0
    %v368 = vpop.f32.mrf.mxu0
    %v369 = vadd.f32 %v223, %v368
    %v370 = vpop.f32.mrf.mxu0
    %371 = vdwg.mxu0
    %v372 = vld [vmem:[%s4] sm:$0x1]
    %v374 = vlaneseq
    %v375 = vshrl.u32 %v374, 7
    %v376 = vsub.s32 0, %v375
    %v377 = vrot.slane %v372, %v376
    %v379 = vadd.f32 %v310, %v377
    %v380 = vadd.f32 %v313, %v377
    %v381 = vadd.f32 %v318, %v377
    %v382 = vadd.f32 %v321, %v377
    %v383 = vadd.f32 %v326, %v377
    %v384 = vadd.f32 %v329, %v377
    %v385 = vadd.f32 %v334, %v377
    %v386 = vadd.f32 %v337, %v377
    %v387 = vadd.f32 %v342, %v377
    %v388 = vadd.f32 %v345, %v377
    %v389 = vadd.f32 %v350, %v377
    %v390 = vadd.f32 %v353, %v377
    %v391 = vadd.f32 %v358, %v377
    %v392 = vadd.f32 %v361, %v377
    %v393 = vadd.f32 %v366, %v377
    %v394 = vadd.f32 %v369, %v377
    %v395 = vmax.f32 %v379, 0.0
    %v396 = vmax.f32 %v380, 0.0
    %v397 = vmax.f32 %v381, 0.0
    %v398 = vmax.f32 %v382, 0.0
    %v399 = vmax.f32 %v383, 0.0
    %v400 = vmax.f32 %v384, 0.0
    %v401 = vmax.f32 %v385, 0.0
    %v402 = vmax.f32 %v386, 0.0
    %v403 = vmax.f32 %v387, 0.0
    %v404 = vmax.f32 %v388, 0.0
    %v405 = vmax.f32 %v389, 0.0
    %v406 = vmax.f32 %v390, 0.0
    %v407 = vmax.f32 %v391, 0.0
    %v408 = vmax.f32 %v392, 0.0
    %v409 = vmax.f32 %v393, 0.0
    %v410 = vmax.f32 %v394, 0.0
    %v411 = vpack.c.bf16 %v396, %v395
    %v412 = vpack.c.bf16 %v398, %v397
    %v413 = vpack.c.bf16 %v400, %v399
    %v414 = vpack.c.bf16 %v402, %v401
    %v415 = vpack.c.bf16 %v404, %v403
    %v416 = vpack.c.bf16 %v406, %v405
    %v417 = vpack.c.bf16 %v408, %v407
    %v418 = vpack.c.bf16 %v410, %v409
    %v419 = vld [vmem:[%s5] sm:$0xf]
    %v420 = vld [vmem:[%s5 + $0x4] sm:$0xf]
    %v421 = vld [vmem:[%s5 + $0x8] sm:$0xf]
    %v422 = vld [vmem:[%s5 + $0xc] sm:$0xf]
    %v423 = vld [vmem:[%s5 + $0x10] sm:$0xf]
    %v424 = vld [vmem:[%s5 + $0x14] sm:$0xf]
    %v425 = vld [vmem:[%s5 + $0x18] sm:$0xf]
    %v426 = vld [vmem:[%s5 + $0x1c] sm:$0xf]
    %v427 = vld [vmem:[%s5 + $0x20] sm:$0xf]
    %v428 = vld [vmem:[%s5 + $0x24] sm:$0xf]
    %v429 = vld [vmem:[%s5 + $0x28] sm:$0xf]
    %v430 = vld [vmem:[%s5 + $0x2c] sm:$0xf]
    %v431 = vld [vmem:[%s5 + $0x30] sm:$0xf]
    %v432 = vld [vmem:[%s5 + $0x34] sm:$0xf]
    %v433 = vld [vmem:[%s5 + $0x38] sm:$0xf]
    %v434 = vld [vmem:[%s5 + $0x3c] sm:$0xf]
    %v435 = vld [vmem:[%s5 + $0x40] sm:$0xf]
    %v436 = vld [vmem:[%s5 + $0x44] sm:$0xf]
    %v437 = vld [vmem:[%s5 + $0x48] sm:$0xf]
    %v438 = vld [vmem:[%s5 + $0x4c] sm:$0xf]
    %v439 = vld [vmem:[%s5 + $0x50] sm:$0xf]
    %v440 = vld [vmem:[%s5 + $0x54] sm:$0xf]
    %v441 = vld [vmem:[%s5 + $0x58] sm:$0xf]
    %v442 = vld [vmem:[%s5 + $0x5c] sm:$0xf]
    %v443 = vld [vmem:[%s5 + $0x60] sm:$0xf]
    %v444 = vld [vmem:[%s5 + $0x64] sm:$0xf]
    %v445 = vld [vmem:[%s5 + $0x68] sm:$0xf]
    %v446 = vld [vmem:[%s5 + $0x6c] sm:$0xf]
    %v447 = vld [vmem:[%s5 + $0x70] sm:$0xf]
    %v448 = vld [vmem:[%s5 + $0x74] sm:$0xf]
    %v449 = vld [vmem:[%s5 + $0x78] sm:$0xf]
    %v450 = vld [vmem:[%s5 + $0x7c] sm:$0xf]
    %v451 = vld [vmem:[%s6] sm:$0x1]
    %v453 = vlaneseq
    %v454 = vshrl.u32 %v453, 7
    %v455 = vsub.s32 0, %v454
    %v456 = vrot.slane %v451, %v455
    %v490 = vunpack.c.l.b16 %v419
    %v491 = vunpack.c.l.b16 %v420
    %v492 = vunpack.c.l.b16 %v421
    %v493 = vunpack.c.l.b16 %v422
    %v494 = vunpack.c.l.b16 %v423
    %v495 = vunpack.c.l.b16 %v424
    %v496 = vunpack.c.l.b16 %v425
    %v497 = vunpack.c.l.b16 %v426
    %v498 = vunpack.c.l.b16 %v427
    %v499 = vunpack.c.l.b16 %v428
    %v500 = vunpack.c.l.b16 %v429
    %v501 = vunpack.c.l.b16 %v430
    %v502 = vunpack.c.l.b16 %v431
    %v503 = vunpack.c.l.b16 %v432
    %v504 = vunpack.c.l.b16 %v433
    %v505 = vunpack.c.l.b16 %v434
    %v506 = vunpack.c.l.b16 %v435
    %v507 = vunpack.c.l.b16 %v436
    %v508 = vunpack.c.l.b16 %v437
    %v509 = vunpack.c.l.b16 %v438
    %v510 = vunpack.c.l.b16 %v439
    %v511 = vunpack.c.l.b16 %v440
    %v512 = vunpack.c.l.b16 %v441
    %v513 = vunpack.c.l.b16 %v442
    %v514 = vunpack.c.l.b16 %v443
    %v515 = vunpack.c.l.b16 %v444
    %v516 = vunpack.c.l.b16 %v445
    %v517 = vunpack.c.l.b16 %v446
    %v518 = vunpack.c.l.b16 %v447
    %v519 = vunpack.c.l.b16 %v448
    %v520 = vunpack.c.l.b16 %v449
    %v521 = vunpack.c.l.b16 %v450
    %v522 = vpack.c.b16 %v491, %v490
    %v523 = vpack.c.b16 %v493, %v492
    %v524 = vpack.c.b16 %v495, %v494
    %v525 = vpack.c.b16 %v497, %v496
    %v526 = vpack.c.b16 %v499, %v498
    %v527 = vpack.c.b16 %v501, %v500
    %v528 = vpack.c.b16 %v503, %v502
    %v529 = vpack.c.b16 %v505, %v504
    %v530 = vpack.c.b16 %v507, %v506
    %v531 = vpack.c.b16 %v509, %v508
    %v532 = vpack.c.b16 %v511, %v510
    %v533 = vpack.c.b16 %v513, %v512
    %v534 = vpack.c.b16 %v515, %v514
    %v535 = vpack.c.b16 %v517, %v516
    %v536 = vpack.c.b16 %v519, %v518
    %v537 = vpack.c.b16 %v521, %v520
    %554 = vmatprep.subr.bf16.mxu0 0
    %555 = vmatpush1.bf16.msra.mxu0 %v529
    %556 = vmatprep.subr.bf16.mxu0 0
    %557 = vmatpush1.bf16.msra.mxu0 %v528
    %558 = vmatprep.subr.bf16.mxu0 0
    %559 = vmatpush1.bf16.msra.mxu0 %v527
    %560 = vmatprep.subr.bf16.mxu0 0
    %561 = vmatpush1.bf16.msra.mxu0 %v526
    %562 = vmatprep.subr.bf16.mxu0 0
    %563 = vmatpush1.bf16.msra.mxu0 %v525
    %564 = vmatprep.subr.bf16.mxu0 0
    %565 = vmatpush1.bf16.msra.mxu0 %v524
    %566 = vmatprep.subr.bf16.mxu0 0
    %567 = vmatpush1.bf16.msra.mxu0 %v523
    %568 = vmatprep.subr.bf16.mxu0 0
    %569 = vmatpush1.bf16.msra.mxu0 %v522
    %570 = vmatprep.subr.bf16.mxu0 0
    %571 = vmatpush2.bf16.msra.mxu0 %v537
    %572 = vmatprep.subr.bf16.mxu0 0
    %573 = vmatpush2.bf16.msra.mxu0 %v536
    %574 = vmatprep.subr.bf16.mxu0 0
    %575 = vmatpush2.bf16.msra.mxu0 %v535
    %576 = vmatprep.subr.bf16.mxu0 0
    %577 = vmatpush2.bf16.msra.mxu0 %v534
    %578 = vmatprep.subr.bf16.mxu0 0
    %579 = vmatpush2.bf16.msra.mxu0 %v533
    %580 = vmatprep.subr.bf16.mxu0 0
    %581 = vmatpush2.bf16.msra.mxu0 %v532
    %582 = vmatprep.subr.bf16.mxu0 0
    %583 = vmatpush2.bf16.msra.mxu0 %v531
    %584 = vmatprep.subr.bf16.mxu0 0
    %585 = vmatpush2.bf16.msra.mxu0 %v530
    %586 = vmatprep.mubr.bf16.mxu0 %v413
    %587 = vmatmul.mubr.bf16.gmra.mxu0 %v411
    %v588 = vpop.f32.mrf.mxu0
    %v589 = vadd.f32 %v456, %v588
    %v590 = vpop.f32.mrf.mxu0
    %v591 = vpop.f32.mrf.mxu0
    %v592 = vadd.f32 %v456, %v591
    %v593 = vpop.f32.mrf.mxu0
    %594 = vmatprep.mubr.bf16.mxu0 %v414
    %595 = vmatmul.mubr.bf16.gmra.mxu0 %v412
    %v596 = vpop.f32.mrf.mxu0
    %v597 = vadd.f32 %v456, %v596
    %v598 = vpop.f32.mrf.mxu0
    %v599 = vpop.f32.mrf.mxu0
    %v600 = vadd.f32 %v456, %v599
    %v601 = vpop.f32.mrf.mxu0
    %602 = vdwg.mxu0
    %v603 = vmax.f32 %v589, 0.0
    %v604 = vmax.f32 %v592, 0.0
    %v605 = vmax.f32 %v597, 0.0
    %v606 = vmax.f32 %v600, 0.0
    %v607 = vpack.c.bf16 %v604, %v603
    %v608 = vpack.c.bf16 %v606, %v605
    %609 = vmatprep.subr.bf16.mxu0 0
    %610 = vmatpush1.bf16.msra.mxu0 %v529
    %611 = vmatprep.subr.bf16.mxu0 0
    %612 = vmatpush1.bf16.msra.mxu0 %v528
    %613 = vmatprep.subr.bf16.mxu0 0
    %614 = vmatpush1.bf16.msra.mxu0 %v527
    %615 = vmatprep.subr.bf16.mxu0 0
    %616 = vmatpush1.bf16.msra.mxu0 %v526
    %617 = vmatprep.subr.bf16.mxu0 0
    %618 = vmatpush1.bf16.msra.mxu0 %v525
    %619 = vmatprep.subr.bf16.mxu0 0
    %620 = vmatpush1.bf16.msra.mxu0 %v524
    %621 = vmatprep.subr.bf16.mxu0 0
    %622 = vmatpush1.bf16.msra.mxu0 %v523
    %623 = vmatprep.subr.bf16.mxu0 0
    %624 = vmatpush1.bf16.msra.mxu0 %v522
    %625 = vmatprep.subr.bf16.mxu0 0
    %626 = vmatpush2.bf16.msra.mxu0 %v537
    %627 = vmatprep.subr.bf16.mxu0 0
    %628 = vmatpush2.bf16.msra.mxu0 %v536
    %629 = vmatprep.subr.bf16.mxu0 0
    %630 = vmatpush2.bf16.msra.mxu0 %v535
    %631 = vmatprep.subr.bf16.mxu0 0
    %632 = vmatpush2.bf16.msra.mxu0 %v534
    %633 = vmatprep.subr.bf16.mxu0 0
    %634 = vmatpush2.bf16.msra.mxu0 %v533
    %635 = vmatprep.subr.bf16.mxu0 0
    %636 = vmatpush2.bf16.msra.mxu0 %v532
    %637 = vmatprep.subr.bf16.mxu0 0
    %638 = vmatpush2.bf16.msra.mxu0 %v531
    %639 = vmatprep.subr.bf16.mxu0 0
    %640 = vmatpush2.bf16.msra.mxu0 %v530
    %641 = vmatprep.mubr.bf16.mxu0 %v417
    %642 = vmatmul.mubr.bf16.gmra.mxu0 %v415
    %v643 = vpop.f32.mrf.mxu0
    %v644 = vadd.f32 %v456, %v643
    %v645 = vpop.f32.mrf.mxu0
    %v646 = vpop.f32.mrf.mxu0
    %v647 = vadd.f32 %v456, %v646
    %v648 = vpop.f32.mrf.mxu0
    %649 = vmatprep.mubr.bf16.mxu0 %v418
    %650 = vmatmul.mubr.bf16.gmra.mxu0 %v416
    %v651 = vpop.f32.mrf.mxu0
    %v652 = vadd.f32 %v456, %v651
    %v653 = vpop.f32.mrf.mxu0
    %v654 = vpop.f32.mrf.mxu0
    %v655 = vadd.f32 %v456, %v654
    %v656 = vpop.f32.mrf.mxu0
    %657 = vdwg.mxu0
    %v658 = vmax.f32 %v644, 0.0
    %v659 = vmax.f32 %v647, 0.0
    %v660 = vmax.f32 %v652, 0.0
    %v661 = vmax.f32 %v655, 0.0
    %v662 = vpack.c.bf16 %v659, %v658
    %v663 = vpack.c.bf16 %v661, %v660
    %v664 = vld [vmem:[%s7] sm:$0xf]
    %v665 = vld [vmem:[%s7 + $0x4] sm:$0xf]
    %v666 = vld [vmem:[%s7 + $0x8] sm:$0xf]
    %v667 = vld [vmem:[%s7 + $0xc] sm:$0xf]
    %v668 = vld [vmem:[%s7 + $0x10] sm:$0xf]
    %v669 = vld [vmem:[%s7 + $0x14] sm:$0xf]
    %v670 = vld [vmem:[%s7 + $0x18] sm:$0xf]
    %v671 = vld [vmem:[%s7 + $0x1c] sm:$0xf]
    %v672 = vld [vmem:[%s7 + $0x20] sm:$0xf]
    %v673 = vld [vmem:[%s7 + $0x24] sm:$0xf]
    %v674 = vld [vmem:[%s7 + $0x28] sm:$0xf]
    %v675 = vld [vmem:[%s7 + $0x2c] sm:$0xf]
    %v676 = vld [vmem:[%s7 + $0x30] sm:$0xf]
    %v677 = vld [vmem:[%s7 + $0x34] sm:$0xf]
    %v678 = vld [vmem:[%s7 + $0x38] sm:$0xf]
    %v679 = vld [vmem:[%s7 + $0x3c] sm:$0xf]
    %v680 = vld [vmem:[%s7 + $0x40] sm:$0xf]
    %v681 = vld [vmem:[%s7 + $0x44] sm:$0xf]
    %v682 = vld [vmem:[%s7 + $0x48] sm:$0xf]
    %v683 = vld [vmem:[%s7 + $0x4c] sm:$0xf]
    %v684 = vld [vmem:[%s7 + $0x50] sm:$0xf]
    %v685 = vld [vmem:[%s7 + $0x54] sm:$0xf]
    %v686 = vld [vmem:[%s7 + $0x58] sm:$0xf]
    %v687 = vld [vmem:[%s7 + $0x5c] sm:$0xf]
    %v688 = vld [vmem:[%s7 + $0x60] sm:$0xf]
    %v689 = vld [vmem:[%s7 + $0x64] sm:$0xf]
    %v690 = vld [vmem:[%s7 + $0x68] sm:$0xf]
    %v691 = vld [vmem:[%s7 + $0x6c] sm:$0xf]
    %v692 = vld [vmem:[%s7 + $0x70] sm:$0xf]
    %v693 = vld [vmem:[%s7 + $0x74] sm:$0xf]
    %v694 = vld [vmem:[%s7 + $0x78] sm:$0xf]
    %v695 = vld [vmem:[%s7 + $0x7c] sm:$0xf]
    %v696 = vld [vmem:[%s8] sm:$0x1]
    %v698 = vlaneseq
    %v699 = vshrl.u32 %v698, 7
    %v700 = vsub.s32 0, %v699
    %v701 = vrot.slane %v696, %v700
    %v735 = vunpack.c.l.b16 %v664
    %v736 = vunpack.c.l.b16 %v665
    %v737 = vunpack.c.l.b16 %v666
    %v738 = vunpack.c.l.b16 %v667
    %v739 = vunpack.c.l.b16 %v668
    %v740 = vunpack.c.l.b16 %v669
    %v741 = vunpack.c.l.b16 %v670
    %v742 = vunpack.c.l.b16 %v671
    %v743 = vunpack.c.l.b16 %v672
    %v744 = vunpack.c.l.b16 %v673
    %v745 = vunpack.c.l.b16 %v674
    %v746 = vunpack.c.l.b16 %v675
    %v747 = vunpack.c.l.b16 %v676
    %v748 = vunpack.c.l.b16 %v677
    %v749 = vunpack.c.l.b16 %v678
    %v750 = vunpack.c.l.b16 %v679
    %v751 = vunpack.c.l.b16 %v680
    %v752 = vunpack.c.l.b16 %v681
    %v753 = vunpack.c.l.b16 %v682
    %v754 = vunpack.c.l.b16 %v683
    %v755 = vunpack.c.l.b16 %v684
    %v756 = vunpack.c.l.b16 %v685
    %v757 = vunpack.c.l.b16 %v686
    %v758 = vunpack.c.l.b16 %v687
    %v759 = vunpack.c.l.b16 %v688
    %v760 = vunpack.c.l.b16 %v689
    %v761 = vunpack.c.l.b16 %v690
    %v762 = vunpack.c.l.b16 %v691
    %v763 = vunpack.c.l.b16 %v692
    %v764 = vunpack.c.l.b16 %v693
    %v765 = vunpack.c.l.b16 %v694
    %v766 = vunpack.c.l.b16 %v695
    %v767 = vpack.c.b16 %v736, %v735
    %v768 = vpack.c.b16 %v738, %v737
    %v769 = vpack.c.b16 %v740, %v739
    %v770 = vpack.c.b16 %v742, %v741
    %v771 = vpack.c.b16 %v744, %v743
    %v772 = vpack.c.b16 %v746, %v745
    %v773 = vpack.c.b16 %v748, %v747
    %v774 = vpack.c.b16 %v750, %v749
    %v775 = vpack.c.b16 %v752, %v751
    %v776 = vpack.c.b16 %v754, %v753
    %v777 = vpack.c.b16 %v756, %v755
    %v778 = vpack.c.b16 %v758, %v757
    %v779 = vpack.c.b16 %v760, %v759
    %v780 = vpack.c.b16 %v762, %v761
    %v781 = vpack.c.b16 %v764, %v763
    %v782 = vpack.c.b16 %v766, %v765
    %799 = vmatprep.subr.bf16.mxu0 0
    %800 = vmatpush1.bf16.msra.mxu0 %v774
    %801 = vmatprep.subr.bf16.mxu0 0
    %802 = vmatpush1.bf16.msra.mxu0 %v773
    %803 = vmatprep.subr.bf16.mxu0 0
    %804 = vmatpush1.bf16.msra.mxu0 %v772
    %805 = vmatprep.subr.bf16.mxu0 0
    %806 = vmatpush1.bf16.msra.mxu0 %v771
    %807 = vmatprep.subr.bf16.mxu0 0
    %808 = vmatpush1.bf16.msra.mxu0 %v770
    %809 = vmatprep.subr.bf16.mxu0 0
    %810 = vmatpush1.bf16.msra.mxu0 %v769
    %811 = vmatprep.subr.bf16.mxu0 0
    %812 = vmatpush1.bf16.msra.mxu0 %v768
    %813 = vmatprep.subr.bf16.mxu0 0
    %814 = vmatpush1.bf16.msra.mxu0 %v767
    %815 = vmatprep.subr.bf16.mxu0 0
    %816 = vmatpush2.bf16.msra.mxu0 %v782
    %817 = vmatprep.subr.bf16.mxu0 0
    %818 = vmatpush2.bf16.msra.mxu0 %v781
    %819 = vmatprep.subr.bf16.mxu0 0
    %820 = vmatpush2.bf16.msra.mxu0 %v780
    %821 = vmatprep.subr.bf16.mxu0 0
    %822 = vmatpush2.bf16.msra.mxu0 %v779
    %823 = vmatprep.subr.bf16.mxu0 0
    %824 = vmatpush2.bf16.msra.mxu0 %v778
    %825 = vmatprep.subr.bf16.mxu0 0
    %826 = vmatpush2.bf16.msra.mxu0 %v777
    %827 = vmatprep.subr.bf16.mxu0 0
    %828 = vmatpush2.bf16.msra.mxu0 %v776
    %829 = vmatprep.subr.bf16.mxu0 0
    %830 = vmatpush2.bf16.msra.mxu0 %v775
    %831 = vmatprep.mubr.bf16.mxu0 %v662
    %832 = vmatmul.mubr.bf16.gmra.mxu0 %v607
    %v833 = vpop.f32.mrf.mxu0
    %v834 = vadd.f32 %v701, %v833
    %v835 = vpop.f32.mrf.mxu0
    %v836 = vpop.f32.mrf.mxu0
    %v837 = vadd.f32 %v701, %v836
    %v838 = vpop.f32.mrf.mxu0
    %839 = vmatprep.mubr.bf16.mxu0 %v663
    %840 = vmatmul.mubr.bf16.gmra.mxu0 %v608
    %v841 = vpop.f32.mrf.mxu0
    %v842 = vadd.f32 %v701, %v841
    %v843 = vpop.f32.mrf.mxu0
    %v844 = vpop.f32.mrf.mxu0
    %v845 = vadd.f32 %v701, %v844
    %v846 = vpop.f32.mrf.mxu0
    %847 = vdwg.mxu0
    %v848 = vld [vmem:[%s9] sm:$0xf]
    %v849 = vld [vmem:[%s9 + $0x4] sm:$0xf]
    %v850 = vld [vmem:[%s9 + $0x8] sm:$0xf]
    %v851 = vld [vmem:[%s9 + $0xc] sm:$0xf]
    %v852 = vunpack.c.l.bf16 %v848
    %v853 = vunpack.c.l.bf16 %v849
    %v854 = vunpack.c.l.bf16 %v850
    %v855 = vunpack.c.l.bf16 %v851
    %v856 = vadd.f32 %v834, %v852
    %v857 = vadd.f32 %v837, %v853
    %v858 = vadd.f32 %v842, %v854
    %v859 = vadd.f32 %v845, %v855
    %v860 = vmax.f32 %v856, 0.0
    %v861 = vmax.f32 %v857, 0.0
    %v862 = vmax.f32 %v858, 0.0
    %v863 = vmax.f32 %v859, 0.0
    %864 = vst [vmem:[#allocation2] sm:$0xff] %v860
    %865 = vst [vmem:[#allocation2 + $0x8] sm:$0xff] %v861
    %866 = vst [vmem:[#allocation2 + $0x10] sm:$0xff] %v862
    %867 = vst [vmem:[#allocation2 + $0x18] sm:$0xff] %v863
    // Predicated region
    $region42: #{pointsift_res_forward.5} parent=1 // pred_check
      _
    $region43: #{pointsift_res_forward.5} parent=1 // pred_check_branch
      %869 = sbr.rel (0) target = $region45
    $region44: #{pointsift_res_forward.5} parent=1 // pred_region
      %s871 = ssub.s32 512, 512
      %872 = vsyncadd [#allocation3], %s871
      %s873 = sshll.u32 [#allocation2], 4
      %s874 = int_to_ptr.vmem [resolvable:$true] %s873
      %879 = dma.vmem_to_hbm [thread:$0]  %s874, 512, %s10, [#allocation3], 128, 128, 8
    $region45: #{pointsift_res_forward.5} parent=1 // pred_fallthru
      _
    // Predicated region
    $region46: #{pointsift_res_forward.5} parent=1 // pred_check
      _
    $region47: #{pointsift_res_forward.5} parent=1 // pred_check_branch
      %881 = sbr.rel (0) target = $region49
    $region48: #{pointsift_res_forward.5} parent=1 // pred_region
      %882 = dma.done [#allocation3], 512
    $region49: #{pointsift_res_forward.5} parent=1 // pred_fallthru
      _
    %883 = vsyncpa [#allocation3], 1

</llo_original>
